<compile_context>
chip_gen: v6e
topology: v6e:2x2x1
jax: 0.10.0
libtpu: 0.0.40
codegen_flags: <defaults>
</compile_context>

<pallas_src>
import functools
import math

import jax
import jax.numpy as jnp
from jax import lax
from jax.experimental import pallas as pl
from jax.experimental.pallas import tpu as pltpu


# ---------------------------------------------------------------------------
# Pallas kernel: one batch block (Bblk sequences) per grid step.
# ---------------------------------------------------------------------------
def omni_gru_kernel(
    action_ref, aud_ref, objs_ref, frame_ref,
    w_act_ref, b_act_ref,
    w_aud_ref, b_aud_ref,
    w_objp_ref, b_objp_ref,
    w_frmp_ref, b_frmp_ref,
    w_objfc_ref, b_objfc_ref,
    wih0_ref, whh0_ref, bih0_ref, bhh0_ref,
    wih1_ref, whh1_ref, bih1_ref, bhh1_ref,
    wfc_ref, bfc_ref,
    out_ref, h_ref,
    *, Bblk, T, N, IMG, P, H):
  f32 = jnp.float32
  eps_sq = jnp.float32(1e-16)        # (1e-8)^2, matches torch cosine_similarity eps
  relu = lambda v: jnp.maximum(v, 0.0)
  BT = Bblk * T
  inv_n = 1.0 / N

  def proj(x2d, w_ref, b_ref):
    return relu(jnp.dot(x2d, w_ref[...], preferred_element_type=f32) + b_ref[...])

  # ---- modality projections: batch*time folded into matmul rows (eval dropout=id) ----
  act_p = proj(action_ref[...].reshape(BT, -1), w_act_ref, b_act_ref)      # (BT, P)
  aud_p = proj(aud_ref[...].reshape(BT, -1), w_aud_ref, b_aud_ref)         # (BT, P)
  frm_p = proj(frame_ref[...].reshape(BT, -1), w_frmp_ref, b_frmp_ref)     # (BT, P)

  # objects: one stacked (N*BT, IMG) @ (IMG, P) matmul (object-major rows); the
  # per-object slabs are aligned lane slices (IMG is a lane multiple).
  obj_flat = objs_ref[...].reshape(BT, N * IMG)                            # (BT, N*IMG)
  obj_rows = jnp.concatenate(
      [obj_flat[:, n * IMG:(n + 1) * IMG] for n in range(N)], axis=0)      # (N*BT, IMG)
  obj_p_all = proj(obj_rows, w_objp_ref, b_objp_ref)                       # (N*BT, P)
  obj_ps = [obj_p_all[n * BT:(n + 1) * BT, :] for n in range(N)]           # N x (BT, P)

  # ---- cosine-similarity attention, O(N) via pre-normalised features ----
  def normalize(v):                           # v / max(||v||, 1e-8)
    ss = jnp.sum(v * v, axis=-1, keepdims=True)
    return v * lax.rsqrt(jnp.maximum(ss, eps_sq))

  frm_hat = normalize(frm_p)                                               # (BT, P)
  obj_hats = [normalize(op) for op in obj_ps]
  hat_sum = obj_hats[0]
  obj_sum = obj_ps[0]
  for n in range(1, N):
    hat_sum = hat_sum + obj_hats[n]                                        # (BT, P)
    obj_sum = obj_sum + obj_ps[n]

  # softmax over the N per-(b,t) logits, kept as narrow (BT,1) columns.
  logits = []
  for n in range(N):
    theta_n = jnp.sum(frm_hat * obj_hats[n], axis=-1, keepdims=True)       # (BT, 1)
    phi_n = jnp.sum(obj_hats[n] * hat_sum, axis=-1, keepdims=True) * inv_n
    logits.append(theta_n + phi_n)
  mx = logits[0]
  for n in range(1, N):
    mx = jnp.maximum(mx, logits[n])
  es = [jnp.exp(l - mx) for l in logits]
  denom = es[0]
  for n in range(1, N):
    denom = denom + es[n]
  inv_den = 1.0 / denom                                                    # (BT, 1)

  # mean_n [w_n*frm + (1-w_n)*obj_n] = (frm + sum_n obj_n - sum_n w_n*obj_n) / N
  wobj = (es[0] * inv_den) * obj_ps[0]
  for n in range(1, N):
    wobj = wobj + (es[n] * inv_den) * obj_ps[n]
  mix = (frm_p + obj_sum - wobj) * inv_n
  obj_in = proj(mix, w_objfc_ref, b_objfc_ref)                             # (BT, P)

  # ---- GRU layer-0 input gates for the whole block (no lane-dim concat) ----
  gi0 = (jnp.dot(act_p, wih0_ref[0 * P:1 * P, :], preferred_element_type=f32)
         + jnp.dot(aud_p, wih0_ref[1 * P:2 * P, :], preferred_element_type=f32)
         + jnp.dot(obj_in, wih0_ref[2 * P:3 * P, :], preferred_element_type=f32)
         + bih0_ref[...])                                                  # (BT, Gpad)
  gi0 = gi0.reshape(Bblk, T, gi0.shape[-1])                                # time on the middle axis

  # Load the small recurrent weights once, outside the time loop.
  whh0 = whh0_ref[...]; bhh0 = bhh0_ref[...]
  wih1 = wih1_ref[...]; bih1 = bih1_ref[...]
  whh1 = whh1_ref[...]; bhh1 = bhh1_ref[...]

  def gru_cell(gi, gh, h):
    r = jax.nn.sigmoid(gi[:, 0:H] + gh[:, 0:H])
    z = jax.nn.sigmoid(gi[:, H:2 * H] + gh[:, H:2 * H])
    n = jnp.tanh(gi[:, 2 * H:3 * H] + r * gh[:, 2 * H:3 * H])
    return (1.0 - z) * n + z * h

  # Both stacked GRU layers interleaved in one short static time loop; only the two
  # (Bblk, H) hidden states stay live across steps (h0 = zeros like PyTorch h=None).
  h0 = jnp.zeros((Bblk, H), f32)
  h1 = jnp.zeros((Bblk, H), f32)
  for t in range(T):                                    # T is small & static
    gi_t = gi0[:, t, :]                                                    # (Bblk, Gpad)
    gh0 = jnp.dot(h0, whh0, preferred_element_type=f32) + bhh0
    h0 = gru_cell(gi_t, gh0, h0)
    # TODO(synk): inter-layer GRU dropout is identity here (eval-mode forward).
    gi1 = jnp.dot(h0, wih1, preferred_element_type=f32) + bih1
    gh1 = jnp.dot(h1, whh1, preferred_element_type=f32) + bhh1
    h1 = gru_cell(gi1, gh1, h1)

  h_ref[0] = h0
  h_ref[1] = h1

  # ---- head: relu(last-step top-layer output) @ fc (lane-padded to 128) ----
  out_ref[...] = (jnp.dot(relu(h1), wfc_ref[...], preferred_element_type=f32)
                  + bfc_ref[...])


# ---------------------------------------------------------------------------
# Wrapper: shapes / specs / (free) layout plumbing.
# ---------------------------------------------------------------------------
def _pad_last_to_multiple(a, mult=128):
  last = a.shape[-1]
  target = ((last + mult - 1) // mult) * mult
  if target == last:
    return a
  pad = [(0, 0)] * (a.ndim - 1) + [(0, target - last)]
  return jnp.pad(a, pad)


def omni_gru_pallas(params, action, aud, objs, frame, *, batch_block=8):
  B, T, A = action.shape
  AU = aud.shape[-1]
  N, IMG = objs.shape[2], objs.shape[3]
  P = params["w_act"].shape[1]
  H = params["whh0"].shape[0]
  C2 = params["w_fc"].shape[1]

  Bblk = min(B, batch_block)
  assert B % Bblk == 0, "batch must be divisible by the batch block"

  # Zero-pad the narrow GRU-gate (3H) and head (C2) weight columns to 128 lanes so
  # hot vector ops / stores run on dense (8,128) vregs; sliced back below.
  padded = dict(params)
  for k in ("wih0", "bih0", "whh0", "bhh0", "wih1", "bih1", "whh1", "bhh1",
            "w_fc", "b_fc"):
    padded[k] = _pad_last_to_multiple(params[k], 128)
  CP = padded["w_fc"].shape[1]

  # Free (contiguous) reshapes only -- no extra HBM transpose pass over objs.
  objs_r = objs.reshape(B, T, N * IMG)
  frame_r = frame.reshape(B, T, IMG)

  weight_names = ["w_act", "b_act", "w_aud", "b_aud",
                  "w_objp", "b_objp", "w_frmp", "b_frmp",
                  "w_objfc", "b_objfc",
                  "wih0", "whh0", "bih0", "bhh0",
                  "wih1", "whh1", "bih1", "bhh1",
                  "w_fc", "b_fc"]
  weights = [padded[k] for k in weight_names]

  # Full-array, grid-invariant weight blocks (block index never changes, so Pallas
  # does not re-fetch them across grid steps).
  # TODO(synk): at production feature sizes keep the big projection weights in
  # memory_space=pl.ANY and DMA them once into persistent VMEM scratch instead.
  weight_specs = [pl.BlockSpec(w.shape, lambda i: (0, 0)) for w in weights]

  in_specs = [
      pl.BlockSpec((Bblk, T, A), lambda i: (i, 0, 0)),
      pl.BlockSpec((Bblk, T, AU), lambda i: (i, 0, 0)),
      pl.BlockSpec((Bblk, T, N * IMG), lambda i: (i, 0, 0)),
      pl.BlockSpec((Bblk, T, IMG), lambda i: (i, 0, 0)),
  ] + weight_specs

  out_specs = [
      pl.BlockSpec((Bblk, CP), lambda i: (i, 0)),
      pl.BlockSpec((2, Bblk, H), lambda i: (0, i, 0)),
  ]

  kernel = functools.partial(omni_gru_kernel,
                             Bblk=Bblk, T=T, N=N, IMG=IMG, P=P, H=H)

  out_pad, h = pl.pallas_call(
      kernel,
      out_shape=(jax.ShapeDtypeStruct((B, CP), jnp.float32),
                 jax.ShapeDtypeStruct((2, B, H), jnp.float32)),
      grid_spec=pltpu.PrefetchScalarGridSpec(
          num_scalar_prefetch=0,
          grid=(B // Bblk,),
          in_specs=in_specs,
          out_specs=out_specs),
      compiler_params=pltpu.CompilerParams(
          dimension_semantics=("parallel",),
          vmem_limit_bytes=32 * 1024 * 1024),
  )(action, aud, objs_r, frame_r, *weights)

  out = out_pad[:, :C2]                     # (B, number_classes + 2)
  return out, h                             # h: (n_gru_layers, B, H) like PyTorch


# ---------------------------------------------------------------------------
# Pure-JAX reference (same math) for a correctness check.
# ---------------------------------------------------------------------------
def omni_gru_reference(params, action, aud, objs, frame):
  p = params
  relu = lambda v: jnp.maximum(v, 0.0)
  eps = 1e-8

  act_p = relu(action @ p["w_act"] + p["b_act"])          # (B,T,P)
  aud_p = relu(aud @ p["w_aud"] + p["b_aud"])             # (B,T,P)
  obj_p = relu(objs @ p["w_objp"] + p["b_objp"])          # (B,T,N,P)
  frm_p = relu(frame @ p["w_frmp"] + p["b_frmp"])         # (B,T,1,P)

  nrm = lambda v: jnp.maximum(jnp.sqrt(jnp.sum(v * v, axis=-1)), eps)
  theta = jnp.sum(frm_p * obj_p, -1) / (nrm(frm_p) * nrm(obj_p))           # (B,T,N)
  dots = jnp.einsum("btnp,btmp->btnm", obj_p, obj_p)
  on = nrm(obj_p)
  phi = jnp.mean(dots / (on[..., :, None] * on[..., None, :]), axis=-1)    # (B,T,N)
  w = jax.nn.softmax(theta + phi, axis=-1)[..., None]                      # (B,T,N,1)
  obj_in = jnp.mean(w * frm_p + (1.0 - w) * obj_p, axis=-2)                # (B,T,P)
  obj_in = relu(obj_in @ p["w_objfc"] + p["b_objfc"])

  x = jnp.concatenate([act_p, aud_p, obj_in], axis=-1)                     # (B,T,3P)

  def gru_layer(xs, wih, whh, bih, bhh):
    H = whh.shape[0]
    def step(h, xt):
      gi = xt @ wih + bih
      gh = h @ whh + bhh
      r = jax.nn.sigmoid(gi[:, :H] + gh[:, :H])
      z = jax.nn.sigmoid(gi[:, H:2 * H] + gh[:, H:2 * H])
      n = jnp.tanh(gi[:, 2 * H:] + r * gh[:, 2 * H:])
      hn = (1.0 - z) * n + z * h
      return hn, hn
    h0 = jnp.zeros((xs.shape[0], H), xs.dtype)
    hT, ys = lax.scan(step, h0, jnp.swapaxes(xs, 0, 1))
    return jnp.swapaxes(ys, 0, 1), hT

  y0, h0f = gru_layer(x, p["wih0"], p["whh0"], p["bih0"], p["bhh0"])
  y1, h1f = gru_layer(y0, p["wih1"], p["whh1"], p["bih1"], p["bhh1"])
  out = relu(y1[:, -1]) @ p["w_fc"] + p["b_fc"]
  h = jnp.stack([h0f, h1f], axis=0)
  return out, h


# ---------------------------------------------------------------------------
# Deterministic synthetic parameter init (xavier-normal Linear + zero bias,
# PyTorch-default uniform for GRU).
# ---------------------------------------------------------------------------
def init_params(key, A, AU, IMG, P, H, C2):
  ks = jax.random.split(key, 16)

  def xavier(k, fi, fo):
    std = math.sqrt(2.0 / (fi + fo))
    return (std * jax.random.normal(k, (fi, fo))).astype(jnp.float32)

  def unif(k, shape):
    lim = 1.0 / math.sqrt(H)
    return jax.random.uniform(k, shape, jnp.float32, -lim, lim)

  z = lambda d: jnp.zeros((1, d), jnp.float32)
  gru_in = 3 * P   # action + audio + objects
  return {
      "w_act": xavier(ks[0], A, P), "b_act": z(P),
      "w_aud": xavier(ks[1], AU, P), "b_aud": z(P),
      "w_objp": xavier(ks[2], IMG, P), "b_objp": z(P),
      "w_frmp": xavier(ks[3], IMG, P), "b_frmp": z(P),
      "w_objfc": xavier(ks[4], P, P), "b_objfc": z(P),
      "wih0": unif(ks[5], (gru_in, 3 * H)), "whh0": unif(ks[6], (H, 3 * H)),
      "bih0": unif(ks[7], (1, 3 * H)), "bhh0": unif(ks[8], (1, 3 * H)),
      "wih1": unif(ks[9], (H, 3 * H)), "whh1": unif(ks[10], (H, 3 * H)),
      "bih1": unif(ks[11], (1, 3 * H)), "bhh1": unif(ks[12], (1, 3 * H)),
      "w_fc": xavier(ks[13], H, C2), "b_fc": z(C2),
  }


if __name__ == "__main__":
  B, T, N = 16, 8, 4
  A, AU, IMG = 128, 256, 128     # small lane-aligned stand-ins for 1024 / 2304 / 517
  P, H = 128, 32                 # project_dim (scaled down), HIDDEN_SIZE
  OUT_DIM = 8
  C2 = OUT_DIM + 1 + 2           # number_classes + number_position = 11

  key = jax.random.PRNGKey(0)
  k_par, k_in = jax.random.split(key)
  params = init_params(k_par, A, AU, IMG, P, H, C2)

  ks = jax.random.split(k_in, 4)
  action = jax.random.normal(ks[0], (B, T, A), jnp.float32)
  aud = jax.random.normal(ks[1], (B, T, AU), jnp.float32)
  objs = jax.random.normal(ks[2], (B, T, N, IMG), jnp.float32)
  frame = jax.random.normal(ks[3], (B, T, 1, IMG), jnp.float32)

  out, h = omni_gru_pallas(params, action, aud, objs, frame)
  jax.block_until_ready((out, h))

  out_r, h_r = omni_gru_reference(params, action, aud, objs, frame)
  max_diff = max(float(jnp.max(jnp.abs(out - out_r))),
                 float(jnp.max(jnp.abs(h - h_r))))
  if max_diff > 5e-2:
    raise SystemExit(f"mismatch vs reference (max diff {max_diff})")
  print("KERNEL_OK")
</pallas_src>

<mosaic_0001>
module attributes {stable_mosaic.version = 11 : i64} {
  func.func @omni_gru_kernel(%arg0: i32, %arg1: memref<8x8x128xf32, #tpu.memory_space<vmem>>, %arg2: memref<8x8x256xf32, #tpu.memory_space<vmem>>, %arg3: memref<8x8x512xf32, #tpu.memory_space<vmem>>, %arg4: memref<8x8x128xf32, #tpu.memory_space<vmem>>, %arg5: memref<128x128xf32, #tpu.memory_space<vmem>>, %arg6: memref<1x128xf32, #tpu.memory_space<vmem>>, %arg7: memref<256x128xf32, #tpu.memory_space<vmem>>, %arg8: memref<1x128xf32, #tpu.memory_space<vmem>>, %arg9: memref<128x128xf32, #tpu.memory_space<vmem>>, %arg10: memref<1x128xf32, #tpu.memory_space<vmem>>, %arg11: memref<128x128xf32, #tpu.memory_space<vmem>>, %arg12: memref<1x128xf32, #tpu.memory_space<vmem>>, %arg13: memref<128x128xf32, #tpu.memory_space<vmem>>, %arg14: memref<1x128xf32, #tpu.memory_space<vmem>>, %arg15: memref<384x128xf32, #tpu.memory_space<vmem>>, %arg16: memref<32x128xf32, #tpu.memory_space<vmem>>, %arg17: memref<1x128xf32, #tpu.memory_space<vmem>>, %arg18: memref<1x128xf32, #tpu.memory_space<vmem>>, %arg19: memref<32x128xf32, #tpu.memory_space<vmem>>, %arg20: memref<32x128xf32, #tpu.memory_space<vmem>>, %arg21: memref<1x128xf32, #tpu.memory_space<vmem>>, %arg22: memref<1x128xf32, #tpu.memory_space<vmem>>, %arg23: memref<32x128xf32, #tpu.memory_space<vmem>>, %arg24: memref<1x128xf32, #tpu.memory_space<vmem>>, %arg25: memref<8x128xf32, #tpu.memory_space<vmem>>, %arg26: memref<2x8x32xf32, #tpu.memory_space<vmem>>) attributes {dimension_semantics = [#tpu.dimension_semantics<parallel>], iteration_bounds = array<i64: 2>, scalar_prefetch = 0 : i64, scratch_operands = 0 : i64, tpu.core_type = #tpu.core_type<tc>, window_params = [{transform_indices = @transform_0, window_bounds = array<i64: 8, 8, 128>}, {transform_indices = @transform_1, window_bounds = array<i64: 8, 8, 256>}, {transform_indices = @transform_2, window_bounds = array<i64: 8, 8, 512>}, {transform_indices = @transform_3, window_bounds = array<i64: 8, 8, 128>}, {pipeline_mode = #tpu.pipeline_mode<synchronous>, transform_indices = @transform_4, window_bounds = array<i64: 128, 128>}, {pipeline_mode = #tpu.pipeline_mode<synchronous>, transform_indices = @transform_5, window_bounds = array<i64: 1, 128>}, {pipeline_mode = #tpu.pipeline_mode<synchronous>, transform_indices = @transform_6, window_bounds = array<i64: 256, 128>}, {pipeline_mode = #tpu.pipeline_mode<synchronous>, transform_indices = @transform_7, window_bounds = array<i64: 1, 128>}, {pipeline_mode = #tpu.pipeline_mode<synchronous>, transform_indices = @transform_8, window_bounds = array<i64: 128, 128>}, {pipeline_mode = #tpu.pipeline_mode<synchronous>, transform_indices = @transform_9, window_bounds = array<i64: 1, 128>}, {pipeline_mode = #tpu.pipeline_mode<synchronous>, transform_indices = @transform_10, window_bounds = array<i64: 128, 128>}, {pipeline_mode = #tpu.pipeline_mode<synchronous>, transform_indices = @transform_11, window_bounds = array<i64: 1, 128>}, {pipeline_mode = #tpu.pipeline_mode<synchronous>, transform_indices = @transform_12, window_bounds = array<i64: 128, 128>}, {pipeline_mode = #tpu.pipeline_mode<synchronous>, transform_indices = @transform_13, window_bounds = array<i64: 1, 128>}, {pipeline_mode = #tpu.pipeline_mode<synchronous>, transform_indices = @transform_14, window_bounds = array<i64: 384, 128>}, {pipeline_mode = #tpu.pipeline_mode<synchronous>, transform_indices = @transform_15, window_bounds = array<i64: 32, 128>}, {pipeline_mode = #tpu.pipeline_mode<synchronous>, transform_indices = @transform_16, window_bounds = array<i64: 1, 128>}, {pipeline_mode = #tpu.pipeline_mode<synchronous>, transform_indices = @transform_17, window_bounds = array<i64: 1, 128>}, {pipeline_mode = #tpu.pipeline_mode<synchronous>, transform_indices = @transform_18, window_bounds = array<i64: 32, 128>}, {pipeline_mode = #tpu.pipeline_mode<synchronous>, transform_indices = @transform_19, window_bounds = array<i64: 32, 128>}, {pipeline_mode = #tpu.pipeline_mode<synchronous>, transform_indices = @transform_20, window_bounds = array<i64: 1, 128>}, {pipeline_mode = #tpu.pipeline_mode<synchronous>, transform_indices = @transform_21, window_bounds = array<i64: 1, 128>}, {pipeline_mode = #tpu.pipeline_mode<synchronous>, transform_indices = @transform_22, window_bounds = array<i64: 32, 128>}, {pipeline_mode = #tpu.pipeline_mode<synchronous>, transform_indices = @transform_23, window_bounds = array<i64: 1, 128>}, {transform_indices = @transform_24, window_bounds = array<i64: 8, 128>}, {transform_indices = @transform_25, window_bounds = array<i64: 2, 8, 32>}]} {
    %c0 = arith.constant 0 : index
    %c0_0 = arith.constant 0 : index
    %c0_1 = arith.constant 0 : index
    %0 = vector.load %arg1[%c0, %c0_0, %c0_1] : memref<8x8x128xf32, #tpu.memory_space<vmem>>, vector<8x8x128xf32>
    %1 = vector.shape_cast %0 : vector<8x8x128xf32> to vector<64x128xf32>
    %c0_2 = arith.constant 0 : index
    %c0_3 = arith.constant 0 : index
    %2 = vector.load %arg5[%c0_2, %c0_3] : memref<128x128xf32, #tpu.memory_space<vmem>>, vector<128x128xf32>
    %cst = arith.constant dense<0.000000e+00> : vector<64x128xf32>
    %3 = tpu.matmul %1, %2, %cst {dimension_numbers = #tpu.dot_dimension_numbers<[1], [0], [0], [1], [0, 0, 1, 1], [], []>} : vector<64x128xf32>, vector<128x128xf32>, vector<64x128xf32> -> vector<64x128xf32>
    %c0_4 = arith.constant 0 : index
    %c0_5 = arith.constant 0 : index
    %4 = vector.load %arg6[%c0_4, %c0_5] : memref<1x128xf32, #tpu.memory_space<vmem>>, vector<1x128xf32>
    %5 = vector.broadcast %4 : vector<1x128xf32> to vector<64x128xf32>
    %6 = arith.addf %3, %5 : vector<64x128xf32>
    %cst_6 = arith.constant 0.000000e+00 : f32
    %7 = vector.broadcast %cst_6 : f32 to vector<64x128xf32>
    %8 = arith.maximumf %6, %7 : vector<64x128xf32>
    %c0_7 = arith.constant 0 : index
    %c0_8 = arith.constant 0 : index
    %c0_9 = arith.constant 0 : index
    %9 = vector.load %arg2[%c0_7, %c0_8, %c0_9] : memref<8x8x256xf32, #tpu.memory_space<vmem>>, vector<8x8x256xf32>
    %10 = vector.shape_cast %9 : vector<8x8x256xf32> to vector<64x256xf32>
    %c0_10 = arith.constant 0 : index
    %c0_11 = arith.constant 0 : index
    %11 = vector.load %arg7[%c0_10, %c0_11] : memref<256x128xf32, #tpu.memory_space<vmem>>, vector<256x128xf32>
    %cst_12 = arith.constant dense<0.000000e+00> : vector<64x128xf32>
    %12 = tpu.matmul %10, %11, %cst_12 {dimension_numbers = #tpu.dot_dimension_numbers<[1], [0], [0], [1], [0, 0, 1, 1], [], []>} : vector<64x256xf32>, vector<256x128xf32>, vector<64x128xf32> -> vector<64x128xf32>
    %c0_13 = arith.constant 0 : index
    %c0_14 = arith.constant 0 : index
    %13 = vector.load %arg8[%c0_13, %c0_14] : memref<1x128xf32, #tpu.memory_space<vmem>>, vector<1x128xf32>
    %14 = vector.broadcast %13 : vector<1x128xf32> to vector<64x128xf32>
    %15 = arith.addf %12, %14 : vector<64x128xf32>
    %cst_15 = arith.constant 0.000000e+00 : f32
    %16 = vector.broadcast %cst_15 : f32 to vector<64x128xf32>
    %17 = arith.maximumf %15, %16 : vector<64x128xf32>
    %c0_16 = arith.constant 0 : index
    %c0_17 = arith.constant 0 : index
    %c0_18 = arith.constant 0 : index
    %18 = vector.load %arg4[%c0_16, %c0_17, %c0_18] : memref<8x8x128xf32, #tpu.memory_space<vmem>>, vector<8x8x128xf32>
    %19 = vector.shape_cast %18 : vector<8x8x128xf32> to vector<64x128xf32>
    %c0_19 = arith.constant 0 : index
    %c0_20 = arith.constant 0 : index
    %20 = vector.load %arg11[%c0_19, %c0_20] : memref<128x128xf32, #tpu.memory_space<vmem>>, vector<128x128xf32>
    %cst_21 = arith.constant dense<0.000000e+00> : vector<64x128xf32>
    %21 = tpu.matmul %19, %20, %cst_21 {dimension_numbers = #tpu.dot_dimension_numbers<[1], [0], [0], [1], [0, 0, 1, 1], [], []>} : vector<64x128xf32>, vector<128x128xf32>, vector<64x128xf32> -> vector<64x128xf32>
    %c0_22 = arith.constant 0 : index
    %c0_23 = arith.constant 0 : index
    %22 = vector.load %arg12[%c0_22, %c0_23] : memref<1x128xf32, #tpu.memory_space<vmem>>, vector<1x128xf32>
    %23 = vector.broadcast %22 : vector<1x128xf32> to vector<64x128xf32>
    %24 = arith.addf %21, %23 : vector<64x128xf32>
    %cst_24 = arith.constant 0.000000e+00 : f32
    %25 = vector.broadcast %cst_24 : f32 to vector<64x128xf32>
    %26 = arith.maximumf %24, %25 : vector<64x128xf32>
    %c0_25 = arith.constant 0 : index
    %c0_26 = arith.constant 0 : index
    %c0_27 = arith.constant 0 : index
    %27 = vector.load %arg3[%c0_25, %c0_26, %c0_27] : memref<8x8x512xf32, #tpu.memory_space<vmem>>, vector<8x8x512xf32>
    %28 = vector.shape_cast %27 : vector<8x8x512xf32> to vector<64x512xf32>
    %29 = vector.extract_strided_slice %28 {offsets = [0, 0], sizes = [64, 128], strides = [1, 1]} : vector<64x512xf32> to vector<64x128xf32>
    %30 = vector.extract_strided_slice %28 {offsets = [0, 128], sizes = [64, 128], strides = [1, 1]} : vector<64x512xf32> to vector<64x128xf32>
    %31 = vector.extract_strided_slice %28 {offsets = [0, 256], sizes = [64, 128], strides = [1, 1]} : vector<64x512xf32> to vector<64x128xf32>
    %32 = vector.extract_strided_slice %28 {offsets = [0, 384], sizes = [64, 128], strides = [1, 1]} : vector<64x512xf32> to vector<64x128xf32>
    %33 = tpu.concatenate %29, %30, %31, %32 in 0 : vector<64x128xf32>, vector<64x128xf32>, vector<64x128xf32>, vector<64x128xf32> -> vector<256x128xf32>
    %c0_28 = arith.constant 0 : index
    %c0_29 = arith.constant 0 : index
    %34 = vector.load %arg9[%c0_28, %c0_29] : memref<128x128xf32, #tpu.memory_space<vmem>>, vector<128x128xf32>
    %cst_30 = arith.constant dense<0.000000e+00> : vector<256x128xf32>
    %35 = tpu.matmul %33, %34, %cst_30 {dimension_numbers = #tpu.dot_dimension_numbers<[1], [0], [0], [1], [0, 0, 1, 1], [], []>} : vector<256x128xf32>, vector<128x128xf32>, vector<256x128xf32> -> vector<256x128xf32>
    %c0_31 = arith.constant 0 : index
    %c0_32 = arith.constant 0 : index
    %36 = vector.load %arg10[%c0_31, %c0_32] : memref<1x128xf32, #tpu.memory_space<vmem>>, vector<1x128xf32>
    %37 = vector.broadcast %36 : vector<1x128xf32> to vector<256x128xf32>
    %38 = arith.addf %35, %37 : vector<256x128xf32>
    %cst_33 = arith.constant 0.000000e+00 : f32
    %39 = vector.broadcast %cst_33 : f32 to vector<256x128xf32>
    %40 = arith.maximumf %38, %39 : vector<256x128xf32>
    %41 = vector.extract_strided_slice %40 {offsets = [0, 0], sizes = [64, 128], strides = [1, 1]} : vector<256x128xf32> to vector<64x128xf32>
    %42 = vector.extract_strided_slice %40 {offsets = [64, 0], sizes = [64, 128], strides = [1, 1]} : vector<256x128xf32> to vector<64x128xf32>
    %43 = vector.extract_strided_slice %40 {offsets = [128, 0], sizes = [64, 128], strides = [1, 1]} : vector<256x128xf32> to vector<64x128xf32>
    %44 = vector.extract_strided_slice %40 {offsets = [192, 0], sizes = [64, 128], strides = [1, 1]} : vector<256x128xf32> to vector<64x128xf32>
    %45 = arith.mulf %26, %26 : vector<64x128xf32>
    %cst_34 = arith.constant dense<0.000000e+00> : vector<64xf32>
    %46 = vector.multi_reduction <add>, %45, %cst_34 [1] : vector<64x128xf32> to vector<64xf32>
    %47 = vector.shape_cast %46 : vector<64xf32> to vector<64x1xf32>
    %cst_35 = arith.constant 1.000000e-16 : f32
    %48 = vector.broadcast %cst_35 : f32 to vector<64x1xf32>
    %49 = arith.maximumf %47, %48 : vector<64x1xf32>
    %50 = math.rsqrt %49 : vector<64x1xf32>
    %51 = vector.broadcast %50 : vector<64x1xf32> to vector<64x128xf32>
    %52 = arith.mulf %26, %51 : vector<64x128xf32>
    %53 = arith.mulf %41, %41 : vector<64x128xf32>
    %cst_36 = arith.constant dense<0.000000e+00> : vector<64xf32>
    %54 = vector.multi_reduction <add>, %53, %cst_36 [1] : vector<64x128xf32> to vector<64xf32>
    %55 = vector.shape_cast %54 : vector<64xf32> to vector<64x1xf32>
    %cst_37 = arith.constant 1.000000e-16 : f32
    %56 = vector.broadcast %cst_37 : f32 to vector<64x1xf32>
    %57 = arith.maximumf %55, %56 : vector<64x1xf32>
    %58 = math.rsqrt %57 : vector<64x1xf32>
    %59 = vector.broadcast %58 : vector<64x1xf32> to vector<64x128xf32>
    %60 = arith.mulf %41, %59 : vector<64x128xf32>
    %61 = arith.mulf %42, %42 : vector<64x128xf32>
    %cst_38 = arith.constant dense<0.000000e+00> : vector<64xf32>
    %62 = vector.multi_reduction <add>, %61, %cst_38 [1] : vector<64x128xf32> to vector<64xf32>
    %63 = vector.shape_cast %62 : vector<64xf32> to vector<64x1xf32>
    %cst_39 = arith.constant 1.000000e-16 : f32
    %64 = vector.broadcast %cst_39 : f32 to vector<64x1xf32>
    %65 = arith.maximumf %63, %64 : vector<64x1xf32>
    %66 = math.rsqrt %65 : vector<64x1xf32>
    %67 = vector.broadcast %66 : vector<64x1xf32> to vector<64x128xf32>
    %68 = arith.mulf %42, %67 : vector<64x128xf32>
    %69 = arith.mulf %43, %43 : vector<64x128xf32>
    %cst_40 = arith.constant dense<0.000000e+00> : vector<64xf32>
    %70 = vector.multi_reduction <add>, %69, %cst_40 [1] : vector<64x128xf32> to vector<64xf32>
    %71 = vector.shape_cast %70 : vector<64xf32> to vector<64x1xf32>
    %cst_41 = arith.constant 1.000000e-16 : f32
    %72 = vector.broadcast %cst_41 : f32 to vector<64x1xf32>
    %73 = arith.maximumf %71, %72 : vector<64x1xf32>
    %74 = math.rsqrt %73 : vector<64x1xf32>
    %75 = vector.broadcast %74 : vector<64x1xf32> to vector<64x128xf32>
    %76 = arith.mulf %43, %75 : vector<64x128xf32>
    %77 = arith.mulf %44, %44 : vector<64x128xf32>
    %cst_42 = arith.constant dense<0.000000e+00> : vector<64xf32>
    %78 = vector.multi_reduction <add>, %77, %cst_42 [1] : vector<64x128xf32> to vector<64xf32>
    %79 = vector.shape_cast %78 : vector<64xf32> to vector<64x1xf32>
    %cst_43 = arith.constant 1.000000e-16 : f32
    %80 = vector.broadcast %cst_43 : f32 to vector<64x1xf32>
    %81 = arith.maximumf %79, %80 : vector<64x1xf32>
    %82 = math.rsqrt %81 : vector<64x1xf32>
    %83 = vector.broadcast %82 : vector<64x1xf32> to vector<64x128xf32>
    %84 = arith.mulf %44, %83 : vector<64x128xf32>
    %85 = arith.addf %60, %68 : vector<64x128xf32>
    %86 = arith.addf %41, %42 : vector<64x128xf32>
    %87 = arith.addf %85, %76 : vector<64x128xf32>
    %88 = arith.addf %86, %43 : vector<64x128xf32>
    %89 = arith.addf %87, %84 : vector<64x128xf32>
    %90 = arith.addf %88, %44 : vector<64x128xf32>
    %91 = arith.mulf %52, %60 : vector<64x128xf32>
    %cst_44 = arith.constant dense<0.000000e+00> : vector<64xf32>
    %92 = vector.multi_reduction <add>, %91, %cst_44 [1] : vector<64x128xf32> to vector<64xf32>
    %93 = vector.shape_cast %92 : vector<64xf32> to vector<64x1xf32>
    %94 = arith.mulf %60, %89 : vector<64x128xf32>
    %cst_45 = arith.constant dense<0.000000e+00> : vector<64xf32>
    %95 = vector.multi_reduction <add>, %94, %cst_45 [1] : vector<64x128xf32> to vector<64xf32>
    %96 = vector.shape_cast %95 : vector<64xf32> to vector<64x1xf32>
    %cst_46 = arith.constant 2.500000e-01 : f32
    %97 = vector.broadcast %cst_46 : f32 to vector<64x1xf32>
    %98 = arith.mulf %96, %97 : vector<64x1xf32>
    %99 = arith.addf %93, %98 : vector<64x1xf32>
    %100 = arith.mulf %52, %68 : vector<64x128xf32>
    %cst_47 = arith.constant dense<0.000000e+00> : vector<64xf32>
    %101 = vector.multi_reduction <add>, %100, %cst_47 [1] : vector<64x128xf32> to vector<64xf32>
    %102 = vector.shape_cast %101 : vector<64xf32> to vector<64x1xf32>
    %103 = arith.mulf %68, %89 : vector<64x128xf32>
    %cst_48 = arith.constant dense<0.000000e+00> : vector<64xf32>
    %104 = vector.multi_reduction <add>, %103, %cst_48 [1] : vector<64x128xf32> to vector<64xf32>
    %105 = vector.shape_cast %104 : vector<64xf32> to vector<64x1xf32>
    %cst_49 = arith.constant 2.500000e-01 : f32
    %106 = vector.broadcast %cst_49 : f32 to vector<64x1xf32>
    %107 = arith.mulf %105, %106 : vector<64x1xf32>
    %108 = arith.addf %102, %107 : vector<64x1xf32>
    %109 = arith.mulf %52, %76 : vector<64x128xf32>
    %cst_50 = arith.constant dense<0.000000e+00> : vector<64xf32>
    %110 = vector.multi_reduction <add>, %109, %cst_50 [1] : vector<64x128xf32> to vector<64xf32>
    %111 = vector.shape_cast %110 : vector<64xf32> to vector<64x1xf32>
    %112 = arith.mulf %76, %89 : vector<64x128xf32>
    %cst_51 = arith.constant dense<0.000000e+00> : vector<64xf32>
    %113 = vector.multi_reduction <add>, %112, %cst_51 [1] : vector<64x128xf32> to vector<64xf32>
    %114 = vector.shape_cast %113 : vector<64xf32> to vector<64x1xf32>
    %cst_52 = arith.constant 2.500000e-01 : f32
    %115 = vector.broadcast %cst_52 : f32 to vector<64x1xf32>
    %116 = arith.mulf %114, %115 : vector<64x1xf32>
    %117 = arith.addf %111, %116 : vector<64x1xf32>
    %118 = arith.mulf %52, %84 : vector<64x128xf32>
    %cst_53 = arith.constant dense<0.000000e+00> : vector<64xf32>
    %119 = vector.multi_reduction <add>, %118, %cst_53 [1] : vector<64x128xf32> to vector<64xf32>
    %120 = vector.shape_cast %119 : vector<64xf32> to vector<64x1xf32>
    %121 = arith.mulf %84, %89 : vector<64x128xf32>
    %cst_54 = arith.constant dense<0.000000e+00> : vector<64xf32>
    %122 = vector.multi_reduction <add>, %121, %cst_54 [1] : vector<64x128xf32> to vector<64xf32>
    %123 = vector.shape_cast %122 : vector<64xf32> to vector<64x1xf32>
    %cst_55 = arith.constant 2.500000e-01 : f32
    %124 = vector.broadcast %cst_55 : f32 to vector<64x1xf32>
    %125 = arith.mulf %123, %124 : vector<64x1xf32>
    %126 = arith.addf %120, %125 : vector<64x1xf32>
    %127 = arith.maximumf %99, %108 : vector<64x1xf32>
    %128 = arith.maximumf %127, %117 : vector<64x1xf32>
    %129 = arith.maximumf %128, %126 : vector<64x1xf32>
    %130 = arith.subf %99, %129 : vector<64x1xf32>
    %131 = math.exp %130 : vector<64x1xf32>
    %132 = arith.subf %108, %129 : vector<64x1xf32>
    %133 = math.exp %132 : vector<64x1xf32>
    %134 = arith.subf %117, %129 : vector<64x1xf32>
    %135 = math.exp %134 : vector<64x1xf32>
    %136 = arith.subf %126, %129 : vector<64x1xf32>
    %137 = math.exp %136 : vector<64x1xf32>
    %138 = arith.addf %131, %133 : vector<64x1xf32>
    %139 = arith.addf %138, %135 : vector<64x1xf32>
    %140 = arith.addf %139, %137 : vector<64x1xf32>
    %cst_56 = arith.constant 1.000000e+00 : f32
    %141 = vector.broadcast %cst_56 : f32 to vector<64x1xf32>
    %142 = arith.divf %141, %140 : vector<64x1xf32>
    %143 = arith.mulf %131, %142 : vector<64x1xf32>
    %144 = vector.broadcast %143 : vector<64x1xf32> to vector<64x128xf32>
    %145 = arith.mulf %144, %41 : vector<64x128xf32>
    %146 = arith.mulf %133, %142 : vector<64x1xf32>
    %147 = vector.broadcast %146 : vector<64x1xf32> to vector<64x128xf32>
    %148 = arith.mulf %147, %42 : vector<64x128xf32>
    %149 = arith.addf %145, %148 : vector<64x128xf32>
    %150 = arith.mulf %135, %142 : vector<64x1xf32>
    %151 = vector.broadcast %150 : vector<64x1xf32> to vector<64x128xf32>
    %152 = arith.mulf %151, %43 : vector<64x128xf32>
    %153 = arith.addf %149, %152 : vector<64x128xf32>
    %154 = arith.mulf %137, %142 : vector<64x1xf32>
    %155 = vector.broadcast %154 : vector<64x1xf32> to vector<64x128xf32>
    %156 = arith.mulf %155, %44 : vector<64x128xf32>
    %157 = arith.addf %153, %156 : vector<64x128xf32>
    %158 = arith.addf %26, %90 : vector<64x128xf32>
    %159 = arith.subf %158, %157 : vector<64x128xf32>
    %cst_57 = arith.constant 2.500000e-01 : f32
    %160 = vector.broadcast %cst_57 : f32 to vector<64x128xf32>
    %161 = arith.mulf %159, %160 : vector<64x128xf32>
    %c0_58 = arith.constant 0 : index
    %c0_59 = arith.constant 0 : index
    %162 = vector.load %arg13[%c0_58, %c0_59] : memref<128x128xf32, #tpu.memory_space<vmem>>, vector<128x128xf32>
    %cst_60 = arith.constant dense<0.000000e+00> : vector<64x128xf32>
    %163 = tpu.matmul %161, %162, %cst_60 {dimension_numbers = #tpu.dot_dimension_numbers<[1], [0], [0], [1], [0, 0, 1, 1], [], []>} : vector<64x128xf32>, vector<128x128xf32>, vector<64x128xf32> -> vector<64x128xf32>
    %c0_61 = arith.constant 0 : index
    %c0_62 = arith.constant 0 : index
    %164 = vector.load %arg14[%c0_61, %c0_62] : memref<1x128xf32, #tpu.memory_space<vmem>>, vector<1x128xf32>
    %165 = vector.broadcast %164 : vector<1x128xf32> to vector<64x128xf32>
    %166 = arith.addf %163, %165 : vector<64x128xf32>
    %cst_63 = arith.constant 0.000000e+00 : f32
    %167 = vector.broadcast %cst_63 : f32 to vector<64x128xf32>
    %168 = arith.maximumf %166, %167 : vector<64x128xf32>
    %c0_64 = arith.constant 0 : index
    %c0_65 = arith.constant 0 : index
    %169 = vector.load %arg15[%c0_64, %c0_65] : memref<384x128xf32, #tpu.memory_space<vmem>>, vector<128x128xf32>
    %cst_66 = arith.constant dense<0.000000e+00> : vector<64x128xf32>
    %170 = tpu.matmul %8, %169, %cst_66 {dimension_numbers = #tpu.dot_dimension_numbers<[1], [0], [0], [1], [0, 0, 1, 1], [], []>} : vector<64x128xf32>, vector<128x128xf32>, vector<64x128xf32> -> vector<64x128xf32>
    %c128 = arith.constant 128 : index
    %c0_67 = arith.constant 0 : index
    %171 = vector.load %arg15[%c128, %c0_67] : memref<384x128xf32, #tpu.memory_space<vmem>>, vector<128x128xf32>
    %cst_68 = arith.constant dense<0.000000e+00> : vector<64x128xf32>
    %172 = tpu.matmul %17, %171, %cst_68 {dimension_numbers = #tpu.dot_dimension_numbers<[1], [0], [0], [1], [0, 0, 1, 1], [], []>} : vector<64x128xf32>, vector<128x128xf32>, vector<64x128xf32> -> vector<64x128xf32>
    %173 = arith.addf %170, %172 : vector<64x128xf32>
    %c256 = arith.constant 256 : index
    %c0_69 = arith.constant 0 : index
    %174 = vector.load %arg15[%c256, %c0_69] : memref<384x128xf32, #tpu.memory_space<vmem>>, vector<128x128xf32>
    %cst_70 = arith.constant dense<0.000000e+00> : vector<64x128xf32>
    %175 = tpu.matmul %168, %174, %cst_70 {dimension_numbers = #tpu.dot_dimension_numbers<[1], [0], [0], [1], [0, 0, 1, 1], [], []>} : vector<64x128xf32>, vector<128x128xf32>, vector<64x128xf32> -> vector<64x128xf32>
    %176 = arith.addf %173, %175 : vector<64x128xf32>
    %c0_71 = arith.constant 0 : index
    %c0_72 = arith.constant 0 : index
    %177 = vector.load %arg17[%c0_71, %c0_72] : memref<1x128xf32, #tpu.memory_space<vmem>>, vector<1x128xf32>
    %178 = vector.broadcast %177 : vector<1x128xf32> to vector<64x128xf32>
    %179 = arith.addf %176, %178 : vector<64x128xf32>
    %180 = vector.shape_cast %179 : vector<64x128xf32> to vector<8x8x128xf32>
    %c0_73 = arith.constant 0 : index
    %c0_74 = arith.constant 0 : index
    %181 = vector.load %arg16[%c0_73, %c0_74] : memref<32x128xf32, #tpu.memory_space<vmem>>, vector<32x128xf32>
    %c0_75 = arith.constant 0 : index
    %c0_76 = arith.constant 0 : index
    %182 = vector.load %arg18[%c0_75, %c0_76] : memref<1x128xf32, #tpu.memory_space<vmem>>, vector<1x128xf32>
    %c0_77 = arith.constant 0 : index
    %c0_78 = arith.constant 0 : index
    %183 = vector.load %arg19[%c0_77, %c0_78] : memref<32x128xf32, #tpu.memory_space<vmem>>, vector<32x128xf32>
    %c0_79 = arith.constant 0 : index
    %c0_80 = arith.constant 0 : index
    %184 = vector.load %arg21[%c0_79, %c0_80] : memref<1x128xf32, #tpu.memory_space<vmem>>, vector<1x128xf32>
    %c0_81 = arith.constant 0 : index
    %c0_82 = arith.constant 0 : index
    %185 = vector.load %arg20[%c0_81, %c0_82] : memref<32x128xf32, #tpu.memory_space<vmem>>, vector<32x128xf32>
    %c0_83 = arith.constant 0 : index
    %c0_84 = arith.constant 0 : index
    %186 = vector.load %arg22[%c0_83, %c0_84] : memref<1x128xf32, #tpu.memory_space<vmem>>, vector<1x128xf32>
    %cst_85 = arith.constant 0.000000e+00 : f32
    %187 = vector.broadcast %cst_85 : f32 to vector<8x32xf32>
    %cst_86 = arith.constant 0.000000e+00 : f32
    %188 = vector.broadcast %cst_86 : f32 to vector<8x32xf32>
    %189 = vector.extract_strided_slice %180 {offsets = [0, 0, 0], sizes = [8, 1, 128], strides = [1, 1, 1]} : vector<8x8x128xf32> to vector<8x1x128xf32>
    %190 = vector.shape_cast %189 : vector<8x1x128xf32> to vector<8x128xf32>
    %cst_87 = arith.constant dense<0.000000e+00> : vector<8x128xf32>
    %191 = tpu.matmul %187, %181, %cst_87 {dimension_numbers = #tpu.dot_dimension_numbers<[1], [0], [0], [1], [0, 0, 1, 1], [], []>} : vector<8x32xf32>, vector<32x128xf32>, vector<8x128xf32> -> vector<8x128xf32>
    %192 = vector.broadcast %182 : vector<1x128xf32> to vector<8x128xf32>
    %193 = arith.addf %191, %192 : vector<8x128xf32>
    %194 = vector.extract_strided_slice %190 {offsets = [0, 0], sizes = [8, 32], strides = [1, 1]} : vector<8x128xf32> to vector<8x32xf32>
    %195 = vector.extract_strided_slice %193 {offsets = [0, 0], sizes = [8, 32], strides = [1, 1]} : vector<8x128xf32> to vector<8x32xf32>
    %196 = arith.addf %194, %195 : vector<8x32xf32>
    %197 = arith.negf %196 : vector<8x32xf32>
    %198 = math.exp %197 : vector<8x32xf32>
    %cst_88 = arith.constant 1.000000e+00 : f32
    %199 = vector.broadcast %cst_88 : f32 to vector<8x32xf32>
    %200 = arith.addf %199, %198 : vector<8x32xf32>
    %201 = arith.divf %199, %200 : vector<8x32xf32>
    %202 = vector.extract_strided_slice %190 {offsets = [0, 32], sizes = [8, 32], strides = [1, 1]} : vector<8x128xf32> to vector<8x32xf32>
    %203 = vector.extract_strided_slice %193 {offsets = [0, 32], sizes = [8, 32], strides = [1, 1]} : vector<8x128xf32> to vector<8x32xf32>
    %204 = arith.addf %202, %203 : vector<8x32xf32>
    %205 = arith.negf %204 : vector<8x32xf32>
    %206 = math.exp %205 : vector<8x32xf32>
    %cst_89 = arith.constant 1.000000e+00 : f32
    %207 = vector.broadcast %cst_89 : f32 to vector<8x32xf32>
    %208 = arith.addf %207, %206 : vector<8x32xf32>
    %209 = arith.divf %207, %208 : vector<8x32xf32>
    %210 = vector.extract_strided_slice %190 {offsets = [0, 64], sizes = [8, 32], strides = [1, 1]} : vector<8x128xf32> to vector<8x32xf32>
    %211 = vector.extract_strided_slice %193 {offsets = [0, 64], sizes = [8, 32], strides = [1, 1]} : vector<8x128xf32> to vector<8x32xf32>
    %212 = arith.mulf %201, %211 : vector<8x32xf32>
    %213 = arith.addf %210, %212 : vector<8x32xf32>
    %214 = math.tanh %213 : vector<8x32xf32>
    %cst_90 = arith.constant 1.000000e+00 : f32
    %215 = vector.broadcast %cst_90 : f32 to vector<8x32xf32>
    %216 = arith.subf %215, %209 : vector<8x32xf32>
    %217 = arith.mulf %216, %214 : vector<8x32xf32>
    %218 = arith.mulf %209, %187 : vector<8x32xf32>
    %219 = arith.addf %217, %218 : vector<8x32xf32>
    %cst_91 = arith.constant dense<0.000000e+00> : vector<8x128xf32>
    %220 = tpu.matmul %219, %183, %cst_91 {dimension_numbers = #tpu.dot_dimension_numbers<[1], [0], [0], [1], [0, 0, 1, 1], [], []>} : vector<8x32xf32>, vector<32x128xf32>, vector<8x128xf32> -> vector<8x128xf32>
    %221 = vector.broadcast %184 : vector<1x128xf32> to vector<8x128xf32>
    %222 = arith.addf %220, %221 : vector<8x128xf32>
    %cst_92 = arith.constant dense<0.000000e+00> : vector<8x128xf32>
    %223 = tpu.matmul %188, %185, %cst_92 {dimension_numbers = #tpu.dot_dimension_numbers<[1], [0], [0], [1], [0, 0, 1, 1], [], []>} : vector<8x32xf32>, vector<32x128xf32>, vector<8x128xf32> -> vector<8x128xf32>
    %224 = vector.broadcast %186 : vector<1x128xf32> to vector<8x128xf32>
    %225 = arith.addf %223, %224 : vector<8x128xf32>
    %226 = vector.extract_strided_slice %222 {offsets = [0, 0], sizes = [8, 32], strides = [1, 1]} : vector<8x128xf32> to vector<8x32xf32>
    %227 = vector.extract_strided_slice %225 {offsets = [0, 0], sizes = [8, 32], strides = [1, 1]} : vector<8x128xf32> to vector<8x32xf32>
    %228 = arith.addf %226, %227 : vector<8x32xf32>
    %229 = arith.negf %228 : vector<8x32xf32>
    %230 = math.exp %229 : vector<8x32xf32>
    %cst_93 = arith.constant 1.000000e+00 : f32
    %231 = vector.broadcast %cst_93 : f32 to vector<8x32xf32>
    %232 = arith.addf %231, %230 : vector<8x32xf32>
    %233 = arith.divf %231, %232 : vector<8x32xf32>
    %234 = vector.extract_strided_slice %222 {offsets = [0, 32], sizes = [8, 32], strides = [1, 1]} : vector<8x128xf32> to vector<8x32xf32>
    %235 = vector.extract_strided_slice %225 {offsets = [0, 32], sizes = [8, 32], strides = [1, 1]} : vector<8x128xf32> to vector<8x32xf32>
    %236 = arith.addf %234, %235 : vector<8x32xf32>
    %237 = arith.negf %236 : vector<8x32xf32>
    %238 = math.exp %237 : vector<8x32xf32>
    %cst_94 = arith.constant 1.000000e+00 : f32
    %239 = vector.broadcast %cst_94 : f32 to vector<8x32xf32>
    %240 = arith.addf %239, %238 : vector<8x32xf32>
    %241 = arith.divf %239, %240 : vector<8x32xf32>
    %242 = vector.extract_strided_slice %222 {offsets = [0, 64], sizes = [8, 32], strides = [1, 1]} : vector<8x128xf32> to vector<8x32xf32>
    %243 = vector.extract_strided_slice %225 {offsets = [0, 64], sizes = [8, 32], strides = [1, 1]} : vector<8x128xf32> to vector<8x32xf32>
    %244 = arith.mulf %233, %243 : vector<8x32xf32>
    %245 = arith.addf %242, %244 : vector<8x32xf32>
    %246 = math.tanh %245 : vector<8x32xf32>
    %cst_95 = arith.constant 1.000000e+00 : f32
    %247 = vector.broadcast %cst_95 : f32 to vector<8x32xf32>
    %248 = arith.subf %247, %241 : vector<8x32xf32>
    %249 = arith.mulf %248, %246 : vector<8x32xf32>
    %250 = arith.mulf %241, %188 : vector<8x32xf32>
    %251 = arith.addf %249, %250 : vector<8x32xf32>
    %252 = vector.extract_strided_slice %180 {offsets = [0, 1, 0], sizes = [8, 1, 128], strides = [1, 1, 1]} : vector<8x8x128xf32> to vector<8x1x128xf32>
    %253 = vector.shape_cast %252 : vector<8x1x128xf32> to vector<8x128xf32>
    %cst_96 = arith.constant dense<0.000000e+00> : vector<8x128xf32>
    %254 = tpu.matmul %219, %181, %cst_96 {dimension_numbers = #tpu.dot_dimension_numbers<[1], [0], [0], [1], [0, 0, 1, 1], [], []>} : vector<8x32xf32>, vector<32x128xf32>, vector<8x128xf32> -> vector<8x128xf32>
    %255 = vector.broadcast %182 : vector<1x128xf32> to vector<8x128xf32>
    %256 = arith.addf %254, %255 : vector<8x128xf32>
    %257 = vector.extract_strided_slice %253 {offsets = [0, 0], sizes = [8, 32], strides = [1, 1]} : vector<8x128xf32> to vector<8x32xf32>
    %258 = vector.extract_strided_slice %256 {offsets = [0, 0], sizes = [8, 32], strides = [1, 1]} : vector<8x128xf32> to vector<8x32xf32>
    %259 = arith.addf %257, %258 : vector<8x32xf32>
    %260 = arith.negf %259 : vector<8x32xf32>
    %261 = math.exp %260 : vector<8x32xf32>
    %cst_97 = arith.constant 1.000000e+00 : f32
    %262 = vector.broadcast %cst_97 : f32 to vector<8x32xf32>
    %263 = arith.addf %262, %261 : vector<8x32xf32>
    %264 = arith.divf %262, %263 : vector<8x32xf32>
    %265 = vector.extract_strided_slice %253 {offsets = [0, 32], sizes = [8, 32], strides = [1, 1]} : vector<8x128xf32> to vector<8x32xf32>
    %266 = vector.extract_strided_slice %256 {offsets = [0, 32], sizes = [8, 32], strides = [1, 1]} : vector<8x128xf32> to vector<8x32xf32>
    %267 = arith.addf %265, %266 : vector<8x32xf32>
    %268 = arith.negf %267 : vector<8x32xf32>
    %269 = math.exp %268 : vector<8x32xf32>
    %cst_98 = arith.constant 1.000000e+00 : f32
    %270 = vector.broadcast %cst_98 : f32 to vector<8x32xf32>
    %271 = arith.addf %270, %269 : vector<8x32xf32>
    %272 = arith.divf %270, %271 : vector<8x32xf32>
    %273 = vector.extract_strided_slice %253 {offsets = [0, 64], sizes = [8, 32], strides = [1, 1]} : vector<8x128xf32> to vector<8x32xf32>
    %274 = vector.extract_strided_slice %256 {offsets = [0, 64], sizes = [8, 32], strides = [1, 1]} : vector<8x128xf32> to vector<8x32xf32>
    %275 = arith.mulf %264, %274 : vector<8x32xf32>
    %276 = arith.addf %273, %275 : vector<8x32xf32>
    %277 = math.tanh %276 : vector<8x32xf32>
    %cst_99 = arith.constant 1.000000e+00 : f32
    %278 = vector.broadcast %cst_99 : f32 to vector<8x32xf32>
    %279 = arith.subf %278, %272 : vector<8x32xf32>
    %280 = arith.mulf %279, %277 : vector<8x32xf32>
    %281 = arith.mulf %272, %219 : vector<8x32xf32>
    %282 = arith.addf %280, %281 : vector<8x32xf32>
    %cst_100 = arith.constant dense<0.000000e+00> : vector<8x128xf32>
    %283 = tpu.matmul %282, %183, %cst_100 {dimension_numbers = #tpu.dot_dimension_numbers<[1], [0], [0], [1], [0, 0, 1, 1], [], []>} : vector<8x32xf32>, vector<32x128xf32>, vector<8x128xf32> -> vector<8x128xf32>
    %284 = vector.broadcast %184 : vector<1x128xf32> to vector<8x128xf32>
    %285 = arith.addf %283, %284 : vector<8x128xf32>
    %cst_101 = arith.constant dense<0.000000e+00> : vector<8x128xf32>
    %286 = tpu.matmul %251, %185, %cst_101 {dimension_numbers = #tpu.dot_dimension_numbers<[1], [0], [0], [1], [0, 0, 1, 1], [], []>} : vector<8x32xf32>, vector<32x128xf32>, vector<8x128xf32> -> vector<8x128xf32>
    %287 = vector.broadcast %186 : vector<1x128xf32> to vector<8x128xf32>
    %288 = arith.addf %286, %287 : vector<8x128xf32>
    %289 = vector.extract_strided_slice %285 {offsets = [0, 0], sizes = [8, 32], strides = [1, 1]} : vector<8x128xf32> to vector<8x32xf32>
    %290 = vector.extract_strided_slice %288 {offsets = [0, 0], sizes = [8, 32], strides = [1, 1]} : vector<8x128xf32> to vector<8x32xf32>
    %291 = arith.addf %289, %290 : vector<8x32xf32>
    %292 = arith.negf %291 : vector<8x32xf32>
    %293 = math.exp %292 : vector<8x32xf32>
    %cst_102 = arith.constant 1.000000e+00 : f32
    %294 = vector.broadcast %cst_102 : f32 to vector<8x32xf32>
    %295 = arith.addf %294, %293 : vector<8x32xf32>
    %296 = arith.divf %294, %295 : vector<8x32xf32>
    %297 = vector.extract_strided_slice %285 {offsets = [0, 32], sizes = [8, 32], strides = [1, 1]} : vector<8x128xf32> to vector<8x32xf32>
    %298 = vector.extract_strided_slice %288 {offsets = [0, 32], sizes = [8, 32], strides = [1, 1]} : vector<8x128xf32> to vector<8x32xf32>
    %299 = arith.addf %297, %298 : vector<8x32xf32>
    %300 = arith.negf %299 : vector<8x32xf32>
    %301 = math.exp %300 : vector<8x32xf32>
    %cst_103 = arith.constant 1.000000e+00 : f32
    %302 = vector.broadcast %cst_103 : f32 to vector<8x32xf32>
    %303 = arith.addf %302, %301 : vector<8x32xf32>
    %304 = arith.divf %302, %303 : vector<8x32xf32>
    %305 = vector.extract_strided_slice %285 {offsets = [0, 64], sizes = [8, 32], strides = [1, 1]} : vector<8x128xf32> to vector<8x32xf32>
    %306 = vector.extract_strided_slice %288 {offsets = [0, 64], sizes = [8, 32], strides = [1, 1]} : vector<8x128xf32> to vector<8x32xf32>
    %307 = arith.mulf %296, %306 : vector<8x32xf32>
    %308 = arith.addf %305, %307 : vector<8x32xf32>
    %309 = math.tanh %308 : vector<8x32xf32>
    %cst_104 = arith.constant 1.000000e+00 : f32
    %310 = vector.broadcast %cst_104 : f32 to vector<8x32xf32>
    %311 = arith.subf %310, %304 : vector<8x32xf32>
    %312 = arith.mulf %311, %309 : vector<8x32xf32>
    %313 = arith.mulf %304, %251 : vector<8x32xf32>
    %314 = arith.addf %312, %313 : vector<8x32xf32>
    %315 = vector.extract_strided_slice %180 {offsets = [0, 2, 0], sizes = [8, 1, 128], strides = [1, 1, 1]} : vector<8x8x128xf32> to vector<8x1x128xf32>
    %316 = vector.shape_cast %315 : vector<8x1x128xf32> to vector<8x128xf32>
    %cst_105 = arith.constant dense<0.000000e+00> : vector<8x128xf32>
    %317 = tpu.matmul %282, %181, %cst_105 {dimension_numbers = #tpu.dot_dimension_numbers<[1], [0], [0], [1], [0, 0, 1, 1], [], []>} : vector<8x32xf32>, vector<32x128xf32>, vector<8x128xf32> -> vector<8x128xf32>
    %318 = vector.broadcast %182 : vector<1x128xf32> to vector<8x128xf32>
    %319 = arith.addf %317, %318 : vector<8x128xf32>
    %320 = vector.extract_strided_slice %316 {offsets = [0, 0], sizes = [8, 32], strides = [1, 1]} : vector<8x128xf32> to vector<8x32xf32>
    %321 = vector.extract_strided_slice %319 {offsets = [0, 0], sizes = [8, 32], strides = [1, 1]} : vector<8x128xf32> to vector<8x32xf32>
    %322 = arith.addf %320, %321 : vector<8x32xf32>
    %323 = arith.negf %322 : vector<8x32xf32>
    %324 = math.exp %323 : vector<8x32xf32>
    %cst_106 = arith.constant 1.000000e+00 : f32
    %325 = vector.broadcast %cst_106 : f32 to vector<8x32xf32>
    %326 = arith.addf %325, %324 : vector<8x32xf32>
    %327 = arith.divf %325, %326 : vector<8x32xf32>
    %328 = vector.extract_strided_slice %316 {offsets = [0, 32], sizes = [8, 32], strides = [1, 1]} : vector<8x128xf32> to vector<8x32xf32>
    %329 = vector.extract_strided_slice %319 {offsets = [0, 32], sizes = [8, 32], strides = [1, 1]} : vector<8x128xf32> to vector<8x32xf32>
    %330 = arith.addf %328, %329 : vector<8x32xf32>
    %331 = arith.negf %330 : vector<8x32xf32>
    %332 = math.exp %331 : vector<8x32xf32>
    %cst_107 = arith.constant 1.000000e+00 : f32
    %333 = vector.broadcast %cst_107 : f32 to vector<8x32xf32>
    %334 = arith.addf %333, %332 : vector<8x32xf32>
    %335 = arith.divf %333, %334 : vector<8x32xf32>
    %336 = vector.extract_strided_slice %316 {offsets = [0, 64], sizes = [8, 32], strides = [1, 1]} : vector<8x128xf32> to vector<8x32xf32>
    %337 = vector.extract_strided_slice %319 {offsets = [0, 64], sizes = [8, 32], strides = [1, 1]} : vector<8x128xf32> to vector<8x32xf32>
    %338 = arith.mulf %327, %337 : vector<8x32xf32>
    %339 = arith.addf %336, %338 : vector<8x32xf32>
    %340 = math.tanh %339 : vector<8x32xf32>
    %cst_108 = arith.constant 1.000000e+00 : f32
    %341 = vector.broadcast %cst_108 : f32 to vector<8x32xf32>
    %342 = arith.subf %341, %335 : vector<8x32xf32>
    %343 = arith.mulf %342, %340 : vector<8x32xf32>
    %344 = arith.mulf %335, %282 : vector<8x32xf32>
    %345 = arith.addf %343, %344 : vector<8x32xf32>
    %cst_109 = arith.constant dense<0.000000e+00> : vector<8x128xf32>
    %346 = tpu.matmul %345, %183, %cst_109 {dimension_numbers = #tpu.dot_dimension_numbers<[1], [0], [0], [1], [0, 0, 1, 1], [], []>} : vector<8x32xf32>, vector<32x128xf32>, vector<8x128xf32> -> vector<8x128xf32>
    %347 = vector.broadcast %184 : vector<1x128xf32> to vector<8x128xf32>
    %348 = arith.addf %346, %347 : vector<8x128xf32>
    %cst_110 = arith.constant dense<0.000000e+00> : vector<8x128xf32>
    %349 = tpu.matmul %314, %185, %cst_110 {dimension_numbers = #tpu.dot_dimension_numbers<[1], [0], [0], [1], [0, 0, 1, 1], [], []>} : vector<8x32xf32>, vector<32x128xf32>, vector<8x128xf32> -> vector<8x128xf32>
    %350 = vector.broadcast %186 : vector<1x128xf32> to vector<8x128xf32>
    %351 = arith.addf %349, %350 : vector<8x128xf32>
    %352 = vector.extract_strided_slice %348 {offsets = [0, 0], sizes = [8, 32], strides = [1, 1]} : vector<8x128xf32> to vector<8x32xf32>
    %353 = vector.extract_strided_slice %351 {offsets = [0, 0], sizes = [8, 32], strides = [1, 1]} : vector<8x128xf32> to vector<8x32xf32>
    %354 = arith.addf %352, %353 : vector<8x32xf32>
    %355 = arith.negf %354 : vector<8x32xf32>
    %356 = math.exp %355 : vector<8x32xf32>
    %cst_111 = arith.constant 1.000000e+00 : f32
    %357 = vector.broadcast %cst_111 : f32 to vector<8x32xf32>
    %358 = arith.addf %357, %356 : vector<8x32xf32>
    %359 = arith.divf %357, %358 : vector<8x32xf32>
    %360 = vector.extract_strided_slice %348 {offsets = [0, 32], sizes = [8, 32], strides = [1, 1]} : vector<8x128xf32> to vector<8x32xf32>
    %361 = vector.extract_strided_slice %351 {offsets = [0, 32], sizes = [8, 32], strides = [1, 1]} : vector<8x128xf32> to vector<8x32xf32>
    %362 = arith.addf %360, %361 : vector<8x32xf32>
    %363 = arith.negf %362 : vector<8x32xf32>
    %364 = math.exp %363 : vector<8x32xf32>
    %cst_112 = arith.constant 1.000000e+00 : f32
    %365 = vector.broadcast %cst_112 : f32 to vector<8x32xf32>
    %366 = arith.addf %365, %364 : vector<8x32xf32>
    %367 = arith.divf %365, %366 : vector<8x32xf32>
    %368 = vector.extract_strided_slice %348 {offsets = [0, 64], sizes = [8, 32], strides = [1, 1]} : vector<8x128xf32> to vector<8x32xf32>
    %369 = vector.extract_strided_slice %351 {offsets = [0, 64], sizes = [8, 32], strides = [1, 1]} : vector<8x128xf32> to vector<8x32xf32>
    %370 = arith.mulf %359, %369 : vector<8x32xf32>
    %371 = arith.addf %368, %370 : vector<8x32xf32>
    %372 = math.tanh %371 : vector<8x32xf32>
    %cst_113 = arith.constant 1.000000e+00 : f32
    %373 = vector.broadcast %cst_113 : f32 to vector<8x32xf32>
    %374 = arith.subf %373, %367 : vector<8x32xf32>
    %375 = arith.mulf %374, %372 : vector<8x32xf32>
    %376 = arith.mulf %367, %314 : vector<8x32xf32>
    %377 = arith.addf %375, %376 : vector<8x32xf32>
    %378 = vector.extract_strided_slice %180 {offsets = [0, 3, 0], sizes = [8, 1, 128], strides = [1, 1, 1]} : vector<8x8x128xf32> to vector<8x1x128xf32>
    %379 = vector.shape_cast %378 : vector<8x1x128xf32> to vector<8x128xf32>
    %cst_114 = arith.constant dense<0.000000e+00> : vector<8x128xf32>
    %380 = tpu.matmul %345, %181, %cst_114 {dimension_numbers = #tpu.dot_dimension_numbers<[1], [0], [0], [1], [0, 0, 1, 1], [], []>} : vector<8x32xf32>, vector<32x128xf32>, vector<8x128xf32> -> vector<8x128xf32>
    %381 = vector.broadcast %182 : vector<1x128xf32> to vector<8x128xf32>
    %382 = arith.addf %380, %381 : vector<8x128xf32>
    %383 = vector.extract_strided_slice %379 {offsets = [0, 0], sizes = [8, 32], strides = [1, 1]} : vector<8x128xf32> to vector<8x32xf32>
    %384 = vector.extract_strided_slice %382 {offsets = [0, 0], sizes = [8, 32], strides = [1, 1]} : vector<8x128xf32> to vector<8x32xf32>
    %385 = arith.addf %383, %384 : vector<8x32xf32>
    %386 = arith.negf %385 : vector<8x32xf32>
    %387 = math.exp %386 : vector<8x32xf32>
    %cst_115 = arith.constant 1.000000e+00 : f32
    %388 = vector.broadcast %cst_115 : f32 to vector<8x32xf32>
    %389 = arith.addf %388, %387 : vector<8x32xf32>
    %390 = arith.divf %388, %389 : vector<8x32xf32>
    %391 = vector.extract_strided_slice %379 {offsets = [0, 32], sizes = [8, 32], strides = [1, 1]} : vector<8x128xf32> to vector<8x32xf32>
    %392 = vector.extract_strided_slice %382 {offsets = [0, 32], sizes = [8, 32], strides = [1, 1]} : vector<8x128xf32> to vector<8x32xf32>
    %393 = arith.addf %391, %392 : vector<8x32xf32>
    %394 = arith.negf %393 : vector<8x32xf32>
    %395 = math.exp %394 : vector<8x32xf32>
    %cst_116 = arith.constant 1.000000e+00 : f32
    %396 = vector.broadcast %cst_116 : f32 to vector<8x32xf32>
    %397 = arith.addf %396, %395 : vector<8x32xf32>
    %398 = arith.divf %396, %397 : vector<8x32xf32>
    %399 = vector.extract_strided_slice %379 {offsets = [0, 64], sizes = [8, 32], strides = [1, 1]} : vector<8x128xf32> to vector<8x32xf32>
    %400 = vector.extract_strided_slice %382 {offsets = [0, 64], sizes = [8, 32], strides = [1, 1]} : vector<8x128xf32> to vector<8x32xf32>
    %401 = arith.mulf %390, %400 : vector<8x32xf32>
    %402 = arith.addf %399, %401 : vector<8x32xf32>
    %403 = math.tanh %402 : vector<8x32xf32>
    %cst_117 = arith.constant 1.000000e+00 : f32
    %404 = vector.broadcast %cst_117 : f32 to vector<8x32xf32>
    %405 = arith.subf %404, %398 : vector<8x32xf32>
    %406 = arith.mulf %405, %403 : vector<8x32xf32>
    %407 = arith.mulf %398, %345 : vector<8x32xf32>
    %408 = arith.addf %406, %407 : vector<8x32xf32>
    %cst_118 = arith.constant dense<0.000000e+00> : vector<8x128xf32>
    %409 = tpu.matmul %408, %183, %cst_118 {dimension_numbers = #tpu.dot_dimension_numbers<[1], [0], [0], [1], [0, 0, 1, 1], [], []>} : vector<8x32xf32>, vector<32x128xf32>, vector<8x128xf32> -> vector<8x128xf32>
    %410 = vector.broadcast %184 : vector<1x128xf32> to vector<8x128xf32>
    %411 = arith.addf %409, %410 : vector<8x128xf32>
    %cst_119 = arith.constant dense<0.000000e+00> : vector<8x128xf32>
    %412 = tpu.matmul %377, %185, %cst_119 {dimension_numbers = #tpu.dot_dimension_numbers<[1], [0], [0], [1], [0, 0, 1, 1], [], []>} : vector<8x32xf32>, vector<32x128xf32>, vector<8x128xf32> -> vector<8x128xf32>
    %413 = vector.broadcast %186 : vector<1x128xf32> to vector<8x128xf32>
    %414 = arith.addf %412, %413 : vector<8x128xf32>
    %415 = vector.extract_strided_slice %411 {offsets = [0, 0], sizes = [8, 32], strides = [1, 1]} : vector<8x128xf32> to vector<8x32xf32>
    %416 = vector.extract_strided_slice %414 {offsets = [0, 0], sizes = [8, 32], strides = [1, 1]} : vector<8x128xf32> to vector<8x32xf32>
    %417 = arith.addf %415, %416 : vector<8x32xf32>
    %418 = arith.negf %417 : vector<8x32xf32>
    %419 = math.exp %418 : vector<8x32xf32>
    %cst_120 = arith.constant 1.000000e+00 : f32
    %420 = vector.broadcast %cst_120 : f32 to vector<8x32xf32>
    %421 = arith.addf %420, %419 : vector<8x32xf32>
    %422 = arith.divf %420, %421 : vector<8x32xf32>
    %423 = vector.extract_strided_slice %411 {offsets = [0, 32], sizes = [8, 32], strides = [1, 1]} : vector<8x128xf32> to vector<8x32xf32>
    %424 = vector.extract_strided_slice %414 {offsets = [0, 32], sizes = [8, 32], strides = [1, 1]} : vector<8x128xf32> to vector<8x32xf32>
    %425 = arith.addf %423, %424 : vector<8x32xf32>
    %426 = arith.negf %425 : vector<8x32xf32>
    %427 = math.exp %426 : vector<8x32xf32>
    %cst_121 = arith.constant 1.000000e+00 : f32
    %428 = vector.broadcast %cst_121 : f32 to vector<8x32xf32>
    %429 = arith.addf %428, %427 : vector<8x32xf32>
    %430 = arith.divf %428, %429 : vector<8x32xf32>
    %431 = vector.extract_strided_slice %411 {offsets = [0, 64], sizes = [8, 32], strides = [1, 1]} : vector<8x128xf32> to vector<8x32xf32>
    %432 = vector.extract_strided_slice %414 {offsets = [0, 64], sizes = [8, 32], strides = [1, 1]} : vector<8x128xf32> to vector<8x32xf32>
    %433 = arith.mulf %422, %432 : vector<8x32xf32>
    %434 = arith.addf %431, %433 : vector<8x32xf32>
    %435 = math.tanh %434 : vector<8x32xf32>
    %cst_122 = arith.constant 1.000000e+00 : f32
    %436 = vector.broadcast %cst_122 : f32 to vector<8x32xf32>
    %437 = arith.subf %436, %430 : vector<8x32xf32>
    %438 = arith.mulf %437, %435 : vector<8x32xf32>
    %439 = arith.mulf %430, %377 : vector<8x32xf32>
    %440 = arith.addf %438, %439 : vector<8x32xf32>
    %441 = vector.extract_strided_slice %180 {offsets = [0, 4, 0], sizes = [8, 1, 128], strides = [1, 1, 1]} : vector<8x8x128xf32> to vector<8x1x128xf32>
    %442 = vector.shape_cast %441 : vector<8x1x128xf32> to vector<8x128xf32>
    %cst_123 = arith.constant dense<0.000000e+00> : vector<8x128xf32>
    %443 = tpu.matmul %408, %181, %cst_123 {dimension_numbers = #tpu.dot_dimension_numbers<[1], [0], [0], [1], [0, 0, 1, 1], [], []>} : vector<8x32xf32>, vector<32x128xf32>, vector<8x128xf32> -> vector<8x128xf32>
    %444 = vector.broadcast %182 : vector<1x128xf32> to vector<8x128xf32>
    %445 = arith.addf %443, %444 : vector<8x128xf32>
    %446 = vector.extract_strided_slice %442 {offsets = [0, 0], sizes = [8, 32], strides = [1, 1]} : vector<8x128xf32> to vector<8x32xf32>
    %447 = vector.extract_strided_slice %445 {offsets = [0, 0], sizes = [8, 32], strides = [1, 1]} : vector<8x128xf32> to vector<8x32xf32>
    %448 = arith.addf %446, %447 : vector<8x32xf32>
    %449 = arith.negf %448 : vector<8x32xf32>
    %450 = math.exp %449 : vector<8x32xf32>
    %cst_124 = arith.constant 1.000000e+00 : f32
    %451 = vector.broadcast %cst_124 : f32 to vector<8x32xf32>
    %452 = arith.addf %451, %450 : vector<8x32xf32>
    %453 = arith.divf %451, %452 : vector<8x32xf32>
    %454 = vector.extract_strided_slice %442 {offsets = [0, 32], sizes = [8, 32], strides = [1, 1]} : vector<8x128xf32> to vector<8x32xf32>
    %455 = vector.extract_strided_slice %445 {offsets = [0, 32], sizes = [8, 32], strides = [1, 1]} : vector<8x128xf32> to vector<8x32xf32>
    %456 = arith.addf %454, %455 : vector<8x32xf32>
    %457 = arith.negf %456 : vector<8x32xf32>
    %458 = math.exp %457 : vector<8x32xf32>
    %cst_125 = arith.constant 1.000000e+00 : f32
    %459 = vector.broadcast %cst_125 : f32 to vector<8x32xf32>
    %460 = arith.addf %459, %458 : vector<8x32xf32>
    %461 = arith.divf %459, %460 : vector<8x32xf32>
    %462 = vector.extract_strided_slice %442 {offsets = [0, 64], sizes = [8, 32], strides = [1, 1]} : vector<8x128xf32> to vector<8x32xf32>
    %463 = vector.extract_strided_slice %445 {offsets = [0, 64], sizes = [8, 32], strides = [1, 1]} : vector<8x128xf32> to vector<8x32xf32>
    %464 = arith.mulf %453, %463 : vector<8x32xf32>
    %465 = arith.addf %462, %464 : vector<8x32xf32>
    %466 = math.tanh %465 : vector<8x32xf32>
    %cst_126 = arith.constant 1.000000e+00 : f32
    %467 = vector.broadcast %cst_126 : f32 to vector<8x32xf32>
    %468 = arith.subf %467, %461 : vector<8x32xf32>
    %469 = arith.mulf %468, %466 : vector<8x32xf32>
    %470 = arith.mulf %461, %408 : vector<8x32xf32>
    %471 = arith.addf %469, %470 : vector<8x32xf32>
    %cst_127 = arith.constant dense<0.000000e+00> : vector<8x128xf32>
    %472 = tpu.matmul %471, %183, %cst_127 {dimension_numbers = #tpu.dot_dimension_numbers<[1], [0], [0], [1], [0, 0, 1, 1], [], []>} : vector<8x32xf32>, vector<32x128xf32>, vector<8x128xf32> -> vector<8x128xf32>
    %473 = vector.broadcast %184 : vector<1x128xf32> to vector<8x128xf32>
    %474 = arith.addf %472, %473 : vector<8x128xf32>
    %cst_128 = arith.constant dense<0.000000e+00> : vector<8x128xf32>
    %475 = tpu.matmul %440, %185, %cst_128 {dimension_numbers = #tpu.dot_dimension_numbers<[1], [0], [0], [1], [0, 0, 1, 1], [], []>} : vector<8x32xf32>, vector<32x128xf32>, vector<8x128xf32> -> vector<8x128xf32>
    %476 = vector.broadcast %186 : vector<1x128xf32> to vector<8x128xf32>
    %477 = arith.addf %475, %476 : vector<8x128xf32>
    %478 = vector.extract_strided_slice %474 {offsets = [0, 0], sizes = [8, 32], strides = [1, 1]} : vector<8x128xf32> to vector<8x32xf32>
    %479 = vector.extract_strided_slice %477 {offsets = [0, 0], sizes = [8, 32], strides = [1, 1]} : vector<8x128xf32> to vector<8x32xf32>
    %480 = arith.addf %478, %479 : vector<8x32xf32>
    %481 = arith.negf %480 : vector<8x32xf32>
    %482 = math.exp %481 : vector<8x32xf32>
    %cst_129 = arith.constant 1.000000e+00 : f32
    %483 = vector.broadcast %cst_129 : f32 to vector<8x32xf32>
    %484 = arith.addf %483, %482 : vector<8x32xf32>
    %485 = arith.divf %483, %484 : vector<8x32xf32>
    %486 = vector.extract_strided_slice %474 {offsets = [0, 32], sizes = [8, 32], strides = [1, 1]} : vector<8x128xf32> to vector<8x32xf32>
    %487 = vector.extract_strided_slice %477 {offsets = [0, 32], sizes = [8, 32], strides = [1, 1]} : vector<8x128xf32> to vector<8x32xf32>
    %488 = arith.addf %486, %487 : vector<8x32xf32>
    %489 = arith.negf %488 : vector<8x32xf32>
    %490 = math.exp %489 : vector<8x32xf32>
    %cst_130 = arith.constant 1.000000e+00 : f32
    %491 = vector.broadcast %cst_130 : f32 to vector<8x32xf32>
    %492 = arith.addf %491, %490 : vector<8x32xf32>
    %493 = arith.divf %491, %492 : vector<8x32xf32>
    %494 = vector.extract_strided_slice %474 {offsets = [0, 64], sizes = [8, 32], strides = [1, 1]} : vector<8x128xf32> to vector<8x32xf32>
    %495 = vector.extract_strided_slice %477 {offsets = [0, 64], sizes = [8, 32], strides = [1, 1]} : vector<8x128xf32> to vector<8x32xf32>
    %496 = arith.mulf %485, %495 : vector<8x32xf32>
    %497 = arith.addf %494, %496 : vector<8x32xf32>
    %498 = math.tanh %497 : vector<8x32xf32>
    %cst_131 = arith.constant 1.000000e+00 : f32
    %499 = vector.broadcast %cst_131 : f32 to vector<8x32xf32>
    %500 = arith.subf %499, %493 : vector<8x32xf32>
    %501 = arith.mulf %500, %498 : vector<8x32xf32>
    %502 = arith.mulf %493, %440 : vector<8x32xf32>
    %503 = arith.addf %501, %502 : vector<8x32xf32>
    %504 = vector.extract_strided_slice %180 {offsets = [0, 5, 0], sizes = [8, 1, 128], strides = [1, 1, 1]} : vector<8x8x128xf32> to vector<8x1x128xf32>
    %505 = vector.shape_cast %504 : vector<8x1x128xf32> to vector<8x128xf32>
    %cst_132 = arith.constant dense<0.000000e+00> : vector<8x128xf32>
    %506 = tpu.matmul %471, %181, %cst_132 {dimension_numbers = #tpu.dot_dimension_numbers<[1], [0], [0], [1], [0, 0, 1, 1], [], []>} : vector<8x32xf32>, vector<32x128xf32>, vector<8x128xf32> -> vector<8x128xf32>
    %507 = vector.broadcast %182 : vector<1x128xf32> to vector<8x128xf32>
    %508 = arith.addf %506, %507 : vector<8x128xf32>
    %509 = vector.extract_strided_slice %505 {offsets = [0, 0], sizes = [8, 32], strides = [1, 1]} : vector<8x128xf32> to vector<8x32xf32>
    %510 = vector.extract_strided_slice %508 {offsets = [0, 0], sizes = [8, 32], strides = [1, 1]} : vector<8x128xf32> to vector<8x32xf32>
    %511 = arith.addf %509, %510 : vector<8x32xf32>
    %512 = arith.negf %511 : vector<8x32xf32>
    %513 = math.exp %512 : vector<8x32xf32>
    %cst_133 = arith.constant 1.000000e+00 : f32
    %514 = vector.broadcast %cst_133 : f32 to vector<8x32xf32>
    %515 = arith.addf %514, %513 : vector<8x32xf32>
    %516 = arith.divf %514, %515 : vector<8x32xf32>
    %517 = vector.extract_strided_slice %505 {offsets = [0, 32], sizes = [8, 32], strides = [1, 1]} : vector<8x128xf32> to vector<8x32xf32>
    %518 = vector.extract_strided_slice %508 {offsets = [0, 32], sizes = [8, 32], strides = [1, 1]} : vector<8x128xf32> to vector<8x32xf32>
    %519 = arith.addf %517, %518 : vector<8x32xf32>
    %520 = arith.negf %519 : vector<8x32xf32>
    %521 = math.exp %520 : vector<8x32xf32>
    %cst_134 = arith.constant 1.000000e+00 : f32
    %522 = vector.broadcast %cst_134 : f32 to vector<8x32xf32>
    %523 = arith.addf %522, %521 : vector<8x32xf32>
    %524 = arith.divf %522, %523 : vector<8x32xf32>
    %525 = vector.extract_strided_slice %505 {offsets = [0, 64], sizes = [8, 32], strides = [1, 1]} : vector<8x128xf32> to vector<8x32xf32>
    %526 = vector.extract_strided_slice %508 {offsets = [0, 64], sizes = [8, 32], strides = [1, 1]} : vector<8x128xf32> to vector<8x32xf32>
    %527 = arith.mulf %516, %526 : vector<8x32xf32>
    %528 = arith.addf %525, %527 : vector<8x32xf32>
    %529 = math.tanh %528 : vector<8x32xf32>
    %cst_135 = arith.constant 1.000000e+00 : f32
    %530 = vector.broadcast %cst_135 : f32 to vector<8x32xf32>
    %531 = arith.subf %530, %524 : vector<8x32xf32>
    %532 = arith.mulf %531, %529 : vector<8x32xf32>
    %533 = arith.mulf %524, %471 : vector<8x32xf32>
    %534 = arith.addf %532, %533 : vector<8x32xf32>
    %cst_136 = arith.constant dense<0.000000e+00> : vector<8x128xf32>
    %535 = tpu.matmul %534, %183, %cst_136 {dimension_numbers = #tpu.dot_dimension_numbers<[1], [0], [0], [1], [0, 0, 1, 1], [], []>} : vector<8x32xf32>, vector<32x128xf32>, vector<8x128xf32> -> vector<8x128xf32>
    %536 = vector.broadcast %184 : vector<1x128xf32> to vector<8x128xf32>
    %537 = arith.addf %535, %536 : vector<8x128xf32>
    %cst_137 = arith.constant dense<0.000000e+00> : vector<8x128xf32>
    %538 = tpu.matmul %503, %185, %cst_137 {dimension_numbers = #tpu.dot_dimension_numbers<[1], [0], [0], [1], [0, 0, 1, 1], [], []>} : vector<8x32xf32>, vector<32x128xf32>, vector<8x128xf32> -> vector<8x128xf32>
    %539 = vector.broadcast %186 : vector<1x128xf32> to vector<8x128xf32>
    %540 = arith.addf %538, %539 : vector<8x128xf32>
    %541 = vector.extract_strided_slice %537 {offsets = [0, 0], sizes = [8, 32], strides = [1, 1]} : vector<8x128xf32> to vector<8x32xf32>
    %542 = vector.extract_strided_slice %540 {offsets = [0, 0], sizes = [8, 32], strides = [1, 1]} : vector<8x128xf32> to vector<8x32xf32>
    %543 = arith.addf %541, %542 : vector<8x32xf32>
    %544 = arith.negf %543 : vector<8x32xf32>
    %545 = math.exp %544 : vector<8x32xf32>
    %cst_138 = arith.constant 1.000000e+00 : f32
    %546 = vector.broadcast %cst_138 : f32 to vector<8x32xf32>
    %547 = arith.addf %546, %545 : vector<8x32xf32>
    %548 = arith.divf %546, %547 : vector<8x32xf32>
    %549 = vector.extract_strided_slice %537 {offsets = [0, 32], sizes = [8, 32], strides = [1, 1]} : vector<8x128xf32> to vector<8x32xf32>
    %550 = vector.extract_strided_slice %540 {offsets = [0, 32], sizes = [8, 32], strides = [1, 1]} : vector<8x128xf32> to vector<8x32xf32>
    %551 = arith.addf %549, %550 : vector<8x32xf32>
    %552 = arith.negf %551 : vector<8x32xf32>
    %553 = math.exp %552 : vector<8x32xf32>
    %cst_139 = arith.constant 1.000000e+00 : f32
    %554 = vector.broadcast %cst_139 : f32 to vector<8x32xf32>
    %555 = arith.addf %554, %553 : vector<8x32xf32>
    %556 = arith.divf %554, %555 : vector<8x32xf32>
    %557 = vector.extract_strided_slice %537 {offsets = [0, 64], sizes = [8, 32], strides = [1, 1]} : vector<8x128xf32> to vector<8x32xf32>
    %558 = vector.extract_strided_slice %540 {offsets = [0, 64], sizes = [8, 32], strides = [1, 1]} : vector<8x128xf32> to vector<8x32xf32>
    %559 = arith.mulf %548, %558 : vector<8x32xf32>
    %560 = arith.addf %557, %559 : vector<8x32xf32>
    %561 = math.tanh %560 : vector<8x32xf32>
    %cst_140 = arith.constant 1.000000e+00 : f32
    %562 = vector.broadcast %cst_140 : f32 to vector<8x32xf32>
    %563 = arith.subf %562, %556 : vector<8x32xf32>
    %564 = arith.mulf %563, %561 : vector<8x32xf32>
    %565 = arith.mulf %556, %503 : vector<8x32xf32>
    %566 = arith.addf %564, %565 : vector<8x32xf32>
    %567 = vector.extract_strided_slice %180 {offsets = [0, 6, 0], sizes = [8, 1, 128], strides = [1, 1, 1]} : vector<8x8x128xf32> to vector<8x1x128xf32>
    %568 = vector.shape_cast %567 : vector<8x1x128xf32> to vector<8x128xf32>
    %cst_141 = arith.constant dense<0.000000e+00> : vector<8x128xf32>
    %569 = tpu.matmul %534, %181, %cst_141 {dimension_numbers = #tpu.dot_dimension_numbers<[1], [0], [0], [1], [0, 0, 1, 1], [], []>} : vector<8x32xf32>, vector<32x128xf32>, vector<8x128xf32> -> vector<8x128xf32>
    %570 = vector.broadcast %182 : vector<1x128xf32> to vector<8x128xf32>
    %571 = arith.addf %569, %570 : vector<8x128xf32>
    %572 = vector.extract_strided_slice %568 {offsets = [0, 0], sizes = [8, 32], strides = [1, 1]} : vector<8x128xf32> to vector<8x32xf32>
    %573 = vector.extract_strided_slice %571 {offsets = [0, 0], sizes = [8, 32], strides = [1, 1]} : vector<8x128xf32> to vector<8x32xf32>
    %574 = arith.addf %572, %573 : vector<8x32xf32>
    %575 = arith.negf %574 : vector<8x32xf32>
    %576 = math.exp %575 : vector<8x32xf32>
    %cst_142 = arith.constant 1.000000e+00 : f32
    %577 = vector.broadcast %cst_142 : f32 to vector<8x32xf32>
    %578 = arith.addf %577, %576 : vector<8x32xf32>
    %579 = arith.divf %577, %578 : vector<8x32xf32>
    %580 = vector.extract_strided_slice %568 {offsets = [0, 32], sizes = [8, 32], strides = [1, 1]} : vector<8x128xf32> to vector<8x32xf32>
    %581 = vector.extract_strided_slice %571 {offsets = [0, 32], sizes = [8, 32], strides = [1, 1]} : vector<8x128xf32> to vector<8x32xf32>
    %582 = arith.addf %580, %581 : vector<8x32xf32>
    %583 = arith.negf %582 : vector<8x32xf32>
    %584 = math.exp %583 : vector<8x32xf32>
    %cst_143 = arith.constant 1.000000e+00 : f32
    %585 = vector.broadcast %cst_143 : f32 to vector<8x32xf32>
    %586 = arith.addf %585, %584 : vector<8x32xf32>
    %587 = arith.divf %585, %586 : vector<8x32xf32>
    %588 = vector.extract_strided_slice %568 {offsets = [0, 64], sizes = [8, 32], strides = [1, 1]} : vector<8x128xf32> to vector<8x32xf32>
    %589 = vector.extract_strided_slice %571 {offsets = [0, 64], sizes = [8, 32], strides = [1, 1]} : vector<8x128xf32> to vector<8x32xf32>
    %590 = arith.mulf %579, %589 : vector<8x32xf32>
    %591 = arith.addf %588, %590 : vector<8x32xf32>
    %592 = math.tanh %591 : vector<8x32xf32>
    %cst_144 = arith.constant 1.000000e+00 : f32
    %593 = vector.broadcast %cst_144 : f32 to vector<8x32xf32>
    %594 = arith.subf %593, %587 : vector<8x32xf32>
    %595 = arith.mulf %594, %592 : vector<8x32xf32>
    %596 = arith.mulf %587, %534 : vector<8x32xf32>
    %597 = arith.addf %595, %596 : vector<8x32xf32>
    %cst_145 = arith.constant dense<0.000000e+00> : vector<8x128xf32>
    %598 = tpu.matmul %597, %183, %cst_145 {dimension_numbers = #tpu.dot_dimension_numbers<[1], [0], [0], [1], [0, 0, 1, 1], [], []>} : vector<8x32xf32>, vector<32x128xf32>, vector<8x128xf32> -> vector<8x128xf32>
    %599 = vector.broadcast %184 : vector<1x128xf32> to vector<8x128xf32>
    %600 = arith.addf %598, %599 : vector<8x128xf32>
    %cst_146 = arith.constant dense<0.000000e+00> : vector<8x128xf32>
    %601 = tpu.matmul %566, %185, %cst_146 {dimension_numbers = #tpu.dot_dimension_numbers<[1], [0], [0], [1], [0, 0, 1, 1], [], []>} : vector<8x32xf32>, vector<32x128xf32>, vector<8x128xf32> -> vector<8x128xf32>
    %602 = vector.broadcast %186 : vector<1x128xf32> to vector<8x128xf32>
    %603 = arith.addf %601, %602 : vector<8x128xf32>
    %604 = vector.extract_strided_slice %600 {offsets = [0, 0], sizes = [8, 32], strides = [1, 1]} : vector<8x128xf32> to vector<8x32xf32>
    %605 = vector.extract_strided_slice %603 {offsets = [0, 0], sizes = [8, 32], strides = [1, 1]} : vector<8x128xf32> to vector<8x32xf32>
    %606 = arith.addf %604, %605 : vector<8x32xf32>
    %607 = arith.negf %606 : vector<8x32xf32>
    %608 = math.exp %607 : vector<8x32xf32>
    %cst_147 = arith.constant 1.000000e+00 : f32
    %609 = vector.broadcast %cst_147 : f32 to vector<8x32xf32>
    %610 = arith.addf %609, %608 : vector<8x32xf32>
    %611 = arith.divf %609, %610 : vector<8x32xf32>
    %612 = vector.extract_strided_slice %600 {offsets = [0, 32], sizes = [8, 32], strides = [1, 1]} : vector<8x128xf32> to vector<8x32xf32>
    %613 = vector.extract_strided_slice %603 {offsets = [0, 32], sizes = [8, 32], strides = [1, 1]} : vector<8x128xf32> to vector<8x32xf32>
    %614 = arith.addf %612, %613 : vector<8x32xf32>
    %615 = arith.negf %614 : vector<8x32xf32>
    %616 = math.exp %615 : vector<8x32xf32>
    %cst_148 = arith.constant 1.000000e+00 : f32
    %617 = vector.broadcast %cst_148 : f32 to vector<8x32xf32>
    %618 = arith.addf %617, %616 : vector<8x32xf32>
    %619 = arith.divf %617, %618 : vector<8x32xf32>
    %620 = vector.extract_strided_slice %600 {offsets = [0, 64], sizes = [8, 32], strides = [1, 1]} : vector<8x128xf32> to vector<8x32xf32>
    %621 = vector.extract_strided_slice %603 {offsets = [0, 64], sizes = [8, 32], strides = [1, 1]} : vector<8x128xf32> to vector<8x32xf32>
    %622 = arith.mulf %611, %621 : vector<8x32xf32>
    %623 = arith.addf %620, %622 : vector<8x32xf32>
    %624 = math.tanh %623 : vector<8x32xf32>
    %cst_149 = arith.constant 1.000000e+00 : f32
    %625 = vector.broadcast %cst_149 : f32 to vector<8x32xf32>
    %626 = arith.subf %625, %619 : vector<8x32xf32>
    %627 = arith.mulf %626, %624 : vector<8x32xf32>
    %628 = arith.mulf %619, %566 : vector<8x32xf32>
    %629 = arith.addf %627, %628 : vector<8x32xf32>
    %630 = vector.extract_strided_slice %180 {offsets = [0, 7, 0], sizes = [8, 1, 128], strides = [1, 1, 1]} : vector<8x8x128xf32> to vector<8x1x128xf32>
    %631 = vector.shape_cast %630 : vector<8x1x128xf32> to vector<8x128xf32>
    %cst_150 = arith.constant dense<0.000000e+00> : vector<8x128xf32>
    %632 = tpu.matmul %597, %181, %cst_150 {dimension_numbers = #tpu.dot_dimension_numbers<[1], [0], [0], [1], [0, 0, 1, 1], [], []>} : vector<8x32xf32>, vector<32x128xf32>, vector<8x128xf32> -> vector<8x128xf32>
    %633 = vector.broadcast %182 : vector<1x128xf32> to vector<8x128xf32>
    %634 = arith.addf %632, %633 : vector<8x128xf32>
    %635 = vector.extract_strided_slice %631 {offsets = [0, 0], sizes = [8, 32], strides = [1, 1]} : vector<8x128xf32> to vector<8x32xf32>
    %636 = vector.extract_strided_slice %634 {offsets = [0, 0], sizes = [8, 32], strides = [1, 1]} : vector<8x128xf32> to vector<8x32xf32>
    %637 = arith.addf %635, %636 : vector<8x32xf32>
    %638 = arith.negf %637 : vector<8x32xf32>
    %639 = math.exp %638 : vector<8x32xf32>
    %cst_151 = arith.constant 1.000000e+00 : f32
    %640 = vector.broadcast %cst_151 : f32 to vector<8x32xf32>
    %641 = arith.addf %640, %639 : vector<8x32xf32>
    %642 = arith.divf %640, %641 : vector<8x32xf32>
    %643 = vector.extract_strided_slice %631 {offsets = [0, 32], sizes = [8, 32], strides = [1, 1]} : vector<8x128xf32> to vector<8x32xf32>
    %644 = vector.extract_strided_slice %634 {offsets = [0, 32], sizes = [8, 32], strides = [1, 1]} : vector<8x128xf32> to vector<8x32xf32>
    %645 = arith.addf %643, %644 : vector<8x32xf32>
    %646 = arith.negf %645 : vector<8x32xf32>
    %647 = math.exp %646 : vector<8x32xf32>
    %cst_152 = arith.constant 1.000000e+00 : f32
    %648 = vector.broadcast %cst_152 : f32 to vector<8x32xf32>
    %649 = arith.addf %648, %647 : vector<8x32xf32>
    %650 = arith.divf %648, %649 : vector<8x32xf32>
    %651 = vector.extract_strided_slice %631 {offsets = [0, 64], sizes = [8, 32], strides = [1, 1]} : vector<8x128xf32> to vector<8x32xf32>
    %652 = vector.extract_strided_slice %634 {offsets = [0, 64], sizes = [8, 32], strides = [1, 1]} : vector<8x128xf32> to vector<8x32xf32>
    %653 = arith.mulf %642, %652 : vector<8x32xf32>
    %654 = arith.addf %651, %653 : vector<8x32xf32>
    %655 = math.tanh %654 : vector<8x32xf32>
    %cst_153 = arith.constant 1.000000e+00 : f32
    %656 = vector.broadcast %cst_153 : f32 to vector<8x32xf32>
    %657 = arith.subf %656, %650 : vector<8x32xf32>
    %658 = arith.mulf %657, %655 : vector<8x32xf32>
    %659 = arith.mulf %650, %597 : vector<8x32xf32>
    %660 = arith.addf %658, %659 : vector<8x32xf32>
    %cst_154 = arith.constant dense<0.000000e+00> : vector<8x128xf32>
    %661 = tpu.matmul %660, %183, %cst_154 {dimension_numbers = #tpu.dot_dimension_numbers<[1], [0], [0], [1], [0, 0, 1, 1], [], []>} : vector<8x32xf32>, vector<32x128xf32>, vector<8x128xf32> -> vector<8x128xf32>
    %662 = vector.broadcast %184 : vector<1x128xf32> to vector<8x128xf32>
    %663 = arith.addf %661, %662 : vector<8x128xf32>
    %cst_155 = arith.constant dense<0.000000e+00> : vector<8x128xf32>
    %664 = tpu.matmul %629, %185, %cst_155 {dimension_numbers = #tpu.dot_dimension_numbers<[1], [0], [0], [1], [0, 0, 1, 1], [], []>} : vector<8x32xf32>, vector<32x128xf32>, vector<8x128xf32> -> vector<8x128xf32>
    %665 = vector.broadcast %186 : vector<1x128xf32> to vector<8x128xf32>
    %666 = arith.addf %664, %665 : vector<8x128xf32>
    %667 = vector.extract_strided_slice %663 {offsets = [0, 0], sizes = [8, 32], strides = [1, 1]} : vector<8x128xf32> to vector<8x32xf32>
    %668 = vector.extract_strided_slice %666 {offsets = [0, 0], sizes = [8, 32], strides = [1, 1]} : vector<8x128xf32> to vector<8x32xf32>
    %669 = arith.addf %667, %668 : vector<8x32xf32>
    %670 = arith.negf %669 : vector<8x32xf32>
    %671 = math.exp %670 : vector<8x32xf32>
    %cst_156 = arith.constant 1.000000e+00 : f32
    %672 = vector.broadcast %cst_156 : f32 to vector<8x32xf32>
    %673 = arith.addf %672, %671 : vector<8x32xf32>
    %674 = arith.divf %672, %673 : vector<8x32xf32>
    %675 = vector.extract_strided_slice %663 {offsets = [0, 32], sizes = [8, 32], strides = [1, 1]} : vector<8x128xf32> to vector<8x32xf32>
    %676 = vector.extract_strided_slice %666 {offsets = [0, 32], sizes = [8, 32], strides = [1, 1]} : vector<8x128xf32> to vector<8x32xf32>
    %677 = arith.addf %675, %676 : vector<8x32xf32>
    %678 = arith.negf %677 : vector<8x32xf32>
    %679 = math.exp %678 : vector<8x32xf32>
    %cst_157 = arith.constant 1.000000e+00 : f32
    %680 = vector.broadcast %cst_157 : f32 to vector<8x32xf32>
    %681 = arith.addf %680, %679 : vector<8x32xf32>
    %682 = arith.divf %680, %681 : vector<8x32xf32>
    %683 = vector.extract_strided_slice %663 {offsets = [0, 64], sizes = [8, 32], strides = [1, 1]} : vector<8x128xf32> to vector<8x32xf32>
    %684 = vector.extract_strided_slice %666 {offsets = [0, 64], sizes = [8, 32], strides = [1, 1]} : vector<8x128xf32> to vector<8x32xf32>
    %685 = arith.mulf %674, %684 : vector<8x32xf32>
    %686 = arith.addf %683, %685 : vector<8x32xf32>
    %687 = math.tanh %686 : vector<8x32xf32>
    %cst_158 = arith.constant 1.000000e+00 : f32
    %688 = vector.broadcast %cst_158 : f32 to vector<8x32xf32>
    %689 = arith.subf %688, %682 : vector<8x32xf32>
    %690 = arith.mulf %689, %687 : vector<8x32xf32>
    %691 = arith.mulf %682, %629 : vector<8x32xf32>
    %692 = arith.addf %690, %691 : vector<8x32xf32>
    %c0_159 = arith.constant 0 : index
    %c0_160 = arith.constant 0 : index
    %c0_161 = arith.constant 0 : index
    %693 = vector.load %arg26[%c0_159, %c0_160, %c0_161] : memref<2x8x32xf32, #tpu.memory_space<vmem>>, vector<1x8x32xf32>
    %694 = vector.shape_cast %693 : vector<1x8x32xf32> to vector<8x32xf32>
    %695 = vector.shape_cast %660 : vector<8x32xf32> to vector<1x8x32xf32>
    tpu.vector_store %arg26[%c0_159, %c0_160, %c0_161], %695 {strides = array<i32>} : memref<2x8x32xf32, #tpu.memory_space<vmem>>, vector<1x8x32xf32>,
    %c1 = arith.constant 1 : index
    %c0_162 = arith.constant 0 : index
    %c0_163 = arith.constant 0 : index
    %696 = vector.load %arg26[%c1, %c0_162, %c0_163] : memref<2x8x32xf32, #tpu.memory_space<vmem>>, vector<1x8x32xf32>
    %697 = vector.shape_cast %696 : vector<1x8x32xf32> to vector<8x32xf32>
    %698 = vector.shape_cast %692 : vector<8x32xf32> to vector<1x8x32xf32>
    tpu.vector_store %arg26[%c1, %c0_162, %c0_163], %698 {strides = array<i32>} : memref<2x8x32xf32, #tpu.memory_space<vmem>>, vector<1x8x32xf32>,
    %cst_164 = arith.constant 0.000000e+00 : f32
    %699 = vector.broadcast %cst_164 : f32 to vector<8x32xf32>
    %700 = arith.maximumf %692, %699 : vector<8x32xf32>
    %c0_165 = arith.constant 0 : index
    %c0_166 = arith.constant 0 : index
    %701 = vector.load %arg23[%c0_165, %c0_166] : memref<32x128xf32, #tpu.memory_space<vmem>>, vector<32x128xf32>
    %cst_167 = arith.constant dense<0.000000e+00> : vector<8x128xf32>
    %702 = tpu.matmul %700, %701, %cst_167 {dimension_numbers = #tpu.dot_dimension_numbers<[1], [0], [0], [1], [0, 0, 1, 1], [], []>} : vector<8x32xf32>, vector<32x128xf32>, vector<8x128xf32> -> vector<8x128xf32>
    %c0_168 = arith.constant 0 : index
    %c0_169 = arith.constant 0 : index
    %703 = vector.load %arg24[%c0_168, %c0_169] : memref<1x128xf32, #tpu.memory_space<vmem>>, vector<1x128xf32>
    %704 = vector.broadcast %703 : vector<1x128xf32> to vector<8x128xf32>
    %705 = arith.addf %702, %704 : vector<8x128xf32>
    %c0_170 = arith.constant 0 : index
    %c0_171 = arith.constant 0 : index
    %706 = vector.load %arg25[%c0_170, %c0_171] : memref<8x128xf32, #tpu.memory_space<vmem>>, vector<8x128xf32>
    tpu.vector_store %arg25[%c0_170, %c0_171], %705 {strides = array<i32>} : memref<8x128xf32, #tpu.memory_space<vmem>>, vector<8x128xf32>,
    return
  }
  func.func @transform_0(%arg0: i32) -> (i32, i32, i32) {
    %c0_i32 = arith.constant 0 : i32
    %c0_i32_0 = arith.constant 0 : i32
    %c0_i32_1 = arith.constant 0 : i32
    return %arg0, %c0_i32, %c0_i32_0 : i32, i32, i32
  }
  func.func @transform_1(%arg0: i32) -> (i32, i32, i32) {
    %c0_i32 = arith.constant 0 : i32
    %c0_i32_0 = arith.constant 0 : i32
    %c0_i32_1 = arith.constant 0 : i32
    return %arg0, %c0_i32, %c0_i32_0 : i32, i32, i32
  }
  func.func @transform_2(%arg0: i32) -> (i32, i32, i32) {
    %c0_i32 = arith.constant 0 : i32
    %c0_i32_0 = arith.constant 0 : i32
    %c0_i32_1 = arith.constant 0 : i32
    return %arg0, %c0_i32, %c0_i32_0 : i32, i32, i32
  }
  func.func @transform_3(%arg0: i32) -> (i32, i32, i32) {
    %c0_i32 = arith.constant 0 : i32
    %c0_i32_0 = arith.constant 0 : i32
    %c0_i32_1 = arith.constant 0 : i32
    return %arg0, %c0_i32, %c0_i32_0 : i32, i32, i32
  }
  func.func @transform_4(%arg0: i32) -> (i32, i32) {
    %c0_i32 = arith.constant 0 : i32
    %c0_i32_0 = arith.constant 0 : i32
    %c0_i32_1 = arith.constant 0 : i32
    return %c0_i32, %c0_i32_0 : i32, i32
  }
  func.func @transform_5(%arg0: i32) -> (i32, i32) {
    %c0_i32 = arith.constant 0 : i32
    %c0_i32_0 = arith.constant 0 : i32
    %c0_i32_1 = arith.constant 0 : i32
    return %c0_i32, %c0_i32_0 : i32, i32
  }
  func.func @transform_6(%arg0: i32) -> (i32, i32) {
    %c0_i32 = arith.constant 0 : i32
    %c0_i32_0 = arith.constant 0 : i32
    %c0_i32_1 = arith.constant 0 : i32
    return %c0_i32, %c0_i32_0 : i32, i32
  }
  func.func @transform_7(%arg0: i32) -> (i32, i32) {
    %c0_i32 = arith.constant 0 : i32
    %c0_i32_0 = arith.constant 0 : i32
    %c0_i32_1 = arith.constant 0 : i32
    return %c0_i32, %c0_i32_0 : i32, i32
  }
  func.func @transform_8(%arg0: i32) -> (i32, i32) {
    %c0_i32 = arith.constant 0 : i32
    %c0_i32_0 = arith.constant 0 : i32
    %c0_i32_1 = arith.constant 0 : i32
    return %c0_i32, %c0_i32_0 : i32, i32
  }
  func.func @transform_9(%arg0: i32) -> (i32, i32) {
    %c0_i32 = arith.constant 0 : i32
    %c0_i32_0 = arith.constant 0 : i32
    %c0_i32_1 = arith.constant 0 : i32
    return %c0_i32, %c0_i32_0 : i32, i32
  }
  func.func @transform_10(%arg0: i32) -> (i32, i32) {
    %c0_i32 = arith.constant 0 : i32
    %c0_i32_0 = arith.constant 0 : i32
    %c0_i32_1 = arith.constant 0 : i32
    return %c0_i32, %c0_i32_0 : i32, i32
  }
  func.func @transform_11(%arg0: i32) -> (i32, i32) {
    %c0_i32 = arith.constant 0 : i32
    %c0_i32_0 = arith.constant 0 : i32
    %c0_i32_1 = arith.constant 0 : i32
    return %c0_i32, %c0_i32_0 : i32, i32
  }
  func.func @transform_12(%arg0: i32) -> (i32, i32) {
    %c0_i32 = arith.constant 0 : i32
    %c0_i32_0 = arith.constant 0 : i32
    %c0_i32_1 = arith.constant 0 : i32
    return %c0_i32, %c0_i32_0 : i32, i32
  }
  func.func @transform_13(%arg0: i32) -> (i32, i32) {
    %c0_i32 = arith.constant 0 : i32
    %c0_i32_0 = arith.constant 0 : i32
    %c0_i32_1 = arith.constant 0 : i32
    return %c0_i32, %c0_i32_0 : i32, i32
  }
  func.func @transform_14(%arg0: i32) -> (i32, i32) {
    %c0_i32 = arith.constant 0 : i32
    %c0_i32_0 = arith.constant 0 : i32
    %c0_i32_1 = arith.constant 0 : i32
    return %c0_i32, %c0_i32_0 : i32, i32
  }
  func.func @transform_15(%arg0: i32) -> (i32, i32) {
    %c0_i32 = arith.constant 0 : i32
    %c0_i32_0 = arith.constant 0 : i32
    %c0_i32_1 = arith.constant 0 : i32
    return %c0_i32, %c0_i32_0 : i32, i32
  }
  func.func @transform_16(%arg0: i32) -> (i32, i32) {
    %c0_i32 = arith.constant 0 : i32
    %c0_i32_0 = arith.constant 0 : i32
    %c0_i32_1 = arith.constant 0 : i32
    return %c0_i32, %c0_i32_0 : i32, i32
  }
  func.func @transform_17(%arg0: i32) -> (i32, i32) {
    %c0_i32 = arith.constant 0 : i32
    %c0_i32_0 = arith.constant 0 : i32
    %c0_i32_1 = arith.constant 0 : i32
    return %c0_i32, %c0_i32_0 : i32, i32
  }
  func.func @transform_18(%arg0: i32) -> (i32, i32) {
    %c0_i32 = arith.constant 0 : i32
    %c0_i32_0 = arith.constant 0 : i32
    %c0_i32_1 = arith.constant 0 : i32
    return %c0_i32, %c0_i32_0 : i32, i32
  }
  func.func @transform_19(%arg0: i32) -> (i32, i32) {
    %c0_i32 = arith.constant 0 : i32
    %c0_i32_0 = arith.constant 0 : i32
    %c0_i32_1 = arith.constant 0 : i32
    return %c0_i32, %c0_i32_0 : i32, i32
  }
  func.func @transform_20(%arg0: i32) -> (i32, i32) {
    %c0_i32 = arith.constant 0 : i32
    %c0_i32_0 = arith.constant 0 : i32
    %c0_i32_1 = arith.constant 0 : i32
    return %c0_i32, %c0_i32_0 : i32, i32
  }
  func.func @transform_21(%arg0: i32) -> (i32, i32) {
    %c0_i32 = arith.constant 0 : i32
    %c0_i32_0 = arith.constant 0 : i32
    %c0_i32_1 = arith.constant 0 : i32
    return %c0_i32, %c0_i32_0 : i32, i32
  }
  func.func @transform_22(%arg0: i32) -> (i32, i32) {
    %c0_i32 = arith.constant 0 : i32
    %c0_i32_0 = arith.constant 0 : i32
    %c0_i32_1 = arith.constant 0 : i32
    return %c0_i32, %c0_i32_0 : i32, i32
  }
  func.func @transform_23(%arg0: i32) -> (i32, i32) {
    %c0_i32 = arith.constant 0 : i32
    %c0_i32_0 = arith.constant 0 : i32
    %c0_i32_1 = arith.constant 0 : i32
    return %c0_i32, %c0_i32_0 : i32, i32
  }
  func.func @transform_24(%arg0: i32) -> (i32, i32) {
    %c0_i32 = arith.constant 0 : i32
    %c0_i32_0 = arith.constant 0 : i32
    return %arg0, %c0_i32 : i32, i32
  }
  func.func @transform_25(%arg0: i32) -> (i32, i32, i32) {
    %c0_i32 = arith.constant 0 : i32
    %c0_i32_0 = arith.constant 0 : i32
    %c0_i32_1 = arith.constant 0 : i32
    return %c0_i32, %arg0, %c0_i32_0 : i32, i32, i32
  }
}

</mosaic_0001>

<llo_original>
// kernel: tpu_custom_call.1
$region0: #{tpu_custom_call.1}
  #allocation0 [shape = 'u32[]', space=smem, size = 0x4, offset = 0x4, fixed_abs, tag = 'smem constant byte address 0x4 - core index']
  #allocation1 [shape = 'u32[144,128]{1,0:T(1,128)}', space=vmem, size = 0x12000, scoped, tag = 'internal scratch']
  %s0 = inlined_call_operand.hbm [shape: f32[16,8,128], index: 0, kind: input, shape index: {}]
  %s1 = inlined_call_operand.hbm [shape: f32[16,8,256], index: 1, kind: input, shape index: {}]
  %s2 = inlined_call_operand.hbm [shape: f32[16,8,512], index: 2, kind: input, shape index: {}]
  %s3 = inlined_call_operand.hbm [shape: f32[16,8,128], index: 3, kind: input, shape index: {}]
  %s4 = inlined_call_operand.hbm [shape: f32[128,128], index: 4, kind: input, shape index: {}]
  %s5 = inlined_call_operand.hbm [shape: f32[1,128], index: 5, kind: input, shape index: {}]
  %s6 = inlined_call_operand.hbm [shape: f32[256,128], index: 6, kind: input, shape index: {}]
  %s7 = inlined_call_operand.hbm [shape: f32[1,128], index: 7, kind: input, shape index: {}]
  %s8 = inlined_call_operand.hbm [shape: f32[128,128], index: 8, kind: input, shape index: {}]
  %s9 = inlined_call_operand.hbm [shape: f32[1,128], index: 9, kind: input, shape index: {}]
  %s10 = inlined_call_operand.hbm [shape: f32[128,128], index: 10, kind: input, shape index: {}]
  %s11 = inlined_call_operand.hbm [shape: f32[1,128], index: 11, kind: input, shape index: {}]
  %s12 = inlined_call_operand.hbm [shape: f32[128,128], index: 12, kind: input, shape index: {}]
  %s13 = inlined_call_operand.hbm [shape: f32[1,128], index: 13, kind: input, shape index: {}]
  %s14 = inlined_call_operand.hbm [shape: f32[384,128], index: 14, kind: input, shape index: {}]
  %s15 = inlined_call_operand.hbm [shape: f32[32,128], index: 15, kind: input, shape index: {}]
  %s16 = inlined_call_operand.hbm [shape: f32[1,128], index: 16, kind: input, shape index: {}]
  %s17 = inlined_call_operand.hbm [shape: f32[1,128], index: 17, kind: input, shape index: {}]
  %s18 = inlined_call_operand.vmem [shape: f32[32,128], index: 18, kind: input, shape index: {}]
  %s19 = inlined_call_operand.hbm [shape: f32[32,128], index: 19, kind: input, shape index: {}]
  %s20 = inlined_call_operand.vmem [shape: f32[1,128], index: 20, kind: input, shape index: {}]
  %s21 = inlined_call_operand.vmem [shape: f32[1,128], index: 21, kind: input, shape index: {}]
  %s22 = inlined_call_operand.hbm [shape: f32[32,128], index: 22, kind: input, shape index: {}]
  %s23 = inlined_call_operand.vmem [shape: f32[1,128], index: 23, kind: input, shape index: {}]
  %s24 = inlined_call_operand.hbm [shape: f32[16,128], index: 24, kind: output, shape index: {0}]
  %s25 = inlined_call_operand.hbm [shape: f32[2,16,32], index: 25, kind: output, shape index: {1}]
  %26 = xla_tuple %s24, %s25
  %s27 = sld [smem:[#allocation0]]
  $region217: #{tpu_custom_call.1} parent=0
    _
  %s29 = ssub.s32 1, %s27
  %s30 = scalar_select 0, %s29, %s27
  $region1: #{tpu_custom_call.1} parent=0
    #allocation2 [shape = 'u8[65536]{0}', space=vmem, size = 0x10000, scoped, tag = 'input window, operand 0']
    #allocation3 [shape = 's32[2]{0}', space=sflag, size = 0x8, scoped, tag = 'scoped memory for tpu_custom_call.1']
    #allocation4 [shape = 's32[2]{0}', space=sflag, size = 0x8, scoped, tag = 'scoped memory for tpu_custom_call.1']
    #allocation5 [shape = 'u8[131072]{0}', space=vmem, size = 0x20000, scoped, tag = 'input window, operand 1']
    #allocation6 [shape = 's32[2]{0}', space=sflag, size = 0x8, scoped, tag = 'scoped memory for tpu_custom_call.1']
    #allocation7 [shape = 'u8[262144]{0}', space=vmem, size = 0x40000, scoped, tag = 'input window, operand 2']
    #allocation8 [shape = 'u8[65536]{0}', space=vmem, size = 0x10000, scoped, tag = 'input window, operand 3']
    #allocation9 [shape = 's32[2]{0}', space=sflag, size = 0x8, scoped, tag = 'scoped memory for tpu_custom_call.1']
    #allocation10 [shape = 'u8[65536]{0}', space=vmem, size = 0x10000, scoped, tag = 'input window, operand 4, single buffered']
    #allocation11 [shape = 'u8[512]{0}', space=vmem, size = 0x400, scoped, tag = 'input window, operand 5, single buffered']
    #allocation12 [shape = 's32[1]{0}', space=sflag, size = 0x4, scoped, tag = 'scoped memory for tpu_custom_call.1']
    #allocation13 [shape = 'u8[131072]{0}', space=vmem, size = 0x20000, scoped, tag = 'input window, operand 6, single buffered']
    #allocation14 [shape = 'u8[512]{0}', space=vmem, size = 0x400, scoped, tag = 'input window, operand 7, single buffered']
    #allocation15 [shape = 's32[1]{0}', space=sflag, size = 0x4, scoped, tag = 'scoped memory for tpu_custom_call.1']
    #allocation16 [shape = 'u8[65536]{0}', space=vmem, size = 0x10000, scoped, tag = 'input window, operand 8, single buffered']
    #allocation17 [shape = 'u8[512]{0}', space=vmem, size = 0x400, scoped, tag = 'input window, operand 9, single buffered']
    #allocation18 [shape = 's32[1]{0}', space=sflag, size = 0x4, scoped, tag = 'scoped memory for tpu_custom_call.1']
    #allocation19 [shape = 'u8[65536]{0}', space=vmem, size = 0x10000, scoped, tag = 'input window, operand 10, single buffered']
    #allocation20 [shape = 'u8[512]{0}', space=vmem, size = 0x400, scoped, tag = 'input window, operand 11, single buffered']
    #allocation21 [shape = 's32[1]{0}', space=sflag, size = 0x4, scoped, tag = 'scoped memory for tpu_custom_call.1']
    #allocation22 [shape = 'u8[65536]{0}', space=vmem, size = 0x10000, scoped, tag = 'input window, operand 12, single buffered']
    #allocation23 [shape = 'u8[512]{0}', space=vmem, size = 0x400, scoped, tag = 'input window, operand 13, single buffered']
    #allocation24 [shape = 's32[1]{0}', space=sflag, size = 0x4, scoped, tag = 'scoped memory for tpu_custom_call.1']
    #allocation25 [shape = 'u8[196608]{0}', space=vmem, size = 0x30000, scoped, tag = 'input window, operand 14, single buffered']
    #allocation26 [shape = 'u8[16384]{0}', space=vmem, size = 0x4000, scoped, tag = 'input window, operand 15, single buffered']
    #allocation27 [shape = 's32[1]{0}', space=sflag, size = 0x4, scoped, tag = 'scoped memory for tpu_custom_call.1']
    #allocation28 [shape = 'u8[512]{0}', space=vmem, size = 0x400, scoped, tag = 'input window, operand 16, single buffered']
    #allocation29 [shape = 'u8[512]{0}', space=vmem, size = 0x400, scoped, tag = 'input window, operand 17, single buffered']
    #allocation30 [shape = 's32[1]{0}', space=sflag, size = 0x4, scoped, tag = 'scoped memory for tpu_custom_call.1']
    #allocation31 [shape = 'u8[16384]{0}', space=vmem, size = 0x4000, scoped, tag = 'input window, operand 19, single buffered']
    #allocation32 [shape = 'u8[16384]{0}', space=vmem, size = 0x4000, scoped, tag = 'input window, operand 22, single buffered']
    #allocation33 [shape = 's32[1]{0}', space=sflag, size = 0x4, scoped, tag = 'scoped memory for tpu_custom_call.1']
    #allocation34 [shape = 'u8[8192]{0}', space=vmem, size = 0x2000, scoped, tag = 'output window, operand 0']
    #allocation35 [shape = 'u8[16384]{0}', space=vmem, size = 0x4000, scoped, tag = 'output window, operand 1']
    #allocation36 [shape = 's32[2]{0}', space=sflag, size = 0x8, scoped, tag = 'scoped memory for tpu_custom_call.1']
    %31 = vsyncpa [#allocation3], 0
    %s32 = scalar_lea.sflag [#allocation3], 1
    %33 = vsyncpa %s32, 0
    %34 = vsyncpa [#allocation6], 0
    %s35 = scalar_lea.sflag [#allocation6], 1
    %36 = vsyncpa %s35, 0
    %37 = vsyncpa [#allocation9], 0
    %s38 = scalar_lea.sflag [#allocation9], 1
    %39 = vsyncpa %s38, 0
    %40 = vsyncpa [#allocation12], 0
    %41 = vsyncpa [#allocation15], 0
    %42 = vsyncpa [#allocation18], 0
    %43 = vsyncpa [#allocation21], 0
    %44 = vsyncpa [#allocation24], 0
    %45 = vsyncpa [#allocation27], 0
    %46 = vsyncpa [#allocation30], 0
    %47 = vsyncpa [#allocation33], 0
    %48 = vsyncpa [#allocation4], 0
    %s49 = scalar_lea.sflag [#allocation4], 1
    %50 = vsyncpa %s49, 0
    %51 = vsyncpa [#allocation36], 0
    %s52 = scalar_lea.sflag [#allocation36], 1
    %53 = vsyncpa %s52, 0
    loop: start=0, step=1, limit=4
    $region2: #{tpu_custom_call.1} parent=1 // loop_pre_header
      _
    $region3: #{tpu_custom_call.1} parent=1 // loop_header
      %s55 = sphi 0, %s59
      %p56 = scmp.ge.s32.totalorder %s55, 4
      %s65 = sphi 0, %s67
      %s68 = sphi 0, %s65
      %s69 = sphi 0, %s68
      %s85 = sphi 0, %s69
      %s91 = sphi 0, %s93
      %s94 = sphi 0, %s91
      %s95 = sphi 0, %s94
      %s111 = sphi 0, %s95
      %s117 = sphi 0, %s119
      %s120 = sphi 0, %s117
      %s121 = sphi 0, %s120
      %s137 = sphi 0, %s121
      %s143 = sphi 0, %s145
      %s146 = sphi 0, %s143
      %s147 = sphi 0, %s146
      %s163 = sphi 0, %s147
      %s167 = sphi 0, %s167
      %s169 = sphi 0, %s167
      %s170 = sphi 0, %s169
      %s184 = sphi 0, %s170
      %s188 = sphi 0, %s188
      %s190 = sphi 0, %s188
      %s191 = sphi 0, %s190
      %s205 = sphi 0, %s191
      %s209 = sphi 0, %s209
      %s211 = sphi 0, %s209
      %s212 = sphi 0, %s211
      %s226 = sphi 0, %s212
      %s230 = sphi 0, %s230
      %s232 = sphi 0, %s230
      %s233 = sphi 0, %s232
      %s247 = sphi 0, %s233
      %s251 = sphi 0, %s251
      %s253 = sphi 0, %s251
      %s254 = sphi 0, %s253
      %s268 = sphi 0, %s254
      %s272 = sphi 0, %s272
      %s274 = sphi 0, %s272
      %s275 = sphi 0, %s274
      %s289 = sphi 0, %s275
      %s293 = sphi 0, %s293
      %s295 = sphi 0, %s293
      %s296 = sphi 0, %s295
      %s310 = sphi 0, %s296
      %s314 = sphi 0, %s314
      %s316 = sphi 0, %s314
      %s317 = sphi 0, %s316
      %s331 = sphi 0, %s317
      %s335 = sphi 0, %s335
      %s337 = sphi 0, %s335
      %s338 = sphi 0, %s337
      %s352 = sphi 0, %s338
      %s356 = sphi 0, %s356
      %s358 = sphi 0, %s356
      %s359 = sphi 0, %s358
      %s373 = sphi 0, %s359
      %s377 = sphi 0, %s377
      %s379 = sphi 0, %s377
      %s380 = sphi 0, %s379
      %s394 = sphi 0, %s380
      %s398 = sphi 0, %s398
      %s400 = sphi 0, %s398
      %s401 = sphi 0, %s400
      %s415 = sphi 0, %s401
      %s419 = sphi 0, %s419
      %s421 = sphi 0, %s419
      %s422 = sphi 0, %s421
      %s436 = sphi 0, %s422
      %s440 = sphi 0, %s440
      %s442 = sphi 0, %s440
      %s443 = sphi 0, %s442
      %s457 = sphi 0, %s443
      %s461 = sphi 0, %s461
      %s463 = sphi 0, %s461
      %s464 = sphi 0, %s463
      %s478 = sphi 0, %s464
      %s482 = sphi 0, %s482
      %s484 = sphi 0, %s482
      %s485 = sphi 0, %s484
      %s499 = sphi 0, %s485
      %s503 = sphi 0, %s503
      %s505 = sphi 0, %s503
      %s506 = sphi 0, %s505
      %s520 = sphi 0, %s506
      %s524 = sphi 0, %s524
      %s526 = sphi 0, %s524
      %s527 = sphi 0, %s526
      %s541 = sphi 0, %s527
      %s545 = sphi 0, %s545
      %s547 = sphi 0, %s545
      %s548 = sphi 0, %s547
      %s562 = sphi 0, %s548
      %s566 = sphi 0, %s566
      %s568 = sphi 0, %s566
      %s569 = sphi 0, %s568
      %s583 = sphi 0, %s569
      %s589 = sphi 0, %s591
      %s592 = sphi 0, %s589
      %s593 = sphi 0, %s592
      %s609 = sphi 0, %s593
      %s615 = sphi 0, %s617
      %s618 = sphi 0, %s615
      %s619 = sphi 0, %s618
      %s635 = sphi 0, %s619
    $region4: #{tpu_custom_call.1} parent=1 // loop_header_branch
      %58 = sbr.rel (%p56) target = $region8
    $region5: #{tpu_custom_call.1} parent=1 // loop_body
      %s60 = ssub.s32 %s55, 1
      %s61 = ssub.s32 %s55, 2
      %s62 = sadd.s32 %s55, 1
      %s63 = ssub.s32 %s55, %s62
      %p64 = scmp.eq.s32.totalorder %s63, 0
      %s66 = sadd.s32 %s65, 1
      %s67 = scalar_select %p64, %s65, %s66
      %p70 = pneg %p64
      %p71 = scmp.eq.s32.totalorder %s55, 1
      %p72 = por %p70, %p71
      %p73 = scmp.ne.s32.totalorder %s65, %s68
      %p74 = scmp.eq.s32.totalorder %s55, 0
      %p75 = por %p73, %p74
      %p76 = scmp.ne.s32.totalorder %s65, %s68
      %p77 = scmp.eq.s32.totalorder %s60, 1
      %p78 = por %p76, %p77
      %p79 = scmp.ne.s32.totalorder %s68, %s69
      %p80 = scmp.eq.s32.totalorder %s60, 0
      %p81 = por %p79, %p80
      %p82 = scmp.ne.s32.totalorder %s68, %s69
      %p83 = scmp.eq.s32.totalorder %s61, 1
      %p84 = por %p82, %p83
      %p86 = scmp.ne.s32.totalorder %s69, %s85
      %p87 = scmp.eq.s32.totalorder %s61, 0
      %p88 = por %p86, %p87
      %s89 = ssub.s32 %s55, %s62
      %p90 = scmp.eq.s32.totalorder %s89, 0
      %s92 = sadd.s32 %s91, 1
      %s93 = scalar_select %p90, %s91, %s92
      %p96 = pneg %p90
      %p97 = scmp.eq.s32.totalorder %s55, 1
      %p98 = por %p96, %p97
      %p99 = scmp.ne.s32.totalorder %s91, %s94
      %p100 = scmp.eq.s32.totalorder %s55, 0
      %p101 = por %p99, %p100
      %p102 = scmp.ne.s32.totalorder %s91, %s94
      %p103 = scmp.eq.s32.totalorder %s60, 1
      %p104 = por %p102, %p103
      %p105 = scmp.ne.s32.totalorder %s94, %s95
      %p106 = scmp.eq.s32.totalorder %s60, 0
      %p107 = por %p105, %p106
      %p108 = scmp.ne.s32.totalorder %s94, %s95
      %p109 = scmp.eq.s32.totalorder %s61, 1
      %p110 = por %p108, %p109
      %p112 = scmp.ne.s32.totalorder %s95, %s111
      %p113 = scmp.eq.s32.totalorder %s61, 0
      %p114 = por %p112, %p113
      %s115 = ssub.s32 %s55, %s62
      %p116 = scmp.eq.s32.totalorder %s115, 0
      %s118 = sadd.s32 %s117, 1
      %s119 = scalar_select %p116, %s117, %s118
      %p122 = pneg %p116
      %p123 = scmp.eq.s32.totalorder %s55, 1
      %p124 = por %p122, %p123
      %p125 = scmp.ne.s32.totalorder %s117, %s120
      %p126 = scmp.eq.s32.totalorder %s55, 0
      %p127 = por %p125, %p126
      %p128 = scmp.ne.s32.totalorder %s117, %s120
      %p129 = scmp.eq.s32.totalorder %s60, 1
      %p130 = por %p128, %p129
      %p131 = scmp.ne.s32.totalorder %s120, %s121
      %p132 = scmp.eq.s32.totalorder %s60, 0
      %p133 = por %p131, %p132
      %p134 = scmp.ne.s32.totalorder %s120, %s121
      %p135 = scmp.eq.s32.totalorder %s61, 1
      %p136 = por %p134, %p135
      %p138 = scmp.ne.s32.totalorder %s121, %s137
      %p139 = scmp.eq.s32.totalorder %s61, 0
      %p140 = por %p138, %p139
      %s141 = ssub.s32 %s55, %s62
      %p142 = scmp.eq.s32.totalorder %s141, 0
      %s144 = sadd.s32 %s143, 1
      %s145 = scalar_select %p142, %s143, %s144
      %p148 = pneg %p142
      %p149 = scmp.eq.s32.totalorder %s55, 1
      %p150 = por %p148, %p149
      %p151 = scmp.ne.s32.totalorder %s143, %s146
      %p152 = scmp.eq.s32.totalorder %s55, 0
      %p153 = por %p151, %p152
      %p154 = scmp.ne.s32.totalorder %s143, %s146
      %p155 = scmp.eq.s32.totalorder %s60, 1
      %p156 = por %p154, %p155
      %p157 = scmp.ne.s32.totalorder %s146, %s147
      %p158 = scmp.eq.s32.totalorder %s60, 0
      %p159 = por %p157, %p158
      %p160 = scmp.ne.s32.totalorder %s146, %s147
      %p161 = scmp.eq.s32.totalorder %s61, 1
      %p162 = por %p160, %p161
      %p164 = scmp.ne.s32.totalorder %s147, %s163
      %p165 = scmp.eq.s32.totalorder %s61, 0
      %p166 = por %p164, %p165
      %s168 = sadd.s32 %s167, 1
      %p171 = scmp.eq.s32.totalorder %s55, 1
      %p172 = scmp.ne.s32.totalorder %s167, %s169
      %p173 = scmp.eq.s32.totalorder %s55, 0
      %p174 = por %p172, %p173
      %p175 = scmp.ne.s32.totalorder %s167, %s169
      %p176 = scmp.eq.s32.totalorder %s60, 1
      %p177 = por %p175, %p176
      %p178 = scmp.ne.s32.totalorder %s169, %s170
      %p179 = scmp.eq.s32.totalorder %s60, 0
      %p180 = por %p178, %p179
      %p181 = scmp.ne.s32.totalorder %s169, %s170
      %p182 = scmp.eq.s32.totalorder %s61, 1
      %p183 = por %p181, %p182
      %p185 = scmp.ne.s32.totalorder %s170, %s184
      %p186 = scmp.eq.s32.totalorder %s61, 0
      %p187 = por %p185, %p186
      %s189 = sadd.s32 %s188, 1
      %p192 = scmp.eq.s32.totalorder %s55, 1
      %p193 = scmp.ne.s32.totalorder %s188, %s190
      %p194 = scmp.eq.s32.totalorder %s55, 0
      %p195 = por %p193, %p194
      %p196 = scmp.ne.s32.totalorder %s188, %s190
      %p197 = scmp.eq.s32.totalorder %s60, 1
      %p198 = por %p196, %p197
      %p199 = scmp.ne.s32.totalorder %s190, %s191
      %p200 = scmp.eq.s32.totalorder %s60, 0
      %p201 = por %p199, %p200
      %p202 = scmp.ne.s32.totalorder %s190, %s191
      %p203 = scmp.eq.s32.totalorder %s61, 1
      %p204 = por %p202, %p203
      %p206 = scmp.ne.s32.totalorder %s191, %s205
      %p207 = scmp.eq.s32.totalorder %s61, 0
      %p208 = por %p206, %p207
      %s210 = sadd.s32 %s209, 1
      %p213 = scmp.eq.s32.totalorder %s55, 1
      %p214 = scmp.ne.s32.totalorder %s209, %s211
      %p215 = scmp.eq.s32.totalorder %s55, 0
      %p216 = por %p214, %p215
      %p217 = scmp.ne.s32.totalorder %s209, %s211
      %p218 = scmp.eq.s32.totalorder %s60, 1
      %p219 = por %p217, %p218
      %p220 = scmp.ne.s32.totalorder %s211, %s212
      %p221 = scmp.eq.s32.totalorder %s60, 0
      %p222 = por %p220, %p221
      %p223 = scmp.ne.s32.totalorder %s211, %s212
      %p224 = scmp.eq.s32.totalorder %s61, 1
      %p225 = por %p223, %p224
      %p227 = scmp.ne.s32.totalorder %s212, %s226
      %p228 = scmp.eq.s32.totalorder %s61, 0
      %p229 = por %p227, %p228
      %s231 = sadd.s32 %s230, 1
      %p234 = scmp.eq.s32.totalorder %s55, 1
      %p235 = scmp.ne.s32.totalorder %s230, %s232
      %p236 = scmp.eq.s32.totalorder %s55, 0
      %p237 = por %p235, %p236
      %p238 = scmp.ne.s32.totalorder %s230, %s232
      %p239 = scmp.eq.s32.totalorder %s60, 1
      %p240 = por %p238, %p239
      %p241 = scmp.ne.s32.totalorder %s232, %s233
      %p242 = scmp.eq.s32.totalorder %s60, 0
      %p243 = por %p241, %p242
      %p244 = scmp.ne.s32.totalorder %s232, %s233
      %p245 = scmp.eq.s32.totalorder %s61, 1
      %p246 = por %p244, %p245
      %p248 = scmp.ne.s32.totalorder %s233, %s247
      %p249 = scmp.eq.s32.totalorder %s61, 0
      %p250 = por %p248, %p249
      %s252 = sadd.s32 %s251, 1
      %p255 = scmp.eq.s32.totalorder %s55, 1
      %p256 = scmp.ne.s32.totalorder %s251, %s253
      %p257 = scmp.eq.s32.totalorder %s55, 0
      %p258 = por %p256, %p257
      %p259 = scmp.ne.s32.totalorder %s251, %s253
      %p260 = scmp.eq.s32.totalorder %s60, 1
      %p261 = por %p259, %p260
      %p262 = scmp.ne.s32.totalorder %s253, %s254
      %p263 = scmp.eq.s32.totalorder %s60, 0
      %p264 = por %p262, %p263
      %p265 = scmp.ne.s32.totalorder %s253, %s254
      %p266 = scmp.eq.s32.totalorder %s61, 1
      %p267 = por %p265, %p266
      %p269 = scmp.ne.s32.totalorder %s254, %s268
      %p270 = scmp.eq.s32.totalorder %s61, 0
      %p271 = por %p269, %p270
      %s273 = sadd.s32 %s272, 1
      %p276 = scmp.eq.s32.totalorder %s55, 1
      %p277 = scmp.ne.s32.totalorder %s272, %s274
      %p278 = scmp.eq.s32.totalorder %s55, 0
      %p279 = por %p277, %p278
      %p280 = scmp.ne.s32.totalorder %s272, %s274
      %p281 = scmp.eq.s32.totalorder %s60, 1
      %p282 = por %p280, %p281
      %p283 = scmp.ne.s32.totalorder %s274, %s275
      %p284 = scmp.eq.s32.totalorder %s60, 0
      %p285 = por %p283, %p284
      %p286 = scmp.ne.s32.totalorder %s274, %s275
      %p287 = scmp.eq.s32.totalorder %s61, 1
      %p288 = por %p286, %p287
      %p290 = scmp.ne.s32.totalorder %s275, %s289
      %p291 = scmp.eq.s32.totalorder %s61, 0
      %p292 = por %p290, %p291
      %s294 = sadd.s32 %s293, 1
      %p297 = scmp.eq.s32.totalorder %s55, 1
      %p298 = scmp.ne.s32.totalorder %s293, %s295
      %p299 = scmp.eq.s32.totalorder %s55, 0
      %p300 = por %p298, %p299
      %p301 = scmp.ne.s32.totalorder %s293, %s295
      %p302 = scmp.eq.s32.totalorder %s60, 1
      %p303 = por %p301, %p302
      %p304 = scmp.ne.s32.totalorder %s295, %s296
      %p305 = scmp.eq.s32.totalorder %s60, 0
      %p306 = por %p304, %p305
      %p307 = scmp.ne.s32.totalorder %s295, %s296
      %p308 = scmp.eq.s32.totalorder %s61, 1
      %p309 = por %p307, %p308
      %p311 = scmp.ne.s32.totalorder %s296, %s310
      %p312 = scmp.eq.s32.totalorder %s61, 0
      %p313 = por %p311, %p312
      %s315 = sadd.s32 %s314, 1
      %p318 = scmp.eq.s32.totalorder %s55, 1
      %p319 = scmp.ne.s32.totalorder %s314, %s316
      %p320 = scmp.eq.s32.totalorder %s55, 0
      %p321 = por %p319, %p320
      %p322 = scmp.ne.s32.totalorder %s314, %s316
      %p323 = scmp.eq.s32.totalorder %s60, 1
      %p324 = por %p322, %p323
      %p325 = scmp.ne.s32.totalorder %s316, %s317
      %p326 = scmp.eq.s32.totalorder %s60, 0
      %p327 = por %p325, %p326
      %p328 = scmp.ne.s32.totalorder %s316, %s317
      %p329 = scmp.eq.s32.totalorder %s61, 1
      %p330 = por %p328, %p329
      %p332 = scmp.ne.s32.totalorder %s317, %s331
      %p333 = scmp.eq.s32.totalorder %s61, 0
      %p334 = por %p332, %p333
      %s336 = sadd.s32 %s335, 1
      %p339 = scmp.eq.s32.totalorder %s55, 1
      %p340 = scmp.ne.s32.totalorder %s335, %s337
      %p341 = scmp.eq.s32.totalorder %s55, 0
      %p342 = por %p340, %p341
      %p343 = scmp.ne.s32.totalorder %s335, %s337
      %p344 = scmp.eq.s32.totalorder %s60, 1
      %p345 = por %p343, %p344
      %p346 = scmp.ne.s32.totalorder %s337, %s338
      %p347 = scmp.eq.s32.totalorder %s60, 0
      %p348 = por %p346, %p347
      %p349 = scmp.ne.s32.totalorder %s337, %s338
      %p350 = scmp.eq.s32.totalorder %s61, 1
      %p351 = por %p349, %p350
      %p353 = scmp.ne.s32.totalorder %s338, %s352
      %p354 = scmp.eq.s32.totalorder %s61, 0
      %p355 = por %p353, %p354
      %s357 = sadd.s32 %s356, 1
      %p360 = scmp.eq.s32.totalorder %s55, 1
      %p361 = scmp.ne.s32.totalorder %s356, %s358
      %p362 = scmp.eq.s32.totalorder %s55, 0
      %p363 = por %p361, %p362
      %p364 = scmp.ne.s32.totalorder %s356, %s358
      %p365 = scmp.eq.s32.totalorder %s60, 1
      %p366 = por %p364, %p365
      %p367 = scmp.ne.s32.totalorder %s358, %s359
      %p368 = scmp.eq.s32.totalorder %s60, 0
      %p369 = por %p367, %p368
      %p370 = scmp.ne.s32.totalorder %s358, %s359
      %p371 = scmp.eq.s32.totalorder %s61, 1
      %p372 = por %p370, %p371
      %p374 = scmp.ne.s32.totalorder %s359, %s373
      %p375 = scmp.eq.s32.totalorder %s61, 0
      %p376 = por %p374, %p375
      %s378 = sadd.s32 %s377, 1
      %p381 = scmp.eq.s32.totalorder %s55, 1
      %p382 = scmp.ne.s32.totalorder %s377, %s379
      %p383 = scmp.eq.s32.totalorder %s55, 0
      %p384 = por %p382, %p383
      %p385 = scmp.ne.s32.totalorder %s377, %s379
      %p386 = scmp.eq.s32.totalorder %s60, 1
      %p387 = por %p385, %p386
      %p388 = scmp.ne.s32.totalorder %s379, %s380
      %p389 = scmp.eq.s32.totalorder %s60, 0
      %p390 = por %p388, %p389
      %p391 = scmp.ne.s32.totalorder %s379, %s380
      %p392 = scmp.eq.s32.totalorder %s61, 1
      %p393 = por %p391, %p392
      %p395 = scmp.ne.s32.totalorder %s380, %s394
      %p396 = scmp.eq.s32.totalorder %s61, 0
      %p397 = por %p395, %p396
      %s399 = sadd.s32 %s398, 1
      %p402 = scmp.eq.s32.totalorder %s55, 1
      %p403 = scmp.ne.s32.totalorder %s398, %s400
      %p404 = scmp.eq.s32.totalorder %s55, 0
      %p405 = por %p403, %p404
      %p406 = scmp.ne.s32.totalorder %s398, %s400
      %p407 = scmp.eq.s32.totalorder %s60, 1
      %p408 = por %p406, %p407
      %p409 = scmp.ne.s32.totalorder %s400, %s401
      %p410 = scmp.eq.s32.totalorder %s60, 0
      %p411 = por %p409, %p410
      %p412 = scmp.ne.s32.totalorder %s400, %s401
      %p413 = scmp.eq.s32.totalorder %s61, 1
      %p414 = por %p412, %p413
      %p416 = scmp.ne.s32.totalorder %s401, %s415
      %p417 = scmp.eq.s32.totalorder %s61, 0
      %p418 = por %p416, %p417
      %s420 = sadd.s32 %s419, 1
      %p423 = scmp.eq.s32.totalorder %s55, 1
      %p424 = scmp.ne.s32.totalorder %s419, %s421
      %p425 = scmp.eq.s32.totalorder %s55, 0
      %p426 = por %p424, %p425
      %p427 = scmp.ne.s32.totalorder %s419, %s421
      %p428 = scmp.eq.s32.totalorder %s60, 1
      %p429 = por %p427, %p428
      %p430 = scmp.ne.s32.totalorder %s421, %s422
      %p431 = scmp.eq.s32.totalorder %s60, 0
      %p432 = por %p430, %p431
      %p433 = scmp.ne.s32.totalorder %s421, %s422
      %p434 = scmp.eq.s32.totalorder %s61, 1
      %p435 = por %p433, %p434
      %p437 = scmp.ne.s32.totalorder %s422, %s436
      %p438 = scmp.eq.s32.totalorder %s61, 0
      %p439 = por %p437, %p438
      %s441 = sadd.s32 %s440, 1
      %p444 = scmp.eq.s32.totalorder %s55, 1
      %p445 = scmp.ne.s32.totalorder %s440, %s442
      %p446 = scmp.eq.s32.totalorder %s55, 0
      %p447 = por %p445, %p446
      %p448 = scmp.ne.s32.totalorder %s440, %s442
      %p449 = scmp.eq.s32.totalorder %s60, 1
      %p450 = por %p448, %p449
      %p451 = scmp.ne.s32.totalorder %s442, %s443
      %p452 = scmp.eq.s32.totalorder %s60, 0
      %p453 = por %p451, %p452
      %p454 = scmp.ne.s32.totalorder %s442, %s443
      %p455 = scmp.eq.s32.totalorder %s61, 1
      %p456 = por %p454, %p455
      %p458 = scmp.ne.s32.totalorder %s443, %s457
      %p459 = scmp.eq.s32.totalorder %s61, 0
      %p460 = por %p458, %p459
      %s462 = sadd.s32 %s461, 1
      %p465 = scmp.eq.s32.totalorder %s55, 1
      %p466 = scmp.ne.s32.totalorder %s461, %s463
      %p467 = scmp.eq.s32.totalorder %s55, 0
      %p468 = por %p466, %p467
      %p469 = scmp.ne.s32.totalorder %s461, %s463
      %p470 = scmp.eq.s32.totalorder %s60, 1
      %p471 = por %p469, %p470
      %p472 = scmp.ne.s32.totalorder %s463, %s464
      %p473 = scmp.eq.s32.totalorder %s60, 0
      %p474 = por %p472, %p473
      %p475 = scmp.ne.s32.totalorder %s463, %s464
      %p476 = scmp.eq.s32.totalorder %s61, 1
      %p477 = por %p475, %p476
      %p479 = scmp.ne.s32.totalorder %s464, %s478
      %p480 = scmp.eq.s32.totalorder %s61, 0
      %p481 = por %p479, %p480
      %s483 = sadd.s32 %s482, 1
      %p486 = scmp.eq.s32.totalorder %s55, 1
      %p487 = scmp.ne.s32.totalorder %s482, %s484
      %p488 = scmp.eq.s32.totalorder %s55, 0
      %p489 = por %p487, %p488
      %p490 = scmp.ne.s32.totalorder %s482, %s484
      %p491 = scmp.eq.s32.totalorder %s60, 1
      %p492 = por %p490, %p491
      %p493 = scmp.ne.s32.totalorder %s484, %s485
      %p494 = scmp.eq.s32.totalorder %s60, 0
      %p495 = por %p493, %p494
      %p496 = scmp.ne.s32.totalorder %s484, %s485
      %p497 = scmp.eq.s32.totalorder %s61, 1
      %p498 = por %p496, %p497
      %p500 = scmp.ne.s32.totalorder %s485, %s499
      %p501 = scmp.eq.s32.totalorder %s61, 0
      %p502 = por %p500, %p501
      %s504 = sadd.s32 %s503, 1
      %p507 = scmp.eq.s32.totalorder %s55, 1
      %p508 = scmp.ne.s32.totalorder %s503, %s505
      %p509 = scmp.eq.s32.totalorder %s55, 0
      %p510 = por %p508, %p509
      %p511 = scmp.ne.s32.totalorder %s503, %s505
      %p512 = scmp.eq.s32.totalorder %s60, 1
      %p513 = por %p511, %p512
      %p514 = scmp.ne.s32.totalorder %s505, %s506
      %p515 = scmp.eq.s32.totalorder %s60, 0
      %p516 = por %p514, %p515
      %p517 = scmp.ne.s32.totalorder %s505, %s506
      %p518 = scmp.eq.s32.totalorder %s61, 1
      %p519 = por %p517, %p518
      %p521 = scmp.ne.s32.totalorder %s506, %s520
      %p522 = scmp.eq.s32.totalorder %s61, 0
      %p523 = por %p521, %p522
      %s525 = sadd.s32 %s524, 1
      %p528 = scmp.eq.s32.totalorder %s55, 1
      %p529 = scmp.ne.s32.totalorder %s524, %s526
      %p530 = scmp.eq.s32.totalorder %s55, 0
      %p531 = por %p529, %p530
      %p532 = scmp.ne.s32.totalorder %s524, %s526
      %p533 = scmp.eq.s32.totalorder %s60, 1
      %p534 = por %p532, %p533
      %p535 = scmp.ne.s32.totalorder %s526, %s527
      %p536 = scmp.eq.s32.totalorder %s60, 0
      %p537 = por %p535, %p536
      %p538 = scmp.ne.s32.totalorder %s526, %s527
      %p539 = scmp.eq.s32.totalorder %s61, 1
      %p540 = por %p538, %p539
      %p542 = scmp.ne.s32.totalorder %s527, %s541
      %p543 = scmp.eq.s32.totalorder %s61, 0
      %p544 = por %p542, %p543
      %s546 = sadd.s32 %s545, 1
      %p549 = scmp.eq.s32.totalorder %s55, 1
      %p550 = scmp.ne.s32.totalorder %s545, %s547
      %p551 = scmp.eq.s32.totalorder %s55, 0
      %p552 = por %p550, %p551
      %p553 = scmp.ne.s32.totalorder %s545, %s547
      %p554 = scmp.eq.s32.totalorder %s60, 1
      %p555 = por %p553, %p554
      %p556 = scmp.ne.s32.totalorder %s547, %s548
      %p557 = scmp.eq.s32.totalorder %s60, 0
      %p558 = por %p556, %p557
      %p559 = scmp.ne.s32.totalorder %s547, %s548
      %p560 = scmp.eq.s32.totalorder %s61, 1
      %p561 = por %p559, %p560
      %p563 = scmp.ne.s32.totalorder %s548, %s562
      %p564 = scmp.eq.s32.totalorder %s61, 0
      %p565 = por %p563, %p564
      %s567 = sadd.s32 %s566, 1
      %p570 = scmp.eq.s32.totalorder %s55, 1
      %p571 = scmp.ne.s32.totalorder %s566, %s568
      %p572 = scmp.eq.s32.totalorder %s55, 0
      %p573 = por %p571, %p572
      %p574 = scmp.ne.s32.totalorder %s566, %s568
      %p575 = scmp.eq.s32.totalorder %s60, 1
      %p576 = por %p574, %p575
      %p577 = scmp.ne.s32.totalorder %s568, %s569
      %p578 = scmp.eq.s32.totalorder %s60, 0
      %p579 = por %p577, %p578
      %p580 = scmp.ne.s32.totalorder %s568, %s569
      %p581 = scmp.eq.s32.totalorder %s61, 1
      %p582 = por %p580, %p581
      %p584 = scmp.ne.s32.totalorder %s569, %s583
      %p585 = scmp.eq.s32.totalorder %s61, 0
      %p586 = por %p584, %p585
      %s587 = ssub.s32 %s55, %s62
      %p588 = scmp.eq.s32.totalorder %s587, 0
      %s590 = sadd.s32 %s589, 1
      %s591 = scalar_select %p588, %s589, %s590
      %p594 = pneg %p588
      %p595 = scmp.eq.s32.totalorder %s55, 1
      %p596 = por %p594, %p595
      %p597 = scmp.ne.s32.totalorder %s589, %s592
      %p598 = scmp.eq.s32.totalorder %s55, 0
      %p599 = por %p597, %p598
      %p600 = scmp.ne.s32.totalorder %s589, %s592
      %p601 = scmp.eq.s32.totalorder %s60, 1
      %p602 = por %p600, %p601
      %p603 = scmp.ne.s32.totalorder %s592, %s593
      %p604 = scmp.eq.s32.totalorder %s60, 0
      %p605 = por %p603, %p604
      %p606 = scmp.ne.s32.totalorder %s592, %s593
      %p607 = scmp.eq.s32.totalorder %s61, 1
      %p608 = por %p606, %p607
      %p610 = scmp.ne.s32.totalorder %s593, %s609
      %p611 = scmp.eq.s32.totalorder %s61, 0
      %p612 = por %p610, %p611
      %s613 = ssub.s32 %s55, %s62
      %p614 = scmp.eq.s32.totalorder %s613, 0
      %s616 = sadd.s32 %s615, 1
      %s617 = scalar_select %p614, %s615, %s616
      %p620 = pneg %p614
      %p621 = scmp.eq.s32.totalorder %s55, 1
      %p622 = por %p620, %p621
      %p623 = scmp.ne.s32.totalorder %s615, %s618
      %p624 = scmp.eq.s32.totalorder %s55, 0
      %p625 = por %p623, %p624
      %p626 = scmp.ne.s32.totalorder %s615, %s618
      %p627 = scmp.eq.s32.totalorder %s60, 1
      %p628 = por %p626, %p627
      %p629 = scmp.ne.s32.totalorder %s618, %s619
      %p630 = scmp.eq.s32.totalorder %s60, 0
      %p631 = por %p629, %p630
      %p632 = scmp.ne.s32.totalorder %s618, %s619
      %p633 = scmp.eq.s32.totalorder %s61, 1
      %p634 = por %p632, %p633
      %p636 = scmp.ne.s32.totalorder %s619, %s635
      %p637 = scmp.eq.s32.totalorder %s61, 0
      %p638 = por %p636, %p637
      %p639 = scmp.le.s32.totalorder 1, %s55
      %p640 = scmp.lt.s32.totalorder %s55, 3
      %p641 = pnand %p639, %p640
      %p642 = pneg %p641
      // Predicated region
      $region9: #{tpu_custom_call.1} parent=5 // pred_check
        _
      $region10: #{tpu_custom_call.1} parent=5 // pred_check_branch
        %644 = sbr.rel (%p641) target = $region12
      $region11: #{tpu_custom_call.1} parent=5 // pred_region
        %s645 = ssub.s32 %s55, 1
        // Predicated region
        $region13: #{tpu_custom_call.1} parent=11 // pred_check
          %p646 = pneg %p180
        $region14: #{tpu_custom_call.1} parent=11 // pred_check_branch
          %648 = sbr.rel (%p646) target = $region16
        $region15: #{tpu_custom_call.1} parent=11 // pred_region
          %s650 = ssub.s32 2048, 2048
          %651 = vsyncadd [#allocation9], %s650
          %s652 = sshll.u32 [#allocation10], 4
          %s653 = int_to_ptr.vmem [resolvable:$true] %s652
          %658 = dma.hbm_to_vmem [thread:$0]  %s4, 2048, %s653, [#allocation9], 128, 128, 8
        $region16: #{tpu_custom_call.1} parent=11 // pred_fallthru
          _
        // Predicated region
        $region17: #{tpu_custom_call.1} parent=11 // pred_check
          %p659 = pneg %p201
        $region18: #{tpu_custom_call.1} parent=11 // pred_check_branch
          %661 = sbr.rel (%p659) target = $region20
        $region19: #{tpu_custom_call.1} parent=11 // pred_region
          %s663 = ssub.s32 16, 16
          %664 = vsyncadd [#allocation12], %s663
          %s666 = sshll.u32 [#allocation11], 4
          %s667 = int_to_ptr.vmem [resolvable:$true] %s666
          %669 = dma.hbm_to_vmem [thread:$0]  %s5, 16, %s667, [#allocation12]
        $region20: #{tpu_custom_call.1} parent=11 // pred_fallthru
          _
        // Predicated region
        $region21: #{tpu_custom_call.1} parent=11 // pred_check
          %p670 = pneg %p222
        $region22: #{tpu_custom_call.1} parent=11 // pred_check_branch
          %672 = sbr.rel (%p670) target = $region24
        $region23: #{tpu_custom_call.1} parent=11 // pred_region
          %s674 = ssub.s32 4096, 4096
          %675 = vsyncadd [#allocation12], %s674
          %s676 = sshll.u32 [#allocation13], 4
          %s677 = int_to_ptr.vmem [resolvable:$true] %s676
          %682 = dma.hbm_to_vmem [thread:$0]  %s6, 4096, %s677, [#allocation12], 128, 128, 8
        $region24: #{tpu_custom_call.1} parent=11 // pred_fallthru
          _
        // Predicated region
        $region25: #{tpu_custom_call.1} parent=11 // pred_check
          %p683 = pneg %p243
        $region26: #{tpu_custom_call.1} parent=11 // pred_check_branch
          %685 = sbr.rel (%p683) target = $region28
        $region27: #{tpu_custom_call.1} parent=11 // pred_region
          %s687 = ssub.s32 16, 16
          %688 = vsyncadd [#allocation15], %s687
          %s690 = sshll.u32 [#allocation14], 4
          %s691 = int_to_ptr.vmem [resolvable:$true] %s690
          %693 = dma.hbm_to_vmem [thread:$0]  %s7, 16, %s691, [#allocation15]
        $region28: #{tpu_custom_call.1} parent=11 // pred_fallthru
          _
        // Predicated region
        $region29: #{tpu_custom_call.1} parent=11 // pred_check
          %p694 = pneg %p264
        $region30: #{tpu_custom_call.1} parent=11 // pred_check_branch
          %696 = sbr.rel (%p694) target = $region32
        $region31: #{tpu_custom_call.1} parent=11 // pred_region
          %s698 = ssub.s32 2048, 2048
          %699 = vsyncadd [#allocation15], %s698
          %s700 = sshll.u32 [#allocation16], 4
          %s701 = int_to_ptr.vmem [resolvable:$true] %s700
          %706 = dma.hbm_to_vmem [thread:$0]  %s8, 2048, %s701, [#allocation15], 128, 128, 8
        $region32: #{tpu_custom_call.1} parent=11 // pred_fallthru
          _
        // Predicated region
        $region33: #{tpu_custom_call.1} parent=11 // pred_check
          %p707 = pneg %p285
        $region34: #{tpu_custom_call.1} parent=11 // pred_check_branch
          %709 = sbr.rel (%p707) target = $region36
        $region35: #{tpu_custom_call.1} parent=11 // pred_region
          %s711 = ssub.s32 16, 16
          %712 = vsyncadd [#allocation18], %s711
          %s714 = sshll.u32 [#allocation17], 4
          %s715 = int_to_ptr.vmem [resolvable:$true] %s714
          %717 = dma.hbm_to_vmem [thread:$0]  %s9, 16, %s715, [#allocation18]
        $region36: #{tpu_custom_call.1} parent=11 // pred_fallthru
          _
        // Predicated region
        $region37: #{tpu_custom_call.1} parent=11 // pred_check
          %p718 = pneg %p306
        $region38: #{tpu_custom_call.1} parent=11 // pred_check_branch
          %720 = sbr.rel (%p718) target = $region40
        $region39: #{tpu_custom_call.1} parent=11 // pred_region
          %s722 = ssub.s32 2048, 2048
          %723 = vsyncadd [#allocation18], %s722
          %s724 = sshll.u32 [#allocation19], 4
          %s725 = int_to_ptr.vmem [resolvable:$true] %s724
          %730 = dma.hbm_to_vmem [thread:$0]  %s10, 2048, %s725, [#allocation18], 128, 128, 8
        $region40: #{tpu_custom_call.1} parent=11 // pred_fallthru
          _
        // Predicated region
        $region41: #{tpu_custom_call.1} parent=11 // pred_check
          %p731 = pneg %p327
        $region42: #{tpu_custom_call.1} parent=11 // pred_check_branch
          %733 = sbr.rel (%p731) target = $region44
        $region43: #{tpu_custom_call.1} parent=11 // pred_region
          %s735 = ssub.s32 16, 16
          %736 = vsyncadd [#allocation21], %s735
          %s738 = sshll.u32 [#allocation20], 4
          %s739 = int_to_ptr.vmem [resolvable:$true] %s738
          %741 = dma.hbm_to_vmem [thread:$0]  %s11, 16, %s739, [#allocation21]
        $region44: #{tpu_custom_call.1} parent=11 // pred_fallthru
          _
        // Predicated region
        $region45: #{tpu_custom_call.1} parent=11 // pred_check
          %p742 = pneg %p348
        $region46: #{tpu_custom_call.1} parent=11 // pred_check_branch
          %744 = sbr.rel (%p742) target = $region48
        $region47: #{tpu_custom_call.1} parent=11 // pred_region
          %s746 = ssub.s32 2048, 2048
          %747 = vsyncadd [#allocation21], %s746
          %s748 = sshll.u32 [#allocation22], 4
          %s749 = int_to_ptr.vmem [resolvable:$true] %s748
          %754 = dma.hbm_to_vmem [thread:$0]  %s12, 2048, %s749, [#allocation21], 128, 128, 8
        $region48: #{tpu_custom_call.1} parent=11 // pred_fallthru
          _
        // Predicated region
        $region49: #{tpu_custom_call.1} parent=11 // pred_check
          %p755 = pneg %p369
        $region50: #{tpu_custom_call.1} parent=11 // pred_check_branch
          %757 = sbr.rel (%p755) target = $region52
        $region51: #{tpu_custom_call.1} parent=11 // pred_region
          %s759 = ssub.s32 16, 16
          %760 = vsyncadd [#allocation24], %s759
          %s762 = sshll.u32 [#allocation23], 4
          %s763 = int_to_ptr.vmem [resolvable:$true] %s762
          %765 = dma.hbm_to_vmem [thread:$0]  %s13, 16, %s763, [#allocation24]
        $region52: #{tpu_custom_call.1} parent=11 // pred_fallthru
          _
        // Predicated region
        $region53: #{tpu_custom_call.1} parent=11 // pred_check
          %p766 = pneg %p390
        $region54: #{tpu_custom_call.1} parent=11 // pred_check_branch
          %768 = sbr.rel (%p766) target = $region56
        $region55: #{tpu_custom_call.1} parent=11 // pred_region
          %s770 = ssub.s32 6144, 6144
          %771 = vsyncadd [#allocation24], %s770
          %s772 = sshll.u32 [#allocation25], 4
          %s773 = int_to_ptr.vmem [resolvable:$true] %s772
          %778 = dma.hbm_to_vmem [thread:$0]  %s14, 6144, %s773, [#allocation24], 128, 128, 8
        $region56: #{tpu_custom_call.1} parent=11 // pred_fallthru
          _
        // Predicated region
        $region57: #{tpu_custom_call.1} parent=11 // pred_check
          %p779 = pneg %p411
        $region58: #{tpu_custom_call.1} parent=11 // pred_check_branch
          %781 = sbr.rel (%p779) target = $region60
        $region59: #{tpu_custom_call.1} parent=11 // pred_region
          %s783 = ssub.s32 512, 512
          %784 = vsyncadd [#allocation27], %s783
          %s785 = sshll.u32 [#allocation26], 4
          %s786 = int_to_ptr.vmem [resolvable:$true] %s785
          %791 = dma.hbm_to_vmem [thread:$0]  %s15, 512, %s786, [#allocation27], 128, 128, 8
        $region60: #{tpu_custom_call.1} parent=11 // pred_fallthru
          _
        // Predicated region
        $region61: #{tpu_custom_call.1} parent=11 // pred_check
          %p792 = pneg %p432
        $region62: #{tpu_custom_call.1} parent=11 // pred_check_branch
          %794 = sbr.rel (%p792) target = $region64
        $region63: #{tpu_custom_call.1} parent=11 // pred_region
          %s796 = ssub.s32 16, 16
          %797 = vsyncadd [#allocation27], %s796
          %s799 = sshll.u32 [#allocation28], 4
          %s800 = int_to_ptr.vmem [resolvable:$true] %s799
          %802 = dma.hbm_to_vmem [thread:$0]  %s16, 16, %s800, [#allocation27]
        $region64: #{tpu_custom_call.1} parent=11 // pred_fallthru
          _
        // Predicated region
        $region65: #{tpu_custom_call.1} parent=11 // pred_check
          %p803 = pneg %p453
        $region66: #{tpu_custom_call.1} parent=11 // pred_check_branch
          %805 = sbr.rel (%p803) target = $region68
        $region67: #{tpu_custom_call.1} parent=11 // pred_region
          %s807 = ssub.s32 16, 16
          %808 = vsyncadd [#allocation30], %s807
          %s810 = sshll.u32 [#allocation29], 4
          %s811 = int_to_ptr.vmem [resolvable:$true] %s810
          %813 = dma.hbm_to_vmem [thread:$0]  %s17, 16, %s811, [#allocation30]
        $region68: #{tpu_custom_call.1} parent=11 // pred_fallthru
          _
        // Predicated region
        $region69: #{tpu_custom_call.1} parent=11 // pred_check
          %p814 = pneg %p474
        $region70: #{tpu_custom_call.1} parent=11 // pred_check_branch
          %816 = sbr.rel (%p814) target = $region72
        $region71: #{tpu_custom_call.1} parent=11 // pred_region
          _
        $region72: #{tpu_custom_call.1} parent=11 // pred_fallthru
          _
        // Predicated region
        $region73: #{tpu_custom_call.1} parent=11 // pred_check
          %p817 = pneg %p495
        $region74: #{tpu_custom_call.1} parent=11 // pred_check_branch
          %819 = sbr.rel (%p817) target = $region76
        $region75: #{tpu_custom_call.1} parent=11 // pred_region
          %s821 = ssub.s32 512, 512
          %822 = vsyncadd [#allocation30], %s821
          %s823 = sshll.u32 [#allocation31], 4
          %s824 = int_to_ptr.vmem [resolvable:$true] %s823
          %829 = dma.hbm_to_vmem [thread:$0]  %s19, 512, %s824, [#allocation30], 128, 128, 8
        $region76: #{tpu_custom_call.1} parent=11 // pred_fallthru
          _
        // Predicated region
        $region77: #{tpu_custom_call.1} parent=11 // pred_check
          %p830 = pneg %p516
        $region78: #{tpu_custom_call.1} parent=11 // pred_check_branch
          %832 = sbr.rel (%p830) target = $region80
        $region79: #{tpu_custom_call.1} parent=11 // pred_region
          _
        $region80: #{tpu_custom_call.1} parent=11 // pred_fallthru
          _
        // Predicated region
        $region81: #{tpu_custom_call.1} parent=11 // pred_check
          %p833 = pneg %p537
        $region82: #{tpu_custom_call.1} parent=11 // pred_check_branch
          %835 = sbr.rel (%p833) target = $region84
        $region83: #{tpu_custom_call.1} parent=11 // pred_region
          _
        $region84: #{tpu_custom_call.1} parent=11 // pred_fallthru
          _
        // Predicated region
        $region85: #{tpu_custom_call.1} parent=11 // pred_check
          %p836 = pneg %p558
        $region86: #{tpu_custom_call.1} parent=11 // pred_check_branch
          %838 = sbr.rel (%p836) target = $region88
        $region87: #{tpu_custom_call.1} parent=11 // pred_region
          %s840 = ssub.s32 512, 512
          %841 = vsyncadd [#allocation33], %s840
          %s842 = sshll.u32 [#allocation32], 4
          %s843 = int_to_ptr.vmem [resolvable:$true] %s842
          %848 = dma.hbm_to_vmem [thread:$0]  %s22, 512, %s843, [#allocation33], 128, 128, 8
        $region88: #{tpu_custom_call.1} parent=11 // pred_fallthru
          _
        // Predicated region
        $region89: #{tpu_custom_call.1} parent=11 // pred_check
          %p849 = pneg %p579
        $region90: #{tpu_custom_call.1} parent=11 // pred_check_branch
          %851 = sbr.rel (%p849) target = $region92
        $region91: #{tpu_custom_call.1} parent=11 // pred_region
          _
        $region92: #{tpu_custom_call.1} parent=11 // pred_fallthru
          _
      $region12: #{tpu_custom_call.1} parent=5 // pred_fallthru
        _
      %p852 = scmp.lt.s32.totalorder %s55, 2
      // Predicated region
      $region93: #{tpu_custom_call.1} parent=5 // pred_check
        %p853 = pneg %p852
      $region94: #{tpu_custom_call.1} parent=5 // pred_check_branch
        %855 = sbr.rel (%p853) target = $region96
      $region95: #{tpu_custom_call.1} parent=5 // pred_region
        // Predicated region
        $region97: #{tpu_custom_call.1} parent=95 // pred_check
          %p856 = pneg %p75
        $region98: #{tpu_custom_call.1} parent=95 // pred_check_branch
          %858 = sbr.rel (%p856) target = $region100
        $region99: #{tpu_custom_call.1} parent=95 // pred_region
          %s859 = sand.u32 %s65, 1
          %s860 = scalar_lea.sflag [#allocation3], %s859
          %s861 = sand.u32 %s65, 1
          %s862 = smul.addr %s861, 64
          %s863 = scalar_lea.vmem [#allocation2], %s862
          %s864 = smul.u32 8, %s55
          %s866 = ssub.s32 1024, 1024
          %867 = vsyncadd %s860, %s866
          %s868 = smul.addr %s864, 128
          %s869 = scalar_lea.hbm %s0, %s868
          %s870 = sshll.u32 %s863, 4
          %s871 = int_to_ptr.vmem [resolvable:$true] %s870
          %876 = dma.hbm_to_vmem [thread:$0]  %s869, 1024, %s871, %s860, 128, 128, 8
        $region100: #{tpu_custom_call.1} parent=95 // pred_fallthru
          _
        // Predicated region
        $region101: #{tpu_custom_call.1} parent=95 // pred_check
          %p877 = pneg %p101
        $region102: #{tpu_custom_call.1} parent=95 // pred_check_branch
          %879 = sbr.rel (%p877) target = $region104
        $region103: #{tpu_custom_call.1} parent=95 // pred_region
          %s880 = sand.u32 %s55, 1
          %s881 = scalar_lea.sflag [#allocation6], %s880
          %s882 = sand.u32 %s91, 1
          %s883 = smul.addr %s882, 128
          %s884 = scalar_lea.vmem [#allocation5], %s883
          %s885 = smul.u32 8, %s55
          %s887 = ssub.s32 2048, 2048
          %888 = vsyncadd %s881, %s887
          %s889 = smul.addr %s885, 2
          %s890 = smul.addr %s889, 128
          %s891 = scalar_lea.hbm %s1, %s890
          %s892 = sshll.u32 %s884, 4
          %s893 = int_to_ptr.vmem [resolvable:$true] %s892
          %898 = dma.hbm_to_vmem [thread:$0]  %s891, 2048, %s893, %s881, 256, 256, 16
        $region104: #{tpu_custom_call.1} parent=95 // pred_fallthru
          _
        // Predicated region
        $region105: #{tpu_custom_call.1} parent=95 // pred_check
          %p899 = pneg %p127
        $region106: #{tpu_custom_call.1} parent=95 // pred_check_branch
          %901 = sbr.rel (%p899) target = $region108
        $region107: #{tpu_custom_call.1} parent=95 // pred_region
          %s902 = sand.u32 %s55, 1
          %s903 = scalar_lea.sflag [#allocation6], %s902
          %s904 = sand.u32 %s117, 1
          %s905 = smul.addr %s904, 256
          %s906 = scalar_lea.vmem [#allocation7], %s905
          %s907 = smul.u32 8, %s55
          %s909 = ssub.s32 4096, 4096
          %910 = vsyncadd %s903, %s909
          %s911 = smul.addr %s907, 4
          %s912 = smul.addr %s911, 128
          %s913 = scalar_lea.hbm %s2, %s912
          %s914 = sshll.u32 %s906, 4
          %s915 = int_to_ptr.vmem [resolvable:$true] %s914
          %920 = dma.hbm_to_vmem [thread:$0]  %s913, 4096, %s915, %s903, 512, 512, 32
        $region108: #{tpu_custom_call.1} parent=95 // pred_fallthru
          _
        // Predicated region
        $region109: #{tpu_custom_call.1} parent=95 // pred_check
          %p921 = pneg %p153
        $region110: #{tpu_custom_call.1} parent=95 // pred_check_branch
          %923 = sbr.rel (%p921) target = $region112
        $region111: #{tpu_custom_call.1} parent=95 // pred_region
          %s924 = sand.u32 %s55, 1
          %s925 = scalar_lea.sflag [#allocation9], %s924
          %s926 = sand.u32 %s143, 1
          %s927 = smul.addr %s926, 64
          %s928 = scalar_lea.vmem [#allocation8], %s927
          %s929 = smul.u32 8, %s55
          %s931 = ssub.s32 1024, 1024
          %932 = vsyncadd %s925, %s931
          %s933 = smul.addr %s929, 128
          %s934 = scalar_lea.hbm %s3, %s933
          %s935 = sshll.u32 %s928, 4
          %s936 = int_to_ptr.vmem [resolvable:$true] %s935
          %941 = dma.hbm_to_vmem [thread:$0]  %s934, 1024, %s936, %s925, 128, 128, 8
        $region112: #{tpu_custom_call.1} parent=95 // pred_fallthru
          _
      $region96: #{tpu_custom_call.1} parent=5 // pred_fallthru
        _
      %p942 = scmp.le.s32.totalorder 1, %s55
      %p943 = scmp.lt.s32.totalorder %s55, 3
      %p944 = pnand %p942, %p943
      %p945 = pneg %p944
      // Predicated region
      $region113: #{tpu_custom_call.1} parent=5 // pred_check
        _
      $region114: #{tpu_custom_call.1} parent=5 // pred_check_branch
        %947 = sbr.rel (%p944) target = $region116
      $region115: #{tpu_custom_call.1} parent=5 // pred_region
        %s948 = ssub.s32 %s55, 1
        %s949 = sand.u32 %s68, 1
        %s950 = scalar_lea.sflag [#allocation3], %s949
        %s951 = sand.u32 %s68, 1
        %s952 = smul.addr %s951, 64
        %s953 = scalar_lea.vmem [#allocation2], %s952
        // Predicated region
        $region117: #{tpu_custom_call.1} parent=115 // pred_check
          %p954 = pneg %p81
        $region118: #{tpu_custom_call.1} parent=115 // pred_check_branch
          %956 = sbr.rel (%p954) target = $region120
        $region119: #{tpu_custom_call.1} parent=115 // pred_region
          %957 = dma.done %s950, 1024
        $region120: #{tpu_custom_call.1} parent=115 // pred_fallthru
          _
        %s958 = sand.u32 %s60, 1
        %s959 = scalar_lea.sflag [#allocation6], %s958
        %s960 = sand.u32 %s94, 1
        %s961 = smul.addr %s960, 128
        %s962 = scalar_lea.vmem [#allocation5], %s961
        // Predicated region
        $region121: #{tpu_custom_call.1} parent=115 // pred_check
          %p963 = pneg %p107
        $region122: #{tpu_custom_call.1} parent=115 // pred_check_branch
          %965 = sbr.rel (%p963) target = $region124
        $region123: #{tpu_custom_call.1} parent=115 // pred_region
          %966 = dma.done %s959, 2048
        $region124: #{tpu_custom_call.1} parent=115 // pred_fallthru
          _
        %s967 = sand.u32 %s60, 1
        %s968 = scalar_lea.sflag [#allocation6], %s967
        %s969 = sand.u32 %s120, 1
        %s970 = smul.addr %s969, 256
        %s971 = scalar_lea.vmem [#allocation7], %s970
        // Predicated region
        $region125: #{tpu_custom_call.1} parent=115 // pred_check
          %p972 = pneg %p133
        $region126: #{tpu_custom_call.1} parent=115 // pred_check_branch
          %974 = sbr.rel (%p972) target = $region128
        $region127: #{tpu_custom_call.1} parent=115 // pred_region
          %975 = dma.done %s968, 4096
        $region128: #{tpu_custom_call.1} parent=115 // pred_fallthru
          _
        %s976 = sand.u32 %s60, 1
        %s977 = scalar_lea.sflag [#allocation9], %s976
        %s978 = sand.u32 %s146, 1
        %s979 = smul.addr %s978, 64
        %s980 = scalar_lea.vmem [#allocation8], %s979
        // Predicated region
        $region129: #{tpu_custom_call.1} parent=115 // pred_check
          %p981 = pneg %p159
        $region130: #{tpu_custom_call.1} parent=115 // pred_check_branch
          %983 = sbr.rel (%p981) target = $region132
        $region131: #{tpu_custom_call.1} parent=115 // pred_region
          %984 = dma.done %s977, 1024
        $region132: #{tpu_custom_call.1} parent=115 // pred_fallthru
          _
        // Predicated region
        $region133: #{tpu_custom_call.1} parent=115 // pred_check
          %p985 = pneg %p180
        $region134: #{tpu_custom_call.1} parent=115 // pred_check_branch
          %987 = sbr.rel (%p985) target = $region136
        $region135: #{tpu_custom_call.1} parent=115 // pred_region
          %988 = dma.done [#allocation9], 2048
        $region136: #{tpu_custom_call.1} parent=115 // pred_fallthru
          _
        // Predicated region
        $region137: #{tpu_custom_call.1} parent=115 // pred_check
          %p989 = pneg %p201
        $region138: #{tpu_custom_call.1} parent=115 // pred_check_branch
          %991 = sbr.rel (%p989) target = $region140
        $region139: #{tpu_custom_call.1} parent=115 // pred_region
          %992 = dma.done [#allocation12], 16
        $region140: #{tpu_custom_call.1} parent=115 // pred_fallthru
          _
        // Predicated region
        $region141: #{tpu_custom_call.1} parent=115 // pred_check
          %p993 = pneg %p222
        $region142: #{tpu_custom_call.1} parent=115 // pred_check_branch
          %995 = sbr.rel (%p993) target = $region144
        $region143: #{tpu_custom_call.1} parent=115 // pred_region
          %996 = dma.done [#allocation12], 4096
        $region144: #{tpu_custom_call.1} parent=115 // pred_fallthru
          _
        // Predicated region
        $region145: #{tpu_custom_call.1} parent=115 // pred_check
          %p997 = pneg %p243
        $region146: #{tpu_custom_call.1} parent=115 // pred_check_branch
          %999 = sbr.rel (%p997) target = $region148
        $region147: #{tpu_custom_call.1} parent=115 // pred_region
          %1000 = dma.done [#allocation15], 16
        $region148: #{tpu_custom_call.1} parent=115 // pred_fallthru
          _
        // Predicated region
        $region149: #{tpu_custom_call.1} parent=115 // pred_check
          %p1001 = pneg %p264
        $region150: #{tpu_custom_call.1} parent=115 // pred_check_branch
          %1003 = sbr.rel (%p1001) target = $region152
        $region151: #{tpu_custom_call.1} parent=115 // pred_region
          %1004 = dma.done [#allocation15], 2048
        $region152: #{tpu_custom_call.1} parent=115 // pred_fallthru
          _
        // Predicated region
        $region153: #{tpu_custom_call.1} parent=115 // pred_check
          %p1005 = pneg %p285
        $region154: #{tpu_custom_call.1} parent=115 // pred_check_branch
          %1007 = sbr.rel (%p1005) target = $region156
        $region155: #{tpu_custom_call.1} parent=115 // pred_region
          %1008 = dma.done [#allocation18], 16
        $region156: #{tpu_custom_call.1} parent=115 // pred_fallthru
          _
        // Predicated region
        $region157: #{tpu_custom_call.1} parent=115 // pred_check
          %p1009 = pneg %p306
        $region158: #{tpu_custom_call.1} parent=115 // pred_check_branch
          %1011 = sbr.rel (%p1009) target = $region160
        $region159: #{tpu_custom_call.1} parent=115 // pred_region
          %1012 = dma.done [#allocation18], 2048
        $region160: #{tpu_custom_call.1} parent=115 // pred_fallthru
          _
        // Predicated region
        $region161: #{tpu_custom_call.1} parent=115 // pred_check
          %p1013 = pneg %p327
        $region162: #{tpu_custom_call.1} parent=115 // pred_check_branch
          %1015 = sbr.rel (%p1013) target = $region164
        $region163: #{tpu_custom_call.1} parent=115 // pred_region
          %1016 = dma.done [#allocation21], 16
        $region164: #{tpu_custom_call.1} parent=115 // pred_fallthru
          _
        // Predicated region
        $region165: #{tpu_custom_call.1} parent=115 // pred_check
          %p1017 = pneg %p348
        $region166: #{tpu_custom_call.1} parent=115 // pred_check_branch
          %1019 = sbr.rel (%p1017) target = $region168
        $region167: #{tpu_custom_call.1} parent=115 // pred_region
          %1020 = dma.done [#allocation21], 2048
        $region168: #{tpu_custom_call.1} parent=115 // pred_fallthru
          _
        // Predicated region
        $region169: #{tpu_custom_call.1} parent=115 // pred_check
          %p1021 = pneg %p369
        $region170: #{tpu_custom_call.1} parent=115 // pred_check_branch
          %1023 = sbr.rel (%p1021) target = $region172
        $region171: #{tpu_custom_call.1} parent=115 // pred_region
          %1024 = dma.done [#allocation24], 16
        $region172: #{tpu_custom_call.1} parent=115 // pred_fallthru
          _
        // Predicated region
        $region173: #{tpu_custom_call.1} parent=115 // pred_check
          %p1025 = pneg %p390
        $region174: #{tpu_custom_call.1} parent=115 // pred_check_branch
          %1027 = sbr.rel (%p1025) target = $region176
        $region175: #{tpu_custom_call.1} parent=115 // pred_region
          %1028 = dma.done [#allocation24], 6144
        $region176: #{tpu_custom_call.1} parent=115 // pred_fallthru
          _
        // Predicated region
        $region177: #{tpu_custom_call.1} parent=115 // pred_check
          %p1029 = pneg %p411
        $region178: #{tpu_custom_call.1} parent=115 // pred_check_branch
          %1031 = sbr.rel (%p1029) target = $region180
        $region179: #{tpu_custom_call.1} parent=115 // pred_region
          %1032 = dma.done [#allocation27], 512
        $region180: #{tpu_custom_call.1} parent=115 // pred_fallthru
          _
        // Predicated region
        $region181: #{tpu_custom_call.1} parent=115 // pred_check
          %p1033 = pneg %p432
        $region182: #{tpu_custom_call.1} parent=115 // pred_check_branch
          %1035 = sbr.rel (%p1033) target = $region184
        $region183: #{tpu_custom_call.1} parent=115 // pred_region
          %1036 = dma.done [#allocation27], 16
        $region184: #{tpu_custom_call.1} parent=115 // pred_fallthru
          _
        // Predicated region
        $region185: #{tpu_custom_call.1} parent=115 // pred_check
          %p1037 = pneg %p453
        $region186: #{tpu_custom_call.1} parent=115 // pred_check_branch
          %1039 = sbr.rel (%p1037) target = $region188
        $region187: #{tpu_custom_call.1} parent=115 // pred_region
          %1040 = dma.done [#allocation30], 16
        $region188: #{tpu_custom_call.1} parent=115 // pred_fallthru
          _
        // Predicated region
        $region189: #{tpu_custom_call.1} parent=115 // pred_check
          %p1041 = pneg %p495
        $region190: #{tpu_custom_call.1} parent=115 // pred_check_branch
          %1043 = sbr.rel (%p1041) target = $region192
        $region191: #{tpu_custom_call.1} parent=115 // pred_region
          %1044 = dma.done [#allocation30], 512
        $region192: #{tpu_custom_call.1} parent=115 // pred_fallthru
          _
        // Predicated region
        $region193: #{tpu_custom_call.1} parent=115 // pred_check
          %p1045 = pneg %p558
        $region194: #{tpu_custom_call.1} parent=115 // pred_check_branch
          %1047 = sbr.rel (%p1045) target = $region196
        $region195: #{tpu_custom_call.1} parent=115 // pred_region
          %1048 = dma.done [#allocation33], 512
        $region196: #{tpu_custom_call.1} parent=115 // pred_fallthru
          _
        %s1049 = sand.u32 %s68, 1
        %s1050 = scalar_lea.sflag [#allocation3], %s1049
        %s1051 = sand.u32 %s68, 1
        %s1052 = smul.addr %s1051, 64
        %s1053 = scalar_lea.vmem [#allocation2], %s1052
        %p1054 = pneg %p81
        %p1055 = pneg %p78
        %s1056 = sand.u32 %s60, 1
        %s1057 = scalar_lea.sflag [#allocation6], %s1056
        %s1058 = sand.u32 %s94, 1
        %s1059 = smul.addr %s1058, 128
        %s1060 = scalar_lea.vmem [#allocation5], %s1059
        %p1061 = pneg %p107
        %p1062 = pneg %p104
        %s1063 = sand.u32 %s60, 1
        %s1064 = scalar_lea.sflag [#allocation6], %s1063
        %s1065 = sand.u32 %s120, 1
        %s1066 = smul.addr %s1065, 256
        %s1067 = scalar_lea.vmem [#allocation7], %s1066
        %p1068 = pneg %p133
        %p1069 = pneg %p130
        %s1070 = sand.u32 %s60, 1
        %s1071 = scalar_lea.sflag [#allocation9], %s1070
        %s1072 = sand.u32 %s146, 1
        %s1073 = smul.addr %s1072, 64
        %s1074 = scalar_lea.vmem [#allocation8], %s1073
        %p1075 = pneg %p159
        %p1076 = pneg %p156
        %p1077 = pneg %p180
        %p1078 = pneg %p177
        %p1079 = pneg %p201
        %p1080 = pneg %p198
        %p1081 = pneg %p222
        %p1082 = pneg %p219
        %p1083 = pneg %p243
        %p1084 = pneg %p240
        %p1085 = pneg %p264
        %p1086 = pneg %p261
        %p1087 = pneg %p285
        %p1088 = pneg %p282
        %p1089 = pneg %p306
        %p1090 = pneg %p303
        %p1091 = pneg %p327
        %p1092 = pneg %p324
        %p1093 = pneg %p348
        %p1094 = pneg %p345
        %p1095 = pneg %p369
        %p1096 = pneg %p366
        %p1097 = pneg %p390
        %p1098 = pneg %p387
        %p1099 = pneg %p411
        %p1100 = pneg %p408
        %p1101 = pneg %p432
        %p1102 = pneg %p429
        %p1103 = pneg %p453
        %p1104 = pneg %p450
        %p1105 = pneg %p474
        %p1106 = pneg %p471
        %p1107 = pneg %p495
        %p1108 = pneg %p492
        %p1109 = pneg %p516
        %p1110 = pneg %p513
        %p1111 = pneg %p537
        %p1112 = pneg %p534
        %p1113 = pneg %p558
        %p1114 = pneg %p555
        %p1115 = pneg %p579
        %p1116 = pneg %p576
        %p1117 = pneg %p605
        %p1118 = pneg %p602
        %s1119 = sand.u32 %s592, 1
        %s1120 = scalar_lea.sflag [#allocation4], %s1119
        %s1121 = sand.u32 %s592, 1
        %s1122 = smul.addr %s1121, 8
        %s1123 = scalar_lea.vmem [#allocation34], %s1122
        %p1124 = pneg %p631
        %p1125 = pneg %p628
        %s1126 = sand.u32 %s618, 1
        %s1127 = scalar_lea.sflag [#allocation36], %s1126
        %s1128 = sand.u32 %s618, 1
        %s1129 = smul.addr %s1128, 16
        %s1130 = scalar_lea.vmem [#allocation35], %s1129
        %s1131 = smul.u32 8, %s60
        %s1132 = smul.u32 8, %s60
        %s1133 = smul.u32 8, %s60
        %s1134 = smul.u32 8, %s60
        %v1135 = vld [vmem:[%s953] sm:$0xff]
        %v1136 = vld [vmem:[%s953 + $0x8] sm:$0xff]
        %v1137 = vld [vmem:[%s953 + $0x10] sm:$0xff]
        %v1138 = vld [vmem:[%s953 + $0x18] sm:$0xff]
        %v1139 = vld [vmem:[%s953 + $0x20] sm:$0xff]
        %v1140 = vld [vmem:[%s953 + $0x28] sm:$0xff]
        %v1141 = vld [vmem:[%s953 + $0x30] sm:$0xff]
        %v1142 = vld [vmem:[%s953 + $0x38] sm:$0xff]
        %v1143 = vld [vmem:[#allocation10] sm:$0xff]
        %v1144 = vld [vmem:[#allocation10 + $0x8] sm:$0xff]
        %v1145 = vld [vmem:[#allocation10 + $0x10] sm:$0xff]
        %v1146 = vld [vmem:[#allocation10 + $0x18] sm:$0xff]
        %v1147 = vld [vmem:[#allocation10 + $0x20] sm:$0xff]
        %v1148 = vld [vmem:[#allocation10 + $0x28] sm:$0xff]
        %v1149 = vld [vmem:[#allocation10 + $0x30] sm:$0xff]
        %v1150 = vld [vmem:[#allocation10 + $0x38] sm:$0xff]
        %v1151 = vld [vmem:[#allocation10 + $0x40] sm:$0xff]
        %v1152 = vld [vmem:[#allocation10 + $0x48] sm:$0xff]
        %v1153 = vld [vmem:[#allocation10 + $0x50] sm:$0xff]
        %v1154 = vld [vmem:[#allocation10 + $0x58] sm:$0xff]
        %v1155 = vld [vmem:[#allocation10 + $0x60] sm:$0xff]
        %v1156 = vld [vmem:[#allocation10 + $0x68] sm:$0xff]
        %v1157 = vld [vmem:[#allocation10 + $0x70] sm:$0xff]
        %v1158 = vld [vmem:[#allocation10 + $0x78] sm:$0xff]
        %v1159 = vld [vmem:[#allocation11] sm:$0x1]
        %v1161 = vlaneseq
        %v1162 = vshrl.u32 %v1161, 7
        %v1163 = vsub.s32 0, %v1162
        %v1164 = vrot.slane %v1159, %v1163
        %1166 = vmatprep.subr.mxu0 0.0
        %1167 = vmatpush1.msra.mxu0 %v1158
        %1168 = vmatprep.subr.mxu0 0.0
        %1169 = vmatpush1.msra.mxu0 %v1157
        %1170 = vmatprep.subr.mxu0 0.0
        %1171 = vmatpush1.msra.mxu0 %v1156
        %1172 = vmatprep.subr.mxu0 0.0
        %1173 = vmatpush1.msra.mxu0 %v1155
        %1174 = vmatprep.subr.mxu0 0.0
        %1175 = vmatpush1.msra.mxu0 %v1154
        %1176 = vmatprep.subr.mxu0 0.0
        %1177 = vmatpush1.msra.mxu0 %v1153
        %1178 = vmatprep.subr.mxu0 0.0
        %1179 = vmatpush1.msra.mxu0 %v1152
        %1180 = vmatprep.subr.mxu0 0.0
        %1181 = vmatpush1.msra.mxu0 %v1151
        %1182 = vmatprep.subr.mxu0 0.0
        %1183 = vmatpush1.msra.mxu0 %v1150
        %1184 = vmatprep.subr.mxu0 0.0
        %1185 = vmatpush1.msra.mxu0 %v1149
        %1186 = vmatprep.subr.mxu0 0.0
        %1187 = vmatpush1.msra.mxu0 %v1148
        %1188 = vmatprep.subr.mxu0 0.0
        %1189 = vmatpush1.msra.mxu0 %v1147
        %1190 = vmatprep.subr.mxu0 0.0
        %1191 = vmatpush1.msra.mxu0 %v1146
        %1192 = vmatprep.subr.mxu0 0.0
        %1193 = vmatpush1.msra.mxu0 %v1145
        %1194 = vmatprep.subr.mxu0 0.0
        %1195 = vmatpush1.msra.mxu0 %v1144
        %1196 = vmatprep.subr.mxu0 0.0
        %1197 = vmatpush1.msra.mxu0 %v1143
        %1198 = vmatprep.subr.mxu0 0.0
        %1199 = vmatpush2.msra.mxu0 0.0
        %1200 = vmatprep.subr.mxu0 0.0
        %1201 = vmatpush2.msra.mxu0 0.0
        %1202 = vmatprep.subr.mxu0 0.0
        %1203 = vmatpush2.msra.mxu0 0.0
        %1204 = vmatprep.subr.mxu0 0.0
        %1205 = vmatpush2.msra.mxu0 0.0
        %1206 = vmatprep.subr.mxu0 0.0
        %1207 = vmatpush2.msra.mxu0 0.0
        %1208 = vmatprep.subr.mxu0 0.0
        %1209 = vmatpush2.msra.mxu0 0.0
        %1210 = vmatprep.subr.mxu0 0.0
        %1211 = vmatpush2.msra.mxu0 0.0
        %1212 = vmatprep.subr.mxu0 0.0
        %1213 = vmatpush2.msra.mxu0 0.0
        %1214 = vmatprep.subr.mxu0 0.0
        %1215 = vmatpush2.msra.mxu0 0.0
        %1216 = vmatprep.subr.mxu0 0.0
        %1217 = vmatpush2.msra.mxu0 0.0
        %1218 = vmatprep.subr.mxu0 0.0
        %1219 = vmatpush2.msra.mxu0 0.0
        %1220 = vmatprep.subr.mxu0 0.0
        %1221 = vmatpush2.msra.mxu0 0.0
        %1222 = vmatprep.subr.mxu0 0.0
        %1223 = vmatpush2.msra.mxu0 0.0
        %1224 = vmatprep.subr.mxu0 0.0
        %1225 = vmatpush2.msra.mxu0 0.0
        %1226 = vmatprep.subr.mxu0 0.0
        %1227 = vmatpush2.msra.mxu0 0.0
        %1228 = vmatprep.subr.mxu0 0.0
        %1229 = vmatpush2.msra.mxu0 0.0
        %1230 = vmatprep.mubr.f32.mxu0 0.0
        %1231 = vmatmul.mubr.f32.gmra.mxu0 %v1135
        %v1232 = vpop.f32.mrf.mxu0
        %v1233 = vadd.f32 %v1164, %v1232
        %v1234 = vpop.f32.mrf.mxu0
        %1235 = vmatprep.mubr.f32.mxu0 0.0
        %1236 = vmatmul.mubr.f32.gmra.mxu0 %v1136
        %v1237 = vpop.f32.mrf.mxu0
        %v1238 = vadd.f32 %v1164, %v1237
        %v1239 = vpop.f32.mrf.mxu0
        %1240 = vmatprep.mubr.f32.mxu0 0.0
        %1241 = vmatmul.mubr.f32.gmra.mxu0 %v1137
        %v1242 = vpop.f32.mrf.mxu0
        %v1243 = vadd.f32 %v1164, %v1242
        %v1244 = vpop.f32.mrf.mxu0
        %1245 = vmatprep.mubr.f32.mxu0 0.0
        %1246 = vmatmul.mubr.f32.gmra.mxu0 %v1138
        %v1247 = vpop.f32.mrf.mxu0
        %v1248 = vadd.f32 %v1164, %v1247
        %v1249 = vpop.f32.mrf.mxu0
        %1250 = vmatprep.mubr.f32.mxu0 0.0
        %1251 = vmatmul.mubr.f32.gmra.mxu0 %v1139
        %v1252 = vpop.f32.mrf.mxu0
        %v1253 = vadd.f32 %v1164, %v1252
        %v1254 = vpop.f32.mrf.mxu0
        %1255 = vmatprep.mubr.f32.mxu0 0.0
        %1256 = vmatmul.mubr.f32.gmra.mxu0 %v1140
        %v1257 = vpop.f32.mrf.mxu0
        %v1258 = vadd.f32 %v1164, %v1257
        %v1259 = vpop.f32.mrf.mxu0
        %1260 = vmatprep.mubr.f32.mxu0 0.0
        %1261 = vmatmul.mubr.f32.gmra.mxu0 %v1141
        %v1262 = vpop.f32.mrf.mxu0
        %v1263 = vadd.f32 %v1164, %v1262
        %v1264 = vpop.f32.mrf.mxu0
        %1265 = vmatprep.mubr.f32.mxu0 0.0
        %1266 = vmatmul.mubr.f32.gmra.mxu0 %v1142
        %v1267 = vpop.f32.mrf.mxu0
        %v1268 = vadd.f32 %v1164, %v1267
        %v1269 = vpop.f32.mrf.mxu0
        %1270 = vdwg.mxu0
        %v1271 = vmax.f32 %v1233, 0.0
        %v1272 = vmax.f32 %v1238, 0.0
        %v1273 = vmax.f32 %v1243, 0.0
        %v1274 = vmax.f32 %v1248, 0.0
        %v1275 = vmax.f32 %v1253, 0.0
        %v1276 = vmax.f32 %v1258, 0.0
        %v1277 = vmax.f32 %v1263, 0.0
        %v1278 = vmax.f32 %v1268, 0.0
        %v1279 = vld [vmem:[%s962] sm:$0xff]
        %v1280 = vld [vmem:[%s962 + $0x8] sm:$0xff]
        %v1281 = vld [vmem:[%s962 + $0x10] sm:$0xff]
        %v1282 = vld [vmem:[%s962 + $0x18] sm:$0xff]
        %v1283 = vld [vmem:[%s962 + $0x20] sm:$0xff]
        %v1284 = vld [vmem:[%s962 + $0x28] sm:$0xff]
        %v1285 = vld [vmem:[%s962 + $0x30] sm:$0xff]
        %v1286 = vld [vmem:[%s962 + $0x38] sm:$0xff]
        %v1287 = vld [vmem:[%s962 + $0x40] sm:$0xff]
        %v1288 = vld [vmem:[%s962 + $0x48] sm:$0xff]
        %v1289 = vld [vmem:[%s962 + $0x50] sm:$0xff]
        %v1290 = vld [vmem:[%s962 + $0x58] sm:$0xff]
        %v1291 = vld [vmem:[%s962 + $0x60] sm:$0xff]
        %v1292 = vld [vmem:[%s962 + $0x68] sm:$0xff]
        %v1293 = vld [vmem:[%s962 + $0x70] sm:$0xff]
        %v1294 = vld [vmem:[%s962 + $0x78] sm:$0xff]
        %v1295 = vld [vmem:[#allocation13] sm:$0xff]
        %v1296 = vld [vmem:[#allocation13 + $0x8] sm:$0xff]
        %v1297 = vld [vmem:[#allocation13 + $0x10] sm:$0xff]
        %v1298 = vld [vmem:[#allocation13 + $0x18] sm:$0xff]
        %v1299 = vld [vmem:[#allocation13 + $0x20] sm:$0xff]
        %v1300 = vld [vmem:[#allocation13 + $0x28] sm:$0xff]
        %v1301 = vld [vmem:[#allocation13 + $0x30] sm:$0xff]
        %v1302 = vld [vmem:[#allocation13 + $0x38] sm:$0xff]
        %v1303 = vld [vmem:[#allocation13 + $0x40] sm:$0xff]
        %v1304 = vld [vmem:[#allocation13 + $0x48] sm:$0xff]
        %v1305 = vld [vmem:[#allocation13 + $0x50] sm:$0xff]
        %v1306 = vld [vmem:[#allocation13 + $0x58] sm:$0xff]
        %v1307 = vld [vmem:[#allocation13 + $0x60] sm:$0xff]
        %v1308 = vld [vmem:[#allocation13 + $0x68] sm:$0xff]
        %v1309 = vld [vmem:[#allocation13 + $0x70] sm:$0xff]
        %v1310 = vld [vmem:[#allocation13 + $0x78] sm:$0xff]
        %v1311 = vld [vmem:[#allocation13 + $0x80] sm:$0xff]
        %v1312 = vld [vmem:[#allocation13 + $0x88] sm:$0xff]
        %v1313 = vld [vmem:[#allocation13 + $0x90] sm:$0xff]
        %v1314 = vld [vmem:[#allocation13 + $0x98] sm:$0xff]
        %v1315 = vld [vmem:[#allocation13 + $0xa0] sm:$0xff]
        %v1316 = vld [vmem:[#allocation13 + $0xa8] sm:$0xff]
        %v1317 = vld [vmem:[#allocation13 + $0xb0] sm:$0xff]
        %v1318 = vld [vmem:[#allocation13 + $0xb8] sm:$0xff]
        %v1319 = vld [vmem:[#allocation13 + $0xc0] sm:$0xff]
        %v1320 = vld [vmem:[#allocation13 + $0xc8] sm:$0xff]
        %v1321 = vld [vmem:[#allocation13 + $0xd0] sm:$0xff]
        %v1322 = vld [vmem:[#allocation13 + $0xd8] sm:$0xff]
        %v1323 = vld [vmem:[#allocation13 + $0xe0] sm:$0xff]
        %v1324 = vld [vmem:[#allocation13 + $0xe8] sm:$0xff]
        %v1325 = vld [vmem:[#allocation13 + $0xf0] sm:$0xff]
        %v1326 = vld [vmem:[#allocation13 + $0xf8] sm:$0xff]
        %v1327 = vld [vmem:[#allocation14] sm:$0x1]
        %v1329 = vlaneseq
        %v1330 = vshrl.u32 %v1329, 7
        %v1331 = vsub.s32 0, %v1330
        %v1332 = vrot.slane %v1327, %v1331
        %1334 = vmatprep.subr.mxu0 0.0
        %1335 = vmatpush1.msra.mxu0 %v1310
        %1336 = vmatprep.subr.mxu0 0.0
        %1337 = vmatpush1.msra.mxu0 %v1309
        %1338 = vmatprep.subr.mxu0 0.0
        %1339 = vmatpush1.msra.mxu0 %v1308
        %1340 = vmatprep.subr.mxu0 0.0
        %1341 = vmatpush1.msra.mxu0 %v1307
        %1342 = vmatprep.subr.mxu0 0.0
        %1343 = vmatpush1.msra.mxu0 %v1306
        %1344 = vmatprep.subr.mxu0 0.0
        %1345 = vmatpush1.msra.mxu0 %v1305
        %1346 = vmatprep.subr.mxu0 0.0
        %1347 = vmatpush1.msra.mxu0 %v1304
        %1348 = vmatprep.subr.mxu0 0.0
        %1349 = vmatpush1.msra.mxu0 %v1303
        %1350 = vmatprep.subr.mxu0 0.0
        %1351 = vmatpush1.msra.mxu0 %v1302
        %1352 = vmatprep.subr.mxu0 0.0
        %1353 = vmatpush1.msra.mxu0 %v1301
        %1354 = vmatprep.subr.mxu0 0.0
        %1355 = vmatpush1.msra.mxu0 %v1300
        %1356 = vmatprep.subr.mxu0 0.0
        %1357 = vmatpush1.msra.mxu0 %v1299
        %1358 = vmatprep.subr.mxu0 0.0
        %1359 = vmatpush1.msra.mxu0 %v1298
        %1360 = vmatprep.subr.mxu0 0.0
        %1361 = vmatpush1.msra.mxu0 %v1297
        %1362 = vmatprep.subr.mxu0 0.0
        %1363 = vmatpush1.msra.mxu0 %v1296
        %1364 = vmatprep.subr.mxu0 0.0
        %1365 = vmatpush1.msra.mxu0 %v1295
        %1366 = vmatprep.subr.mxu0 0.0
        %1367 = vmatpush2.msra.mxu0 %v1326
        %1368 = vmatprep.subr.mxu0 0.0
        %1369 = vmatpush2.msra.mxu0 %v1325
        %1370 = vmatprep.subr.mxu0 0.0
        %1371 = vmatpush2.msra.mxu0 %v1324
        %1372 = vmatprep.subr.mxu0 0.0
        %1373 = vmatpush2.msra.mxu0 %v1323
        %1374 = vmatprep.subr.mxu0 0.0
        %1375 = vmatpush2.msra.mxu0 %v1322
        %1376 = vmatprep.subr.mxu0 0.0
        %1377 = vmatpush2.msra.mxu0 %v1321
        %1378 = vmatprep.subr.mxu0 0.0
        %1379 = vmatpush2.msra.mxu0 %v1320
        %1380 = vmatprep.subr.mxu0 0.0
        %1381 = vmatpush2.msra.mxu0 %v1319
        %1382 = vmatprep.subr.mxu0 0.0
        %1383 = vmatpush2.msra.mxu0 %v1318
        %1384 = vmatprep.subr.mxu0 0.0
        %1385 = vmatpush2.msra.mxu0 %v1317
        %1386 = vmatprep.subr.mxu0 0.0
        %1387 = vmatpush2.msra.mxu0 %v1316
        %1388 = vmatprep.subr.mxu0 0.0
        %1389 = vmatpush2.msra.mxu0 %v1315
        %1390 = vmatprep.subr.mxu0 0.0
        %1391 = vmatpush2.msra.mxu0 %v1314
        %1392 = vmatprep.subr.mxu0 0.0
        %1393 = vmatpush2.msra.mxu0 %v1313
        %1394 = vmatprep.subr.mxu0 0.0
        %1395 = vmatpush2.msra.mxu0 %v1312
        %1396 = vmatprep.subr.mxu0 0.0
        %1397 = vmatpush2.msra.mxu0 %v1311
        %1398 = vmatprep.mubr.f32.mxu0 %v1280
        %1399 = vmatmul.mubr.f32.gmra.mxu0 %v1279
        %v1400 = vpop.f32.mrf.mxu0
        %v1401 = vadd.f32 %v1332, %v1400
        %v1402 = vpop.f32.mrf.mxu0
        %1403 = vmatprep.mubr.f32.mxu0 %v1282
        %1404 = vmatmul.mubr.f32.gmra.mxu0 %v1281
        %v1405 = vpop.f32.mrf.mxu0
        %v1406 = vadd.f32 %v1332, %v1405
        %v1407 = vpop.f32.mrf.mxu0
        %1408 = vmatprep.mubr.f32.mxu0 %v1284
        %1409 = vmatmul.mubr.f32.gmra.mxu0 %v1283
        %v1410 = vpop.f32.mrf.mxu0
        %v1411 = vadd.f32 %v1332, %v1410
        %v1412 = vpop.f32.mrf.mxu0
        %1413 = vmatprep.mubr.f32.mxu0 %v1286
        %1414 = vmatmul.mubr.f32.gmra.mxu0 %v1285
        %v1415 = vpop.f32.mrf.mxu0
        %v1416 = vadd.f32 %v1332, %v1415
        %v1417 = vpop.f32.mrf.mxu0
        %1418 = vmatprep.mubr.f32.mxu0 %v1288
        %1419 = vmatmul.mubr.f32.gmra.mxu0 %v1287
        %v1420 = vpop.f32.mrf.mxu0
        %v1421 = vadd.f32 %v1332, %v1420
        %v1422 = vpop.f32.mrf.mxu0
        %1423 = vmatprep.mubr.f32.mxu0 %v1290
        %1424 = vmatmul.mubr.f32.gmra.mxu0 %v1289
        %v1425 = vpop.f32.mrf.mxu0
        %v1426 = vadd.f32 %v1332, %v1425
        %v1427 = vpop.f32.mrf.mxu0
        %1428 = vmatprep.mubr.f32.mxu0 %v1292
        %1429 = vmatmul.mubr.f32.gmra.mxu0 %v1291
        %v1430 = vpop.f32.mrf.mxu0
        %v1431 = vadd.f32 %v1332, %v1430
        %v1432 = vpop.f32.mrf.mxu0
        %1433 = vmatprep.mubr.f32.mxu0 %v1294
        %1434 = vmatmul.mubr.f32.gmra.mxu0 %v1293
        %v1435 = vpop.f32.mrf.mxu0
        %v1436 = vadd.f32 %v1332, %v1435
        %v1437 = vpop.f32.mrf.mxu0
        %1438 = vdwg.mxu0
        %v1439 = vmax.f32 %v1401, 0.0
        %v1440 = vmax.f32 %v1406, 0.0
        %v1441 = vmax.f32 %v1411, 0.0
        %v1442 = vmax.f32 %v1416, 0.0
        %v1443 = vmax.f32 %v1421, 0.0
        %v1444 = vmax.f32 %v1426, 0.0
        %v1445 = vmax.f32 %v1431, 0.0
        %v1446 = vmax.f32 %v1436, 0.0
        %v1447 = vld [vmem:[%s980] sm:$0xff]
        %v1448 = vld [vmem:[%s980 + $0x8] sm:$0xff]
        %v1449 = vld [vmem:[%s980 + $0x10] sm:$0xff]
        %v1450 = vld [vmem:[%s980 + $0x18] sm:$0xff]
        %v1451 = vld [vmem:[%s980 + $0x20] sm:$0xff]
        %v1452 = vld [vmem:[%s980 + $0x28] sm:$0xff]
        %v1453 = vld [vmem:[%s980 + $0x30] sm:$0xff]
        %v1454 = vld [vmem:[%s980 + $0x38] sm:$0xff]
        %v1455 = vld [vmem:[#allocation19] sm:$0xff]
        %v1456 = vld [vmem:[#allocation19 + $0x8] sm:$0xff]
        %v1457 = vld [vmem:[#allocation19 + $0x10] sm:$0xff]
        %v1458 = vld [vmem:[#allocation19 + $0x18] sm:$0xff]
        %v1459 = vld [vmem:[#allocation19 + $0x20] sm:$0xff]
        %v1460 = vld [vmem:[#allocation19 + $0x28] sm:$0xff]
        %v1461 = vld [vmem:[#allocation19 + $0x30] sm:$0xff]
        %v1462 = vld [vmem:[#allocation19 + $0x38] sm:$0xff]
        %v1463 = vld [vmem:[#allocation19 + $0x40] sm:$0xff]
        %v1464 = vld [vmem:[#allocation19 + $0x48] sm:$0xff]
        %v1465 = vld [vmem:[#allocation19 + $0x50] sm:$0xff]
        %v1466 = vld [vmem:[#allocation19 + $0x58] sm:$0xff]
        %v1467 = vld [vmem:[#allocation19 + $0x60] sm:$0xff]
        %v1468 = vld [vmem:[#allocation19 + $0x68] sm:$0xff]
        %v1469 = vld [vmem:[#allocation19 + $0x70] sm:$0xff]
        %v1470 = vld [vmem:[#allocation19 + $0x78] sm:$0xff]
        %v1471 = vld [vmem:[#allocation20] sm:$0x1]
        %v1473 = vlaneseq
        %v1474 = vshrl.u32 %v1473, 7
        %v1475 = vsub.s32 0, %v1474
        %v1476 = vrot.slane %v1471, %v1475
        %1478 = vmatprep.subr.mxu0 0.0
        %1479 = vmatpush1.msra.mxu0 %v1470
        %1480 = vmatprep.subr.mxu0 0.0
        %1481 = vmatpush1.msra.mxu0 %v1469
        %1482 = vmatprep.subr.mxu0 0.0
        %1483 = vmatpush1.msra.mxu0 %v1468
        %1484 = vmatprep.subr.mxu0 0.0
        %1485 = vmatpush1.msra.mxu0 %v1467
        %1486 = vmatprep.subr.mxu0 0.0
        %1487 = vmatpush1.msra.mxu0 %v1466
        %1488 = vmatprep.subr.mxu0 0.0
        %1489 = vmatpush1.msra.mxu0 %v1465
        %1490 = vmatprep.subr.mxu0 0.0
        %1491 = vmatpush1.msra.mxu0 %v1464
        %1492 = vmatprep.subr.mxu0 0.0
        %1493 = vmatpush1.msra.mxu0 %v1463
        %1494 = vmatprep.subr.mxu0 0.0
        %1495 = vmatpush1.msra.mxu0 %v1462
        %1496 = vmatprep.subr.mxu0 0.0
        %1497 = vmatpush1.msra.mxu0 %v1461
        %1498 = vmatprep.subr.mxu0 0.0
        %1499 = vmatpush1.msra.mxu0 %v1460
        %1500 = vmatprep.subr.mxu0 0.0
        %1501 = vmatpush1.msra.mxu0 %v1459
        %1502 = vmatprep.subr.mxu0 0.0
        %1503 = vmatpush1.msra.mxu0 %v1458
        %1504 = vmatprep.subr.mxu0 0.0
        %1505 = vmatpush1.msra.mxu0 %v1457
        %1506 = vmatprep.subr.mxu0 0.0
        %1507 = vmatpush1.msra.mxu0 %v1456
        %1508 = vmatprep.subr.mxu0 0.0
        %1509 = vmatpush1.msra.mxu0 %v1455
        %1510 = vmatprep.subr.mxu0 0.0
        %1511 = vmatpush2.msra.mxu0 0.0
        %1512 = vmatprep.subr.mxu0 0.0
        %1513 = vmatpush2.msra.mxu0 0.0
        %1514 = vmatprep.subr.mxu0 0.0
        %1515 = vmatpush2.msra.mxu0 0.0
        %1516 = vmatprep.subr.mxu0 0.0
        %1517 = vmatpush2.msra.mxu0 0.0
        %1518 = vmatprep.subr.mxu0 0.0
        %1519 = vmatpush2.msra.mxu0 0.0
        %1520 = vmatprep.subr.mxu0 0.0
        %1521 = vmatpush2.msra.mxu0 0.0
        %1522 = vmatprep.subr.mxu0 0.0
        %1523 = vmatpush2.msra.mxu0 0.0
        %1524 = vmatprep.subr.mxu0 0.0
        %1525 = vmatpush2.msra.mxu0 0.0
        %1526 = vmatprep.subr.mxu0 0.0
        %1527 = vmatpush2.msra.mxu0 0.0
        %1528 = vmatprep.subr.mxu0 0.0
        %1529 = vmatpush2.msra.mxu0 0.0
        %1530 = vmatprep.subr.mxu0 0.0
        %1531 = vmatpush2.msra.mxu0 0.0
        %1532 = vmatprep.subr.mxu0 0.0
        %1533 = vmatpush2.msra.mxu0 0.0
        %1534 = vmatprep.subr.mxu0 0.0
        %1535 = vmatpush2.msra.mxu0 0.0
        %1536 = vmatprep.subr.mxu0 0.0
        %1537 = vmatpush2.msra.mxu0 0.0
        %1538 = vmatprep.subr.mxu0 0.0
        %1539 = vmatpush2.msra.mxu0 0.0
        %1540 = vmatprep.subr.mxu0 0.0
        %1541 = vmatpush2.msra.mxu0 0.0
        %1542 = vmatprep.mubr.f32.mxu0 0.0
        %1543 = vmatmul.mubr.f32.gmra.mxu0 %v1447
        %v1544 = vpop.f32.mrf.mxu0
        %v1545 = vadd.f32 %v1476, %v1544
        %v1546 = vpop.f32.mrf.mxu0
        %1547 = vmatprep.mubr.f32.mxu0 0.0
        %1548 = vmatmul.mubr.f32.gmra.mxu0 %v1448
        %v1549 = vpop.f32.mrf.mxu0
        %v1550 = vadd.f32 %v1476, %v1549
        %v1551 = vpop.f32.mrf.mxu0
        %1552 = vmatprep.mubr.f32.mxu0 0.0
        %1553 = vmatmul.mubr.f32.gmra.mxu0 %v1449
        %v1554 = vpop.f32.mrf.mxu0
        %v1555 = vadd.f32 %v1476, %v1554
        %v1556 = vpop.f32.mrf.mxu0
        %1557 = vmatprep.mubr.f32.mxu0 0.0
        %1558 = vmatmul.mubr.f32.gmra.mxu0 %v1450
        %v1559 = vpop.f32.mrf.mxu0
        %v1560 = vadd.f32 %v1476, %v1559
        %v1561 = vpop.f32.mrf.mxu0
        %1562 = vmatprep.mubr.f32.mxu0 0.0
        %1563 = vmatmul.mubr.f32.gmra.mxu0 %v1451
        %v1564 = vpop.f32.mrf.mxu0
        %v1565 = vadd.f32 %v1476, %v1564
        %v1566 = vpop.f32.mrf.mxu0
        %1567 = vmatprep.mubr.f32.mxu0 0.0
        %1568 = vmatmul.mubr.f32.gmra.mxu0 %v1452
        %v1569 = vpop.f32.mrf.mxu0
        %v1570 = vadd.f32 %v1476, %v1569
        %v1571 = vpop.f32.mrf.mxu0
        %1572 = vmatprep.mubr.f32.mxu0 0.0
        %1573 = vmatmul.mubr.f32.gmra.mxu0 %v1453
        %v1574 = vpop.f32.mrf.mxu0
        %v1575 = vadd.f32 %v1476, %v1574
        %v1576 = vpop.f32.mrf.mxu0
        %1577 = vmatprep.mubr.f32.mxu0 0.0
        %1578 = vmatmul.mubr.f32.gmra.mxu0 %v1454
        %v1579 = vpop.f32.mrf.mxu0
        %v1580 = vadd.f32 %v1476, %v1579
        %v1581 = vpop.f32.mrf.mxu0
        %1582 = vdwg.mxu0
        %v1583 = vmax.f32 %v1545, 0.0
        %v1584 = vmax.f32 %v1550, 0.0
        %v1585 = vmax.f32 %v1555, 0.0
        %v1586 = vmax.f32 %v1560, 0.0
        %v1587 = vmax.f32 %v1565, 0.0
        %v1588 = vmax.f32 %v1570, 0.0
        %v1589 = vmax.f32 %v1575, 0.0
        %v1590 = vmax.f32 %v1580, 0.0
        %v1591 = vld [vmem:[%s971] sm:$0xff]
        %v1592 = vld [vmem:[%s971 + $0x8] sm:$0xff]
        %v1593 = vld [vmem:[%s971 + $0x10] sm:$0xff]
        %v1594 = vld [vmem:[%s971 + $0x18] sm:$0xff]
        %v1595 = vld [vmem:[%s971 + $0x20] sm:$0xff]
        %v1596 = vld [vmem:[%s971 + $0x28] sm:$0xff]
        %v1597 = vld [vmem:[%s971 + $0x30] sm:$0xff]
        %v1598 = vld [vmem:[%s971 + $0x38] sm:$0xff]
        %v1599 = vld [vmem:[%s971 + $0x40] sm:$0xff]
        %v1600 = vld [vmem:[%s971 + $0x48] sm:$0xff]
        %v1601 = vld [vmem:[%s971 + $0x50] sm:$0xff]
        %v1602 = vld [vmem:[%s971 + $0x58] sm:$0xff]
        %v1603 = vld [vmem:[%s971 + $0x60] sm:$0xff]
        %v1604 = vld [vmem:[%s971 + $0x68] sm:$0xff]
        %v1605 = vld [vmem:[%s971 + $0x70] sm:$0xff]
        %v1606 = vld [vmem:[%s971 + $0x78] sm:$0xff]
        %v1607 = vld [vmem:[%s971 + $0x80] sm:$0xff]
        %v1608 = vld [vmem:[%s971 + $0x88] sm:$0xff]
        %v1609 = vld [vmem:[%s971 + $0x90] sm:$0xff]
        %v1610 = vld [vmem:[%s971 + $0x98] sm:$0xff]
        %v1611 = vld [vmem:[%s971 + $0xa0] sm:$0xff]
        %v1612 = vld [vmem:[%s971 + $0xa8] sm:$0xff]
        %v1613 = vld [vmem:[%s971 + $0xb0] sm:$0xff]
        %v1614 = vld [vmem:[%s971 + $0xb8] sm:$0xff]
        %v1615 = vld [vmem:[%s971 + $0xc0] sm:$0xff]
        %v1616 = vld [vmem:[%s971 + $0xc8] sm:$0xff]
        %v1617 = vld [vmem:[%s971 + $0xd0] sm:$0xff]
        %v1618 = vld [vmem:[%s971 + $0xd8] sm:$0xff]
        %v1619 = vld [vmem:[%s971 + $0xe0] sm:$0xff]
        %v1620 = vld [vmem:[%s971 + $0xe8] sm:$0xff]
        %v1621 = vld [vmem:[%s971 + $0xf0] sm:$0xff]
        %v1622 = vld [vmem:[%s971 + $0xf8] sm:$0xff]
        %v1623 = vld [vmem:[#allocation16] sm:$0xff]
        %v1624 = vld [vmem:[#allocation16 + $0x8] sm:$0xff]
        %v1625 = vld [vmem:[#allocation16 + $0x10] sm:$0xff]
        %v1626 = vld [vmem:[#allocation16 + $0x18] sm:$0xff]
        %v1627 = vld [vmem:[#allocation16 + $0x20] sm:$0xff]
        %v1628 = vld [vmem:[#allocation16 + $0x28] sm:$0xff]
        %v1629 = vld [vmem:[#allocation16 + $0x30] sm:$0xff]
        %v1630 = vld [vmem:[#allocation16 + $0x38] sm:$0xff]
        %v1631 = vld [vmem:[#allocation16 + $0x40] sm:$0xff]
        %v1632 = vld [vmem:[#allocation16 + $0x48] sm:$0xff]
        %v1633 = vld [vmem:[#allocation16 + $0x50] sm:$0xff]
        %v1634 = vld [vmem:[#allocation16 + $0x58] sm:$0xff]
        %v1635 = vld [vmem:[#allocation16 + $0x60] sm:$0xff]
        %v1636 = vld [vmem:[#allocation16 + $0x68] sm:$0xff]
        %v1637 = vld [vmem:[#allocation16 + $0x70] sm:$0xff]
        %v1638 = vld [vmem:[#allocation16 + $0x78] sm:$0xff]
        %v1639 = vld [vmem:[#allocation17] sm:$0x1]
        %v1641 = vlaneseq
        %v1642 = vshrl.u32 %v1641, 7
        %v1643 = vsub.s32 0, %v1642
        %v1644 = vrot.slane %v1639, %v1643
        %1646 = vmatprep.subr.mxu0 0.0
        %1647 = vmatpush1.msra.mxu0 %v1638
        %1648 = vmatprep.subr.mxu0 0.0
        %1649 = vmatpush1.msra.mxu0 %v1637
        %1650 = vmatprep.subr.mxu0 0.0
        %1651 = vmatpush1.msra.mxu0 %v1636
        %1652 = vmatprep.subr.mxu0 0.0
        %1653 = vmatpush1.msra.mxu0 %v1635
        %1654 = vmatprep.subr.mxu0 0.0
        %1655 = vmatpush1.msra.mxu0 %v1634
        %1656 = vmatprep.subr.mxu0 0.0
        %1657 = vmatpush1.msra.mxu0 %v1633
        %1658 = vmatprep.subr.mxu0 0.0
        %1659 = vmatpush1.msra.mxu0 %v1632
        %1660 = vmatprep.subr.mxu0 0.0
        %1661 = vmatpush1.msra.mxu0 %v1631
        %1662 = vmatprep.subr.mxu0 0.0
        %1663 = vmatpush1.msra.mxu0 %v1630
        %1664 = vmatprep.subr.mxu0 0.0
        %1665 = vmatpush1.msra.mxu0 %v1629
        %1666 = vmatprep.subr.mxu0 0.0
        %1667 = vmatpush1.msra.mxu0 %v1628
        %1668 = vmatprep.subr.mxu0 0.0
        %1669 = vmatpush1.msra.mxu0 %v1627
        %1670 = vmatprep.subr.mxu0 0.0
        %1671 = vmatpush1.msra.mxu0 %v1626
        %1672 = vmatprep.subr.mxu0 0.0
        %1673 = vmatpush1.msra.mxu0 %v1625
        %1674 = vmatprep.subr.mxu0 0.0
        %1675 = vmatpush1.msra.mxu0 %v1624
        %1676 = vmatprep.subr.mxu0 0.0
        %1677 = vmatpush1.msra.mxu0 %v1623
        %1678 = vmatprep.subr.mxu0 0.0
        %1679 = vmatpush2.msra.mxu0 0.0
        %1680 = vmatprep.subr.mxu0 0.0
        %1681 = vmatpush2.msra.mxu0 0.0
        %1682 = vmatprep.subr.mxu0 0.0
        %1683 = vmatpush2.msra.mxu0 0.0
        %1684 = vmatprep.subr.mxu0 0.0
        %1685 = vmatpush2.msra.mxu0 0.0
        %1686 = vmatprep.subr.mxu0 0.0
        %1687 = vmatpush2.msra.mxu0 0.0
        %1688 = vmatprep.subr.mxu0 0.0
        %1689 = vmatpush2.msra.mxu0 0.0
        %1690 = vmatprep.subr.mxu0 0.0
        %1691 = vmatpush2.msra.mxu0 0.0
        %1692 = vmatprep.subr.mxu0 0.0
        %1693 = vmatpush2.msra.mxu0 0.0
        %1694 = vmatprep.subr.mxu0 0.0
        %1695 = vmatpush2.msra.mxu0 0.0
        %1696 = vmatprep.subr.mxu0 0.0
        %1697 = vmatpush2.msra.mxu0 0.0
        %1698 = vmatprep.subr.mxu0 0.0
        %1699 = vmatpush2.msra.mxu0 0.0
        %1700 = vmatprep.subr.mxu0 0.0
        %1701 = vmatpush2.msra.mxu0 0.0
        %1702 = vmatprep.subr.mxu0 0.0
        %1703 = vmatpush2.msra.mxu0 0.0
        %1704 = vmatprep.subr.mxu0 0.0
        %1705 = vmatpush2.msra.mxu0 0.0
        %1706 = vmatprep.subr.mxu0 0.0
        %1707 = vmatpush2.msra.mxu0 0.0
        %1708 = vmatprep.subr.mxu0 0.0
        %1709 = vmatpush2.msra.mxu0 0.0
        %1710 = vmatprep.mubr.f32.mxu0 0.0
        %1711 = vmatmul.mubr.f32.gmra.mxu0 %v1591
        %v1712 = vpop.f32.mrf.mxu0
        %v1713 = vadd.f32 %v1644, %v1712
        %v1714 = vpop.f32.mrf.mxu0
        %1715 = vmatprep.mubr.f32.mxu0 0.0
        %1716 = vmatmul.mubr.f32.gmra.mxu0 %v1595
        %v1717 = vpop.f32.mrf.mxu0
        %v1718 = vadd.f32 %v1644, %v1717
        %v1719 = vpop.f32.mrf.mxu0
        %1720 = vmatprep.mubr.f32.mxu0 0.0
        %1721 = vmatmul.mubr.f32.gmra.mxu0 %v1599
        %v1722 = vpop.f32.mrf.mxu0
        %v1723 = vadd.f32 %v1644, %v1722
        %v1724 = vpop.f32.mrf.mxu0
        %1725 = vmatprep.mubr.f32.mxu0 0.0
        %1726 = vmatmul.mubr.f32.gmra.mxu0 %v1603
        %v1727 = vpop.f32.mrf.mxu0
        %v1728 = vadd.f32 %v1644, %v1727
        %v1729 = vpop.f32.mrf.mxu0
        %1730 = vmatprep.mubr.f32.mxu0 0.0
        %1731 = vmatmul.mubr.f32.gmra.mxu0 %v1607
        %v1732 = vpop.f32.mrf.mxu0
        %v1733 = vadd.f32 %v1644, %v1732
        %v1734 = vpop.f32.mrf.mxu0
        %1735 = vmatprep.mubr.f32.mxu0 0.0
        %1736 = vmatmul.mubr.f32.gmra.mxu0 %v1611
        %v1737 = vpop.f32.mrf.mxu0
        %v1738 = vadd.f32 %v1644, %v1737
        %v1739 = vpop.f32.mrf.mxu0
        %1740 = vmatprep.mubr.f32.mxu0 0.0
        %1741 = vmatmul.mubr.f32.gmra.mxu0 %v1615
        %v1742 = vpop.f32.mrf.mxu0
        %v1743 = vadd.f32 %v1644, %v1742
        %v1744 = vpop.f32.mrf.mxu0
        %1745 = vmatprep.mubr.f32.mxu0 0.0
        %1746 = vmatmul.mubr.f32.gmra.mxu0 %v1619
        %v1747 = vpop.f32.mrf.mxu0
        %v1748 = vadd.f32 %v1644, %v1747
        %v1749 = vpop.f32.mrf.mxu0
        %1750 = vmatprep.mubr.f32.mxu0 0.0
        %1751 = vmatmul.mubr.f32.gmra.mxu0 %v1592
        %v1752 = vpop.f32.mrf.mxu0
        %v1753 = vadd.f32 %v1644, %v1752
        %v1754 = vpop.f32.mrf.mxu0
        %1755 = vmatprep.mubr.f32.mxu0 0.0
        %1756 = vmatmul.mubr.f32.gmra.mxu0 %v1596
        %v1757 = vpop.f32.mrf.mxu0
        %v1758 = vadd.f32 %v1644, %v1757
        %v1759 = vpop.f32.mrf.mxu0
        %1760 = vmatprep.mubr.f32.mxu0 0.0
        %1761 = vmatmul.mubr.f32.gmra.mxu0 %v1600
        %v1762 = vpop.f32.mrf.mxu0
        %v1763 = vadd.f32 %v1644, %v1762
        %v1764 = vpop.f32.mrf.mxu0
        %1765 = vmatprep.mubr.f32.mxu0 0.0
        %1766 = vmatmul.mubr.f32.gmra.mxu0 %v1604
        %v1767 = vpop.f32.mrf.mxu0
        %v1768 = vadd.f32 %v1644, %v1767
        %v1769 = vpop.f32.mrf.mxu0
        %1770 = vmatprep.mubr.f32.mxu0 0.0
        %1771 = vmatmul.mubr.f32.gmra.mxu0 %v1608
        %v1772 = vpop.f32.mrf.mxu0
        %v1773 = vadd.f32 %v1644, %v1772
        %v1774 = vpop.f32.mrf.mxu0
        %1775 = vmatprep.mubr.f32.mxu0 0.0
        %1776 = vmatmul.mubr.f32.gmra.mxu0 %v1612
        %v1777 = vpop.f32.mrf.mxu0
        %v1778 = vadd.f32 %v1644, %v1777
        %v1779 = vpop.f32.mrf.mxu0
        %1780 = vmatprep.mubr.f32.mxu0 0.0
        %1781 = vmatmul.mubr.f32.gmra.mxu0 %v1616
        %v1782 = vpop.f32.mrf.mxu0
        %v1783 = vadd.f32 %v1644, %v1782
        %v1784 = vpop.f32.mrf.mxu0
        %1785 = vmatprep.mubr.f32.mxu0 0.0
        %1786 = vmatmul.mubr.f32.gmra.mxu0 %v1620
        %v1787 = vpop.f32.mrf.mxu0
        %v1788 = vadd.f32 %v1644, %v1787
        %v1789 = vpop.f32.mrf.mxu0
        %1790 = vmatprep.mubr.f32.mxu0 0.0
        %1791 = vmatmul.mubr.f32.gmra.mxu0 %v1593
        %v1792 = vpop.f32.mrf.mxu0
        %v1793 = vadd.f32 %v1644, %v1792
        %v1794 = vpop.f32.mrf.mxu0
        %1795 = vmatprep.mubr.f32.mxu0 0.0
        %1796 = vmatmul.mubr.f32.gmra.mxu0 %v1597
        %v1797 = vpop.f32.mrf.mxu0
        %v1798 = vadd.f32 %v1644, %v1797
        %v1799 = vpop.f32.mrf.mxu0
        %1800 = vmatprep.mubr.f32.mxu0 0.0
        %1801 = vmatmul.mubr.f32.gmra.mxu0 %v1601
        %v1802 = vpop.f32.mrf.mxu0
        %v1803 = vadd.f32 %v1644, %v1802
        %v1804 = vpop.f32.mrf.mxu0
        %1805 = vmatprep.mubr.f32.mxu0 0.0
        %1806 = vmatmul.mubr.f32.gmra.mxu0 %v1605
        %v1807 = vpop.f32.mrf.mxu0
        %v1808 = vadd.f32 %v1644, %v1807
        %v1809 = vpop.f32.mrf.mxu0
        %1810 = vmatprep.mubr.f32.mxu0 0.0
        %1811 = vmatmul.mubr.f32.gmra.mxu0 %v1609
        %v1812 = vpop.f32.mrf.mxu0
        %v1813 = vadd.f32 %v1644, %v1812
        %v1814 = vpop.f32.mrf.mxu0
        %1815 = vmatprep.mubr.f32.mxu0 0.0
        %1816 = vmatmul.mubr.f32.gmra.mxu0 %v1613
        %v1817 = vpop.f32.mrf.mxu0
        %v1818 = vadd.f32 %v1644, %v1817
        %v1819 = vpop.f32.mrf.mxu0
        %1820 = vmatprep.mubr.f32.mxu0 0.0
        %1821 = vmatmul.mubr.f32.gmra.mxu0 %v1617
        %v1822 = vpop.f32.mrf.mxu0
        %v1823 = vadd.f32 %v1644, %v1822
        %v1824 = vpop.f32.mrf.mxu0
        %1825 = vmatprep.mubr.f32.mxu0 0.0
        %1826 = vmatmul.mubr.f32.gmra.mxu0 %v1621
        %v1827 = vpop.f32.mrf.mxu0
        %v1828 = vadd.f32 %v1644, %v1827
        %v1829 = vpop.f32.mrf.mxu0
        %1830 = vmatprep.mubr.f32.mxu0 0.0
        %1831 = vmatmul.mubr.f32.gmra.mxu0 %v1594
        %v1832 = vpop.f32.mrf.mxu0
        %v1833 = vadd.f32 %v1644, %v1832
        %v1834 = vpop.f32.mrf.mxu0
        %1835 = vmatprep.mubr.f32.mxu0 0.0
        %1836 = vmatmul.mubr.f32.gmra.mxu0 %v1598
        %v1837 = vpop.f32.mrf.mxu0
        %v1838 = vadd.f32 %v1644, %v1837
        %v1839 = vpop.f32.mrf.mxu0
        %1840 = vmatprep.mubr.f32.mxu0 0.0
        %1841 = vmatmul.mubr.f32.gmra.mxu0 %v1602
        %v1842 = vpop.f32.mrf.mxu0
        %v1843 = vadd.f32 %v1644, %v1842
        %v1844 = vpop.f32.mrf.mxu0
        %1845 = vmatprep.mubr.f32.mxu0 0.0
        %1846 = vmatmul.mubr.f32.gmra.mxu0 %v1606
        %v1847 = vpop.f32.mrf.mxu0
        %v1848 = vadd.f32 %v1644, %v1847
        %v1849 = vpop.f32.mrf.mxu0
        %1850 = vmatprep.mubr.f32.mxu0 0.0
        %1851 = vmatmul.mubr.f32.gmra.mxu0 %v1610
        %v1852 = vpop.f32.mrf.mxu0
        %v1853 = vadd.f32 %v1644, %v1852
        %v1854 = vpop.f32.mrf.mxu0
        %1855 = vmatprep.mubr.f32.mxu0 0.0
        %1856 = vmatmul.mubr.f32.gmra.mxu0 %v1614
        %v1857 = vpop.f32.mrf.mxu0
        %v1858 = vadd.f32 %v1644, %v1857
        %v1859 = vpop.f32.mrf.mxu0
        %1860 = vmatprep.mubr.f32.mxu0 0.0
        %1861 = vmatmul.mubr.f32.gmra.mxu0 %v1618
        %v1862 = vpop.f32.mrf.mxu0
        %v1863 = vadd.f32 %v1644, %v1862
        %v1864 = vpop.f32.mrf.mxu0
        %1865 = vmatprep.mubr.f32.mxu0 0.0
        %1866 = vmatmul.mubr.f32.gmra.mxu0 %v1622
        %v1867 = vpop.f32.mrf.mxu0
        %v1868 = vadd.f32 %v1644, %v1867
        %v1869 = vpop.f32.mrf.mxu0
        %1870 = vdwg.mxu0
        %v1871 = vmax.f32 %v1713, 0.0
        %v1872 = vmax.f32 %v1718, 0.0
        %v1873 = vmax.f32 %v1723, 0.0
        %v1874 = vmax.f32 %v1728, 0.0
        %v1875 = vmax.f32 %v1733, 0.0
        %v1876 = vmax.f32 %v1738, 0.0
        %v1877 = vmax.f32 %v1743, 0.0
        %v1878 = vmax.f32 %v1748, 0.0
        %v1879 = vmax.f32 %v1753, 0.0
        %v1880 = vmax.f32 %v1758, 0.0
        %v1881 = vmax.f32 %v1763, 0.0
        %v1882 = vmax.f32 %v1768, 0.0
        %v1883 = vmax.f32 %v1773, 0.0
        %v1884 = vmax.f32 %v1778, 0.0
        %v1885 = vmax.f32 %v1783, 0.0
        %v1886 = vmax.f32 %v1788, 0.0
        %v1887 = vmax.f32 %v1793, 0.0
        %v1888 = vmax.f32 %v1798, 0.0
        %v1889 = vmax.f32 %v1803, 0.0
        %v1890 = vmax.f32 %v1808, 0.0
        %v1891 = vmax.f32 %v1813, 0.0
        %v1892 = vmax.f32 %v1818, 0.0
        %v1893 = vmax.f32 %v1823, 0.0
        %v1894 = vmax.f32 %v1828, 0.0
        %v1895 = vmax.f32 %v1833, 0.0
        %v1896 = vmax.f32 %v1838, 0.0
        %v1897 = vmax.f32 %v1843, 0.0
        %v1898 = vmax.f32 %v1848, 0.0
        %v1899 = vmax.f32 %v1853, 0.0
        %v1900 = vmax.f32 %v1858, 0.0
        %v1901 = vmax.f32 %v1863, 0.0
        %v1902 = vmax.f32 %v1868, 0.0
        %v1903 = vmul.f32 %v1583, %v1583
        %v1904 = vmul.f32 %v1584, %v1584
        %v1905 = vmul.f32 %v1585, %v1585
        %v1906 = vmul.f32 %v1586, %v1586
        %v1907 = vmul.f32 %v1587, %v1587
        %v1908 = vmul.f32 %v1588, %v1588
        %v1909 = vmul.f32 %v1589, %v1589
        %v1910 = vmul.f32 %v1590, %v1590
        %1911 = vadd.xlane.f32.xlu0 %v1903
        %v1912 = vpop.xlane.xlu0 %1911
        %1913 = vadd.xlane.f32.xlu0 %v1904
        %v1914 = vpop.xlane.xlu0 %1913
        %1915 = vadd.xlane.f32.xlu0 %v1905
        %v1916 = vpop.xlane.xlu0 %1915
        %1917 = vadd.xlane.f32.xlu0 %v1906
        %v1918 = vpop.xlane.xlu0 %1917
        %1919 = vadd.xlane.f32.xlu0 %v1907
        %v1920 = vpop.xlane.xlu0 %1919
        %1921 = vadd.xlane.f32.xlu0 %v1908
        %v1922 = vpop.xlane.xlu0 %1921
        %1923 = vadd.xlane.f32.xlu0 %v1909
        %v1924 = vpop.xlane.xlu0 %1923
        %1925 = vadd.xlane.f32.xlu0 %v1910
        %v1926 = vpop.xlane.xlu0 %1925
        %v1927 = vmax.f32 %v1912, 1e-16
        %v1928 = vmax.f32 %v1914, 1e-16
        %v1929 = vmax.f32 %v1916, 1e-16
        %v1930 = vmax.f32 %v1918, 1e-16
        %v1931 = vmax.f32 %v1920, 1e-16
        %v1932 = vmax.f32 %v1922, 1e-16
        %v1933 = vmax.f32 %v1924, 1e-16
        %v1934 = vmax.f32 %v1926, 1e-16
        %v1935 = vrsqrt.pop %v1927
        %v1936 = vrsqrt.pop %v1928
        %v1937 = vrsqrt.pop %v1929
        %v1938 = vrsqrt.pop %v1930
        %v1939 = vrsqrt.pop %v1931
        %v1940 = vrsqrt.pop %v1932
        %v1941 = vrsqrt.pop %v1933
        %v1942 = vrsqrt.pop %v1934
        %v1943 = vmul.f32 %v1583, %v1935
        %v1944 = vmul.f32 %v1584, %v1936
        %v1945 = vmul.f32 %v1585, %v1937
        %v1946 = vmul.f32 %v1586, %v1938
        %v1947 = vmul.f32 %v1587, %v1939
        %v1948 = vmul.f32 %v1588, %v1940
        %v1949 = vmul.f32 %v1589, %v1941
        %v1950 = vmul.f32 %v1590, %v1942
        %v1951 = vmul.f32 %v1871, %v1871
        %v1952 = vmul.f32 %v1872, %v1872
        %v1953 = vmul.f32 %v1873, %v1873
        %v1954 = vmul.f32 %v1874, %v1874
        %v1955 = vmul.f32 %v1875, %v1875
        %v1956 = vmul.f32 %v1876, %v1876
        %v1957 = vmul.f32 %v1877, %v1877
        %v1958 = vmul.f32 %v1878, %v1878
        %1959 = vadd.xlane.f32.xlu0 %v1951
        %v1960 = vpop.xlane.xlu0 %1959
        %1961 = vadd.xlane.f32.xlu0 %v1952
        %v1962 = vpop.xlane.xlu0 %1961
        %1963 = vadd.xlane.f32.xlu0 %v1953
        %v1964 = vpop.xlane.xlu0 %1963
        %1965 = vadd.xlane.f32.xlu0 %v1954
        %v1966 = vpop.xlane.xlu0 %1965
        %1967 = vadd.xlane.f32.xlu0 %v1955
        %v1968 = vpop.xlane.xlu0 %1967
        %1969 = vadd.xlane.f32.xlu0 %v1956
        %v1970 = vpop.xlane.xlu0 %1969
        %1971 = vadd.xlane.f32.xlu0 %v1957
        %v1972 = vpop.xlane.xlu0 %1971
        %1973 = vadd.xlane.f32.xlu0 %v1958
        %v1974 = vpop.xlane.xlu0 %1973
        %v1975 = vmax.f32 %v1960, 1e-16
        %v1976 = vmax.f32 %v1962, 1e-16
        %v1977 = vmax.f32 %v1964, 1e-16
        %v1978 = vmax.f32 %v1966, 1e-16
        %v1979 = vmax.f32 %v1968, 1e-16
        %v1980 = vmax.f32 %v1970, 1e-16
        %v1981 = vmax.f32 %v1972, 1e-16
        %v1982 = vmax.f32 %v1974, 1e-16
        %v1983 = vrsqrt.pop %v1975
        %v1984 = vrsqrt.pop %v1976
        %v1985 = vrsqrt.pop %v1977
        %v1986 = vrsqrt.pop %v1978
        %v1987 = vrsqrt.pop %v1979
        %v1988 = vrsqrt.pop %v1980
        %v1989 = vrsqrt.pop %v1981
        %v1990 = vrsqrt.pop %v1982
        %v1991 = vmul.f32 %v1871, %v1983
        %v1992 = vmul.f32 %v1872, %v1984
        %v1993 = vmul.f32 %v1873, %v1985
        %v1994 = vmul.f32 %v1874, %v1986
        %v1995 = vmul.f32 %v1875, %v1987
        %v1996 = vmul.f32 %v1876, %v1988
        %v1997 = vmul.f32 %v1877, %v1989
        %v1998 = vmul.f32 %v1878, %v1990
        %v1999 = vmul.f32 %v1879, %v1879
        %v2000 = vmul.f32 %v1880, %v1880
        %v2001 = vmul.f32 %v1881, %v1881
        %v2002 = vmul.f32 %v1882, %v1882
        %v2003 = vmul.f32 %v1883, %v1883
        %v2004 = vmul.f32 %v1884, %v1884
        %v2005 = vmul.f32 %v1885, %v1885
        %v2006 = vmul.f32 %v1886, %v1886
        %2007 = vadd.xlane.f32.xlu0 %v1999
        %v2008 = vpop.xlane.xlu0 %2007
        %2009 = vadd.xlane.f32.xlu0 %v2000
        %v2010 = vpop.xlane.xlu0 %2009
        %2011 = vadd.xlane.f32.xlu0 %v2001
        %v2012 = vpop.xlane.xlu0 %2011
        %2013 = vadd.xlane.f32.xlu0 %v2002
        %v2014 = vpop.xlane.xlu0 %2013
        %2015 = vadd.xlane.f32.xlu0 %v2003
        %v2016 = vpop.xlane.xlu0 %2015
        %2017 = vadd.xlane.f32.xlu0 %v2004
        %v2018 = vpop.xlane.xlu0 %2017
        %2019 = vadd.xlane.f32.xlu0 %v2005
        %v2020 = vpop.xlane.xlu0 %2019
        %2021 = vadd.xlane.f32.xlu0 %v2006
        %v2022 = vpop.xlane.xlu0 %2021
        %v2023 = vmax.f32 %v2008, 1e-16
        %v2024 = vmax.f32 %v2010, 1e-16
        %v2025 = vmax.f32 %v2012, 1e-16
        %v2026 = vmax.f32 %v2014, 1e-16
        %v2027 = vmax.f32 %v2016, 1e-16
        %v2028 = vmax.f32 %v2018, 1e-16
        %v2029 = vmax.f32 %v2020, 1e-16
        %v2030 = vmax.f32 %v2022, 1e-16
        %v2031 = vrsqrt.pop %v2023
        %v2032 = vrsqrt.pop %v2024
        %v2033 = vrsqrt.pop %v2025
        %v2034 = vrsqrt.pop %v2026
        %v2035 = vrsqrt.pop %v2027
        %v2036 = vrsqrt.pop %v2028
        %v2037 = vrsqrt.pop %v2029
        %v2038 = vrsqrt.pop %v2030
        %v2039 = vmul.f32 %v1879, %v2031
        %v2040 = vmul.f32 %v1880, %v2032
        %v2041 = vmul.f32 %v1881, %v2033
        %v2042 = vmul.f32 %v1882, %v2034
        %v2043 = vmul.f32 %v1883, %v2035
        %v2044 = vmul.f32 %v1884, %v2036
        %v2045 = vmul.f32 %v1885, %v2037
        %v2046 = vmul.f32 %v1886, %v2038
        %v2047 = vmul.f32 %v1887, %v1887
        %v2048 = vmul.f32 %v1888, %v1888
        %v2049 = vmul.f32 %v1889, %v1889
        %v2050 = vmul.f32 %v1890, %v1890
        %v2051 = vmul.f32 %v1891, %v1891
        %v2052 = vmul.f32 %v1892, %v1892
        %v2053 = vmul.f32 %v1893, %v1893
        %v2054 = vmul.f32 %v1894, %v1894
        %2055 = vadd.xlane.f32.xlu0 %v2047
        %v2056 = vpop.xlane.xlu0 %2055
        %2057 = vadd.xlane.f32.xlu0 %v2048
        %v2058 = vpop.xlane.xlu0 %2057
        %2059 = vadd.xlane.f32.xlu0 %v2049
        %v2060 = vpop.xlane.xlu0 %2059
        %2061 = vadd.xlane.f32.xlu0 %v2050
        %v2062 = vpop.xlane.xlu0 %2061
        %2063 = vadd.xlane.f32.xlu0 %v2051
        %v2064 = vpop.xlane.xlu0 %2063
        %2065 = vadd.xlane.f32.xlu0 %v2052
        %v2066 = vpop.xlane.xlu0 %2065
        %2067 = vadd.xlane.f32.xlu0 %v2053
        %v2068 = vpop.xlane.xlu0 %2067
        %2069 = vadd.xlane.f32.xlu0 %v2054
        %v2070 = vpop.xlane.xlu0 %2069
        %v2071 = vmax.f32 %v2056, 1e-16
        %v2072 = vmax.f32 %v2058, 1e-16
        %v2073 = vmax.f32 %v2060, 1e-16
        %v2074 = vmax.f32 %v2062, 1e-16
        %v2075 = vmax.f32 %v2064, 1e-16
        %v2076 = vmax.f32 %v2066, 1e-16
        %v2077 = vmax.f32 %v2068, 1e-16
        %v2078 = vmax.f32 %v2070, 1e-16
        %v2079 = vrsqrt.pop %v2071
        %v2080 = vrsqrt.pop %v2072
        %v2081 = vrsqrt.pop %v2073
        %v2082 = vrsqrt.pop %v2074
        %v2083 = vrsqrt.pop %v2075
        %v2084 = vrsqrt.pop %v2076
        %v2085 = vrsqrt.pop %v2077
        %v2086 = vrsqrt.pop %v2078
        %v2087 = vmul.f32 %v1887, %v2079
        %v2088 = vmul.f32 %v1888, %v2080
        %v2089 = vmul.f32 %v1889, %v2081
        %v2090 = vmul.f32 %v1890, %v2082
        %v2091 = vmul.f32 %v1891, %v2083
        %v2092 = vmul.f32 %v1892, %v2084
        %v2093 = vmul.f32 %v1893, %v2085
        %v2094 = vmul.f32 %v1894, %v2086
        %v2095 = vmul.f32 %v1895, %v1895
        %v2096 = vmul.f32 %v1896, %v1896
        %v2097 = vmul.f32 %v1897, %v1897
        %v2098 = vmul.f32 %v1898, %v1898
        %v2099 = vmul.f32 %v1899, %v1899
        %v2100 = vmul.f32 %v1900, %v1900
        %v2101 = vmul.f32 %v1901, %v1901
        %v2102 = vmul.f32 %v1902, %v1902
        %2103 = vadd.xlane.f32.xlu0 %v2095
        %v2104 = vpop.xlane.xlu0 %2103
        %2105 = vadd.xlane.f32.xlu0 %v2096
        %v2106 = vpop.xlane.xlu0 %2105
        %2107 = vadd.xlane.f32.xlu0 %v2097
        %v2108 = vpop.xlane.xlu0 %2107
        %2109 = vadd.xlane.f32.xlu0 %v2098
        %v2110 = vpop.xlane.xlu0 %2109
        %2111 = vadd.xlane.f32.xlu0 %v2099
        %v2112 = vpop.xlane.xlu0 %2111
        %2113 = vadd.xlane.f32.xlu0 %v2100
        %v2114 = vpop.xlane.xlu0 %2113
        %2115 = vadd.xlane.f32.xlu0 %v2101
        %v2116 = vpop.xlane.xlu0 %2115
        %2117 = vadd.xlane.f32.xlu0 %v2102
        %v2118 = vpop.xlane.xlu0 %2117
        %v2119 = vmax.f32 %v2104, 1e-16
        %v2120 = vmax.f32 %v2106, 1e-16
        %v2121 = vmax.f32 %v2108, 1e-16
        %v2122 = vmax.f32 %v2110, 1e-16
        %v2123 = vmax.f32 %v2112, 1e-16
        %v2124 = vmax.f32 %v2114, 1e-16
        %v2125 = vmax.f32 %v2116, 1e-16
        %v2126 = vmax.f32 %v2118, 1e-16
        %v2127 = vrsqrt.pop %v2119
        %v2128 = vrsqrt.pop %v2120
        %v2129 = vrsqrt.pop %v2121
        %v2130 = vrsqrt.pop %v2122
        %v2131 = vrsqrt.pop %v2123
        %v2132 = vrsqrt.pop %v2124
        %v2133 = vrsqrt.pop %v2125
        %v2134 = vrsqrt.pop %v2126
        %v2135 = vmul.f32 %v1895, %v2127
        %v2136 = vmul.f32 %v1896, %v2128
        %v2137 = vmul.f32 %v1897, %v2129
        %v2138 = vmul.f32 %v1898, %v2130
        %v2139 = vmul.f32 %v1899, %v2131
        %v2140 = vmul.f32 %v1900, %v2132
        %v2141 = vmul.f32 %v1901, %v2133
        %v2142 = vmul.f32 %v1902, %v2134
        %v2143 = vadd.f32 %v1991, %v2039
        %v2144 = vadd.f32 %v1992, %v2040
        %v2145 = vadd.f32 %v1993, %v2041
        %v2146 = vadd.f32 %v1994, %v2042
        %v2147 = vadd.f32 %v1995, %v2043
        %v2148 = vadd.f32 %v1996, %v2044
        %v2149 = vadd.f32 %v1997, %v2045
        %v2150 = vadd.f32 %v1998, %v2046
        %v2151 = vadd.f32 %v1871, %v1879
        %v2152 = vadd.f32 %v1872, %v1880
        %v2153 = vadd.f32 %v1873, %v1881
        %v2154 = vadd.f32 %v1874, %v1882
        %v2155 = vadd.f32 %v1875, %v1883
        %v2156 = vadd.f32 %v1876, %v1884
        %v2157 = vadd.f32 %v1877, %v1885
        %v2158 = vadd.f32 %v1878, %v1886
        %v2159 = vadd.f32 %v2143, %v2087
        %v2160 = vadd.f32 %v2144, %v2088
        %v2161 = vadd.f32 %v2145, %v2089
        %v2162 = vadd.f32 %v2146, %v2090
        %v2163 = vadd.f32 %v2147, %v2091
        %v2164 = vadd.f32 %v2148, %v2092
        %v2165 = vadd.f32 %v2149, %v2093
        %v2166 = vadd.f32 %v2150, %v2094
        %v2167 = vadd.f32 %v2151, %v1887
        %v2168 = vadd.f32 %v2152, %v1888
        %v2169 = vadd.f32 %v2153, %v1889
        %v2170 = vadd.f32 %v2154, %v1890
        %v2171 = vadd.f32 %v2155, %v1891
        %v2172 = vadd.f32 %v2156, %v1892
        %v2173 = vadd.f32 %v2157, %v1893
        %v2174 = vadd.f32 %v2158, %v1894
        %v2175 = vadd.f32 %v2159, %v2135
        %v2176 = vadd.f32 %v2160, %v2136
        %v2177 = vadd.f32 %v2161, %v2137
        %v2178 = vadd.f32 %v2162, %v2138
        %v2179 = vadd.f32 %v2163, %v2139
        %v2180 = vadd.f32 %v2164, %v2140
        %v2181 = vadd.f32 %v2165, %v2141
        %v2182 = vadd.f32 %v2166, %v2142
        %v2183 = vadd.f32 %v2167, %v1895
        %v2184 = vadd.f32 %v2168, %v1896
        %v2185 = vadd.f32 %v2169, %v1897
        %v2186 = vadd.f32 %v2170, %v1898
        %v2187 = vadd.f32 %v2171, %v1899
        %v2188 = vadd.f32 %v2172, %v1900
        %v2189 = vadd.f32 %v2173, %v1901
        %v2190 = vadd.f32 %v2174, %v1902
        %v2191 = vmul.f32 %v1943, %v1991
        %v2192 = vmul.f32 %v1944, %v1992
        %v2193 = vmul.f32 %v1945, %v1993
        %v2194 = vmul.f32 %v1946, %v1994
        %v2195 = vmul.f32 %v1947, %v1995
        %v2196 = vmul.f32 %v1948, %v1996
        %v2197 = vmul.f32 %v1949, %v1997
        %v2198 = vmul.f32 %v1950, %v1998
        %2199 = vadd.xlane.f32.xlu0 %v2191
        %v2200 = vpop.xlane.xlu0 %2199
        %2201 = vadd.xlane.f32.xlu0 %v2192
        %v2202 = vpop.xlane.xlu0 %2201
        %2203 = vadd.xlane.f32.xlu0 %v2193
        %v2204 = vpop.xlane.xlu0 %2203
        %2205 = vadd.xlane.f32.xlu0 %v2194
        %v2206 = vpop.xlane.xlu0 %2205
        %2207 = vadd.xlane.f32.xlu0 %v2195
        %v2208 = vpop.xlane.xlu0 %2207
        %2209 = vadd.xlane.f32.xlu0 %v2196
        %v2210 = vpop.xlane.xlu0 %2209
        %2211 = vadd.xlane.f32.xlu0 %v2197
        %v2212 = vpop.xlane.xlu0 %2211
        %2213 = vadd.xlane.f32.xlu0 %v2198
        %v2214 = vpop.xlane.xlu0 %2213
        %v2215 = vmul.f32 %v1991, %v2175
        %v2216 = vmul.f32 %v1992, %v2176
        %v2217 = vmul.f32 %v1993, %v2177
        %v2218 = vmul.f32 %v1994, %v2178
        %v2219 = vmul.f32 %v1995, %v2179
        %v2220 = vmul.f32 %v1996, %v2180
        %v2221 = vmul.f32 %v1997, %v2181
        %v2222 = vmul.f32 %v1998, %v2182
        %2223 = vadd.xlane.f32.xlu0 %v2215
        %v2224 = vpop.xlane.xlu0 %2223
        %2225 = vadd.xlane.f32.xlu0 %v2216
        %v2226 = vpop.xlane.xlu0 %2225
        %2227 = vadd.xlane.f32.xlu0 %v2217
        %v2228 = vpop.xlane.xlu0 %2227
        %2229 = vadd.xlane.f32.xlu0 %v2218
        %v2230 = vpop.xlane.xlu0 %2229
        %2231 = vadd.xlane.f32.xlu0 %v2219
        %v2232 = vpop.xlane.xlu0 %2231
        %2233 = vadd.xlane.f32.xlu0 %v2220
        %v2234 = vpop.xlane.xlu0 %2233
        %2235 = vadd.xlane.f32.xlu0 %v2221
        %v2236 = vpop.xlane.xlu0 %2235
        %2237 = vadd.xlane.f32.xlu0 %v2222
        %v2238 = vpop.xlane.xlu0 %2237
        %v2239 = vmul.f32 %v2224, 0.25
        %v2240 = vmul.f32 %v2226, 0.25
        %v2241 = vmul.f32 %v2228, 0.25
        %v2242 = vmul.f32 %v2230, 0.25
        %v2243 = vmul.f32 %v2232, 0.25
        %v2244 = vmul.f32 %v2234, 0.25
        %v2245 = vmul.f32 %v2236, 0.25
        %v2246 = vmul.f32 %v2238, 0.25
        %v2247 = vadd.f32 %v2200, %v2239
        %v2248 = vadd.f32 %v2202, %v2240
        %v2249 = vadd.f32 %v2204, %v2241
        %v2250 = vadd.f32 %v2206, %v2242
        %v2251 = vadd.f32 %v2208, %v2243
        %v2252 = vadd.f32 %v2210, %v2244
        %v2253 = vadd.f32 %v2212, %v2245
        %v2254 = vadd.f32 %v2214, %v2246
        %v2255 = vmul.f32 %v1943, %v2039
        %v2256 = vmul.f32 %v1944, %v2040
        %v2257 = vmul.f32 %v1945, %v2041
        %v2258 = vmul.f32 %v1946, %v2042
        %v2259 = vmul.f32 %v1947, %v2043
        %v2260 = vmul.f32 %v1948, %v2044
        %v2261 = vmul.f32 %v1949, %v2045
        %v2262 = vmul.f32 %v1950, %v2046
        %2263 = vadd.xlane.f32.xlu0 %v2255
        %v2264 = vpop.xlane.xlu0 %2263
        %2265 = vadd.xlane.f32.xlu0 %v2256
        %v2266 = vpop.xlane.xlu0 %2265
        %2267 = vadd.xlane.f32.xlu0 %v2257
        %v2268 = vpop.xlane.xlu0 %2267
        %2269 = vadd.xlane.f32.xlu0 %v2258
        %v2270 = vpop.xlane.xlu0 %2269
        %2271 = vadd.xlane.f32.xlu0 %v2259
        %v2272 = vpop.xlane.xlu0 %2271
        %2273 = vadd.xlane.f32.xlu0 %v2260
        %v2274 = vpop.xlane.xlu0 %2273
        %2275 = vadd.xlane.f32.xlu0 %v2261
        %v2276 = vpop.xlane.xlu0 %2275
        %2277 = vadd.xlane.f32.xlu0 %v2262
        %v2278 = vpop.xlane.xlu0 %2277
        %v2279 = vmul.f32 %v2039, %v2175
        %v2280 = vmul.f32 %v2040, %v2176
        %v2281 = vmul.f32 %v2041, %v2177
        %v2282 = vmul.f32 %v2042, %v2178
        %v2283 = vmul.f32 %v2043, %v2179
        %v2284 = vmul.f32 %v2044, %v2180
        %v2285 = vmul.f32 %v2045, %v2181
        %v2286 = vmul.f32 %v2046, %v2182
        %2287 = vadd.xlane.f32.xlu0 %v2279
        %v2288 = vpop.xlane.xlu0 %2287
        %2289 = vadd.xlane.f32.xlu0 %v2280
        %v2290 = vpop.xlane.xlu0 %2289
        %2291 = vadd.xlane.f32.xlu0 %v2281
        %v2292 = vpop.xlane.xlu0 %2291
        %2293 = vadd.xlane.f32.xlu0 %v2282
        %v2294 = vpop.xlane.xlu0 %2293
        %2295 = vadd.xlane.f32.xlu0 %v2283
        %v2296 = vpop.xlane.xlu0 %2295
        %2297 = vadd.xlane.f32.xlu0 %v2284
        %v2298 = vpop.xlane.xlu0 %2297
        %2299 = vadd.xlane.f32.xlu0 %v2285
        %v2300 = vpop.xlane.xlu0 %2299
        %2301 = vadd.xlane.f32.xlu0 %v2286
        %v2302 = vpop.xlane.xlu0 %2301
        %v2303 = vmul.f32 %v2288, 0.25
        %v2304 = vmul.f32 %v2290, 0.25
        %v2305 = vmul.f32 %v2292, 0.25
        %v2306 = vmul.f32 %v2294, 0.25
        %v2307 = vmul.f32 %v2296, 0.25
        %v2308 = vmul.f32 %v2298, 0.25
        %v2309 = vmul.f32 %v2300, 0.25
        %v2310 = vmul.f32 %v2302, 0.25
        %v2311 = vadd.f32 %v2264, %v2303
        %v2312 = vadd.f32 %v2266, %v2304
        %v2313 = vadd.f32 %v2268, %v2305
        %v2314 = vadd.f32 %v2270, %v2306
        %v2315 = vadd.f32 %v2272, %v2307
        %v2316 = vadd.f32 %v2274, %v2308
        %v2317 = vadd.f32 %v2276, %v2309
        %v2318 = vadd.f32 %v2278, %v2310
        %v2319 = vmul.f32 %v1943, %v2087
        %v2320 = vmul.f32 %v1944, %v2088
        %v2321 = vmul.f32 %v1945, %v2089
        %v2322 = vmul.f32 %v1946, %v2090
        %v2323 = vmul.f32 %v1947, %v2091
        %v2324 = vmul.f32 %v1948, %v2092
        %v2325 = vmul.f32 %v1949, %v2093
        %v2326 = vmul.f32 %v1950, %v2094
        %2327 = vadd.xlane.f32.xlu0 %v2319
        %v2328 = vpop.xlane.xlu0 %2327
        %2329 = vadd.xlane.f32.xlu0 %v2320
        %v2330 = vpop.xlane.xlu0 %2329
        %2331 = vadd.xlane.f32.xlu0 %v2321
        %v2332 = vpop.xlane.xlu0 %2331
        %2333 = vadd.xlane.f32.xlu0 %v2322
        %v2334 = vpop.xlane.xlu0 %2333
        %2335 = vadd.xlane.f32.xlu0 %v2323
        %v2336 = vpop.xlane.xlu0 %2335
        %2337 = vadd.xlane.f32.xlu0 %v2324
        %v2338 = vpop.xlane.xlu0 %2337
        %2339 = vadd.xlane.f32.xlu0 %v2325
        %v2340 = vpop.xlane.xlu0 %2339
        %2341 = vadd.xlane.f32.xlu0 %v2326
        %v2342 = vpop.xlane.xlu0 %2341
        %v2343 = vmul.f32 %v2087, %v2175
        %v2344 = vmul.f32 %v2088, %v2176
        %v2345 = vmul.f32 %v2089, %v2177
        %v2346 = vmul.f32 %v2090, %v2178
        %v2347 = vmul.f32 %v2091, %v2179
        %v2348 = vmul.f32 %v2092, %v2180
        %v2349 = vmul.f32 %v2093, %v2181
        %v2350 = vmul.f32 %v2094, %v2182
        %2351 = vadd.xlane.f32.xlu0 %v2343
        %v2352 = vpop.xlane.xlu0 %2351
        %2353 = vadd.xlane.f32.xlu0 %v2344
        %v2354 = vpop.xlane.xlu0 %2353
        %2355 = vadd.xlane.f32.xlu0 %v2345
        %v2356 = vpop.xlane.xlu0 %2355
        %2357 = vadd.xlane.f32.xlu0 %v2346
        %v2358 = vpop.xlane.xlu0 %2357
        %2359 = vadd.xlane.f32.xlu0 %v2347
        %v2360 = vpop.xlane.xlu0 %2359
        %2361 = vadd.xlane.f32.xlu0 %v2348
        %v2362 = vpop.xlane.xlu0 %2361
        %2363 = vadd.xlane.f32.xlu0 %v2349
        %v2364 = vpop.xlane.xlu0 %2363
        %2365 = vadd.xlane.f32.xlu0 %v2350
        %v2366 = vpop.xlane.xlu0 %2365
        %v2367 = vmul.f32 %v2352, 0.25
        %v2368 = vmul.f32 %v2354, 0.25
        %v2369 = vmul.f32 %v2356, 0.25
        %v2370 = vmul.f32 %v2358, 0.25
        %v2371 = vmul.f32 %v2360, 0.25
        %v2372 = vmul.f32 %v2362, 0.25
        %v2373 = vmul.f32 %v2364, 0.25
        %v2374 = vmul.f32 %v2366, 0.25
        %v2375 = vadd.f32 %v2328, %v2367
        %v2376 = vadd.f32 %v2330, %v2368
        %v2377 = vadd.f32 %v2332, %v2369
        %v2378 = vadd.f32 %v2334, %v2370
        %v2379 = vadd.f32 %v2336, %v2371
        %v2380 = vadd.f32 %v2338, %v2372
        %v2381 = vadd.f32 %v2340, %v2373
        %v2382 = vadd.f32 %v2342, %v2374
        %v2383 = vmul.f32 %v1943, %v2135
        %v2384 = vmul.f32 %v1944, %v2136
        %v2385 = vmul.f32 %v1945, %v2137
        %v2386 = vmul.f32 %v1946, %v2138
        %v2387 = vmul.f32 %v1947, %v2139
        %v2388 = vmul.f32 %v1948, %v2140
        %v2389 = vmul.f32 %v1949, %v2141
        %v2390 = vmul.f32 %v1950, %v2142
        %2391 = vadd.xlane.f32.xlu0 %v2383
        %v2392 = vpop.xlane.xlu0 %2391
        %2393 = vadd.xlane.f32.xlu0 %v2384
        %v2394 = vpop.xlane.xlu0 %2393
        %2395 = vadd.xlane.f32.xlu0 %v2385
        %v2396 = vpop.xlane.xlu0 %2395
        %2397 = vadd.xlane.f32.xlu0 %v2386
        %v2398 = vpop.xlane.xlu0 %2397
        %2399 = vadd.xlane.f32.xlu0 %v2387
        %v2400 = vpop.xlane.xlu0 %2399
        %2401 = vadd.xlane.f32.xlu0 %v2388
        %v2402 = vpop.xlane.xlu0 %2401
        %2403 = vadd.xlane.f32.xlu0 %v2389
        %v2404 = vpop.xlane.xlu0 %2403
        %2405 = vadd.xlane.f32.xlu0 %v2390
        %v2406 = vpop.xlane.xlu0 %2405
        %v2407 = vmul.f32 %v2135, %v2175
        %v2408 = vmul.f32 %v2136, %v2176
        %v2409 = vmul.f32 %v2137, %v2177
        %v2410 = vmul.f32 %v2138, %v2178
        %v2411 = vmul.f32 %v2139, %v2179
        %v2412 = vmul.f32 %v2140, %v2180
        %v2413 = vmul.f32 %v2141, %v2181
        %v2414 = vmul.f32 %v2142, %v2182
        %2415 = vadd.xlane.f32.xlu0 %v2407
        %v2416 = vpop.xlane.xlu0 %2415
        %2417 = vadd.xlane.f32.xlu0 %v2408
        %v2418 = vpop.xlane.xlu0 %2417
        %2419 = vadd.xlane.f32.xlu0 %v2409
        %v2420 = vpop.xlane.xlu0 %2419
        %2421 = vadd.xlane.f32.xlu0 %v2410
        %v2422 = vpop.xlane.xlu0 %2421
        %2423 = vadd.xlane.f32.xlu0 %v2411
        %v2424 = vpop.xlane.xlu0 %2423
        %2425 = vadd.xlane.f32.xlu0 %v2412
        %v2426 = vpop.xlane.xlu0 %2425
        %2427 = vadd.xlane.f32.xlu0 %v2413
        %v2428 = vpop.xlane.xlu0 %2427
        %2429 = vadd.xlane.f32.xlu0 %v2414
        %v2430 = vpop.xlane.xlu0 %2429
        %v2431 = vmul.f32 %v2416, 0.25
        %v2432 = vmul.f32 %v2418, 0.25
        %v2433 = vmul.f32 %v2420, 0.25
        %v2434 = vmul.f32 %v2422, 0.25
        %v2435 = vmul.f32 %v2424, 0.25
        %v2436 = vmul.f32 %v2426, 0.25
        %v2437 = vmul.f32 %v2428, 0.25
        %v2438 = vmul.f32 %v2430, 0.25
        %v2439 = vadd.f32 %v2392, %v2431
        %v2440 = vadd.f32 %v2394, %v2432
        %v2441 = vadd.f32 %v2396, %v2433
        %v2442 = vadd.f32 %v2398, %v2434
        %v2443 = vadd.f32 %v2400, %v2435
        %v2444 = vadd.f32 %v2402, %v2436
        %v2445 = vadd.f32 %v2404, %v2437
        %v2446 = vadd.f32 %v2406, %v2438
        %v2447 = vmax.f32 %v2247, %v2311
        %v2448 = vmax.f32 %v2248, %v2312
        %v2449 = vmax.f32 %v2249, %v2313
        %v2450 = vmax.f32 %v2250, %v2314
        %v2451 = vmax.f32 %v2251, %v2315
        %v2452 = vmax.f32 %v2252, %v2316
        %v2453 = vmax.f32 %v2253, %v2317
        %v2454 = vmax.f32 %v2254, %v2318
        %v2455 = vmax.f32 %v2447, %v2375
        %v2456 = vmax.f32 %v2448, %v2376
        %v2457 = vmax.f32 %v2449, %v2377
        %v2458 = vmax.f32 %v2450, %v2378
        %v2459 = vmax.f32 %v2451, %v2379
        %v2460 = vmax.f32 %v2452, %v2380
        %v2461 = vmax.f32 %v2453, %v2381
        %v2462 = vmax.f32 %v2454, %v2382
        %v2463 = vmax.f32 %v2455, %v2439
        %v2464 = vmax.f32 %v2456, %v2440
        %v2465 = vmax.f32 %v2457, %v2441
        %v2466 = vmax.f32 %v2458, %v2442
        %v2467 = vmax.f32 %v2459, %v2443
        %v2468 = vmax.f32 %v2460, %v2444
        %v2469 = vmax.f32 %v2461, %v2445
        %v2470 = vmax.f32 %v2462, %v2446
        %v2471 = vsub.f32 %v2247, %v2463
        %v2472 = vsub.f32 %v2248, %v2464
        %v2473 = vsub.f32 %v2249, %v2465
        %v2474 = vsub.f32 %v2250, %v2466
        %v2475 = vsub.f32 %v2251, %v2467
        %v2476 = vsub.f32 %v2252, %v2468
        %v2477 = vsub.f32 %v2253, %v2469
        %v2478 = vsub.f32 %v2254, %v2470
        %v2479 = vmul.f32 %v2471, 1.442695
        %v2480 = vpow.pop %v2479
        %v2481 = vmul.f32 %v2472, 1.442695
        %v2482 = vpow.pop %v2481
        %v2483 = vmul.f32 %v2473, 1.442695
        %v2484 = vpow.pop %v2483
        %v2485 = vmul.f32 %v2474, 1.442695
        %v2486 = vpow.pop %v2485
        %v2487 = vmul.f32 %v2475, 1.442695
        %v2488 = vpow.pop %v2487
        %v2489 = vmul.f32 %v2476, 1.442695
        %v2490 = vpow.pop %v2489
        %v2491 = vmul.f32 %v2477, 1.442695
        %v2492 = vpow.pop %v2491
        %v2493 = vmul.f32 %v2478, 1.442695
        %v2494 = vpow.pop %v2493
        %v2495 = vsub.f32 %v2311, %v2463
        %v2496 = vsub.f32 %v2312, %v2464
        %v2497 = vsub.f32 %v2313, %v2465
        %v2498 = vsub.f32 %v2314, %v2466
        %v2499 = vsub.f32 %v2315, %v2467
        %v2500 = vsub.f32 %v2316, %v2468
        %v2501 = vsub.f32 %v2317, %v2469
        %v2502 = vsub.f32 %v2318, %v2470
        %v2503 = vmul.f32 %v2495, 1.442695
        %v2504 = vpow.pop %v2503
        %v2505 = vmul.f32 %v2496, 1.442695
        %v2506 = vpow.pop %v2505
        %v2507 = vmul.f32 %v2497, 1.442695
        %v2508 = vpow.pop %v2507
        %v2509 = vmul.f32 %v2498, 1.442695
        %v2510 = vpow.pop %v2509
        %v2511 = vmul.f32 %v2499, 1.442695
        %v2512 = vpow.pop %v2511
        %v2513 = vmul.f32 %v2500, 1.442695
        %v2514 = vpow.pop %v2513
        %v2515 = vmul.f32 %v2501, 1.442695
        %v2516 = vpow.pop %v2515
        %v2517 = vmul.f32 %v2502, 1.442695
        %v2518 = vpow.pop %v2517
        %v2519 = vsub.f32 %v2375, %v2463
        %v2520 = vsub.f32 %v2376, %v2464
        %v2521 = vsub.f32 %v2377, %v2465
        %v2522 = vsub.f32 %v2378, %v2466
        %v2523 = vsub.f32 %v2379, %v2467
        %v2524 = vsub.f32 %v2380, %v2468
        %v2525 = vsub.f32 %v2381, %v2469
        %v2526 = vsub.f32 %v2382, %v2470
        %v2527 = vmul.f32 %v2519, 1.442695
        %v2528 = vpow.pop %v2527
        %v2529 = vmul.f32 %v2520, 1.442695
        %v2530 = vpow.pop %v2529
        %v2531 = vmul.f32 %v2521, 1.442695
        %v2532 = vpow.pop %v2531
        %v2533 = vmul.f32 %v2522, 1.442695
        %v2534 = vpow.pop %v2533
        %v2535 = vmul.f32 %v2523, 1.442695
        %v2536 = vpow.pop %v2535
        %v2537 = vmul.f32 %v2524, 1.442695
        %v2538 = vpow.pop %v2537
        %v2539 = vmul.f32 %v2525, 1.442695
        %v2540 = vpow.pop %v2539
        %v2541 = vmul.f32 %v2526, 1.442695
        %v2542 = vpow.pop %v2541
        %v2543 = vsub.f32 %v2439, %v2463
        %v2544 = vsub.f32 %v2440, %v2464
        %v2545 = vsub.f32 %v2441, %v2465
        %v2546 = vsub.f32 %v2442, %v2466
        %v2547 = vsub.f32 %v2443, %v2467
        %v2548 = vsub.f32 %v2444, %v2468
        %v2549 = vsub.f32 %v2445, %v2469
        %v2550 = vsub.f32 %v2446, %v2470
        %v2551 = vmul.f32 %v2543, 1.442695
        %v2552 = vpow.pop %v2551
        %v2553 = vmul.f32 %v2544, 1.442695
        %v2554 = vpow.pop %v2553
        %v2555 = vmul.f32 %v2545, 1.442695
        %v2556 = vpow.pop %v2555
        %v2557 = vmul.f32 %v2546, 1.442695
        %v2558 = vpow.pop %v2557
        %v2559 = vmul.f32 %v2547, 1.442695
        %v2560 = vpow.pop %v2559
        %v2561 = vmul.f32 %v2548, 1.442695
        %v2562 = vpow.pop %v2561
        %v2563 = vmul.f32 %v2549, 1.442695
        %v2564 = vpow.pop %v2563
        %v2565 = vmul.f32 %v2550, 1.442695
        %v2566 = vpow.pop %v2565
        %v2567 = vadd.f32 %v2480, %v2504
        %v2568 = vadd.f32 %v2482, %v2506
        %v2569 = vadd.f32 %v2484, %v2508
        %v2570 = vadd.f32 %v2486, %v2510
        %v2571 = vadd.f32 %v2488, %v2512
        %v2572 = vadd.f32 %v2490, %v2514
        %v2573 = vadd.f32 %v2492, %v2516
        %v2574 = vadd.f32 %v2494, %v2518
        %v2575 = vadd.f32 %v2567, %v2528
        %v2576 = vadd.f32 %v2568, %v2530
        %v2577 = vadd.f32 %v2569, %v2532
        %v2578 = vadd.f32 %v2570, %v2534
        %v2579 = vadd.f32 %v2571, %v2536
        %v2580 = vadd.f32 %v2572, %v2538
        %v2581 = vadd.f32 %v2573, %v2540
        %v2582 = vadd.f32 %v2574, %v2542
        %v2583 = vadd.f32 %v2575, %v2552
        %v2584 = vadd.f32 %v2576, %v2554
        %v2585 = vadd.f32 %v2577, %v2556
        %v2586 = vadd.f32 %v2578, %v2558
        %v2587 = vadd.f32 %v2579, %v2560
        %v2588 = vadd.f32 %v2580, %v2562
        %v2589 = vadd.f32 %v2581, %v2564
        %v2590 = vadd.f32 %v2582, %v2566
        %v2591 = vrcp.pop %v2583
        %v2592 = vmul.f32 1.0, %v2591
        %v2593 = vrcp.pop %v2584
        %v2594 = vmul.f32 1.0, %v2593
        %v2595 = vrcp.pop %v2585
        %v2596 = vmul.f32 1.0, %v2595
        %v2597 = vrcp.pop %v2586
        %v2598 = vmul.f32 1.0, %v2597
        %v2599 = vrcp.pop %v2587
        %v2600 = vmul.f32 1.0, %v2599
        %v2601 = vrcp.pop %v2588
        %v2602 = vmul.f32 1.0, %v2601
        %v2603 = vrcp.pop %v2589
        %v2604 = vmul.f32 1.0, %v2603
        %v2605 = vrcp.pop %v2590
        %v2606 = vmul.f32 1.0, %v2605
        %v2607 = vmul.f32 %v2480, %v2592
        %v2608 = vmul.f32 %v2482, %v2594
        %v2609 = vmul.f32 %v2484, %v2596
        %v2610 = vmul.f32 %v2486, %v2598
        %v2611 = vmul.f32 %v2488, %v2600
        %v2612 = vmul.f32 %v2490, %v2602
        %v2613 = vmul.f32 %v2492, %v2604
        %v2614 = vmul.f32 %v2494, %v2606
        %v2615 = vmul.f32 %v2607, %v1871
        %v2616 = vmul.f32 %v2608, %v1872
        %v2617 = vmul.f32 %v2609, %v1873
        %v2618 = vmul.f32 %v2610, %v1874
        %v2619 = vmul.f32 %v2611, %v1875
        %v2620 = vmul.f32 %v2612, %v1876
        %v2621 = vmul.f32 %v2613, %v1877
        %v2622 = vmul.f32 %v2614, %v1878
        %v2623 = vmul.f32 %v2504, %v2592
        %v2624 = vmul.f32 %v2506, %v2594
        %v2625 = vmul.f32 %v2508, %v2596
        %v2626 = vmul.f32 %v2510, %v2598
        %v2627 = vmul.f32 %v2512, %v2600
        %v2628 = vmul.f32 %v2514, %v2602
        %v2629 = vmul.f32 %v2516, %v2604
        %v2630 = vmul.f32 %v2518, %v2606
        %v2631 = vmul.f32 %v2623, %v1879
        %v2632 = vmul.f32 %v2624, %v1880
        %v2633 = vmul.f32 %v2625, %v1881
        %v2634 = vmul.f32 %v2626, %v1882
        %v2635 = vmul.f32 %v2627, %v1883
        %v2636 = vmul.f32 %v2628, %v1884
        %v2637 = vmul.f32 %v2629, %v1885
        %v2638 = vmul.f32 %v2630, %v1886
        %v2639 = vadd.f32 %v2615, %v2631
        %v2640 = vadd.f32 %v2616, %v2632
        %v2641 = vadd.f32 %v2617, %v2633
        %v2642 = vadd.f32 %v2618, %v2634
        %v2643 = vadd.f32 %v2619, %v2635
        %v2644 = vadd.f32 %v2620, %v2636
        %v2645 = vadd.f32 %v2621, %v2637
        %v2646 = vadd.f32 %v2622, %v2638
        %v2647 = vmul.f32 %v2528, %v2592
        %v2648 = vmul.f32 %v2530, %v2594
        %v2649 = vmul.f32 %v2532, %v2596
        %v2650 = vmul.f32 %v2534, %v2598
        %v2651 = vmul.f32 %v2536, %v2600
        %v2652 = vmul.f32 %v2538, %v2602
        %v2653 = vmul.f32 %v2540, %v2604
        %v2654 = vmul.f32 %v2542, %v2606
        %v2655 = vmul.f32 %v2647, %v1887
        %v2656 = vmul.f32 %v2648, %v1888
        %v2657 = vmul.f32 %v2649, %v1889
        %v2658 = vmul.f32 %v2650, %v1890
        %v2659 = vmul.f32 %v2651, %v1891
        %v2660 = vmul.f32 %v2652, %v1892
        %v2661 = vmul.f32 %v2653, %v1893
        %v2662 = vmul.f32 %v2654, %v1894
        %v2663 = vadd.f32 %v2639, %v2655
        %v2664 = vadd.f32 %v2640, %v2656
        %v2665 = vadd.f32 %v2641, %v2657
        %v2666 = vadd.f32 %v2642, %v2658
        %v2667 = vadd.f32 %v2643, %v2659
        %v2668 = vadd.f32 %v2644, %v2660
        %v2669 = vadd.f32 %v2645, %v2661
        %v2670 = vadd.f32 %v2646, %v2662
        %v2671 = vmul.f32 %v2552, %v2592
        %v2672 = vmul.f32 %v2554, %v2594
        %v2673 = vmul.f32 %v2556, %v2596
        %v2674 = vmul.f32 %v2558, %v2598
        %v2675 = vmul.f32 %v2560, %v2600
        %v2676 = vmul.f32 %v2562, %v2602
        %v2677 = vmul.f32 %v2564, %v2604
        %v2678 = vmul.f32 %v2566, %v2606
        %v2679 = vmul.f32 %v2671, %v1895
        %v2680 = vmul.f32 %v2672, %v1896
        %v2681 = vmul.f32 %v2673, %v1897
        %v2682 = vmul.f32 %v2674, %v1898
        %v2683 = vmul.f32 %v2675, %v1899
        %v2684 = vmul.f32 %v2676, %v1900
        %v2685 = vmul.f32 %v2677, %v1901
        %v2686 = vmul.f32 %v2678, %v1902
        %v2687 = vadd.f32 %v2663, %v2679
        %v2688 = vadd.f32 %v2664, %v2680
        %v2689 = vadd.f32 %v2665, %v2681
        %v2690 = vadd.f32 %v2666, %v2682
        %v2691 = vadd.f32 %v2667, %v2683
        %v2692 = vadd.f32 %v2668, %v2684
        %v2693 = vadd.f32 %v2669, %v2685
        %v2694 = vadd.f32 %v2670, %v2686
        %v2695 = vadd.f32 %v1583, %v2183
        %v2696 = vadd.f32 %v1584, %v2184
        %v2697 = vadd.f32 %v1585, %v2185
        %v2698 = vadd.f32 %v1586, %v2186
        %v2699 = vadd.f32 %v1587, %v2187
        %v2700 = vadd.f32 %v1588, %v2188
        %v2701 = vadd.f32 %v1589, %v2189
        %v2702 = vadd.f32 %v1590, %v2190
        %v2703 = vsub.f32 %v2695, %v2687
        %v2704 = vsub.f32 %v2696, %v2688
        %v2705 = vsub.f32 %v2697, %v2689
        %v2706 = vsub.f32 %v2698, %v2690
        %v2707 = vsub.f32 %v2699, %v2691
        %v2708 = vsub.f32 %v2700, %v2692
        %v2709 = vsub.f32 %v2701, %v2693
        %v2710 = vsub.f32 %v2702, %v2694
        %v2711 = vmul.f32 %v2703, 0.25
        %v2712 = vmul.f32 %v2704, 0.25
        %v2713 = vmul.f32 %v2705, 0.25
        %v2714 = vmul.f32 %v2706, 0.25
        %v2715 = vmul.f32 %v2707, 0.25
        %v2716 = vmul.f32 %v2708, 0.25
        %v2717 = vmul.f32 %v2709, 0.25
        %v2718 = vmul.f32 %v2710, 0.25
        %v2719 = vld [vmem:[#allocation22] sm:$0xff]
        %v2720 = vld [vmem:[#allocation22 + $0x8] sm:$0xff]
        %v2721 = vld [vmem:[#allocation22 + $0x10] sm:$0xff]
        %v2722 = vld [vmem:[#allocation22 + $0x18] sm:$0xff]
        %v2723 = vld [vmem:[#allocation22 + $0x20] sm:$0xff]
        %v2724 = vld [vmem:[#allocation22 + $0x28] sm:$0xff]
        %v2725 = vld [vmem:[#allocation22 + $0x30] sm:$0xff]
        %v2726 = vld [vmem:[#allocation22 + $0x38] sm:$0xff]
        %v2727 = vld [vmem:[#allocation22 + $0x40] sm:$0xff]
        %v2728 = vld [vmem:[#allocation22 + $0x48] sm:$0xff]
        %v2729 = vld [vmem:[#allocation22 + $0x50] sm:$0xff]
        %v2730 = vld [vmem:[#allocation22 + $0x58] sm:$0xff]
        %v2731 = vld [vmem:[#allocation22 + $0x60] sm:$0xff]
        %v2732 = vld [vmem:[#allocation22 + $0x68] sm:$0xff]
        %v2733 = vld [vmem:[#allocation22 + $0x70] sm:$0xff]
        %v2734 = vld [vmem:[#allocation22 + $0x78] sm:$0xff]
        %v2735 = vld [vmem:[#allocation23] sm:$0x1]
        %v2737 = vlaneseq
        %v2738 = vshrl.u32 %v2737, 7
        %v2739 = vsub.s32 0, %v2738
        %v2740 = vrot.slane %v2735, %v2739
        %2742 = vmatprep.subr.mxu0 0.0
        %2743 = vmatpush1.msra.mxu0 %v2734
        %2744 = vmatprep.subr.mxu0 0.0
        %2745 = vmatpush1.msra.mxu0 %v2733
        %2746 = vmatprep.subr.mxu0 0.0
        %2747 = vmatpush1.msra.mxu0 %v2732
        %2748 = vmatprep.subr.mxu0 0.0
        %2749 = vmatpush1.msra.mxu0 %v2731
        %2750 = vmatprep.subr.mxu0 0.0
        %2751 = vmatpush1.msra.mxu0 %v2730
        %2752 = vmatprep.subr.mxu0 0.0
        %2753 = vmatpush1.msra.mxu0 %v2729
        %2754 = vmatprep.subr.mxu0 0.0
        %2755 = vmatpush1.msra.mxu0 %v2728
        %2756 = vmatprep.subr.mxu0 0.0
        %2757 = vmatpush1.msra.mxu0 %v2727
        %2758 = vmatprep.subr.mxu0 0.0
        %2759 = vmatpush1.msra.mxu0 %v2726
        %2760 = vmatprep.subr.mxu0 0.0
        %2761 = vmatpush1.msra.mxu0 %v2725
        %2762 = vmatprep.subr.mxu0 0.0
        %2763 = vmatpush1.msra.mxu0 %v2724
        %2764 = vmatprep.subr.mxu0 0.0
        %2765 = vmatpush1.msra.mxu0 %v2723
        %2766 = vmatprep.subr.mxu0 0.0
        %2767 = vmatpush1.msra.mxu0 %v2722
        %2768 = vmatprep.subr.mxu0 0.0
        %2769 = vmatpush1.msra.mxu0 %v2721
        %2770 = vmatprep.subr.mxu0 0.0
        %2771 = vmatpush1.msra.mxu0 %v2720
        %2772 = vmatprep.subr.mxu0 0.0
        %2773 = vmatpush1.msra.mxu0 %v2719
        %2774 = vmatprep.subr.mxu0 0.0
        %2775 = vmatpush2.msra.mxu0 0.0
        %2776 = vmatprep.subr.mxu0 0.0
        %2777 = vmatpush2.msra.mxu0 0.0
        %2778 = vmatprep.subr.mxu0 0.0
        %2779 = vmatpush2.msra.mxu0 0.0
        %2780 = vmatprep.subr.mxu0 0.0
        %2781 = vmatpush2.msra.mxu0 0.0
        %2782 = vmatprep.subr.mxu0 0.0
        %2783 = vmatpush2.msra.mxu0 0.0
        %2784 = vmatprep.subr.mxu0 0.0
        %2785 = vmatpush2.msra.mxu0 0.0
        %2786 = vmatprep.subr.mxu0 0.0
        %2787 = vmatpush2.msra.mxu0 0.0
        %2788 = vmatprep.subr.mxu0 0.0
        %2789 = vmatpush2.msra.mxu0 0.0
        %2790 = vmatprep.subr.mxu0 0.0
        %2791 = vmatpush2.msra.mxu0 0.0
        %2792 = vmatprep.subr.mxu0 0.0
        %2793 = vmatpush2.msra.mxu0 0.0
        %2794 = vmatprep.subr.mxu0 0.0
        %2795 = vmatpush2.msra.mxu0 0.0
        %2796 = vmatprep.subr.mxu0 0.0
        %2797 = vmatpush2.msra.mxu0 0.0
        %2798 = vmatprep.subr.mxu0 0.0
        %2799 = vmatpush2.msra.mxu0 0.0
        %2800 = vmatprep.subr.mxu0 0.0
        %2801 = vmatpush2.msra.mxu0 0.0
        %2802 = vmatprep.subr.mxu0 0.0
        %2803 = vmatpush2.msra.mxu0 0.0
        %2804 = vmatprep.subr.mxu0 0.0
        %2805 = vmatpush2.msra.mxu0 0.0
        %2806 = vmatprep.mubr.f32.mxu0 0.0
        %2807 = vmatmul.mubr.f32.gmra.mxu0 %v2711
        %v2808 = vpop.f32.mrf.mxu0
        %v2809 = vadd.f32 %v2740, %v2808
        %v2810 = vpop.f32.mrf.mxu0
        %2811 = vmatprep.mubr.f32.mxu0 0.0
        %2812 = vmatmul.mubr.f32.gmra.mxu0 %v2712
        %v2813 = vpop.f32.mrf.mxu0
        %v2814 = vadd.f32 %v2740, %v2813
        %v2815 = vpop.f32.mrf.mxu0
        %2816 = vmatprep.mubr.f32.mxu0 0.0
        %2817 = vmatmul.mubr.f32.gmra.mxu0 %v2713
        %v2818 = vpop.f32.mrf.mxu0
        %v2819 = vadd.f32 %v2740, %v2818
        %v2820 = vpop.f32.mrf.mxu0
        %2821 = vmatprep.mubr.f32.mxu0 0.0
        %2822 = vmatmul.mubr.f32.gmra.mxu0 %v2714
        %v2823 = vpop.f32.mrf.mxu0
        %v2824 = vadd.f32 %v2740, %v2823
        %v2825 = vpop.f32.mrf.mxu0
        %2826 = vmatprep.mubr.f32.mxu0 0.0
        %2827 = vmatmul.mubr.f32.gmra.mxu0 %v2715
        %v2828 = vpop.f32.mrf.mxu0
        %v2829 = vadd.f32 %v2740, %v2828
        %v2830 = vpop.f32.mrf.mxu0
        %2831 = vmatprep.mubr.f32.mxu0 0.0
        %2832 = vmatmul.mubr.f32.gmra.mxu0 %v2716
        %v2833 = vpop.f32.mrf.mxu0
        %v2834 = vadd.f32 %v2740, %v2833
        %v2835 = vpop.f32.mrf.mxu0
        %2836 = vmatprep.mubr.f32.mxu0 0.0
        %2837 = vmatmul.mubr.f32.gmra.mxu0 %v2717
        %v2838 = vpop.f32.mrf.mxu0
        %v2839 = vadd.f32 %v2740, %v2838
        %v2840 = vpop.f32.mrf.mxu0
        %2841 = vmatprep.mubr.f32.mxu0 0.0
        %2842 = vmatmul.mubr.f32.gmra.mxu0 %v2718
        %v2843 = vpop.f32.mrf.mxu0
        %v2844 = vadd.f32 %v2740, %v2843
        %v2845 = vpop.f32.mrf.mxu0
        %2846 = vdwg.mxu0
        %v2847 = vmax.f32 %v2809, 0.0
        %v2848 = vmax.f32 %v2814, 0.0
        %v2849 = vmax.f32 %v2819, 0.0
        %v2850 = vmax.f32 %v2824, 0.0
        %v2851 = vmax.f32 %v2829, 0.0
        %v2852 = vmax.f32 %v2834, 0.0
        %v2853 = vmax.f32 %v2839, 0.0
        %v2854 = vmax.f32 %v2844, 0.0
        %v2855 = vld [vmem:[#allocation25] sm:$0xff]
        %v2856 = vld [vmem:[#allocation25 + $0x8] sm:$0xff]
        %v2857 = vld [vmem:[#allocation25 + $0x10] sm:$0xff]
        %v2858 = vld [vmem:[#allocation25 + $0x18] sm:$0xff]
        %v2859 = vld [vmem:[#allocation25 + $0x20] sm:$0xff]
        %v2860 = vld [vmem:[#allocation25 + $0x28] sm:$0xff]
        %v2861 = vld [vmem:[#allocation25 + $0x30] sm:$0xff]
        %v2862 = vld [vmem:[#allocation25 + $0x38] sm:$0xff]
        %v2863 = vld [vmem:[#allocation25 + $0x40] sm:$0xff]
        %v2864 = vld [vmem:[#allocation25 + $0x48] sm:$0xff]
        %v2865 = vld [vmem:[#allocation25 + $0x50] sm:$0xff]
        %v2866 = vld [vmem:[#allocation25 + $0x58] sm:$0xff]
        %v2867 = vld [vmem:[#allocation25 + $0x60] sm:$0xff]
        %v2868 = vld [vmem:[#allocation25 + $0x68] sm:$0xff]
        %v2869 = vld [vmem:[#allocation25 + $0x70] sm:$0xff]
        %v2870 = vld [vmem:[#allocation25 + $0x78] sm:$0xff]
        %v2871 = vld [vmem:[#allocation25 + $0x80] sm:$0xff]
        %v2872 = vld [vmem:[#allocation25 + $0x88] sm:$0xff]
        %v2873 = vld [vmem:[#allocation25 + $0x90] sm:$0xff]
        %v2874 = vld [vmem:[#allocation25 + $0x98] sm:$0xff]
        %v2875 = vld [vmem:[#allocation25 + $0xa0] sm:$0xff]
        %v2876 = vld [vmem:[#allocation25 + $0xa8] sm:$0xff]
        %v2877 = vld [vmem:[#allocation25 + $0xb0] sm:$0xff]
        %v2878 = vld [vmem:[#allocation25 + $0xb8] sm:$0xff]
        %v2879 = vld [vmem:[#allocation25 + $0xc0] sm:$0xff]
        %v2880 = vld [vmem:[#allocation25 + $0xc8] sm:$0xff]
        %v2881 = vld [vmem:[#allocation25 + $0xd0] sm:$0xff]
        %v2882 = vld [vmem:[#allocation25 + $0xd8] sm:$0xff]
        %v2883 = vld [vmem:[#allocation25 + $0xe0] sm:$0xff]
        %v2884 = vld [vmem:[#allocation25 + $0xe8] sm:$0xff]
        %v2885 = vld [vmem:[#allocation25 + $0xf0] sm:$0xff]
        %v2886 = vld [vmem:[#allocation25 + $0xf8] sm:$0xff]
        %2887 = vmatprep.subr.mxu0 0.0
        %2888 = vmatpush1.msra.mxu0 %v2886
        %2889 = vmatprep.subr.mxu0 0.0
        %2890 = vmatpush1.msra.mxu0 %v2885
        %2891 = vmatprep.subr.mxu0 0.0
        %2892 = vmatpush1.msra.mxu0 %v2884
        %2893 = vmatprep.subr.mxu0 0.0
        %2894 = vmatpush1.msra.mxu0 %v2883
        %2895 = vmatprep.subr.mxu0 0.0
        %2896 = vmatpush1.msra.mxu0 %v2882
        %2897 = vmatprep.subr.mxu0 0.0
        %2898 = vmatpush1.msra.mxu0 %v2881
        %2899 = vmatprep.subr.mxu0 0.0
        %2900 = vmatpush1.msra.mxu0 %v2880
        %2901 = vmatprep.subr.mxu0 0.0
        %2902 = vmatpush1.msra.mxu0 %v2879
        %2903 = vmatprep.subr.mxu0 0.0
        %2904 = vmatpush1.msra.mxu0 %v2878
        %2905 = vmatprep.subr.mxu0 0.0
        %2906 = vmatpush1.msra.mxu0 %v2877
        %2907 = vmatprep.subr.mxu0 0.0
        %2908 = vmatpush1.msra.mxu0 %v2876
        %2909 = vmatprep.subr.mxu0 0.0
        %2910 = vmatpush1.msra.mxu0 %v2875
        %2911 = vmatprep.subr.mxu0 0.0
        %2912 = vmatpush1.msra.mxu0 %v2874
        %2913 = vmatprep.subr.mxu0 0.0
        %2914 = vmatpush1.msra.mxu0 %v2873
        %2915 = vmatprep.subr.mxu0 0.0
        %2916 = vmatpush1.msra.mxu0 %v2872
        %2917 = vmatprep.subr.mxu0 0.0
        %2918 = vmatpush1.msra.mxu0 %v2871
        %2919 = vmatprep.subr.mxu0 0.0
        %2920 = vmatpush2.msra.mxu0 0.0
        %2921 = vmatprep.subr.mxu0 0.0
        %2922 = vmatpush2.msra.mxu0 0.0
        %2923 = vmatprep.subr.mxu0 0.0
        %2924 = vmatpush2.msra.mxu0 0.0
        %2925 = vmatprep.subr.mxu0 0.0
        %2926 = vmatpush2.msra.mxu0 0.0
        %2927 = vmatprep.subr.mxu0 0.0
        %2928 = vmatpush2.msra.mxu0 0.0
        %2929 = vmatprep.subr.mxu0 0.0
        %2930 = vmatpush2.msra.mxu0 0.0
        %2931 = vmatprep.subr.mxu0 0.0
        %2932 = vmatpush2.msra.mxu0 0.0
        %2933 = vmatprep.subr.mxu0 0.0
        %2934 = vmatpush2.msra.mxu0 0.0
        %2935 = vmatprep.subr.mxu0 0.0
        %2936 = vmatpush2.msra.mxu0 0.0
        %2937 = vmatprep.subr.mxu0 0.0
        %2938 = vmatpush2.msra.mxu0 0.0
        %2939 = vmatprep.subr.mxu0 0.0
        %2940 = vmatpush2.msra.mxu0 0.0
        %2941 = vmatprep.subr.mxu0 0.0
        %2942 = vmatpush2.msra.mxu0 0.0
        %2943 = vmatprep.subr.mxu0 0.0
        %2944 = vmatpush2.msra.mxu0 0.0
        %2945 = vmatprep.subr.mxu0 0.0
        %2946 = vmatpush2.msra.mxu0 0.0
        %2947 = vmatprep.subr.mxu0 0.0
        %2948 = vmatpush2.msra.mxu0 0.0
        %2949 = vmatprep.subr.mxu0 0.0
        %2950 = vmatpush2.msra.mxu0 0.0
        %2951 = vmatprep.mubr.f32.mxu0 0.0
        %2952 = vmatmul.mubr.f32.gmra.mxu0 %v1439
        %v2953 = vpop.f32.mrf.mxu0
        %v2954 = vadd.f32 0.0, %v2953
        %v2955 = vpop.f32.mrf.mxu0
        %2956 = vmatprep.mubr.f32.mxu0 0.0
        %2957 = vmatmul.mubr.f32.gmra.mxu0 %v1440
        %v2958 = vpop.f32.mrf.mxu0
        %v2959 = vadd.f32 0.0, %v2958
        %v2960 = vpop.f32.mrf.mxu0
        %2961 = vmatprep.mubr.f32.mxu0 0.0
        %2962 = vmatmul.mubr.f32.gmra.mxu0 %v1441
        %v2963 = vpop.f32.mrf.mxu0
        %v2964 = vadd.f32 0.0, %v2963
        %v2965 = vpop.f32.mrf.mxu0
        %2966 = vmatprep.mubr.f32.mxu0 0.0
        %2967 = vmatmul.mubr.f32.gmra.mxu0 %v1442
        %v2968 = vpop.f32.mrf.mxu0
        %v2969 = vadd.f32 0.0, %v2968
        %v2970 = vpop.f32.mrf.mxu0
        %2971 = vmatprep.mubr.f32.mxu0 0.0
        %2972 = vmatmul.mubr.f32.gmra.mxu0 %v1443
        %v2973 = vpop.f32.mrf.mxu0
        %v2974 = vadd.f32 0.0, %v2973
        %v2975 = vpop.f32.mrf.mxu0
        %2976 = vmatprep.mubr.f32.mxu0 0.0
        %2977 = vmatmul.mubr.f32.gmra.mxu0 %v1444
        %v2978 = vpop.f32.mrf.mxu0
        %v2979 = vadd.f32 0.0, %v2978
        %v2980 = vpop.f32.mrf.mxu0
        %2981 = vmatprep.mubr.f32.mxu0 0.0
        %2982 = vmatmul.mubr.f32.gmra.mxu0 %v1445
        %v2983 = vpop.f32.mrf.mxu0
        %v2984 = vadd.f32 0.0, %v2983
        %v2985 = vpop.f32.mrf.mxu0
        %2986 = vmatprep.mubr.f32.mxu0 0.0
        %2987 = vmatmul.mubr.f32.gmra.mxu0 %v1446
        %v2988 = vpop.f32.mrf.mxu0
        %v2989 = vadd.f32 0.0, %v2988
        %v2990 = vpop.f32.mrf.mxu0
        %2991 = vdwg.mxu0
        %2992 = vmatprep.subr.mxu0 0.0
        %2993 = vmatpush1.msra.mxu0 %v2870
        %2994 = vmatprep.subr.mxu0 0.0
        %2995 = vmatpush1.msra.mxu0 %v2869
        %2996 = vmatprep.subr.mxu0 0.0
        %2997 = vmatpush1.msra.mxu0 %v2868
        %2998 = vmatprep.subr.mxu0 0.0
        %2999 = vmatpush1.msra.mxu0 %v2867
        %3000 = vmatprep.subr.mxu0 0.0
        %3001 = vmatpush1.msra.mxu0 %v2866
        %3002 = vmatprep.subr.mxu0 0.0
        %3003 = vmatpush1.msra.mxu0 %v2865
        %3004 = vmatprep.subr.mxu0 0.0
        %3005 = vmatpush1.msra.mxu0 %v2864
        %3006 = vmatprep.subr.mxu0 0.0
        %3007 = vmatpush1.msra.mxu0 %v2863
        %3008 = vmatprep.subr.mxu0 0.0
        %3009 = vmatpush1.msra.mxu0 %v2862
        %3010 = vmatprep.subr.mxu0 0.0
        %3011 = vmatpush1.msra.mxu0 %v2861
        %3012 = vmatprep.subr.mxu0 0.0
        %3013 = vmatpush1.msra.mxu0 %v2860
        %3014 = vmatprep.subr.mxu0 0.0
        %3015 = vmatpush1.msra.mxu0 %v2859
        %3016 = vmatprep.subr.mxu0 0.0
        %3017 = vmatpush1.msra.mxu0 %v2858
        %3018 = vmatprep.subr.mxu0 0.0
        %3019 = vmatpush1.msra.mxu0 %v2857
        %3020 = vmatprep.subr.mxu0 0.0
        %3021 = vmatpush1.msra.mxu0 %v2856
        %3022 = vmatprep.subr.mxu0 0.0
        %3023 = vmatpush1.msra.mxu0 %v2855
        %3024 = vmatprep.subr.mxu0 0.0
        %3025 = vmatpush2.msra.mxu0 0.0
        %3026 = vmatprep.subr.mxu0 0.0
        %3027 = vmatpush2.msra.mxu0 0.0
        %3028 = vmatprep.subr.mxu0 0.0
        %3029 = vmatpush2.msra.mxu0 0.0
        %3030 = vmatprep.subr.mxu0 0.0
        %3031 = vmatpush2.msra.mxu0 0.0
        %3032 = vmatprep.subr.mxu0 0.0
        %3033 = vmatpush2.msra.mxu0 0.0
        %3034 = vmatprep.subr.mxu0 0.0
        %3035 = vmatpush2.msra.mxu0 0.0
        %3036 = vmatprep.subr.mxu0 0.0
        %3037 = vmatpush2.msra.mxu0 0.0
        %3038 = vmatprep.subr.mxu0 0.0
        %3039 = vmatpush2.msra.mxu0 0.0
        %3040 = vmatprep.subr.mxu0 0.0
        %3041 = vmatpush2.msra.mxu0 0.0
        %3042 = vmatprep.subr.mxu0 0.0
        %3043 = vmatpush2.msra.mxu0 0.0
        %3044 = vmatprep.subr.mxu0 0.0
        %3045 = vmatpush2.msra.mxu0 0.0
        %3046 = vmatprep.subr.mxu0 0.0
        %3047 = vmatpush2.msra.mxu0 0.0
        %3048 = vmatprep.subr.mxu0 0.0
        %3049 = vmatpush2.msra.mxu0 0.0
        %3050 = vmatprep.subr.mxu0 0.0
        %3051 = vmatpush2.msra.mxu0 0.0
        %3052 = vmatprep.subr.mxu0 0.0
        %3053 = vmatpush2.msra.mxu0 0.0
        %3054 = vmatprep.subr.mxu0 0.0
        %3055 = vmatpush2.msra.mxu0 0.0
        %3056 = vmatprep.mubr.f32.mxu0 0.0
        %3057 = vmatmul.mubr.f32.gmra.mxu0 %v1271
        %v3058 = vpop.f32.mrf.mxu0
        %v3059 = vadd.f32 %v2954, %v3058
        %v3060 = vpop.f32.mrf.mxu0
        %3061 = vmatprep.mubr.f32.mxu0 0.0
        %3062 = vmatmul.mubr.f32.gmra.mxu0 %v1272
        %v3063 = vpop.f32.mrf.mxu0
        %v3064 = vadd.f32 %v2959, %v3063
        %v3065 = vpop.f32.mrf.mxu0
        %3066 = vmatprep.mubr.f32.mxu0 0.0
        %3067 = vmatmul.mubr.f32.gmra.mxu0 %v1273
        %v3068 = vpop.f32.mrf.mxu0
        %v3069 = vadd.f32 %v2964, %v3068
        %v3070 = vpop.f32.mrf.mxu0
        %3071 = vmatprep.mubr.f32.mxu0 0.0
        %3072 = vmatmul.mubr.f32.gmra.mxu0 %v1274
        %v3073 = vpop.f32.mrf.mxu0
        %v3074 = vadd.f32 %v2969, %v3073
        %v3075 = vpop.f32.mrf.mxu0
        %3076 = vmatprep.mubr.f32.mxu0 0.0
        %3077 = vmatmul.mubr.f32.gmra.mxu0 %v1275
        %v3078 = vpop.f32.mrf.mxu0
        %v3079 = vadd.f32 %v2974, %v3078
        %v3080 = vpop.f32.mrf.mxu0
        %3081 = vmatprep.mubr.f32.mxu0 0.0
        %3082 = vmatmul.mubr.f32.gmra.mxu0 %v1276
        %v3083 = vpop.f32.mrf.mxu0
        %v3084 = vadd.f32 %v2979, %v3083
        %v3085 = vpop.f32.mrf.mxu0
        %3086 = vmatprep.mubr.f32.mxu0 0.0
        %3087 = vmatmul.mubr.f32.gmra.mxu0 %v1277
        %v3088 = vpop.f32.mrf.mxu0
        %v3089 = vadd.f32 %v2984, %v3088
        %v3090 = vpop.f32.mrf.mxu0
        %3091 = vmatprep.mubr.f32.mxu0 0.0
        %3092 = vmatmul.mubr.f32.gmra.mxu0 %v1278
        %v3093 = vpop.f32.mrf.mxu0
        %v3094 = vadd.f32 %v2989, %v3093
        %v3095 = vpop.f32.mrf.mxu0
        %3096 = vdwg.mxu0
        %v3097 = vld [vmem:[#allocation25 + $0x100] sm:$0xff]
        %v3098 = vld [vmem:[#allocation25 + $0x108] sm:$0xff]
        %v3099 = vld [vmem:[#allocation25 + $0x110] sm:$0xff]
        %v3100 = vld [vmem:[#allocation25 + $0x118] sm:$0xff]
        %v3101 = vld [vmem:[#allocation25 + $0x120] sm:$0xff]
        %v3102 = vld [vmem:[#allocation25 + $0x128] sm:$0xff]
        %v3103 = vld [vmem:[#allocation25 + $0x130] sm:$0xff]
        %v3104 = vld [vmem:[#allocation25 + $0x138] sm:$0xff]
        %v3105 = vld [vmem:[#allocation25 + $0x140] sm:$0xff]
        %v3106 = vld [vmem:[#allocation25 + $0x148] sm:$0xff]
        %v3107 = vld [vmem:[#allocation25 + $0x150] sm:$0xff]
        %v3108 = vld [vmem:[#allocation25 + $0x158] sm:$0xff]
        %v3109 = vld [vmem:[#allocation25 + $0x160] sm:$0xff]
        %v3110 = vld [vmem:[#allocation25 + $0x168] sm:$0xff]
        %v3111 = vld [vmem:[#allocation25 + $0x170] sm:$0xff]
        %v3112 = vld [vmem:[#allocation25 + $0x178] sm:$0xff]
        %3113 = vmatprep.subr.mxu0 0.0
        %3114 = vmatpush1.msra.mxu0 %v3112
        %3115 = vmatprep.subr.mxu0 0.0
        %3116 = vmatpush1.msra.mxu0 %v3111
        %3117 = vmatprep.subr.mxu0 0.0
        %3118 = vmatpush1.msra.mxu0 %v3110
        %3119 = vmatprep.subr.mxu0 0.0
        %3120 = vmatpush1.msra.mxu0 %v3109
        %3121 = vmatprep.subr.mxu0 0.0
        %3122 = vmatpush1.msra.mxu0 %v3108
        %3123 = vmatprep.subr.mxu0 0.0
        %3124 = vmatpush1.msra.mxu0 %v3107
        %3125 = vmatprep.subr.mxu0 0.0
        %3126 = vmatpush1.msra.mxu0 %v3106
        %3127 = vmatprep.subr.mxu0 0.0
        %3128 = vmatpush1.msra.mxu0 %v3105
        %3129 = vmatprep.subr.mxu0 0.0
        %3130 = vmatpush1.msra.mxu0 %v3104
        %3131 = vmatprep.subr.mxu0 0.0
        %3132 = vmatpush1.msra.mxu0 %v3103
        %3133 = vmatprep.subr.mxu0 0.0
        %3134 = vmatpush1.msra.mxu0 %v3102
        %3135 = vmatprep.subr.mxu0 0.0
        %3136 = vmatpush1.msra.mxu0 %v3101
        %3137 = vmatprep.subr.mxu0 0.0
        %3138 = vmatpush1.msra.mxu0 %v3100
        %3139 = vmatprep.subr.mxu0 0.0
        %3140 = vmatpush1.msra.mxu0 %v3099
        %3141 = vmatprep.subr.mxu0 0.0
        %3142 = vmatpush1.msra.mxu0 %v3098
        %3143 = vmatprep.subr.mxu0 0.0
        %3144 = vmatpush1.msra.mxu0 %v3097
        %3145 = vmatprep.subr.mxu0 0.0
        %3146 = vmatpush2.msra.mxu0 0.0
        %3147 = vmatprep.subr.mxu0 0.0
        %3148 = vmatpush2.msra.mxu0 0.0
        %3149 = vmatprep.subr.mxu0 0.0
        %3150 = vmatpush2.msra.mxu0 0.0
        %3151 = vmatprep.subr.mxu0 0.0
        %3152 = vmatpush2.msra.mxu0 0.0
        %3153 = vmatprep.subr.mxu0 0.0
        %3154 = vmatpush2.msra.mxu0 0.0
        %3155 = vmatprep.subr.mxu0 0.0
        %3156 = vmatpush2.msra.mxu0 0.0
        %3157 = vmatprep.subr.mxu0 0.0
        %3158 = vmatpush2.msra.mxu0 0.0
        %3159 = vmatprep.subr.mxu0 0.0
        %3160 = vmatpush2.msra.mxu0 0.0
        %3161 = vmatprep.subr.mxu0 0.0
        %3162 = vmatpush2.msra.mxu0 0.0
        %3163 = vmatprep.subr.mxu0 0.0
        %3164 = vmatpush2.msra.mxu0 0.0
        %3165 = vmatprep.subr.mxu0 0.0
        %3166 = vmatpush2.msra.mxu0 0.0
        %3167 = vmatprep.subr.mxu0 0.0
        %3168 = vmatpush2.msra.mxu0 0.0
        %3169 = vmatprep.subr.mxu0 0.0
        %3170 = vmatpush2.msra.mxu0 0.0
        %3171 = vmatprep.subr.mxu0 0.0
        %3172 = vmatpush2.msra.mxu0 0.0
        %3173 = vmatprep.subr.mxu0 0.0
        %3174 = vmatpush2.msra.mxu0 0.0
        %3175 = vmatprep.subr.mxu0 0.0
        %3176 = vmatpush2.msra.mxu0 0.0
        %3177 = vmatprep.mubr.f32.mxu0 0.0
        %3178 = vmatmul.mubr.f32.gmra.mxu0 %v2847
        %v3179 = vpop.f32.mrf.mxu0
        %v3180 = vadd.f32 0.0, %v3179
        %v3181 = vpop.f32.mrf.mxu0
        %3182 = vmatprep.mubr.f32.mxu0 0.0
        %3183 = vmatmul.mubr.f32.gmra.mxu0 %v2848
        %v3184 = vpop.f32.mrf.mxu0
        %v3185 = vadd.f32 0.0, %v3184
        %v3186 = vpop.f32.mrf.mxu0
        %3187 = vmatprep.mubr.f32.mxu0 0.0
        %3188 = vmatmul.mubr.f32.gmra.mxu0 %v2849
        %v3189 = vpop.f32.mrf.mxu0
        %v3190 = vadd.f32 0.0, %v3189
        %v3191 = vpop.f32.mrf.mxu0
        %3192 = vmatprep.mubr.f32.mxu0 0.0
        %3193 = vmatmul.mubr.f32.gmra.mxu0 %v2850
        %v3194 = vpop.f32.mrf.mxu0
        %v3195 = vadd.f32 0.0, %v3194
        %v3196 = vpop.f32.mrf.mxu0
        %3197 = vmatprep.mubr.f32.mxu0 0.0
        %3198 = vmatmul.mubr.f32.gmra.mxu0 %v2851
        %v3199 = vpop.f32.mrf.mxu0
        %v3200 = vadd.f32 0.0, %v3199
        %v3201 = vpop.f32.mrf.mxu0
        %3202 = vmatprep.mubr.f32.mxu0 0.0
        %3203 = vmatmul.mubr.f32.gmra.mxu0 %v2852
        %v3204 = vpop.f32.mrf.mxu0
        %v3205 = vadd.f32 0.0, %v3204
        %v3206 = vpop.f32.mrf.mxu0
        %3207 = vmatprep.mubr.f32.mxu0 0.0
        %3208 = vmatmul.mubr.f32.gmra.mxu0 %v2853
        %v3209 = vpop.f32.mrf.mxu0
        %v3210 = vadd.f32 0.0, %v3209
        %v3211 = vpop.f32.mrf.mxu0
        %3212 = vmatprep.mubr.f32.mxu0 0.0
        %3213 = vmatmul.mubr.f32.gmra.mxu0 %v2854
        %v3214 = vpop.f32.mrf.mxu0
        %v3215 = vadd.f32 0.0, %v3214
        %v3216 = vpop.f32.mrf.mxu0
        %3217 = vdwg.mxu0
        %v3218 = vadd.f32 %v3059, %v3180
        %v3219 = vadd.f32 %v3064, %v3185
        %v3220 = vadd.f32 %v3069, %v3190
        %v3221 = vadd.f32 %v3074, %v3195
        %v3222 = vadd.f32 %v3079, %v3200
        %v3223 = vadd.f32 %v3084, %v3205
        %v3224 = vadd.f32 %v3089, %v3210
        %v3225 = vadd.f32 %v3094, %v3215
        %v3226 = vld [vmem:[#allocation28] sm:$0x1]
        %v3228 = vlaneseq
        %v3229 = vshrl.u32 %v3228, 7
        %v3230 = vsub.s32 0, %v3229
        %v3231 = vrot.slane %v3226, %v3230
        %v3233 = vadd.f32 %v3218, %v3231
        %v3234 = vadd.f32 %v3219, %v3231
        %v3235 = vadd.f32 %v3220, %v3231
        %v3236 = vadd.f32 %v3221, %v3231
        %v3237 = vadd.f32 %v3222, %v3231
        %v3238 = vadd.f32 %v3223, %v3231
        %v3239 = vadd.f32 %v3224, %v3231
        %v3240 = vadd.f32 %v3225, %v3231
        %v3241 = vld [vmem:[#allocation26] sm:$0xff]
        %v3242 = vld [vmem:[#allocation26 + $0x8] sm:$0xff]
        %v3243 = vld [vmem:[#allocation26 + $0x10] sm:$0xff]
        %v3244 = vld [vmem:[#allocation26 + $0x18] sm:$0xff]
        %v3245 = vld [vmem:[#allocation29] sm:$0x1]
        %v3246 = vld [vmem:[%s18] sm:$0xff]
        %v3247 = vld [vmem:[%s18 + $0x8] sm:$0xff]
        %v3248 = vld [vmem:[%s18 + $0x10] sm:$0xff]
        %v3249 = vld [vmem:[%s18 + $0x18] sm:$0xff]
        %v3250 = vld [vmem:[%s20] sm:$0x1]
        %v3251 = vld [vmem:[#allocation31] sm:$0xff]
        %v3252 = vld [vmem:[#allocation31 + $0x8] sm:$0xff]
        %v3253 = vld [vmem:[#allocation31 + $0x10] sm:$0xff]
        %v3254 = vld [vmem:[#allocation31 + $0x18] sm:$0xff]
        %v3255 = vld [vmem:[%s21] sm:$0x1]
        %v3257 = vlaneseq
        %v3258 = vshrl.u32 %v3257, 7
        %v3259 = vsub.s32 0, %v3258
        %v3260 = vrot.slane %v3245, %v3259
        %vm3262 = vcmask 261120
        %v3264 = vsel %vm3262, 0.0, 0
        %3266 = vmatprep.subr.mxu0 0.0
        %3267 = vmatpush1.msra.mxu0 0.0
        %3268 = vmatprep.subr.mxu0 0.0
        %3269 = vmatpush1.msra.mxu0 0.0
        %3270 = vmatprep.subr.mxu0 0.0
        %3271 = vmatpush1.msra.mxu0 0.0
        %3272 = vmatprep.subr.mxu0 0.0
        %3273 = vmatpush1.msra.mxu0 0.0
        %3274 = vmatprep.subr.mxu0 0.0
        %3275 = vmatpush1.msra.mxu0 0.0
        %3276 = vmatprep.subr.mxu0 0.0
        %3277 = vmatpush1.msra.mxu0 0.0
        %3278 = vmatprep.subr.mxu0 0.0
        %3279 = vmatpush1.msra.mxu0 0.0
        %3280 = vmatprep.subr.mxu0 0.0
        %3281 = vmatpush1.msra.mxu0 0.0
        %3282 = vmatprep.subr.mxu0 0.0
        %3283 = vmatpush1.msra.mxu0 0.0
        %3284 = vmatprep.subr.mxu0 0.0
        %3285 = vmatpush1.msra.mxu0 0.0
        %3286 = vmatprep.subr.mxu0 0.0
        %3287 = vmatpush1.msra.mxu0 0.0
        %3288 = vmatprep.subr.mxu0 0.0
        %3289 = vmatpush1.msra.mxu0 0.0
        %3290 = vmatprep.subr.mxu0 0.0
        %3291 = vmatpush1.msra.mxu0 %v3244
        %3292 = vmatprep.subr.mxu0 0.0
        %3293 = vmatpush1.msra.mxu0 %v3243
        %3294 = vmatprep.subr.mxu0 0.0
        %3295 = vmatpush1.msra.mxu0 %v3242
        %3296 = vmatprep.subr.mxu0 0.0
        %3297 = vmatpush1.msra.mxu0 %v3241
        %3298 = vmatprep.subr.mxu0 0.0
        %3299 = vmatpush2.msra.mxu0 0.0
        %3300 = vmatprep.subr.mxu0 0.0
        %3301 = vmatpush2.msra.mxu0 0.0
        %3302 = vmatprep.subr.mxu0 0.0
        %3303 = vmatpush2.msra.mxu0 0.0
        %3304 = vmatprep.subr.mxu0 0.0
        %3305 = vmatpush2.msra.mxu0 0.0
        %3306 = vmatprep.subr.mxu0 0.0
        %3307 = vmatpush2.msra.mxu0 0.0
        %3308 = vmatprep.subr.mxu0 0.0
        %3309 = vmatpush2.msra.mxu0 0.0
        %3310 = vmatprep.subr.mxu0 0.0
        %3311 = vmatpush2.msra.mxu0 0.0
        %3312 = vmatprep.subr.mxu0 0.0
        %3313 = vmatpush2.msra.mxu0 0.0
        %3314 = vmatprep.subr.mxu0 0.0
        %3315 = vmatpush2.msra.mxu0 0.0
        %3316 = vmatprep.subr.mxu0 0.0
        %3317 = vmatpush2.msra.mxu0 0.0
        %3318 = vmatprep.subr.mxu0 0.0
        %3319 = vmatpush2.msra.mxu0 0.0
        %3320 = vmatprep.subr.mxu0 0.0
        %3321 = vmatpush2.msra.mxu0 0.0
        %3322 = vmatprep.subr.mxu0 0.0
        %3323 = vmatpush2.msra.mxu0 0.0
        %3324 = vmatprep.subr.mxu0 0.0
        %3325 = vmatpush2.msra.mxu0 0.0
        %3326 = vmatprep.subr.mxu0 0.0
        %3327 = vmatpush2.msra.mxu0 0.0
        %3328 = vmatprep.subr.mxu0 0.0
        %3329 = vmatpush2.msra.mxu0 0.0
        %3330 = vmatprep.mubr.f32.mxu0 0.0
        %3331 = vmatmul.mubr.f32.gmra.mxu0 %v3264
        %v3332 = vpop.f32.mrf.mxu0
        %v3333 = vadd.f32 %v3260, %v3332
        %v3334 = vpop.f32.mrf.mxu0
        %3335 = vdwg.mxu0
        %v3337 = vrot.slane %v3333, 1
        %v3338 = vrot.slane %v3333, 2
        %v3339 = vrot.slane %v3333, 3
        %v3340 = vrot.slane %v3333, 4
        %v3341 = vrot.slane %v3333, 5
        %v3342 = vrot.slane %v3333, 6
        %v3343 = vrot.slane %v3333, 7
        %v3352 = vadd.f32 %v3233, %v3333
        %v3353 = vadd.f32 %v3234, %v3337
        %v3354 = vadd.f32 %v3235, %v3338
        %v3355 = vadd.f32 %v3236, %v3339
        %v3356 = vadd.f32 %v3237, %v3340
        %v3357 = vadd.f32 %v3238, %v3341
        %v3358 = vadd.f32 %v3239, %v3342
        %v3359 = vadd.f32 %v3240, %v3343
        %v3360 = vxor.u32 %v3352, 2147483648
        %v3361 = vxor.u32 %v3353, 2147483648
        %v3362 = vxor.u32 %v3354, 2147483648
        %v3363 = vxor.u32 %v3355, 2147483648
        %v3364 = vxor.u32 %v3356, 2147483648
        %v3365 = vxor.u32 %v3357, 2147483648
        %v3366 = vxor.u32 %v3358, 2147483648
        %v3367 = vxor.u32 %v3359, 2147483648
        %v3368 = vmul.f32 %v3360, 1.442695
        %v3369 = vpow.pop %v3368
        %v3370 = vmul.f32 %v3361, 1.442695
        %v3371 = vpow.pop %v3370
        %v3372 = vmul.f32 %v3362, 1.442695
        %v3373 = vpow.pop %v3372
        %v3374 = vmul.f32 %v3363, 1.442695
        %v3375 = vpow.pop %v3374
        %v3376 = vmul.f32 %v3364, 1.442695
        %v3377 = vpow.pop %v3376
        %v3378 = vmul.f32 %v3365, 1.442695
        %v3379 = vpow.pop %v3378
        %v3380 = vmul.f32 %v3366, 1.442695
        %v3381 = vpow.pop %v3380
        %v3382 = vmul.f32 %v3367, 1.442695
        %v3383 = vpow.pop %v3382
        %v3384 = vadd.f32 %v3369, 1.0
        %v3385 = vadd.f32 %v3371, 1.0
        %v3386 = vadd.f32 %v3373, 1.0
        %v3387 = vadd.f32 %v3375, 1.0
        %v3388 = vadd.f32 %v3377, 1.0
        %v3389 = vadd.f32 %v3379, 1.0
        %v3390 = vadd.f32 %v3381, 1.0
        %v3391 = vadd.f32 %v3383, 1.0
        %v3392 = vrcp.pop %v3384
        %v3393 = vmul.f32 1.0, %v3392
        %v3394 = vrcp.pop %v3385
        %v3395 = vmul.f32 1.0, %v3394
        %v3396 = vrcp.pop %v3386
        %v3397 = vmul.f32 1.0, %v3396
        %v3398 = vrcp.pop %v3387
        %v3399 = vmul.f32 1.0, %v3398
        %v3400 = vrcp.pop %v3388
        %v3401 = vmul.f32 1.0, %v3400
        %v3402 = vrcp.pop %v3389
        %v3403 = vmul.f32 1.0, %v3402
        %v3404 = vrcp.pop %v3390
        %v3405 = vmul.f32 1.0, %v3404
        %v3406 = vrcp.pop %v3391
        %v3407 = vmul.f32 1.0, %v3406
        %3408 = vrot.lane.b32.xlu0 %v3333, 64
        %v3409 = vpop.permute.xlu0 %3408
        %3410 = vrot.lane.b32.xlu0 %v3337, 64
        %v3411 = vpop.permute.xlu0 %3410
        %3412 = vrot.lane.b32.xlu0 %v3338, 64
        %v3413 = vpop.permute.xlu0 %3412
        %3414 = vrot.lane.b32.xlu0 %v3339, 64
        %v3415 = vpop.permute.xlu0 %3414
        %3416 = vrot.lane.b32.xlu0 %v3340, 64
        %v3417 = vpop.permute.xlu0 %3416
        %3418 = vrot.lane.b32.xlu0 %v3341, 64
        %v3419 = vpop.permute.xlu0 %3418
        %3420 = vrot.lane.b32.xlu0 %v3342, 64
        %v3421 = vpop.permute.xlu0 %3420
        %3422 = vrot.lane.b32.xlu0 %v3343, 64
        %v3423 = vpop.permute.xlu0 %3422
        %v3432 = vmul.f32 %v3393, %v3409
        %v3433 = vmul.f32 %v3395, %v3411
        %v3434 = vmul.f32 %v3397, %v3413
        %v3435 = vmul.f32 %v3399, %v3415
        %v3436 = vmul.f32 %v3401, %v3417
        %v3437 = vmul.f32 %v3403, %v3419
        %v3438 = vmul.f32 %v3405, %v3421
        %v3439 = vmul.f32 %v3407, %v3423
        %3448 = vrot.lane.b32.xlu0 %v3432, 64
        %v3449 = vpop.permute.xlu0 %3448
        %3450 = vrot.lane.b32.xlu0 %v3433, 64
        %v3451 = vpop.permute.xlu0 %3450
        %3452 = vrot.lane.b32.xlu0 %v3434, 64
        %v3453 = vpop.permute.xlu0 %3452
        %3454 = vrot.lane.b32.xlu0 %v3435, 64
        %v3455 = vpop.permute.xlu0 %3454
        %3456 = vrot.lane.b32.xlu0 %v3436, 64
        %v3457 = vpop.permute.xlu0 %3456
        %3458 = vrot.lane.b32.xlu0 %v3437, 64
        %v3459 = vpop.permute.xlu0 %3458
        %3460 = vrot.lane.b32.xlu0 %v3438, 64
        %v3461 = vpop.permute.xlu0 %3460
        %3462 = vrot.lane.b32.xlu0 %v3439, 64
        %v3463 = vpop.permute.xlu0 %3462
        %v3472 = vadd.f32 %v3233, %v3449
        %v3473 = vadd.f32 %v3234, %v3451
        %v3474 = vadd.f32 %v3235, %v3453
        %v3475 = vadd.f32 %v3236, %v3455
        %v3476 = vadd.f32 %v3237, %v3457
        %v3477 = vadd.f32 %v3238, %v3459
        %v3478 = vadd.f32 %v3239, %v3461
        %v3479 = vadd.f32 %v3240, %v3463
        %v3480 = vtanh.pop %v3472
        %v3481 = vtanh.pop %v3473
        %v3482 = vtanh.pop %v3474
        %v3483 = vtanh.pop %v3475
        %v3484 = vtanh.pop %v3476
        %v3485 = vtanh.pop %v3477
        %v3486 = vtanh.pop %v3478
        %v3487 = vtanh.pop %v3479
        %v3488 = vsub.f32 1.0, %v3393
        %v3489 = vsub.f32 1.0, %v3395
        %v3490 = vsub.f32 1.0, %v3397
        %v3491 = vsub.f32 1.0, %v3399
        %v3492 = vsub.f32 1.0, %v3401
        %v3493 = vsub.f32 1.0, %v3403
        %v3494 = vsub.f32 1.0, %v3405
        %v3495 = vsub.f32 1.0, %v3407
        %3504 = vrot.lane.b32.xlu0 %v3480, 96
        %v3505 = vpop.permute.xlu0 %3504
        %3506 = vrot.lane.b32.xlu0 %v3481, 96
        %v3507 = vpop.permute.xlu0 %3506
        %3508 = vrot.lane.b32.xlu0 %v3482, 96
        %v3509 = vpop.permute.xlu0 %3508
        %3510 = vrot.lane.b32.xlu0 %v3483, 96
        %v3511 = vpop.permute.xlu0 %3510
        %3512 = vrot.lane.b32.xlu0 %v3484, 96
        %v3513 = vpop.permute.xlu0 %3512
        %3514 = vrot.lane.b32.xlu0 %v3485, 96
        %v3515 = vpop.permute.xlu0 %3514
        %3516 = vrot.lane.b32.xlu0 %v3486, 96
        %v3517 = vpop.permute.xlu0 %3516
        %3518 = vrot.lane.b32.xlu0 %v3487, 96
        %v3519 = vpop.permute.xlu0 %3518
        %v3528 = vmul.f32 %v3488, %v3505
        %v3529 = vmul.f32 %v3489, %v3507
        %v3530 = vmul.f32 %v3490, %v3509
        %v3531 = vmul.f32 %v3491, %v3511
        %v3532 = vmul.f32 %v3492, %v3513
        %v3533 = vmul.f32 %v3493, %v3515
        %v3534 = vmul.f32 %v3494, %v3517
        %v3535 = vmul.f32 %v3495, %v3519
        %v3536 = vmul.f32 %v3393, 0.0
        %v3537 = vmul.f32 %v3395, 0.0
        %v3538 = vmul.f32 %v3397, 0.0
        %v3539 = vmul.f32 %v3399, 0.0
        %v3540 = vmul.f32 %v3401, 0.0
        %v3541 = vmul.f32 %v3403, 0.0
        %v3542 = vmul.f32 %v3405, 0.0
        %v3543 = vmul.f32 %v3407, 0.0
        %v3544 = vadd.f32 %v3528, %v3536
        %v3545 = vadd.f32 %v3529, %v3537
        %v3546 = vadd.f32 %v3530, %v3538
        %v3547 = vadd.f32 %v3531, %v3539
        %v3548 = vadd.f32 %v3532, %v3540
        %v3549 = vadd.f32 %v3533, %v3541
        %v3550 = vadd.f32 %v3534, %v3542
        %v3551 = vadd.f32 %v3535, %v3543
        %v3553 = vlaneseq
        %v3554 = vshrl.u32 %v3553, 7
        %v3555 = vsub.s32 0, %v3554
        %v3556 = vrot.slane %v3250, %v3555
        %v3566 = vrot.slane %v3545, 7
        %vm3567 = vcmask 1041409
        %v3568 = vsel %vm3567, %v3566, %v3544
        %v3569 = vrot.slane %v3546, 6
        %vm3570 = vcmask 1042434
        %v3571 = vsel %vm3570, %v3569, %v3568
        %v3572 = vrot.slane %v3547, 5
        %vm3573 = vcmask 1043459
        %v3574 = vsel %vm3573, %v3572, %v3571
        %v3575 = vrot.slane %v3548, 4
        %vm3576 = vcmask 1044484
        %v3577 = vsel %vm3576, %v3575, %v3574
        %v3578 = vrot.slane %v3549, 3
        %vm3579 = vcmask 1045509
        %v3580 = vsel %vm3579, %v3578, %v3577
        %v3581 = vrot.slane %v3550, 2
        %vm3582 = vcmask 1046534
        %v3583 = vsel %vm3582, %v3581, %v3580
        %v3584 = vrot.slane %v3551, 1
        %vm3585 = vcmask 1047559
        %v3586 = vsel %vm3585, %v3584, %v3583
        %3587 = vrot.lane.b32.xlu0 %v3586, 96
        %v3588 = vpop.permute.xlu0 %3587
        %v3589 = vsel %vm3262, %v3588, 0
        %3591 = vmatprep.subr.mxu0 0.0
        %3592 = vmatpush1.msra.mxu0 0.0
        %3593 = vmatprep.subr.mxu0 0.0
        %3594 = vmatpush1.msra.mxu0 0.0
        %3595 = vmatprep.subr.mxu0 0.0
        %3596 = vmatpush1.msra.mxu0 0.0
        %3597 = vmatprep.subr.mxu0 0.0
        %3598 = vmatpush1.msra.mxu0 0.0
        %3599 = vmatprep.subr.mxu0 0.0
        %3600 = vmatpush1.msra.mxu0 0.0
        %3601 = vmatprep.subr.mxu0 0.0
        %3602 = vmatpush1.msra.mxu0 0.0
        %3603 = vmatprep.subr.mxu0 0.0
        %3604 = vmatpush1.msra.mxu0 0.0
        %3605 = vmatprep.subr.mxu0 0.0
        %3606 = vmatpush1.msra.mxu0 0.0
        %3607 = vmatprep.subr.mxu0 0.0
        %3608 = vmatpush1.msra.mxu0 0.0
        %3609 = vmatprep.subr.mxu0 0.0
        %3610 = vmatpush1.msra.mxu0 0.0
        %3611 = vmatprep.subr.mxu0 0.0
        %3612 = vmatpush1.msra.mxu0 0.0
        %3613 = vmatprep.subr.mxu0 0.0
        %3614 = vmatpush1.msra.mxu0 0.0
        %3615 = vmatprep.subr.mxu0 0.0
        %3616 = vmatpush1.msra.mxu0 %v3249
        %3617 = vmatprep.subr.mxu0 0.0
        %3618 = vmatpush1.msra.mxu0 %v3248
        %3619 = vmatprep.subr.mxu0 0.0
        %3620 = vmatpush1.msra.mxu0 %v3247
        %3621 = vmatprep.subr.mxu0 0.0
        %3622 = vmatpush1.msra.mxu0 %v3246
        %3623 = vmatprep.subr.mxu0 0.0
        %3624 = vmatpush2.msra.mxu0 0.0
        %3625 = vmatprep.subr.mxu0 0.0
        %3626 = vmatpush2.msra.mxu0 0.0
        %3627 = vmatprep.subr.mxu0 0.0
        %3628 = vmatpush2.msra.mxu0 0.0
        %3629 = vmatprep.subr.mxu0 0.0
        %3630 = vmatpush2.msra.mxu0 0.0
        %3631 = vmatprep.subr.mxu0 0.0
        %3632 = vmatpush2.msra.mxu0 0.0
        %3633 = vmatprep.subr.mxu0 0.0
        %3634 = vmatpush2.msra.mxu0 0.0
        %3635 = vmatprep.subr.mxu0 0.0
        %3636 = vmatpush2.msra.mxu0 0.0
        %3637 = vmatprep.subr.mxu0 0.0
        %3638 = vmatpush2.msra.mxu0 0.0
        %3639 = vmatprep.subr.mxu0 0.0
        %3640 = vmatpush2.msra.mxu0 0.0
        %3641 = vmatprep.subr.mxu0 0.0
        %3642 = vmatpush2.msra.mxu0 0.0
        %3643 = vmatprep.subr.mxu0 0.0
        %3644 = vmatpush2.msra.mxu0 0.0
        %3645 = vmatprep.subr.mxu0 0.0
        %3646 = vmatpush2.msra.mxu0 0.0
        %3647 = vmatprep.subr.mxu0 0.0
        %3648 = vmatpush2.msra.mxu0 0.0
        %3649 = vmatprep.subr.mxu0 0.0
        %3650 = vmatpush2.msra.mxu0 0.0
        %3651 = vmatprep.subr.mxu0 0.0
        %3652 = vmatpush2.msra.mxu0 0.0
        %3653 = vmatprep.subr.mxu0 0.0
        %3654 = vmatpush2.msra.mxu0 0.0
        %3655 = vmatprep.mubr.f32.mxu0 0.0
        %3656 = vmatmul.mubr.f32.gmra.mxu0 %v3589
        %v3657 = vpop.f32.mrf.mxu0
        %v3658 = vadd.f32 %v3556, %v3657
        %v3659 = vpop.f32.mrf.mxu0
        %3660 = vdwg.mxu0
        %v3662 = vlaneseq
        %v3663 = vshrl.u32 %v3662, 7
        %v3664 = vsub.s32 0, %v3663
        %v3665 = vrot.slane %v3255, %v3664
        %3667 = vmatprep.subr.mxu0 0.0
        %3668 = vmatpush1.msra.mxu0 0.0
        %3669 = vmatprep.subr.mxu0 0.0
        %3670 = vmatpush1.msra.mxu0 0.0
        %3671 = vmatprep.subr.mxu0 0.0
        %3672 = vmatpush1.msra.mxu0 0.0
        %3673 = vmatprep.subr.mxu0 0.0
        %3674 = vmatpush1.msra.mxu0 0.0
        %3675 = vmatprep.subr.mxu0 0.0
        %3676 = vmatpush1.msra.mxu0 0.0
        %3677 = vmatprep.subr.mxu0 0.0
        %3678 = vmatpush1.msra.mxu0 0.0
        %3679 = vmatprep.subr.mxu0 0.0
        %3680 = vmatpush1.msra.mxu0 0.0
        %3681 = vmatprep.subr.mxu0 0.0
        %3682 = vmatpush1.msra.mxu0 0.0
        %3683 = vmatprep.subr.mxu0 0.0
        %3684 = vmatpush1.msra.mxu0 0.0
        %3685 = vmatprep.subr.mxu0 0.0
        %3686 = vmatpush1.msra.mxu0 0.0
        %3687 = vmatprep.subr.mxu0 0.0
        %3688 = vmatpush1.msra.mxu0 0.0
        %3689 = vmatprep.subr.mxu0 0.0
        %3690 = vmatpush1.msra.mxu0 0.0
        %3691 = vmatprep.subr.mxu0 0.0
        %3692 = vmatpush1.msra.mxu0 %v3254
        %3693 = vmatprep.subr.mxu0 0.0
        %3694 = vmatpush1.msra.mxu0 %v3253
        %3695 = vmatprep.subr.mxu0 0.0
        %3696 = vmatpush1.msra.mxu0 %v3252
        %3697 = vmatprep.subr.mxu0 0.0
        %3698 = vmatpush1.msra.mxu0 %v3251
        %3699 = vmatprep.subr.mxu0 0.0
        %3700 = vmatpush2.msra.mxu0 0.0
        %3701 = vmatprep.subr.mxu0 0.0
        %3702 = vmatpush2.msra.mxu0 0.0
        %3703 = vmatprep.subr.mxu0 0.0
        %3704 = vmatpush2.msra.mxu0 0.0
        %3705 = vmatprep.subr.mxu0 0.0
        %3706 = vmatpush2.msra.mxu0 0.0
        %3707 = vmatprep.subr.mxu0 0.0
        %3708 = vmatpush2.msra.mxu0 0.0
        %3709 = vmatprep.subr.mxu0 0.0
        %3710 = vmatpush2.msra.mxu0 0.0
        %3711 = vmatprep.subr.mxu0 0.0
        %3712 = vmatpush2.msra.mxu0 0.0
        %3713 = vmatprep.subr.mxu0 0.0
        %3714 = vmatpush2.msra.mxu0 0.0
        %3715 = vmatprep.subr.mxu0 0.0
        %3716 = vmatpush2.msra.mxu0 0.0
        %3717 = vmatprep.subr.mxu0 0.0
        %3718 = vmatpush2.msra.mxu0 0.0
        %3719 = vmatprep.subr.mxu0 0.0
        %3720 = vmatpush2.msra.mxu0 0.0
        %3721 = vmatprep.subr.mxu0 0.0
        %3722 = vmatpush2.msra.mxu0 0.0
        %3723 = vmatprep.subr.mxu0 0.0
        %3724 = vmatpush2.msra.mxu0 0.0
        %3725 = vmatprep.subr.mxu0 0.0
        %3726 = vmatpush2.msra.mxu0 0.0
        %3727 = vmatprep.subr.mxu0 0.0
        %3728 = vmatpush2.msra.mxu0 0.0
        %3729 = vmatprep.subr.mxu0 0.0
        %3730 = vmatpush2.msra.mxu0 0.0
        %3731 = vmatprep.mubr.f32.mxu0 0.0
        %3732 = vmatmul.mubr.f32.gmra.mxu0 %v3264
        %v3733 = vpop.f32.mrf.mxu0
        %v3734 = vadd.f32 %v3665, %v3733
        %v3735 = vpop.f32.mrf.mxu0
        %3736 = vdwg.mxu0
        %v3737 = vadd.f32 %v3658, %v3734
        %v3738 = vxor.u32 %v3737, 2147483648
        %v3739 = vmul.f32 %v3738, 1.442695
        %v3740 = vpow.pop %v3739
        %v3741 = vadd.f32 %v3740, 1.0
        %v3742 = vrcp.pop %v3741
        %v3743 = vmul.f32 1.0, %v3742
        %3745 = vrot.lane.b32.xlu0 %v3734, 64
        %v3746 = vpop.permute.xlu0 %3745
        %v3748 = vmul.f32 %v3743, %v3746
        %3750 = vrot.lane.b32.xlu0 %v3748, 64
        %v3751 = vpop.permute.xlu0 %3750
        %v3753 = vadd.f32 %v3658, %v3751
        %v3754 = vtanh.pop %v3753
        %v3755 = vsub.f32 1.0, %v3743
        %3757 = vrot.lane.b32.xlu0 %v3754, 96
        %v3758 = vpop.permute.xlu0 %3757
        %v3760 = vmul.f32 %v3755, %v3758
        %v3761 = vmul.f32 %v3743, 0.0
        %v3762 = vadd.f32 %v3760, %v3761
        %3763 = vmatprep.subr.mxu0 0.0
        %3764 = vmatpush1.msra.mxu0 0.0
        %3765 = vmatprep.subr.mxu0 0.0
        %3766 = vmatpush1.msra.mxu0 0.0
        %3767 = vmatprep.subr.mxu0 0.0
        %3768 = vmatpush1.msra.mxu0 0.0
        %3769 = vmatprep.subr.mxu0 0.0
        %3770 = vmatpush1.msra.mxu0 0.0
        %3771 = vmatprep.subr.mxu0 0.0
        %3772 = vmatpush1.msra.mxu0 0.0
        %3773 = vmatprep.subr.mxu0 0.0
        %3774 = vmatpush1.msra.mxu0 0.0
        %3775 = vmatprep.subr.mxu0 0.0
        %3776 = vmatpush1.msra.mxu0 0.0
        %3777 = vmatprep.subr.mxu0 0.0
        %3778 = vmatpush1.msra.mxu0 0.0
        %3779 = vmatprep.subr.mxu0 0.0
        %3780 = vmatpush1.msra.mxu0 0.0
        %3781 = vmatprep.subr.mxu0 0.0
        %3782 = vmatpush1.msra.mxu0 0.0
        %3783 = vmatprep.subr.mxu0 0.0
        %3784 = vmatpush1.msra.mxu0 0.0
        %3785 = vmatprep.subr.mxu0 0.0
        %3786 = vmatpush1.msra.mxu0 0.0
        %3787 = vmatprep.subr.mxu0 0.0
        %3788 = vmatpush1.msra.mxu0 %v3244
        %3789 = vmatprep.subr.mxu0 0.0
        %3790 = vmatpush1.msra.mxu0 %v3243
        %3791 = vmatprep.subr.mxu0 0.0
        %3792 = vmatpush1.msra.mxu0 %v3242
        %3793 = vmatprep.subr.mxu0 0.0
        %3794 = vmatpush1.msra.mxu0 %v3241
        %3795 = vmatprep.subr.mxu0 0.0
        %3796 = vmatpush2.msra.mxu0 0.0
        %3797 = vmatprep.subr.mxu0 0.0
        %3798 = vmatpush2.msra.mxu0 0.0
        %3799 = vmatprep.subr.mxu0 0.0
        %3800 = vmatpush2.msra.mxu0 0.0
        %3801 = vmatprep.subr.mxu0 0.0
        %3802 = vmatpush2.msra.mxu0 0.0
        %3803 = vmatprep.subr.mxu0 0.0
        %3804 = vmatpush2.msra.mxu0 0.0
        %3805 = vmatprep.subr.mxu0 0.0
        %3806 = vmatpush2.msra.mxu0 0.0
        %3807 = vmatprep.subr.mxu0 0.0
        %3808 = vmatpush2.msra.mxu0 0.0
        %3809 = vmatprep.subr.mxu0 0.0
        %3810 = vmatpush2.msra.mxu0 0.0
        %3811 = vmatprep.subr.mxu0 0.0
        %3812 = vmatpush2.msra.mxu0 0.0
        %3813 = vmatprep.subr.mxu0 0.0
        %3814 = vmatpush2.msra.mxu0 0.0
        %3815 = vmatprep.subr.mxu0 0.0
        %3816 = vmatpush2.msra.mxu0 0.0
        %3817 = vmatprep.subr.mxu0 0.0
        %3818 = vmatpush2.msra.mxu0 0.0
        %3819 = vmatprep.subr.mxu0 0.0
        %3820 = vmatpush2.msra.mxu0 0.0
        %3821 = vmatprep.subr.mxu0 0.0
        %3822 = vmatpush2.msra.mxu0 0.0
        %3823 = vmatprep.subr.mxu0 0.0
        %3824 = vmatpush2.msra.mxu0 0.0
        %3825 = vmatprep.subr.mxu0 0.0
        %3826 = vmatpush2.msra.mxu0 0.0
        %3827 = vmatprep.mubr.f32.mxu0 0.0
        %3828 = vmatmul.mubr.f32.gmra.mxu0 %v3589
        %v3829 = vpop.f32.mrf.mxu0
        %v3830 = vadd.f32 %v3260, %v3829
        %v3831 = vpop.f32.mrf.mxu0
        %3832 = vdwg.mxu0
        %v3834 = vrot.slane %v3830, 7
        %v3835 = vrot.slane %v3830, 1
        %v3836 = vrot.slane %v3830, 2
        %v3837 = vrot.slane %v3830, 3
        %v3838 = vrot.slane %v3830, 4
        %v3839 = vrot.slane %v3830, 5
        %v3840 = vrot.slane %v3830, 6
        %v3849 = vadd.f32 %v3233, %v3834
        %v3850 = vadd.f32 %v3234, %v3830
        %v3851 = vadd.f32 %v3235, %v3835
        %v3852 = vadd.f32 %v3236, %v3836
        %v3853 = vadd.f32 %v3237, %v3837
        %v3854 = vadd.f32 %v3238, %v3838
        %v3855 = vadd.f32 %v3239, %v3839
        %v3856 = vadd.f32 %v3240, %v3840
        %v3857 = vxor.u32 %v3849, 2147483648
        %v3858 = vxor.u32 %v3850, 2147483648
        %v3859 = vxor.u32 %v3851, 2147483648
        %v3860 = vxor.u32 %v3852, 2147483648
        %v3861 = vxor.u32 %v3853, 2147483648
        %v3862 = vxor.u32 %v3854, 2147483648
        %v3863 = vxor.u32 %v3855, 2147483648
        %v3864 = vxor.u32 %v3856, 2147483648
        %v3865 = vmul.f32 %v3857, 1.442695
        %v3866 = vpow.pop %v3865
        %v3867 = vmul.f32 %v3858, 1.442695
        %v3868 = vpow.pop %v3867
        %v3869 = vmul.f32 %v3859, 1.442695
        %v3870 = vpow.pop %v3869
        %v3871 = vmul.f32 %v3860, 1.442695
        %v3872 = vpow.pop %v3871
        %v3873 = vmul.f32 %v3861, 1.442695
        %v3874 = vpow.pop %v3873
        %v3875 = vmul.f32 %v3862, 1.442695
        %v3876 = vpow.pop %v3875
        %v3877 = vmul.f32 %v3863, 1.442695
        %v3878 = vpow.pop %v3877
        %v3879 = vmul.f32 %v3864, 1.442695
        %v3880 = vpow.pop %v3879
        %v3881 = vadd.f32 %v3866, 1.0
        %v3882 = vadd.f32 %v3868, 1.0
        %v3883 = vadd.f32 %v3870, 1.0
        %v3884 = vadd.f32 %v3872, 1.0
        %v3885 = vadd.f32 %v3874, 1.0
        %v3886 = vadd.f32 %v3876, 1.0
        %v3887 = vadd.f32 %v3878, 1.0
        %v3888 = vadd.f32 %v3880, 1.0
        %v3889 = vrcp.pop %v3881
        %v3890 = vmul.f32 1.0, %v3889
        %v3891 = vrcp.pop %v3882
        %v3892 = vmul.f32 1.0, %v3891
        %v3893 = vrcp.pop %v3883
        %v3894 = vmul.f32 1.0, %v3893
        %v3895 = vrcp.pop %v3884
        %v3896 = vmul.f32 1.0, %v3895
        %v3897 = vrcp.pop %v3885
        %v3898 = vmul.f32 1.0, %v3897
        %v3899 = vrcp.pop %v3886
        %v3900 = vmul.f32 1.0, %v3899
        %v3901 = vrcp.pop %v3887
        %v3902 = vmul.f32 1.0, %v3901
        %v3903 = vrcp.pop %v3888
        %v3904 = vmul.f32 1.0, %v3903
        %3905 = vrot.lane.b32.xlu0 %v3834, 64
        %v3906 = vpop.permute.xlu0 %3905
        %3907 = vrot.lane.b32.xlu0 %v3830, 64
        %v3908 = vpop.permute.xlu0 %3907
        %3909 = vrot.lane.b32.xlu0 %v3835, 64
        %v3910 = vpop.permute.xlu0 %3909
        %3911 = vrot.lane.b32.xlu0 %v3836, 64
        %v3912 = vpop.permute.xlu0 %3911
        %3913 = vrot.lane.b32.xlu0 %v3837, 64
        %v3914 = vpop.permute.xlu0 %3913
        %3915 = vrot.lane.b32.xlu0 %v3838, 64
        %v3916 = vpop.permute.xlu0 %3915
        %3917 = vrot.lane.b32.xlu0 %v3839, 64
        %v3918 = vpop.permute.xlu0 %3917
        %3919 = vrot.lane.b32.xlu0 %v3840, 64
        %v3920 = vpop.permute.xlu0 %3919
        %v3929 = vmul.f32 %v3890, %v3906
        %v3930 = vmul.f32 %v3892, %v3908
        %v3931 = vmul.f32 %v3894, %v3910
        %v3932 = vmul.f32 %v3896, %v3912
        %v3933 = vmul.f32 %v3898, %v3914
        %v3934 = vmul.f32 %v3900, %v3916
        %v3935 = vmul.f32 %v3902, %v3918
        %v3936 = vmul.f32 %v3904, %v3920
        %3945 = vrot.lane.b32.xlu0 %v3929, 64
        %v3946 = vpop.permute.xlu0 %3945
        %3947 = vrot.lane.b32.xlu0 %v3930, 64
        %v3948 = vpop.permute.xlu0 %3947
        %3949 = vrot.lane.b32.xlu0 %v3931, 64
        %v3950 = vpop.permute.xlu0 %3949
        %3951 = vrot.lane.b32.xlu0 %v3932, 64
        %v3952 = vpop.permute.xlu0 %3951
        %3953 = vrot.lane.b32.xlu0 %v3933, 64
        %v3954 = vpop.permute.xlu0 %3953
        %3955 = vrot.lane.b32.xlu0 %v3934, 64
        %v3956 = vpop.permute.xlu0 %3955
        %3957 = vrot.lane.b32.xlu0 %v3935, 64
        %v3958 = vpop.permute.xlu0 %3957
        %3959 = vrot.lane.b32.xlu0 %v3936, 64
        %v3960 = vpop.permute.xlu0 %3959
        %v3969 = vadd.f32 %v3233, %v3946
        %v3970 = vadd.f32 %v3234, %v3948
        %v3971 = vadd.f32 %v3235, %v3950
        %v3972 = vadd.f32 %v3236, %v3952
        %v3973 = vadd.f32 %v3237, %v3954
        %v3974 = vadd.f32 %v3238, %v3956
        %v3975 = vadd.f32 %v3239, %v3958
        %v3976 = vadd.f32 %v3240, %v3960
        %v3977 = vtanh.pop %v3969
        %v3978 = vtanh.pop %v3970
        %v3979 = vtanh.pop %v3971
        %v3980 = vtanh.pop %v3972
        %v3981 = vtanh.pop %v3973
        %v3982 = vtanh.pop %v3974
        %v3983 = vtanh.pop %v3975
        %v3984 = vtanh.pop %v3976
        %v3985 = vsub.f32 1.0, %v3890
        %v3986 = vsub.f32 1.0, %v3892
        %v3987 = vsub.f32 1.0, %v3894
        %v3988 = vsub.f32 1.0, %v3896
        %v3989 = vsub.f32 1.0, %v3898
        %v3990 = vsub.f32 1.0, %v3900
        %v3991 = vsub.f32 1.0, %v3902
        %v3992 = vsub.f32 1.0, %v3904
        %4001 = vrot.lane.b32.xlu0 %v3977, 96
        %v4002 = vpop.permute.xlu0 %4001
        %4003 = vrot.lane.b32.xlu0 %v3978, 96
        %v4004 = vpop.permute.xlu0 %4003
        %4005 = vrot.lane.b32.xlu0 %v3979, 96
        %v4006 = vpop.permute.xlu0 %4005
        %4007 = vrot.lane.b32.xlu0 %v3980, 96
        %v4008 = vpop.permute.xlu0 %4007
        %4009 = vrot.lane.b32.xlu0 %v3981, 96
        %v4010 = vpop.permute.xlu0 %4009
        %4011 = vrot.lane.b32.xlu0 %v3982, 96
        %v4012 = vpop.permute.xlu0 %4011
        %4013 = vrot.lane.b32.xlu0 %v3983, 96
        %v4014 = vpop.permute.xlu0 %4013
        %4015 = vrot.lane.b32.xlu0 %v3984, 96
        %v4016 = vpop.permute.xlu0 %4015
        %v4025 = vmul.f32 %v3985, %v4002
        %v4026 = vmul.f32 %v3986, %v4004
        %v4027 = vmul.f32 %v3987, %v4006
        %v4028 = vmul.f32 %v3988, %v4008
        %v4029 = vmul.f32 %v3989, %v4010
        %v4030 = vmul.f32 %v3990, %v4012
        %v4031 = vmul.f32 %v3991, %v4014
        %v4032 = vmul.f32 %v3992, %v4016
        %v4033 = vrot.slane %v3544, 7
        %v4034 = vrot.slane %v3546, 7
        %v4035 = vrot.slane %v3547, 7
        %v4036 = vrot.slane %v3548, 7
        %v4037 = vrot.slane %v3549, 7
        %v4038 = vrot.slane %v3550, 7
        %v4039 = vrot.slane %v3551, 7
        %v4048 = vmul.f32 %v3890, %v4033
        %v4049 = vmul.f32 %v3892, %v3566
        %v4050 = vmul.f32 %v3894, %v4034
        %v4051 = vmul.f32 %v3896, %v4035
        %v4052 = vmul.f32 %v3898, %v4036
        %v4053 = vmul.f32 %v3900, %v4037
        %v4054 = vmul.f32 %v3902, %v4038
        %v4055 = vmul.f32 %v3904, %v4039
        %v4056 = vadd.f32 %v4025, %v4048
        %v4057 = vadd.f32 %v4026, %v4049
        %v4058 = vadd.f32 %v4027, %v4050
        %v4059 = vadd.f32 %v4028, %v4051
        %v4060 = vadd.f32 %v4029, %v4052
        %v4061 = vadd.f32 %v4030, %v4053
        %v4062 = vadd.f32 %v4031, %v4054
        %v4063 = vadd.f32 %v4032, %v4055
        %v4072 = vrot.slane %v4056, 1
        %v4073 = vsel %vm3567, %v4057, %v4072
        %v4074 = vrot.slane %v4058, 7
        %v4075 = vsel %vm3570, %v4074, %v4073
        %v4076 = vrot.slane %v4059, 6
        %v4077 = vsel %vm3573, %v4076, %v4075
        %v4078 = vrot.slane %v4060, 5
        %v4079 = vsel %vm3576, %v4078, %v4077
        %v4080 = vrot.slane %v4061, 4
        %v4081 = vsel %vm3579, %v4080, %v4079
        %v4082 = vrot.slane %v4062, 3
        %v4083 = vsel %vm3582, %v4082, %v4081
        %v4084 = vrot.slane %v4063, 2
        %v4085 = vsel %vm3585, %v4084, %v4083
        %4086 = vrot.lane.b32.xlu0 %v4085, 96
        %v4087 = vpop.permute.xlu0 %4086
        %v4088 = vsel %vm3262, %v4087, 0
        %4090 = vmatprep.subr.mxu0 0.0
        %4091 = vmatpush1.msra.mxu0 0.0
        %4092 = vmatprep.subr.mxu0 0.0
        %4093 = vmatpush1.msra.mxu0 0.0
        %4094 = vmatprep.subr.mxu0 0.0
        %4095 = vmatpush1.msra.mxu0 0.0
        %4096 = vmatprep.subr.mxu0 0.0
        %4097 = vmatpush1.msra.mxu0 0.0
        %4098 = vmatprep.subr.mxu0 0.0
        %4099 = vmatpush1.msra.mxu0 0.0
        %4100 = vmatprep.subr.mxu0 0.0
        %4101 = vmatpush1.msra.mxu0 0.0
        %4102 = vmatprep.subr.mxu0 0.0
        %4103 = vmatpush1.msra.mxu0 0.0
        %4104 = vmatprep.subr.mxu0 0.0
        %4105 = vmatpush1.msra.mxu0 0.0
        %4106 = vmatprep.subr.mxu0 0.0
        %4107 = vmatpush1.msra.mxu0 0.0
        %4108 = vmatprep.subr.mxu0 0.0
        %4109 = vmatpush1.msra.mxu0 0.0
        %4110 = vmatprep.subr.mxu0 0.0
        %4111 = vmatpush1.msra.mxu0 0.0
        %4112 = vmatprep.subr.mxu0 0.0
        %4113 = vmatpush1.msra.mxu0 0.0
        %4114 = vmatprep.subr.mxu0 0.0
        %4115 = vmatpush1.msra.mxu0 %v3249
        %4116 = vmatprep.subr.mxu0 0.0
        %4117 = vmatpush1.msra.mxu0 %v3248
        %4118 = vmatprep.subr.mxu0 0.0
        %4119 = vmatpush1.msra.mxu0 %v3247
        %4120 = vmatprep.subr.mxu0 0.0
        %4121 = vmatpush1.msra.mxu0 %v3246
        %4122 = vmatprep.subr.mxu0 0.0
        %4123 = vmatpush2.msra.mxu0 0.0
        %4124 = vmatprep.subr.mxu0 0.0
        %4125 = vmatpush2.msra.mxu0 0.0
        %4126 = vmatprep.subr.mxu0 0.0
        %4127 = vmatpush2.msra.mxu0 0.0
        %4128 = vmatprep.subr.mxu0 0.0
        %4129 = vmatpush2.msra.mxu0 0.0
        %4130 = vmatprep.subr.mxu0 0.0
        %4131 = vmatpush2.msra.mxu0 0.0
        %4132 = vmatprep.subr.mxu0 0.0
        %4133 = vmatpush2.msra.mxu0 0.0
        %4134 = vmatprep.subr.mxu0 0.0
        %4135 = vmatpush2.msra.mxu0 0.0
        %4136 = vmatprep.subr.mxu0 0.0
        %4137 = vmatpush2.msra.mxu0 0.0
        %4138 = vmatprep.subr.mxu0 0.0
        %4139 = vmatpush2.msra.mxu0 0.0
        %4140 = vmatprep.subr.mxu0 0.0
        %4141 = vmatpush2.msra.mxu0 0.0
        %4142 = vmatprep.subr.mxu0 0.0
        %4143 = vmatpush2.msra.mxu0 0.0
        %4144 = vmatprep.subr.mxu0 0.0
        %4145 = vmatpush2.msra.mxu0 0.0
        %4146 = vmatprep.subr.mxu0 0.0
        %4147 = vmatpush2.msra.mxu0 0.0
        %4148 = vmatprep.subr.mxu0 0.0
        %4149 = vmatpush2.msra.mxu0 0.0
        %4150 = vmatprep.subr.mxu0 0.0
        %4151 = vmatpush2.msra.mxu0 0.0
        %4152 = vmatprep.subr.mxu0 0.0
        %4153 = vmatpush2.msra.mxu0 0.0
        %4154 = vmatprep.mubr.f32.mxu0 0.0
        %4155 = vmatmul.mubr.f32.gmra.mxu0 %v4088
        %v4156 = vpop.f32.mrf.mxu0
        %v4157 = vadd.f32 %v3556, %v4156
        %v4158 = vpop.f32.mrf.mxu0
        %4159 = vdwg.mxu0
        %4161 = vrot.lane.b32.xlu0 %v3762, 96
        %v4162 = vpop.permute.xlu0 %4161
        %v4163 = vsel %vm3262, %v4162, 0
        %4165 = vmatprep.subr.mxu0 0.0
        %4166 = vmatpush1.msra.mxu0 0.0
        %4167 = vmatprep.subr.mxu0 0.0
        %4168 = vmatpush1.msra.mxu0 0.0
        %4169 = vmatprep.subr.mxu0 0.0
        %4170 = vmatpush1.msra.mxu0 0.0
        %4171 = vmatprep.subr.mxu0 0.0
        %4172 = vmatpush1.msra.mxu0 0.0
        %4173 = vmatprep.subr.mxu0 0.0
        %4174 = vmatpush1.msra.mxu0 0.0
        %4175 = vmatprep.subr.mxu0 0.0
        %4176 = vmatpush1.msra.mxu0 0.0
        %4177 = vmatprep.subr.mxu0 0.0
        %4178 = vmatpush1.msra.mxu0 0.0
        %4179 = vmatprep.subr.mxu0 0.0
        %4180 = vmatpush1.msra.mxu0 0.0
        %4181 = vmatprep.subr.mxu0 0.0
        %4182 = vmatpush1.msra.mxu0 0.0
        %4183 = vmatprep.subr.mxu0 0.0
        %4184 = vmatpush1.msra.mxu0 0.0
        %4185 = vmatprep.subr.mxu0 0.0
        %4186 = vmatpush1.msra.mxu0 0.0
        %4187 = vmatprep.subr.mxu0 0.0
        %4188 = vmatpush1.msra.mxu0 0.0
        %4189 = vmatprep.subr.mxu0 0.0
        %4190 = vmatpush1.msra.mxu0 %v3254
        %4191 = vmatprep.subr.mxu0 0.0
        %4192 = vmatpush1.msra.mxu0 %v3253
        %4193 = vmatprep.subr.mxu0 0.0
        %4194 = vmatpush1.msra.mxu0 %v3252
        %4195 = vmatprep.subr.mxu0 0.0
        %4196 = vmatpush1.msra.mxu0 %v3251
        %4197 = vmatprep.subr.mxu0 0.0
        %4198 = vmatpush2.msra.mxu0 0.0
        %4199 = vmatprep.subr.mxu0 0.0
        %4200 = vmatpush2.msra.mxu0 0.0
        %4201 = vmatprep.subr.mxu0 0.0
        %4202 = vmatpush2.msra.mxu0 0.0
        %4203 = vmatprep.subr.mxu0 0.0
        %4204 = vmatpush2.msra.mxu0 0.0
        %4205 = vmatprep.subr.mxu0 0.0
        %4206 = vmatpush2.msra.mxu0 0.0
        %4207 = vmatprep.subr.mxu0 0.0
        %4208 = vmatpush2.msra.mxu0 0.0
        %4209 = vmatprep.subr.mxu0 0.0
        %4210 = vmatpush2.msra.mxu0 0.0
        %4211 = vmatprep.subr.mxu0 0.0
        %4212 = vmatpush2.msra.mxu0 0.0
        %4213 = vmatprep.subr.mxu0 0.0
        %4214 = vmatpush2.msra.mxu0 0.0
        %4215 = vmatprep.subr.mxu0 0.0
        %4216 = vmatpush2.msra.mxu0 0.0
        %4217 = vmatprep.subr.mxu0 0.0
        %4218 = vmatpush2.msra.mxu0 0.0
        %4219 = vmatprep.subr.mxu0 0.0
        %4220 = vmatpush2.msra.mxu0 0.0
        %4221 = vmatprep.subr.mxu0 0.0
        %4222 = vmatpush2.msra.mxu0 0.0
        %4223 = vmatprep.subr.mxu0 0.0
        %4224 = vmatpush2.msra.mxu0 0.0
        %4225 = vmatprep.subr.mxu0 0.0
        %4226 = vmatpush2.msra.mxu0 0.0
        %4227 = vmatprep.subr.mxu0 0.0
        %4228 = vmatpush2.msra.mxu0 0.0
        %4229 = vmatprep.mubr.f32.mxu0 0.0
        %4230 = vmatmul.mubr.f32.gmra.mxu0 %v4163
        %v4231 = vpop.f32.mrf.mxu0
        %v4232 = vadd.f32 %v3665, %v4231
        %v4233 = vpop.f32.mrf.mxu0
        %4234 = vdwg.mxu0
        %v4235 = vadd.f32 %v4157, %v4232
        %v4236 = vxor.u32 %v4235, 2147483648
        %v4237 = vmul.f32 %v4236, 1.442695
        %v4238 = vpow.pop %v4237
        %v4239 = vadd.f32 %v4238, 1.0
        %v4240 = vrcp.pop %v4239
        %v4241 = vmul.f32 1.0, %v4240
        %4243 = vrot.lane.b32.xlu0 %v4232, 64
        %v4244 = vpop.permute.xlu0 %4243
        %v4246 = vmul.f32 %v4241, %v4244
        %4248 = vrot.lane.b32.xlu0 %v4246, 64
        %v4249 = vpop.permute.xlu0 %4248
        %v4251 = vadd.f32 %v4157, %v4249
        %v4252 = vtanh.pop %v4251
        %v4253 = vsub.f32 1.0, %v4241
        %4255 = vrot.lane.b32.xlu0 %v4252, 96
        %v4256 = vpop.permute.xlu0 %4255
        %v4258 = vmul.f32 %v4253, %v4256
        %v4259 = vmul.f32 %v4241, %v3762
        %v4260 = vadd.f32 %v4258, %v4259
        %4261 = vmatprep.subr.mxu0 0.0
        %4262 = vmatpush1.msra.mxu0 0.0
        %4263 = vmatprep.subr.mxu0 0.0
        %4264 = vmatpush1.msra.mxu0 0.0
        %4265 = vmatprep.subr.mxu0 0.0
        %4266 = vmatpush1.msra.mxu0 0.0
        %4267 = vmatprep.subr.mxu0 0.0
        %4268 = vmatpush1.msra.mxu0 0.0
        %4269 = vmatprep.subr.mxu0 0.0
        %4270 = vmatpush1.msra.mxu0 0.0
        %4271 = vmatprep.subr.mxu0 0.0
        %4272 = vmatpush1.msra.mxu0 0.0
        %4273 = vmatprep.subr.mxu0 0.0
        %4274 = vmatpush1.msra.mxu0 0.0
        %4275 = vmatprep.subr.mxu0 0.0
        %4276 = vmatpush1.msra.mxu0 0.0
        %4277 = vmatprep.subr.mxu0 0.0
        %4278 = vmatpush1.msra.mxu0 0.0
        %4279 = vmatprep.subr.mxu0 0.0
        %4280 = vmatpush1.msra.mxu0 0.0
        %4281 = vmatprep.subr.mxu0 0.0
        %4282 = vmatpush1.msra.mxu0 0.0
        %4283 = vmatprep.subr.mxu0 0.0
        %4284 = vmatpush1.msra.mxu0 0.0
        %4285 = vmatprep.subr.mxu0 0.0
        %4286 = vmatpush1.msra.mxu0 %v3244
        %4287 = vmatprep.subr.mxu0 0.0
        %4288 = vmatpush1.msra.mxu0 %v3243
        %4289 = vmatprep.subr.mxu0 0.0
        %4290 = vmatpush1.msra.mxu0 %v3242
        %4291 = vmatprep.subr.mxu0 0.0
        %4292 = vmatpush1.msra.mxu0 %v3241
        %4293 = vmatprep.subr.mxu0 0.0
        %4294 = vmatpush2.msra.mxu0 0.0
        %4295 = vmatprep.subr.mxu0 0.0
        %4296 = vmatpush2.msra.mxu0 0.0
        %4297 = vmatprep.subr.mxu0 0.0
        %4298 = vmatpush2.msra.mxu0 0.0
        %4299 = vmatprep.subr.mxu0 0.0
        %4300 = vmatpush2.msra.mxu0 0.0
        %4301 = vmatprep.subr.mxu0 0.0
        %4302 = vmatpush2.msra.mxu0 0.0
        %4303 = vmatprep.subr.mxu0 0.0
        %4304 = vmatpush2.msra.mxu0 0.0
        %4305 = vmatprep.subr.mxu0 0.0
        %4306 = vmatpush2.msra.mxu0 0.0
        %4307 = vmatprep.subr.mxu0 0.0
        %4308 = vmatpush2.msra.mxu0 0.0
        %4309 = vmatprep.subr.mxu0 0.0
        %4310 = vmatpush2.msra.mxu0 0.0
        %4311 = vmatprep.subr.mxu0 0.0
        %4312 = vmatpush2.msra.mxu0 0.0
        %4313 = vmatprep.subr.mxu0 0.0
        %4314 = vmatpush2.msra.mxu0 0.0
        %4315 = vmatprep.subr.mxu0 0.0
        %4316 = vmatpush2.msra.mxu0 0.0
        %4317 = vmatprep.subr.mxu0 0.0
        %4318 = vmatpush2.msra.mxu0 0.0
        %4319 = vmatprep.subr.mxu0 0.0
        %4320 = vmatpush2.msra.mxu0 0.0
        %4321 = vmatprep.subr.mxu0 0.0
        %4322 = vmatpush2.msra.mxu0 0.0
        %4323 = vmatprep.subr.mxu0 0.0
        %4324 = vmatpush2.msra.mxu0 0.0
        %4325 = vmatprep.mubr.f32.mxu0 0.0
        %4326 = vmatmul.mubr.f32.gmra.mxu0 %v4088
        %v4327 = vpop.f32.mrf.mxu0
        %v4328 = vadd.f32 %v3260, %v4327
        %v4329 = vpop.f32.mrf.mxu0
        %4330 = vdwg.mxu0
        %v4332 = vrot.slane %v4328, 6
        %v4333 = vrot.slane %v4328, 7
        %v4334 = vrot.slane %v4328, 1
        %v4335 = vrot.slane %v4328, 2
        %v4336 = vrot.slane %v4328, 3
        %v4337 = vrot.slane %v4328, 4
        %v4338 = vrot.slane %v4328, 5
        %v4347 = vadd.f32 %v3233, %v4332
        %v4348 = vadd.f32 %v3234, %v4333
        %v4349 = vadd.f32 %v3235, %v4328
        %v4350 = vadd.f32 %v3236, %v4334
        %v4351 = vadd.f32 %v3237, %v4335
        %v4352 = vadd.f32 %v3238, %v4336
        %v4353 = vadd.f32 %v3239, %v4337
        %v4354 = vadd.f32 %v3240, %v4338
        %v4355 = vxor.u32 %v4347, 2147483648
        %v4356 = vxor.u32 %v4348, 2147483648
        %v4357 = vxor.u32 %v4349, 2147483648
        %v4358 = vxor.u32 %v4350, 2147483648
        %v4359 = vxor.u32 %v4351, 2147483648
        %v4360 = vxor.u32 %v4352, 2147483648
        %v4361 = vxor.u32 %v4353, 2147483648
        %v4362 = vxor.u32 %v4354, 2147483648
        %v4363 = vmul.f32 %v4355, 1.442695
        %v4364 = vpow.pop %v4363
        %v4365 = vmul.f32 %v4356, 1.442695
        %v4366 = vpow.pop %v4365
        %v4367 = vmul.f32 %v4357, 1.442695
        %v4368 = vpow.pop %v4367
        %v4369 = vmul.f32 %v4358, 1.442695
        %v4370 = vpow.pop %v4369
        %v4371 = vmul.f32 %v4359, 1.442695
        %v4372 = vpow.pop %v4371
        %v4373 = vmul.f32 %v4360, 1.442695
        %v4374 = vpow.pop %v4373
        %v4375 = vmul.f32 %v4361, 1.442695
        %v4376 = vpow.pop %v4375
        %v4377 = vmul.f32 %v4362, 1.442695
        %v4378 = vpow.pop %v4377
        %v4379 = vadd.f32 %v4364, 1.0
        %v4380 = vadd.f32 %v4366, 1.0
        %v4381 = vadd.f32 %v4368, 1.0
        %v4382 = vadd.f32 %v4370, 1.0
        %v4383 = vadd.f32 %v4372, 1.0
        %v4384 = vadd.f32 %v4374, 1.0
        %v4385 = vadd.f32 %v4376, 1.0
        %v4386 = vadd.f32 %v4378, 1.0
        %v4387 = vrcp.pop %v4379
        %v4388 = vmul.f32 1.0, %v4387
        %v4389 = vrcp.pop %v4380
        %v4390 = vmul.f32 1.0, %v4389
        %v4391 = vrcp.pop %v4381
        %v4392 = vmul.f32 1.0, %v4391
        %v4393 = vrcp.pop %v4382
        %v4394 = vmul.f32 1.0, %v4393
        %v4395 = vrcp.pop %v4383
        %v4396 = vmul.f32 1.0, %v4395
        %v4397 = vrcp.pop %v4384
        %v4398 = vmul.f32 1.0, %v4397
        %v4399 = vrcp.pop %v4385
        %v4400 = vmul.f32 1.0, %v4399
        %v4401 = vrcp.pop %v4386
        %v4402 = vmul.f32 1.0, %v4401
        %4403 = vrot.lane.b32.xlu0 %v4332, 64
        %v4404 = vpop.permute.xlu0 %4403
        %4405 = vrot.lane.b32.xlu0 %v4333, 64
        %v4406 = vpop.permute.xlu0 %4405
        %4407 = vrot.lane.b32.xlu0 %v4328, 64
        %v4408 = vpop.permute.xlu0 %4407
        %4409 = vrot.lane.b32.xlu0 %v4334, 64
        %v4410 = vpop.permute.xlu0 %4409
        %4411 = vrot.lane.b32.xlu0 %v4335, 64
        %v4412 = vpop.permute.xlu0 %4411
        %4413 = vrot.lane.b32.xlu0 %v4336, 64
        %v4414 = vpop.permute.xlu0 %4413
        %4415 = vrot.lane.b32.xlu0 %v4337, 64
        %v4416 = vpop.permute.xlu0 %4415
        %4417 = vrot.lane.b32.xlu0 %v4338, 64
        %v4418 = vpop.permute.xlu0 %4417
        %v4427 = vmul.f32 %v4388, %v4404
        %v4428 = vmul.f32 %v4390, %v4406
        %v4429 = vmul.f32 %v4392, %v4408
        %v4430 = vmul.f32 %v4394, %v4410
        %v4431 = vmul.f32 %v4396, %v4412
        %v4432 = vmul.f32 %v4398, %v4414
        %v4433 = vmul.f32 %v4400, %v4416
        %v4434 = vmul.f32 %v4402, %v4418
        %4443 = vrot.lane.b32.xlu0 %v4427, 64
        %v4444 = vpop.permute.xlu0 %4443
        %4445 = vrot.lane.b32.xlu0 %v4428, 64
        %v4446 = vpop.permute.xlu0 %4445
        %4447 = vrot.lane.b32.xlu0 %v4429, 64
        %v4448 = vpop.permute.xlu0 %4447
        %4449 = vrot.lane.b32.xlu0 %v4430, 64
        %v4450 = vpop.permute.xlu0 %4449
        %4451 = vrot.lane.b32.xlu0 %v4431, 64
        %v4452 = vpop.permute.xlu0 %4451
        %4453 = vrot.lane.b32.xlu0 %v4432, 64
        %v4454 = vpop.permute.xlu0 %4453
        %4455 = vrot.lane.b32.xlu0 %v4433, 64
        %v4456 = vpop.permute.xlu0 %4455
        %4457 = vrot.lane.b32.xlu0 %v4434, 64
        %v4458 = vpop.permute.xlu0 %4457
        %v4467 = vadd.f32 %v3233, %v4444
        %v4468 = vadd.f32 %v3234, %v4446
        %v4469 = vadd.f32 %v3235, %v4448
        %v4470 = vadd.f32 %v3236, %v4450
        %v4471 = vadd.f32 %v3237, %v4452
        %v4472 = vadd.f32 %v3238, %v4454
        %v4473 = vadd.f32 %v3239, %v4456
        %v4474 = vadd.f32 %v3240, %v4458
        %v4475 = vtanh.pop %v4467
        %v4476 = vtanh.pop %v4468
        %v4477 = vtanh.pop %v4469
        %v4478 = vtanh.pop %v4470
        %v4479 = vtanh.pop %v4471
        %v4480 = vtanh.pop %v4472
        %v4481 = vtanh.pop %v4473
        %v4482 = vtanh.pop %v4474
        %v4483 = vsub.f32 1.0, %v4388
        %v4484 = vsub.f32 1.0, %v4390
        %v4485 = vsub.f32 1.0, %v4392
        %v4486 = vsub.f32 1.0, %v4394
        %v4487 = vsub.f32 1.0, %v4396
        %v4488 = vsub.f32 1.0, %v4398
        %v4489 = vsub.f32 1.0, %v4400
        %v4490 = vsub.f32 1.0, %v4402
        %4499 = vrot.lane.b32.xlu0 %v4475, 96
        %v4500 = vpop.permute.xlu0 %4499
        %4501 = vrot.lane.b32.xlu0 %v4476, 96
        %v4502 = vpop.permute.xlu0 %4501
        %4503 = vrot.lane.b32.xlu0 %v4477, 96
        %v4504 = vpop.permute.xlu0 %4503
        %4505 = vrot.lane.b32.xlu0 %v4478, 96
        %v4506 = vpop.permute.xlu0 %4505
        %4507 = vrot.lane.b32.xlu0 %v4479, 96
        %v4508 = vpop.permute.xlu0 %4507
        %4509 = vrot.lane.b32.xlu0 %v4480, 96
        %v4510 = vpop.permute.xlu0 %4509
        %4511 = vrot.lane.b32.xlu0 %v4481, 96
        %v4512 = vpop.permute.xlu0 %4511
        %4513 = vrot.lane.b32.xlu0 %v4482, 96
        %v4514 = vpop.permute.xlu0 %4513
        %v4523 = vmul.f32 %v4483, %v4500
        %v4524 = vmul.f32 %v4484, %v4502
        %v4525 = vmul.f32 %v4485, %v4504
        %v4526 = vmul.f32 %v4486, %v4506
        %v4527 = vmul.f32 %v4487, %v4508
        %v4528 = vmul.f32 %v4488, %v4510
        %v4529 = vmul.f32 %v4489, %v4512
        %v4530 = vmul.f32 %v4490, %v4514
        %v4531 = vrot.slane %v4056, 7
        %v4532 = vrot.slane %v4057, 7
        %v4533 = vrot.slane %v4059, 7
        %v4534 = vrot.slane %v4060, 7
        %v4535 = vrot.slane %v4061, 7
        %v4536 = vrot.slane %v4062, 7
        %v4537 = vrot.slane %v4063, 7
        %v4546 = vmul.f32 %v4388, %v4531
        %v4547 = vmul.f32 %v4390, %v4532
        %v4548 = vmul.f32 %v4392, %v4074
        %v4549 = vmul.f32 %v4394, %v4533
        %v4550 = vmul.f32 %v4396, %v4534
        %v4551 = vmul.f32 %v4398, %v4535
        %v4552 = vmul.f32 %v4400, %v4536
        %v4553 = vmul.f32 %v4402, %v4537
        %v4554 = vadd.f32 %v4523, %v4546
        %v4555 = vadd.f32 %v4524, %v4547
        %v4556 = vadd.f32 %v4525, %v4548
        %v4557 = vadd.f32 %v4526, %v4549
        %v4558 = vadd.f32 %v4527, %v4550
        %v4559 = vadd.f32 %v4528, %v4551
        %v4560 = vadd.f32 %v4529, %v4552
        %v4561 = vadd.f32 %v4530, %v4553
        %v4570 = vrot.slane %v4554, 2
        %v4571 = vrot.slane %v4555, 1
        %v4572 = vsel %vm3567, %v4571, %v4570
        %v4573 = vsel %vm3570, %v4556, %v4572
        %v4574 = vrot.slane %v4557, 7
        %v4575 = vsel %vm3573, %v4574, %v4573
        %v4576 = vrot.slane %v4558, 6
        %v4577 = vsel %vm3576, %v4576, %v4575
        %v4578 = vrot.slane %v4559, 5
        %v4579 = vsel %vm3579, %v4578, %v4577
        %v4580 = vrot.slane %v4560, 4
        %v4581 = vsel %vm3582, %v4580, %v4579
        %v4582 = vrot.slane %v4561, 3
        %v4583 = vsel %vm3585, %v4582, %v4581
        %4584 = vrot.lane.b32.xlu0 %v4583, 96
        %v4585 = vpop.permute.xlu0 %4584
        %v4586 = vsel %vm3262, %v4585, 0
        %4588 = vmatprep.subr.mxu0 0.0
        %4589 = vmatpush1.msra.mxu0 0.0
        %4590 = vmatprep.subr.mxu0 0.0
        %4591 = vmatpush1.msra.mxu0 0.0
        %4592 = vmatprep.subr.mxu0 0.0
        %4593 = vmatpush1.msra.mxu0 0.0
        %4594 = vmatprep.subr.mxu0 0.0
        %4595 = vmatpush1.msra.mxu0 0.0
        %4596 = vmatprep.subr.mxu0 0.0
        %4597 = vmatpush1.msra.mxu0 0.0
        %4598 = vmatprep.subr.mxu0 0.0
        %4599 = vmatpush1.msra.mxu0 0.0
        %4600 = vmatprep.subr.mxu0 0.0
        %4601 = vmatpush1.msra.mxu0 0.0
        %4602 = vmatprep.subr.mxu0 0.0
        %4603 = vmatpush1.msra.mxu0 0.0
        %4604 = vmatprep.subr.mxu0 0.0
        %4605 = vmatpush1.msra.mxu0 0.0
        %4606 = vmatprep.subr.mxu0 0.0
        %4607 = vmatpush1.msra.mxu0 0.0
        %4608 = vmatprep.subr.mxu0 0.0
        %4609 = vmatpush1.msra.mxu0 0.0
        %4610 = vmatprep.subr.mxu0 0.0
        %4611 = vmatpush1.msra.mxu0 0.0
        %4612 = vmatprep.subr.mxu0 0.0
        %4613 = vmatpush1.msra.mxu0 %v3249
        %4614 = vmatprep.subr.mxu0 0.0
        %4615 = vmatpush1.msra.mxu0 %v3248
        %4616 = vmatprep.subr.mxu0 0.0
        %4617 = vmatpush1.msra.mxu0 %v3247
        %4618 = vmatprep.subr.mxu0 0.0
        %4619 = vmatpush1.msra.mxu0 %v3246
        %4620 = vmatprep.subr.mxu0 0.0
        %4621 = vmatpush2.msra.mxu0 0.0
        %4622 = vmatprep.subr.mxu0 0.0
        %4623 = vmatpush2.msra.mxu0 0.0
        %4624 = vmatprep.subr.mxu0 0.0
        %4625 = vmatpush2.msra.mxu0 0.0
        %4626 = vmatprep.subr.mxu0 0.0
        %4627 = vmatpush2.msra.mxu0 0.0
        %4628 = vmatprep.subr.mxu0 0.0
        %4629 = vmatpush2.msra.mxu0 0.0
        %4630 = vmatprep.subr.mxu0 0.0
        %4631 = vmatpush2.msra.mxu0 0.0
        %4632 = vmatprep.subr.mxu0 0.0
        %4633 = vmatpush2.msra.mxu0 0.0
        %4634 = vmatprep.subr.mxu0 0.0
        %4635 = vmatpush2.msra.mxu0 0.0
        %4636 = vmatprep.subr.mxu0 0.0
        %4637 = vmatpush2.msra.mxu0 0.0
        %4638 = vmatprep.subr.mxu0 0.0
        %4639 = vmatpush2.msra.mxu0 0.0
        %4640 = vmatprep.subr.mxu0 0.0
        %4641 = vmatpush2.msra.mxu0 0.0
        %4642 = vmatprep.subr.mxu0 0.0
        %4643 = vmatpush2.msra.mxu0 0.0
        %4644 = vmatprep.subr.mxu0 0.0
        %4645 = vmatpush2.msra.mxu0 0.0
        %4646 = vmatprep.subr.mxu0 0.0
        %4647 = vmatpush2.msra.mxu0 0.0
        %4648 = vmatprep.subr.mxu0 0.0
        %4649 = vmatpush2.msra.mxu0 0.0
        %4650 = vmatprep.subr.mxu0 0.0
        %4651 = vmatpush2.msra.mxu0 0.0
        %4652 = vmatprep.mubr.f32.mxu0 0.0
        %4653 = vmatmul.mubr.f32.gmra.mxu0 %v4586
        %v4654 = vpop.f32.mrf.mxu0
        %v4655 = vadd.f32 %v3556, %v4654
        %v4656 = vpop.f32.mrf.mxu0
        %4657 = vdwg.mxu0
        %4659 = vrot.lane.b32.xlu0 %v4260, 96
        %v4660 = vpop.permute.xlu0 %4659
        %v4661 = vsel %vm3262, %v4660, 0
        %4663 = vmatprep.subr.mxu0 0.0
        %4664 = vmatpush1.msra.mxu0 0.0
        %4665 = vmatprep.subr.mxu0 0.0
        %4666 = vmatpush1.msra.mxu0 0.0
        %4667 = vmatprep.subr.mxu0 0.0
        %4668 = vmatpush1.msra.mxu0 0.0
        %4669 = vmatprep.subr.mxu0 0.0
        %4670 = vmatpush1.msra.mxu0 0.0
        %4671 = vmatprep.subr.mxu0 0.0
        %4672 = vmatpush1.msra.mxu0 0.0
        %4673 = vmatprep.subr.mxu0 0.0
        %4674 = vmatpush1.msra.mxu0 0.0
        %4675 = vmatprep.subr.mxu0 0.0
        %4676 = vmatpush1.msra.mxu0 0.0
        %4677 = vmatprep.subr.mxu0 0.0
        %4678 = vmatpush1.msra.mxu0 0.0
        %4679 = vmatprep.subr.mxu0 0.0
        %4680 = vmatpush1.msra.mxu0 0.0
        %4681 = vmatprep.subr.mxu0 0.0
        %4682 = vmatpush1.msra.mxu0 0.0
        %4683 = vmatprep.subr.mxu0 0.0
        %4684 = vmatpush1.msra.mxu0 0.0
        %4685 = vmatprep.subr.mxu0 0.0
        %4686 = vmatpush1.msra.mxu0 0.0
        %4687 = vmatprep.subr.mxu0 0.0
        %4688 = vmatpush1.msra.mxu0 %v3254
        %4689 = vmatprep.subr.mxu0 0.0
        %4690 = vmatpush1.msra.mxu0 %v3253
        %4691 = vmatprep.subr.mxu0 0.0
        %4692 = vmatpush1.msra.mxu0 %v3252
        %4693 = vmatprep.subr.mxu0 0.0
        %4694 = vmatpush1.msra.mxu0 %v3251
        %4695 = vmatprep.subr.mxu0 0.0
        %4696 = vmatpush2.msra.mxu0 0.0
        %4697 = vmatprep.subr.mxu0 0.0
        %4698 = vmatpush2.msra.mxu0 0.0
        %4699 = vmatprep.subr.mxu0 0.0
        %4700 = vmatpush2.msra.mxu0 0.0
        %4701 = vmatprep.subr.mxu0 0.0
        %4702 = vmatpush2.msra.mxu0 0.0
        %4703 = vmatprep.subr.mxu0 0.0
        %4704 = vmatpush2.msra.mxu0 0.0
        %4705 = vmatprep.subr.mxu0 0.0
        %4706 = vmatpush2.msra.mxu0 0.0
        %4707 = vmatprep.subr.mxu0 0.0
        %4708 = vmatpush2.msra.mxu0 0.0
        %4709 = vmatprep.subr.mxu0 0.0
        %4710 = vmatpush2.msra.mxu0 0.0
        %4711 = vmatprep.subr.mxu0 0.0
        %4712 = vmatpush2.msra.mxu0 0.0
        %4713 = vmatprep.subr.mxu0 0.0
        %4714 = vmatpush2.msra.mxu0 0.0
        %4715 = vmatprep.subr.mxu0 0.0
        %4716 = vmatpush2.msra.mxu0 0.0
        %4717 = vmatprep.subr.mxu0 0.0
        %4718 = vmatpush2.msra.mxu0 0.0
        %4719 = vmatprep.subr.mxu0 0.0
        %4720 = vmatpush2.msra.mxu0 0.0
        %4721 = vmatprep.subr.mxu0 0.0
        %4722 = vmatpush2.msra.mxu0 0.0
        %4723 = vmatprep.subr.mxu0 0.0
        %4724 = vmatpush2.msra.mxu0 0.0
        %4725 = vmatprep.subr.mxu0 0.0
        %4726 = vmatpush2.msra.mxu0 0.0
        %4727 = vmatprep.mubr.f32.mxu0 0.0
        %4728 = vmatmul.mubr.f32.gmra.mxu0 %v4661
        %v4729 = vpop.f32.mrf.mxu0
        %v4730 = vadd.f32 %v3665, %v4729
        %v4731 = vpop.f32.mrf.mxu0
        %4732 = vdwg.mxu0
        %v4733 = vadd.f32 %v4655, %v4730
        %v4734 = vxor.u32 %v4733, 2147483648
        %v4735 = vmul.f32 %v4734, 1.442695
        %v4736 = vpow.pop %v4735
        %v4737 = vadd.f32 %v4736, 1.0
        %v4738 = vrcp.pop %v4737
        %v4739 = vmul.f32 1.0, %v4738
        %4741 = vrot.lane.b32.xlu0 %v4730, 64
        %v4742 = vpop.permute.xlu0 %4741
        %v4744 = vmul.f32 %v4739, %v4742
        %4746 = vrot.lane.b32.xlu0 %v4744, 64
        %v4747 = vpop.permute.xlu0 %4746
        %v4749 = vadd.f32 %v4655, %v4747
        %v4750 = vtanh.pop %v4749
        %v4751 = vsub.f32 1.0, %v4739
        %4753 = vrot.lane.b32.xlu0 %v4750, 96
        %v4754 = vpop.permute.xlu0 %4753
        %v4756 = vmul.f32 %v4751, %v4754
        %v4757 = vmul.f32 %v4739, %v4260
        %v4758 = vadd.f32 %v4756, %v4757
        %4759 = vmatprep.subr.mxu0 0.0
        %4760 = vmatpush1.msra.mxu0 0.0
        %4761 = vmatprep.subr.mxu0 0.0
        %4762 = vmatpush1.msra.mxu0 0.0
        %4763 = vmatprep.subr.mxu0 0.0
        %4764 = vmatpush1.msra.mxu0 0.0
        %4765 = vmatprep.subr.mxu0 0.0
        %4766 = vmatpush1.msra.mxu0 0.0
        %4767 = vmatprep.subr.mxu0 0.0
        %4768 = vmatpush1.msra.mxu0 0.0
        %4769 = vmatprep.subr.mxu0 0.0
        %4770 = vmatpush1.msra.mxu0 0.0
        %4771 = vmatprep.subr.mxu0 0.0
        %4772 = vmatpush1.msra.mxu0 0.0
        %4773 = vmatprep.subr.mxu0 0.0
        %4774 = vmatpush1.msra.mxu0 0.0
        %4775 = vmatprep.subr.mxu0 0.0
        %4776 = vmatpush1.msra.mxu0 0.0
        %4777 = vmatprep.subr.mxu0 0.0
        %4778 = vmatpush1.msra.mxu0 0.0
        %4779 = vmatprep.subr.mxu0 0.0
        %4780 = vmatpush1.msra.mxu0 0.0
        %4781 = vmatprep.subr.mxu0 0.0
        %4782 = vmatpush1.msra.mxu0 0.0
        %4783 = vmatprep.subr.mxu0 0.0
        %4784 = vmatpush1.msra.mxu0 %v3244
        %4785 = vmatprep.subr.mxu0 0.0
        %4786 = vmatpush1.msra.mxu0 %v3243
        %4787 = vmatprep.subr.mxu0 0.0
        %4788 = vmatpush1.msra.mxu0 %v3242
        %4789 = vmatprep.subr.mxu0 0.0
        %4790 = vmatpush1.msra.mxu0 %v3241
        %4791 = vmatprep.subr.mxu0 0.0
        %4792 = vmatpush2.msra.mxu0 0.0
        %4793 = vmatprep.subr.mxu0 0.0
        %4794 = vmatpush2.msra.mxu0 0.0
        %4795 = vmatprep.subr.mxu0 0.0
        %4796 = vmatpush2.msra.mxu0 0.0
        %4797 = vmatprep.subr.mxu0 0.0
        %4798 = vmatpush2.msra.mxu0 0.0
        %4799 = vmatprep.subr.mxu0 0.0
        %4800 = vmatpush2.msra.mxu0 0.0
        %4801 = vmatprep.subr.mxu0 0.0
        %4802 = vmatpush2.msra.mxu0 0.0
        %4803 = vmatprep.subr.mxu0 0.0
        %4804 = vmatpush2.msra.mxu0 0.0
        %4805 = vmatprep.subr.mxu0 0.0
        %4806 = vmatpush2.msra.mxu0 0.0
        %4807 = vmatprep.subr.mxu0 0.0
        %4808 = vmatpush2.msra.mxu0 0.0
        %4809 = vmatprep.subr.mxu0 0.0
        %4810 = vmatpush2.msra.mxu0 0.0
        %4811 = vmatprep.subr.mxu0 0.0
        %4812 = vmatpush2.msra.mxu0 0.0
        %4813 = vmatprep.subr.mxu0 0.0
        %4814 = vmatpush2.msra.mxu0 0.0
        %4815 = vmatprep.subr.mxu0 0.0
        %4816 = vmatpush2.msra.mxu0 0.0
        %4817 = vmatprep.subr.mxu0 0.0
        %4818 = vmatpush2.msra.mxu0 0.0
        %4819 = vmatprep.subr.mxu0 0.0
        %4820 = vmatpush2.msra.mxu0 0.0
        %4821 = vmatprep.subr.mxu0 0.0
        %4822 = vmatpush2.msra.mxu0 0.0
        %4823 = vmatprep.mubr.f32.mxu0 0.0
        %4824 = vmatmul.mubr.f32.gmra.mxu0 %v4586
        %v4825 = vpop.f32.mrf.mxu0
        %v4826 = vadd.f32 %v3260, %v4825
        %v4827 = vpop.f32.mrf.mxu0
        %4828 = vdwg.mxu0
        %v4830 = vrot.slane %v4826, 5
        %v4831 = vrot.slane %v4826, 6
        %v4832 = vrot.slane %v4826, 7
        %v4833 = vrot.slane %v4826, 1
        %v4834 = vrot.slane %v4826, 2
        %v4835 = vrot.slane %v4826, 3
        %v4836 = vrot.slane %v4826, 4
        %v4845 = vadd.f32 %v3233, %v4830
        %v4846 = vadd.f32 %v3234, %v4831
        %v4847 = vadd.f32 %v3235, %v4832
        %v4848 = vadd.f32 %v3236, %v4826
        %v4849 = vadd.f32 %v3237, %v4833
        %v4850 = vadd.f32 %v3238, %v4834
        %v4851 = vadd.f32 %v3239, %v4835
        %v4852 = vadd.f32 %v3240, %v4836
        %v4853 = vxor.u32 %v4845, 2147483648
        %v4854 = vxor.u32 %v4846, 2147483648
        %v4855 = vxor.u32 %v4847, 2147483648
        %v4856 = vxor.u32 %v4848, 2147483648
        %v4857 = vxor.u32 %v4849, 2147483648
        %v4858 = vxor.u32 %v4850, 2147483648
        %v4859 = vxor.u32 %v4851, 2147483648
        %v4860 = vxor.u32 %v4852, 2147483648
        %v4861 = vmul.f32 %v4853, 1.442695
        %v4862 = vpow.pop %v4861
        %v4863 = vmul.f32 %v4854, 1.442695
        %v4864 = vpow.pop %v4863
        %v4865 = vmul.f32 %v4855, 1.442695
        %v4866 = vpow.pop %v4865
        %v4867 = vmul.f32 %v4856, 1.442695
        %v4868 = vpow.pop %v4867
        %v4869 = vmul.f32 %v4857, 1.442695
        %v4870 = vpow.pop %v4869
        %v4871 = vmul.f32 %v4858, 1.442695
        %v4872 = vpow.pop %v4871
        %v4873 = vmul.f32 %v4859, 1.442695
        %v4874 = vpow.pop %v4873
        %v4875 = vmul.f32 %v4860, 1.442695
        %v4876 = vpow.pop %v4875
        %v4877 = vadd.f32 %v4862, 1.0
        %v4878 = vadd.f32 %v4864, 1.0
        %v4879 = vadd.f32 %v4866, 1.0
        %v4880 = vadd.f32 %v4868, 1.0
        %v4881 = vadd.f32 %v4870, 1.0
        %v4882 = vadd.f32 %v4872, 1.0
        %v4883 = vadd.f32 %v4874, 1.0
        %v4884 = vadd.f32 %v4876, 1.0
        %v4885 = vrcp.pop %v4877
        %v4886 = vmul.f32 1.0, %v4885
        %v4887 = vrcp.pop %v4878
        %v4888 = vmul.f32 1.0, %v4887
        %v4889 = vrcp.pop %v4879
        %v4890 = vmul.f32 1.0, %v4889
        %v4891 = vrcp.pop %v4880
        %v4892 = vmul.f32 1.0, %v4891
        %v4893 = vrcp.pop %v4881
        %v4894 = vmul.f32 1.0, %v4893
        %v4895 = vrcp.pop %v4882
        %v4896 = vmul.f32 1.0, %v4895
        %v4897 = vrcp.pop %v4883
        %v4898 = vmul.f32 1.0, %v4897
        %v4899 = vrcp.pop %v4884
        %v4900 = vmul.f32 1.0, %v4899
        %4901 = vrot.lane.b32.xlu0 %v4830, 64
        %v4902 = vpop.permute.xlu0 %4901
        %4903 = vrot.lane.b32.xlu0 %v4831, 64
        %v4904 = vpop.permute.xlu0 %4903
        %4905 = vrot.lane.b32.xlu0 %v4832, 64
        %v4906 = vpop.permute.xlu0 %4905
        %4907 = vrot.lane.b32.xlu0 %v4826, 64
        %v4908 = vpop.permute.xlu0 %4907
        %4909 = vrot.lane.b32.xlu0 %v4833, 64
        %v4910 = vpop.permute.xlu0 %4909
        %4911 = vrot.lane.b32.xlu0 %v4834, 64
        %v4912 = vpop.permute.xlu0 %4911
        %4913 = vrot.lane.b32.xlu0 %v4835, 64
        %v4914 = vpop.permute.xlu0 %4913
        %4915 = vrot.lane.b32.xlu0 %v4836, 64
        %v4916 = vpop.permute.xlu0 %4915
        %v4925 = vmul.f32 %v4886, %v4902
        %v4926 = vmul.f32 %v4888, %v4904
        %v4927 = vmul.f32 %v4890, %v4906
        %v4928 = vmul.f32 %v4892, %v4908
        %v4929 = vmul.f32 %v4894, %v4910
        %v4930 = vmul.f32 %v4896, %v4912
        %v4931 = vmul.f32 %v4898, %v4914
        %v4932 = vmul.f32 %v4900, %v4916
        %4941 = vrot.lane.b32.xlu0 %v4925, 64
        %v4942 = vpop.permute.xlu0 %4941
        %4943 = vrot.lane.b32.xlu0 %v4926, 64
        %v4944 = vpop.permute.xlu0 %4943
        %4945 = vrot.lane.b32.xlu0 %v4927, 64
        %v4946 = vpop.permute.xlu0 %4945
        %4947 = vrot.lane.b32.xlu0 %v4928, 64
        %v4948 = vpop.permute.xlu0 %4947
        %4949 = vrot.lane.b32.xlu0 %v4929, 64
        %v4950 = vpop.permute.xlu0 %4949
        %4951 = vrot.lane.b32.xlu0 %v4930, 64
        %v4952 = vpop.permute.xlu0 %4951
        %4953 = vrot.lane.b32.xlu0 %v4931, 64
        %v4954 = vpop.permute.xlu0 %4953
        %4955 = vrot.lane.b32.xlu0 %v4932, 64
        %v4956 = vpop.permute.xlu0 %4955
        %v4965 = vadd.f32 %v3233, %v4942
        %v4966 = vadd.f32 %v3234, %v4944
        %v4967 = vadd.f32 %v3235, %v4946
        %v4968 = vadd.f32 %v3236, %v4948
        %v4969 = vadd.f32 %v3237, %v4950
        %v4970 = vadd.f32 %v3238, %v4952
        %v4971 = vadd.f32 %v3239, %v4954
        %v4972 = vadd.f32 %v3240, %v4956
        %v4973 = vtanh.pop %v4965
        %v4974 = vtanh.pop %v4966
        %v4975 = vtanh.pop %v4967
        %v4976 = vtanh.pop %v4968
        %v4977 = vtanh.pop %v4969
        %v4978 = vtanh.pop %v4970
        %v4979 = vtanh.pop %v4971
        %v4980 = vtanh.pop %v4972
        %v4981 = vsub.f32 1.0, %v4886
        %v4982 = vsub.f32 1.0, %v4888
        %v4983 = vsub.f32 1.0, %v4890
        %v4984 = vsub.f32 1.0, %v4892
        %v4985 = vsub.f32 1.0, %v4894
        %v4986 = vsub.f32 1.0, %v4896
        %v4987 = vsub.f32 1.0, %v4898
        %v4988 = vsub.f32 1.0, %v4900
        %4997 = vrot.lane.b32.xlu0 %v4973, 96
        %v4998 = vpop.permute.xlu0 %4997
        %4999 = vrot.lane.b32.xlu0 %v4974, 96
        %v5000 = vpop.permute.xlu0 %4999
        %5001 = vrot.lane.b32.xlu0 %v4975, 96
        %v5002 = vpop.permute.xlu0 %5001
        %5003 = vrot.lane.b32.xlu0 %v4976, 96
        %v5004 = vpop.permute.xlu0 %5003
        %5005 = vrot.lane.b32.xlu0 %v4977, 96
        %v5006 = vpop.permute.xlu0 %5005
        %5007 = vrot.lane.b32.xlu0 %v4978, 96
        %v5008 = vpop.permute.xlu0 %5007
        %5009 = vrot.lane.b32.xlu0 %v4979, 96
        %v5010 = vpop.permute.xlu0 %5009
        %5011 = vrot.lane.b32.xlu0 %v4980, 96
        %v5012 = vpop.permute.xlu0 %5011
        %v5021 = vmul.f32 %v4981, %v4998
        %v5022 = vmul.f32 %v4982, %v5000
        %v5023 = vmul.f32 %v4983, %v5002
        %v5024 = vmul.f32 %v4984, %v5004
        %v5025 = vmul.f32 %v4985, %v5006
        %v5026 = vmul.f32 %v4986, %v5008
        %v5027 = vmul.f32 %v4987, %v5010
        %v5028 = vmul.f32 %v4988, %v5012
        %v5029 = vrot.slane %v4554, 7
        %v5030 = vrot.slane %v4555, 7
        %v5031 = vrot.slane %v4556, 7
        %v5032 = vrot.slane %v4558, 7
        %v5033 = vrot.slane %v4559, 7
        %v5034 = vrot.slane %v4560, 7
        %v5035 = vrot.slane %v4561, 7
        %v5044 = vmul.f32 %v4886, %v5029
        %v5045 = vmul.f32 %v4888, %v5030
        %v5046 = vmul.f32 %v4890, %v5031
        %v5047 = vmul.f32 %v4892, %v4574
        %v5048 = vmul.f32 %v4894, %v5032
        %v5049 = vmul.f32 %v4896, %v5033
        %v5050 = vmul.f32 %v4898, %v5034
        %v5051 = vmul.f32 %v4900, %v5035
        %v5052 = vadd.f32 %v5021, %v5044
        %v5053 = vadd.f32 %v5022, %v5045
        %v5054 = vadd.f32 %v5023, %v5046
        %v5055 = vadd.f32 %v5024, %v5047
        %v5056 = vadd.f32 %v5025, %v5048
        %v5057 = vadd.f32 %v5026, %v5049
        %v5058 = vadd.f32 %v5027, %v5050
        %v5059 = vadd.f32 %v5028, %v5051
        %v5068 = vrot.slane %v5052, 3
        %v5069 = vrot.slane %v5053, 2
        %v5070 = vsel %vm3567, %v5069, %v5068
        %v5071 = vrot.slane %v5054, 1
        %v5072 = vsel %vm3570, %v5071, %v5070
        %v5073 = vsel %vm3573, %v5055, %v5072
        %v5074 = vrot.slane %v5056, 7
        %v5075 = vsel %vm3576, %v5074, %v5073
        %v5076 = vrot.slane %v5057, 6
        %v5077 = vsel %vm3579, %v5076, %v5075
        %v5078 = vrot.slane %v5058, 5
        %v5079 = vsel %vm3582, %v5078, %v5077
        %v5080 = vrot.slane %v5059, 4
        %v5081 = vsel %vm3585, %v5080, %v5079
        %5082 = vrot.lane.b32.xlu0 %v5081, 96
        %v5083 = vpop.permute.xlu0 %5082
        %v5084 = vsel %vm3262, %v5083, 0
        %5086 = vmatprep.subr.mxu0 0.0
        %5087 = vmatpush1.msra.mxu0 0.0
        %5088 = vmatprep.subr.mxu0 0.0
        %5089 = vmatpush1.msra.mxu0 0.0
        %5090 = vmatprep.subr.mxu0 0.0
        %5091 = vmatpush1.msra.mxu0 0.0
        %5092 = vmatprep.subr.mxu0 0.0
        %5093 = vmatpush1.msra.mxu0 0.0
        %5094 = vmatprep.subr.mxu0 0.0
        %5095 = vmatpush1.msra.mxu0 0.0
        %5096 = vmatprep.subr.mxu0 0.0
        %5097 = vmatpush1.msra.mxu0 0.0
        %5098 = vmatprep.subr.mxu0 0.0
        %5099 = vmatpush1.msra.mxu0 0.0
        %5100 = vmatprep.subr.mxu0 0.0
        %5101 = vmatpush1.msra.mxu0 0.0
        %5102 = vmatprep.subr.mxu0 0.0
        %5103 = vmatpush1.msra.mxu0 0.0
        %5104 = vmatprep.subr.mxu0 0.0
        %5105 = vmatpush1.msra.mxu0 0.0
        %5106 = vmatprep.subr.mxu0 0.0
        %5107 = vmatpush1.msra.mxu0 0.0
        %5108 = vmatprep.subr.mxu0 0.0
        %5109 = vmatpush1.msra.mxu0 0.0
        %5110 = vmatprep.subr.mxu0 0.0
        %5111 = vmatpush1.msra.mxu0 %v3249
        %5112 = vmatprep.subr.mxu0 0.0
        %5113 = vmatpush1.msra.mxu0 %v3248
        %5114 = vmatprep.subr.mxu0 0.0
        %5115 = vmatpush1.msra.mxu0 %v3247
        %5116 = vmatprep.subr.mxu0 0.0
        %5117 = vmatpush1.msra.mxu0 %v3246
        %5118 = vmatprep.subr.mxu0 0.0
        %5119 = vmatpush2.msra.mxu0 0.0
        %5120 = vmatprep.subr.mxu0 0.0
        %5121 = vmatpush2.msra.mxu0 0.0
        %5122 = vmatprep.subr.mxu0 0.0
        %5123 = vmatpush2.msra.mxu0 0.0
        %5124 = vmatprep.subr.mxu0 0.0
        %5125 = vmatpush2.msra.mxu0 0.0
        %5126 = vmatprep.subr.mxu0 0.0
        %5127 = vmatpush2.msra.mxu0 0.0
        %5128 = vmatprep.subr.mxu0 0.0
        %5129 = vmatpush2.msra.mxu0 0.0
        %5130 = vmatprep.subr.mxu0 0.0
        %5131 = vmatpush2.msra.mxu0 0.0
        %5132 = vmatprep.subr.mxu0 0.0
        %5133 = vmatpush2.msra.mxu0 0.0
        %5134 = vmatprep.subr.mxu0 0.0
        %5135 = vmatpush2.msra.mxu0 0.0
        %5136 = vmatprep.subr.mxu0 0.0
        %5137 = vmatpush2.msra.mxu0 0.0
        %5138 = vmatprep.subr.mxu0 0.0
        %5139 = vmatpush2.msra.mxu0 0.0
        %5140 = vmatprep.subr.mxu0 0.0
        %5141 = vmatpush2.msra.mxu0 0.0
        %5142 = vmatprep.subr.mxu0 0.0
        %5143 = vmatpush2.msra.mxu0 0.0
        %5144 = vmatprep.subr.mxu0 0.0
        %5145 = vmatpush2.msra.mxu0 0.0
        %5146 = vmatprep.subr.mxu0 0.0
        %5147 = vmatpush2.msra.mxu0 0.0
        %5148 = vmatprep.subr.mxu0 0.0
        %5149 = vmatpush2.msra.mxu0 0.0
        %5150 = vmatprep.mubr.f32.mxu0 0.0
        %5151 = vmatmul.mubr.f32.gmra.mxu0 %v5084
        %v5152 = vpop.f32.mrf.mxu0
        %v5153 = vadd.f32 %v3556, %v5152
        %v5154 = vpop.f32.mrf.mxu0
        %5155 = vdwg.mxu0
        %5157 = vrot.lane.b32.xlu0 %v4758, 96
        %v5158 = vpop.permute.xlu0 %5157
        %v5159 = vsel %vm3262, %v5158, 0
        %5161 = vmatprep.subr.mxu0 0.0
        %5162 = vmatpush1.msra.mxu0 0.0
        %5163 = vmatprep.subr.mxu0 0.0
        %5164 = vmatpush1.msra.mxu0 0.0
        %5165 = vmatprep.subr.mxu0 0.0
        %5166 = vmatpush1.msra.mxu0 0.0
        %5167 = vmatprep.subr.mxu0 0.0
        %5168 = vmatpush1.msra.mxu0 0.0
        %5169 = vmatprep.subr.mxu0 0.0
        %5170 = vmatpush1.msra.mxu0 0.0
        %5171 = vmatprep.subr.mxu0 0.0
        %5172 = vmatpush1.msra.mxu0 0.0
        %5173 = vmatprep.subr.mxu0 0.0
        %5174 = vmatpush1.msra.mxu0 0.0
        %5175 = vmatprep.subr.mxu0 0.0
        %5176 = vmatpush1.msra.mxu0 0.0
        %5177 = vmatprep.subr.mxu0 0.0
        %5178 = vmatpush1.msra.mxu0 0.0
        %5179 = vmatprep.subr.mxu0 0.0
        %5180 = vmatpush1.msra.mxu0 0.0
        %5181 = vmatprep.subr.mxu0 0.0
        %5182 = vmatpush1.msra.mxu0 0.0
        %5183 = vmatprep.subr.mxu0 0.0
        %5184 = vmatpush1.msra.mxu0 0.0
        %5185 = vmatprep.subr.mxu0 0.0
        %5186 = vmatpush1.msra.mxu0 %v3254
        %5187 = vmatprep.subr.mxu0 0.0
        %5188 = vmatpush1.msra.mxu0 %v3253
        %5189 = vmatprep.subr.mxu0 0.0
        %5190 = vmatpush1.msra.mxu0 %v3252
        %5191 = vmatprep.subr.mxu0 0.0
        %5192 = vmatpush1.msra.mxu0 %v3251
        %5193 = vmatprep.subr.mxu0 0.0
        %5194 = vmatpush2.msra.mxu0 0.0
        %5195 = vmatprep.subr.mxu0 0.0
        %5196 = vmatpush2.msra.mxu0 0.0
        %5197 = vmatprep.subr.mxu0 0.0
        %5198 = vmatpush2.msra.mxu0 0.0
        %5199 = vmatprep.subr.mxu0 0.0
        %5200 = vmatpush2.msra.mxu0 0.0
        %5201 = vmatprep.subr.mxu0 0.0
        %5202 = vmatpush2.msra.mxu0 0.0
        %5203 = vmatprep.subr.mxu0 0.0
        %5204 = vmatpush2.msra.mxu0 0.0
        %5205 = vmatprep.subr.mxu0 0.0
        %5206 = vmatpush2.msra.mxu0 0.0
        %5207 = vmatprep.subr.mxu0 0.0
        %5208 = vmatpush2.msra.mxu0 0.0
        %5209 = vmatprep.subr.mxu0 0.0
        %5210 = vmatpush2.msra.mxu0 0.0
        %5211 = vmatprep.subr.mxu0 0.0
        %5212 = vmatpush2.msra.mxu0 0.0
        %5213 = vmatprep.subr.mxu0 0.0
        %5214 = vmatpush2.msra.mxu0 0.0
        %5215 = vmatprep.subr.mxu0 0.0
        %5216 = vmatpush2.msra.mxu0 0.0
        %5217 = vmatprep.subr.mxu0 0.0
        %5218 = vmatpush2.msra.mxu0 0.0
        %5219 = vmatprep.subr.mxu0 0.0
        %5220 = vmatpush2.msra.mxu0 0.0
        %5221 = vmatprep.subr.mxu0 0.0
        %5222 = vmatpush2.msra.mxu0 0.0
        %5223 = vmatprep.subr.mxu0 0.0
        %5224 = vmatpush2.msra.mxu0 0.0
        %5225 = vmatprep.mubr.f32.mxu0 0.0
        %5226 = vmatmul.mubr.f32.gmra.mxu0 %v5159
        %v5227 = vpop.f32.mrf.mxu0
        %v5228 = vadd.f32 %v3665, %v5227
        %v5229 = vpop.f32.mrf.mxu0
        %5230 = vdwg.mxu0
        %v5231 = vadd.f32 %v5153, %v5228
        %v5232 = vxor.u32 %v5231, 2147483648
        %v5233 = vmul.f32 %v5232, 1.442695
        %v5234 = vpow.pop %v5233
        %v5235 = vadd.f32 %v5234, 1.0
        %v5236 = vrcp.pop %v5235
        %v5237 = vmul.f32 1.0, %v5236
        %5239 = vrot.lane.b32.xlu0 %v5228, 64
        %v5240 = vpop.permute.xlu0 %5239
        %v5242 = vmul.f32 %v5237, %v5240
        %5244 = vrot.lane.b32.xlu0 %v5242, 64
        %v5245 = vpop.permute.xlu0 %5244
        %v5247 = vadd.f32 %v5153, %v5245
        %v5248 = vtanh.pop %v5247
        %v5249 = vsub.f32 1.0, %v5237
        %5251 = vrot.lane.b32.xlu0 %v5248, 96
        %v5252 = vpop.permute.xlu0 %5251
        %v5254 = vmul.f32 %v5249, %v5252
        %v5255 = vmul.f32 %v5237, %v4758
        %v5256 = vadd.f32 %v5254, %v5255
        %5257 = vmatprep.subr.mxu0 0.0
        %5258 = vmatpush1.msra.mxu0 0.0
        %5259 = vmatprep.subr.mxu0 0.0
        %5260 = vmatpush1.msra.mxu0 0.0
        %5261 = vmatprep.subr.mxu0 0.0
        %5262 = vmatpush1.msra.mxu0 0.0
        %5263 = vmatprep.subr.mxu0 0.0
        %5264 = vmatpush1.msra.mxu0 0.0
        %5265 = vmatprep.subr.mxu0 0.0
        %5266 = vmatpush1.msra.mxu0 0.0
        %5267 = vmatprep.subr.mxu0 0.0
        %5268 = vmatpush1.msra.mxu0 0.0
        %5269 = vmatprep.subr.mxu0 0.0
        %5270 = vmatpush1.msra.mxu0 0.0
        %5271 = vmatprep.subr.mxu0 0.0
        %5272 = vmatpush1.msra.mxu0 0.0
        %5273 = vmatprep.subr.mxu0 0.0
        %5274 = vmatpush1.msra.mxu0 0.0
        %5275 = vmatprep.subr.mxu0 0.0
        %5276 = vmatpush1.msra.mxu0 0.0
        %5277 = vmatprep.subr.mxu0 0.0
        %5278 = vmatpush1.msra.mxu0 0.0
        %5279 = vmatprep.subr.mxu0 0.0
        %5280 = vmatpush1.msra.mxu0 0.0
        %5281 = vmatprep.subr.mxu0 0.0
        %5282 = vmatpush1.msra.mxu0 %v3244
        %5283 = vmatprep.subr.mxu0 0.0
        %5284 = vmatpush1.msra.mxu0 %v3243
        %5285 = vmatprep.subr.mxu0 0.0
        %5286 = vmatpush1.msra.mxu0 %v3242
        %5287 = vmatprep.subr.mxu0 0.0
        %5288 = vmatpush1.msra.mxu0 %v3241
        %5289 = vmatprep.subr.mxu0 0.0
        %5290 = vmatpush2.msra.mxu0 0.0
        %5291 = vmatprep.subr.mxu0 0.0
        %5292 = vmatpush2.msra.mxu0 0.0
        %5293 = vmatprep.subr.mxu0 0.0
        %5294 = vmatpush2.msra.mxu0 0.0
        %5295 = vmatprep.subr.mxu0 0.0
        %5296 = vmatpush2.msra.mxu0 0.0
        %5297 = vmatprep.subr.mxu0 0.0
        %5298 = vmatpush2.msra.mxu0 0.0
        %5299 = vmatprep.subr.mxu0 0.0
        %5300 = vmatpush2.msra.mxu0 0.0
        %5301 = vmatprep.subr.mxu0 0.0
        %5302 = vmatpush2.msra.mxu0 0.0
        %5303 = vmatprep.subr.mxu0 0.0
        %5304 = vmatpush2.msra.mxu0 0.0
        %5305 = vmatprep.subr.mxu0 0.0
        %5306 = vmatpush2.msra.mxu0 0.0
        %5307 = vmatprep.subr.mxu0 0.0
        %5308 = vmatpush2.msra.mxu0 0.0
        %5309 = vmatprep.subr.mxu0 0.0
        %5310 = vmatpush2.msra.mxu0 0.0
        %5311 = vmatprep.subr.mxu0 0.0
        %5312 = vmatpush2.msra.mxu0 0.0
        %5313 = vmatprep.subr.mxu0 0.0
        %5314 = vmatpush2.msra.mxu0 0.0
        %5315 = vmatprep.subr.mxu0 0.0
        %5316 = vmatpush2.msra.mxu0 0.0
        %5317 = vmatprep.subr.mxu0 0.0
        %5318 = vmatpush2.msra.mxu0 0.0
        %5319 = vmatprep.subr.mxu0 0.0
        %5320 = vmatpush2.msra.mxu0 0.0
        %5321 = vmatprep.mubr.f32.mxu0 0.0
        %5322 = vmatmul.mubr.f32.gmra.mxu0 %v5084
        %v5323 = vpop.f32.mrf.mxu0
        %v5324 = vadd.f32 %v3260, %v5323
        %v5325 = vpop.f32.mrf.mxu0
        %5326 = vdwg.mxu0
        %v5328 = vrot.slane %v5324, 4
        %v5329 = vrot.slane %v5324, 5
        %v5330 = vrot.slane %v5324, 6
        %v5331 = vrot.slane %v5324, 7
        %v5332 = vrot.slane %v5324, 1
        %v5333 = vrot.slane %v5324, 2
        %v5334 = vrot.slane %v5324, 3
        %v5343 = vadd.f32 %v3233, %v5328
        %v5344 = vadd.f32 %v3234, %v5329
        %v5345 = vadd.f32 %v3235, %v5330
        %v5346 = vadd.f32 %v3236, %v5331
        %v5347 = vadd.f32 %v3237, %v5324
        %v5348 = vadd.f32 %v3238, %v5332
        %v5349 = vadd.f32 %v3239, %v5333
        %v5350 = vadd.f32 %v3240, %v5334
        %v5351 = vxor.u32 %v5343, 2147483648
        %v5352 = vxor.u32 %v5344, 2147483648
        %v5353 = vxor.u32 %v5345, 2147483648
        %v5354 = vxor.u32 %v5346, 2147483648
        %v5355 = vxor.u32 %v5347, 2147483648
        %v5356 = vxor.u32 %v5348, 2147483648
        %v5357 = vxor.u32 %v5349, 2147483648
        %v5358 = vxor.u32 %v5350, 2147483648
        %v5359 = vmul.f32 %v5351, 1.442695
        %v5360 = vpow.pop %v5359
        %v5361 = vmul.f32 %v5352, 1.442695
        %v5362 = vpow.pop %v5361
        %v5363 = vmul.f32 %v5353, 1.442695
        %v5364 = vpow.pop %v5363
        %v5365 = vmul.f32 %v5354, 1.442695
        %v5366 = vpow.pop %v5365
        %v5367 = vmul.f32 %v5355, 1.442695
        %v5368 = vpow.pop %v5367
        %v5369 = vmul.f32 %v5356, 1.442695
        %v5370 = vpow.pop %v5369
        %v5371 = vmul.f32 %v5357, 1.442695
        %v5372 = vpow.pop %v5371
        %v5373 = vmul.f32 %v5358, 1.442695
        %v5374 = vpow.pop %v5373
        %v5375 = vadd.f32 %v5360, 1.0
        %v5376 = vadd.f32 %v5362, 1.0
        %v5377 = vadd.f32 %v5364, 1.0
        %v5378 = vadd.f32 %v5366, 1.0
        %v5379 = vadd.f32 %v5368, 1.0
        %v5380 = vadd.f32 %v5370, 1.0
        %v5381 = vadd.f32 %v5372, 1.0
        %v5382 = vadd.f32 %v5374, 1.0
        %v5383 = vrcp.pop %v5375
        %v5384 = vmul.f32 1.0, %v5383
        %v5385 = vrcp.pop %v5376
        %v5386 = vmul.f32 1.0, %v5385
        %v5387 = vrcp.pop %v5377
        %v5388 = vmul.f32 1.0, %v5387
        %v5389 = vrcp.pop %v5378
        %v5390 = vmul.f32 1.0, %v5389
        %v5391 = vrcp.pop %v5379
        %v5392 = vmul.f32 1.0, %v5391
        %v5393 = vrcp.pop %v5380
        %v5394 = vmul.f32 1.0, %v5393
        %v5395 = vrcp.pop %v5381
        %v5396 = vmul.f32 1.0, %v5395
        %v5397 = vrcp.pop %v5382
        %v5398 = vmul.f32 1.0, %v5397
        %5399 = vrot.lane.b32.xlu0 %v5328, 64
        %v5400 = vpop.permute.xlu0 %5399
        %5401 = vrot.lane.b32.xlu0 %v5329, 64
        %v5402 = vpop.permute.xlu0 %5401
        %5403 = vrot.lane.b32.xlu0 %v5330, 64
        %v5404 = vpop.permute.xlu0 %5403
        %5405 = vrot.lane.b32.xlu0 %v5331, 64
        %v5406 = vpop.permute.xlu0 %5405
        %5407 = vrot.lane.b32.xlu0 %v5324, 64
        %v5408 = vpop.permute.xlu0 %5407
        %5409 = vrot.lane.b32.xlu0 %v5332, 64
        %v5410 = vpop.permute.xlu0 %5409
        %5411 = vrot.lane.b32.xlu0 %v5333, 64
        %v5412 = vpop.permute.xlu0 %5411
        %5413 = vrot.lane.b32.xlu0 %v5334, 64
        %v5414 = vpop.permute.xlu0 %5413
        %v5423 = vmul.f32 %v5384, %v5400
        %v5424 = vmul.f32 %v5386, %v5402
        %v5425 = vmul.f32 %v5388, %v5404
        %v5426 = vmul.f32 %v5390, %v5406
        %v5427 = vmul.f32 %v5392, %v5408
        %v5428 = vmul.f32 %v5394, %v5410
        %v5429 = vmul.f32 %v5396, %v5412
        %v5430 = vmul.f32 %v5398, %v5414
        %5439 = vrot.lane.b32.xlu0 %v5423, 64
        %v5440 = vpop.permute.xlu0 %5439
        %5441 = vrot.lane.b32.xlu0 %v5424, 64
        %v5442 = vpop.permute.xlu0 %5441
        %5443 = vrot.lane.b32.xlu0 %v5425, 64
        %v5444 = vpop.permute.xlu0 %5443
        %5445 = vrot.lane.b32.xlu0 %v5426, 64
        %v5446 = vpop.permute.xlu0 %5445
        %5447 = vrot.lane.b32.xlu0 %v5427, 64
        %v5448 = vpop.permute.xlu0 %5447
        %5449 = vrot.lane.b32.xlu0 %v5428, 64
        %v5450 = vpop.permute.xlu0 %5449
        %5451 = vrot.lane.b32.xlu0 %v5429, 64
        %v5452 = vpop.permute.xlu0 %5451
        %5453 = vrot.lane.b32.xlu0 %v5430, 64
        %v5454 = vpop.permute.xlu0 %5453
        %v5463 = vadd.f32 %v3233, %v5440
        %v5464 = vadd.f32 %v3234, %v5442
        %v5465 = vadd.f32 %v3235, %v5444
        %v5466 = vadd.f32 %v3236, %v5446
        %v5467 = vadd.f32 %v3237, %v5448
        %v5468 = vadd.f32 %v3238, %v5450
        %v5469 = vadd.f32 %v3239, %v5452
        %v5470 = vadd.f32 %v3240, %v5454
        %v5471 = vtanh.pop %v5463
        %v5472 = vtanh.pop %v5464
        %v5473 = vtanh.pop %v5465
        %v5474 = vtanh.pop %v5466
        %v5475 = vtanh.pop %v5467
        %v5476 = vtanh.pop %v5468
        %v5477 = vtanh.pop %v5469
        %v5478 = vtanh.pop %v5470
        %v5479 = vsub.f32 1.0, %v5384
        %v5480 = vsub.f32 1.0, %v5386
        %v5481 = vsub.f32 1.0, %v5388
        %v5482 = vsub.f32 1.0, %v5390
        %v5483 = vsub.f32 1.0, %v5392
        %v5484 = vsub.f32 1.0, %v5394
        %v5485 = vsub.f32 1.0, %v5396
        %v5486 = vsub.f32 1.0, %v5398
        %5495 = vrot.lane.b32.xlu0 %v5471, 96
        %v5496 = vpop.permute.xlu0 %5495
        %5497 = vrot.lane.b32.xlu0 %v5472, 96
        %v5498 = vpop.permute.xlu0 %5497
        %5499 = vrot.lane.b32.xlu0 %v5473, 96
        %v5500 = vpop.permute.xlu0 %5499
        %5501 = vrot.lane.b32.xlu0 %v5474, 96
        %v5502 = vpop.permute.xlu0 %5501
        %5503 = vrot.lane.b32.xlu0 %v5475, 96
        %v5504 = vpop.permute.xlu0 %5503
        %5505 = vrot.lane.b32.xlu0 %v5476, 96
        %v5506 = vpop.permute.xlu0 %5505
        %5507 = vrot.lane.b32.xlu0 %v5477, 96
        %v5508 = vpop.permute.xlu0 %5507
        %5509 = vrot.lane.b32.xlu0 %v5478, 96
        %v5510 = vpop.permute.xlu0 %5509
        %v5519 = vmul.f32 %v5479, %v5496
        %v5520 = vmul.f32 %v5480, %v5498
        %v5521 = vmul.f32 %v5481, %v5500
        %v5522 = vmul.f32 %v5482, %v5502
        %v5523 = vmul.f32 %v5483, %v5504
        %v5524 = vmul.f32 %v5484, %v5506
        %v5525 = vmul.f32 %v5485, %v5508
        %v5526 = vmul.f32 %v5486, %v5510
        %v5527 = vrot.slane %v5052, 7
        %v5528 = vrot.slane %v5053, 7
        %v5529 = vrot.slane %v5054, 7
        %v5530 = vrot.slane %v5055, 7
        %v5531 = vrot.slane %v5057, 7
        %v5532 = vrot.slane %v5058, 7
        %v5533 = vrot.slane %v5059, 7
        %v5542 = vmul.f32 %v5384, %v5527
        %v5543 = vmul.f32 %v5386, %v5528
        %v5544 = vmul.f32 %v5388, %v5529
        %v5545 = vmul.f32 %v5390, %v5530
        %v5546 = vmul.f32 %v5392, %v5074
        %v5547 = vmul.f32 %v5394, %v5531
        %v5548 = vmul.f32 %v5396, %v5532
        %v5549 = vmul.f32 %v5398, %v5533
        %v5550 = vadd.f32 %v5519, %v5542
        %v5551 = vadd.f32 %v5520, %v5543
        %v5552 = vadd.f32 %v5521, %v5544
        %v5553 = vadd.f32 %v5522, %v5545
        %v5554 = vadd.f32 %v5523, %v5546
        %v5555 = vadd.f32 %v5524, %v5547
        %v5556 = vadd.f32 %v5525, %v5548
        %v5557 = vadd.f32 %v5526, %v5549
        %v5566 = vrot.slane %v5550, 4
        %v5567 = vrot.slane %v5551, 3
        %v5568 = vsel %vm3567, %v5567, %v5566
        %v5569 = vrot.slane %v5552, 2
        %v5570 = vsel %vm3570, %v5569, %v5568
        %v5571 = vrot.slane %v5553, 1
        %v5572 = vsel %vm3573, %v5571, %v5570
        %v5573 = vsel %vm3576, %v5554, %v5572
        %v5574 = vrot.slane %v5555, 7
        %v5575 = vsel %vm3579, %v5574, %v5573
        %v5576 = vrot.slane %v5556, 6
        %v5577 = vsel %vm3582, %v5576, %v5575
        %v5578 = vrot.slane %v5557, 5
        %v5579 = vsel %vm3585, %v5578, %v5577
        %5580 = vrot.lane.b32.xlu0 %v5579, 96
        %v5581 = vpop.permute.xlu0 %5580
        %v5582 = vsel %vm3262, %v5581, 0
        %5584 = vmatprep.subr.mxu0 0.0
        %5585 = vmatpush1.msra.mxu0 0.0
        %5586 = vmatprep.subr.mxu0 0.0
        %5587 = vmatpush1.msra.mxu0 0.0
        %5588 = vmatprep.subr.mxu0 0.0
        %5589 = vmatpush1.msra.mxu0 0.0
        %5590 = vmatprep.subr.mxu0 0.0
        %5591 = vmatpush1.msra.mxu0 0.0
        %5592 = vmatprep.subr.mxu0 0.0
        %5593 = vmatpush1.msra.mxu0 0.0
        %5594 = vmatprep.subr.mxu0 0.0
        %5595 = vmatpush1.msra.mxu0 0.0
        %5596 = vmatprep.subr.mxu0 0.0
        %5597 = vmatpush1.msra.mxu0 0.0
        %5598 = vmatprep.subr.mxu0 0.0
        %5599 = vmatpush1.msra.mxu0 0.0
        %5600 = vmatprep.subr.mxu0 0.0
        %5601 = vmatpush1.msra.mxu0 0.0
        %5602 = vmatprep.subr.mxu0 0.0
        %5603 = vmatpush1.msra.mxu0 0.0
        %5604 = vmatprep.subr.mxu0 0.0
        %5605 = vmatpush1.msra.mxu0 0.0
        %5606 = vmatprep.subr.mxu0 0.0
        %5607 = vmatpush1.msra.mxu0 0.0
        %5608 = vmatprep.subr.mxu0 0.0
        %5609 = vmatpush1.msra.mxu0 %v3249
        %5610 = vmatprep.subr.mxu0 0.0
        %5611 = vmatpush1.msra.mxu0 %v3248
        %5612 = vmatprep.subr.mxu0 0.0
        %5613 = vmatpush1.msra.mxu0 %v3247
        %5614 = vmatprep.subr.mxu0 0.0
        %5615 = vmatpush1.msra.mxu0 %v3246
        %5616 = vmatprep.subr.mxu0 0.0
        %5617 = vmatpush2.msra.mxu0 0.0
        %5618 = vmatprep.subr.mxu0 0.0
        %5619 = vmatpush2.msra.mxu0 0.0
        %5620 = vmatprep.subr.mxu0 0.0
        %5621 = vmatpush2.msra.mxu0 0.0
        %5622 = vmatprep.subr.mxu0 0.0
        %5623 = vmatpush2.msra.mxu0 0.0
        %5624 = vmatprep.subr.mxu0 0.0
        %5625 = vmatpush2.msra.mxu0 0.0
        %5626 = vmatprep.subr.mxu0 0.0
        %5627 = vmatpush2.msra.mxu0 0.0
        %5628 = vmatprep.subr.mxu0 0.0
        %5629 = vmatpush2.msra.mxu0 0.0
        %5630 = vmatprep.subr.mxu0 0.0
        %5631 = vmatpush2.msra.mxu0 0.0
        %5632 = vmatprep.subr.mxu0 0.0
        %5633 = vmatpush2.msra.mxu0 0.0
        %5634 = vmatprep.subr.mxu0 0.0
        %5635 = vmatpush2.msra.mxu0 0.0
        %5636 = vmatprep.subr.mxu0 0.0
        %5637 = vmatpush2.msra.mxu0 0.0
        %5638 = vmatprep.subr.mxu0 0.0
        %5639 = vmatpush2.msra.mxu0 0.0
        %5640 = vmatprep.subr.mxu0 0.0
        %5641 = vmatpush2.msra.mxu0 0.0
        %5642 = vmatprep.subr.mxu0 0.0
        %5643 = vmatpush2.msra.mxu0 0.0
        %5644 = vmatprep.subr.mxu0 0.0
        %5645 = vmatpush2.msra.mxu0 0.0
        %5646 = vmatprep.subr.mxu0 0.0
        %5647 = vmatpush2.msra.mxu0 0.0
        %5648 = vmatprep.mubr.f32.mxu0 0.0
        %5649 = vmatmul.mubr.f32.gmra.mxu0 %v5582
        %v5650 = vpop.f32.mrf.mxu0
        %v5651 = vadd.f32 %v3556, %v5650
        %v5652 = vpop.f32.mrf.mxu0
        %5653 = vdwg.mxu0
        %5655 = vrot.lane.b32.xlu0 %v5256, 96
        %v5656 = vpop.permute.xlu0 %5655
        %v5657 = vsel %vm3262, %v5656, 0
        %5659 = vmatprep.subr.mxu0 0.0
        %5660 = vmatpush1.msra.mxu0 0.0
        %5661 = vmatprep.subr.mxu0 0.0
        %5662 = vmatpush1.msra.mxu0 0.0
        %5663 = vmatprep.subr.mxu0 0.0
        %5664 = vmatpush1.msra.mxu0 0.0
        %5665 = vmatprep.subr.mxu0 0.0
        %5666 = vmatpush1.msra.mxu0 0.0
        %5667 = vmatprep.subr.mxu0 0.0
        %5668 = vmatpush1.msra.mxu0 0.0
        %5669 = vmatprep.subr.mxu0 0.0
        %5670 = vmatpush1.msra.mxu0 0.0
        %5671 = vmatprep.subr.mxu0 0.0
        %5672 = vmatpush1.msra.mxu0 0.0
        %5673 = vmatprep.subr.mxu0 0.0
        %5674 = vmatpush1.msra.mxu0 0.0
        %5675 = vmatprep.subr.mxu0 0.0
        %5676 = vmatpush1.msra.mxu0 0.0
        %5677 = vmatprep.subr.mxu0 0.0
        %5678 = vmatpush1.msra.mxu0 0.0
        %5679 = vmatprep.subr.mxu0 0.0
        %5680 = vmatpush1.msra.mxu0 0.0
        %5681 = vmatprep.subr.mxu0 0.0
        %5682 = vmatpush1.msra.mxu0 0.0
        %5683 = vmatprep.subr.mxu0 0.0
        %5684 = vmatpush1.msra.mxu0 %v3254
        %5685 = vmatprep.subr.mxu0 0.0
        %5686 = vmatpush1.msra.mxu0 %v3253
        %5687 = vmatprep.subr.mxu0 0.0
        %5688 = vmatpush1.msra.mxu0 %v3252
        %5689 = vmatprep.subr.mxu0 0.0
        %5690 = vmatpush1.msra.mxu0 %v3251
        %5691 = vmatprep.subr.mxu0 0.0
        %5692 = vmatpush2.msra.mxu0 0.0
        %5693 = vmatprep.subr.mxu0 0.0
        %5694 = vmatpush2.msra.mxu0 0.0
        %5695 = vmatprep.subr.mxu0 0.0
        %5696 = vmatpush2.msra.mxu0 0.0
        %5697 = vmatprep.subr.mxu0 0.0
        %5698 = vmatpush2.msra.mxu0 0.0
        %5699 = vmatprep.subr.mxu0 0.0
        %5700 = vmatpush2.msra.mxu0 0.0
        %5701 = vmatprep.subr.mxu0 0.0
        %5702 = vmatpush2.msra.mxu0 0.0
        %5703 = vmatprep.subr.mxu0 0.0
        %5704 = vmatpush2.msra.mxu0 0.0
        %5705 = vmatprep.subr.mxu0 0.0
        %5706 = vmatpush2.msra.mxu0 0.0
        %5707 = vmatprep.subr.mxu0 0.0
        %5708 = vmatpush2.msra.mxu0 0.0
        %5709 = vmatprep.subr.mxu0 0.0
        %5710 = vmatpush2.msra.mxu0 0.0
        %5711 = vmatprep.subr.mxu0 0.0
        %5712 = vmatpush2.msra.mxu0 0.0
        %5713 = vmatprep.subr.mxu0 0.0
        %5714 = vmatpush2.msra.mxu0 0.0
        %5715 = vmatprep.subr.mxu0 0.0
        %5716 = vmatpush2.msra.mxu0 0.0
        %5717 = vmatprep.subr.mxu0 0.0
        %5718 = vmatpush2.msra.mxu0 0.0
        %5719 = vmatprep.subr.mxu0 0.0
        %5720 = vmatpush2.msra.mxu0 0.0
        %5721 = vmatprep.subr.mxu0 0.0
        %5722 = vmatpush2.msra.mxu0 0.0
        %5723 = vmatprep.mubr.f32.mxu0 0.0
        %5724 = vmatmul.mubr.f32.gmra.mxu0 %v5657
        %v5725 = vpop.f32.mrf.mxu0
        %v5726 = vadd.f32 %v3665, %v5725
        %v5727 = vpop.f32.mrf.mxu0
        %5728 = vdwg.mxu0
        %v5729 = vadd.f32 %v5651, %v5726
        %v5730 = vxor.u32 %v5729, 2147483648
        %v5731 = vmul.f32 %v5730, 1.442695
        %v5732 = vpow.pop %v5731
        %v5733 = vadd.f32 %v5732, 1.0
        %v5734 = vrcp.pop %v5733
        %v5735 = vmul.f32 1.0, %v5734
        %5737 = vrot.lane.b32.xlu0 %v5726, 64
        %v5738 = vpop.permute.xlu0 %5737
        %v5740 = vmul.f32 %v5735, %v5738
        %5742 = vrot.lane.b32.xlu0 %v5740, 64
        %v5743 = vpop.permute.xlu0 %5742
        %v5745 = vadd.f32 %v5651, %v5743
        %v5746 = vtanh.pop %v5745
        %v5747 = vsub.f32 1.0, %v5735
        %5749 = vrot.lane.b32.xlu0 %v5746, 96
        %v5750 = vpop.permute.xlu0 %5749
        %v5752 = vmul.f32 %v5747, %v5750
        %v5753 = vmul.f32 %v5735, %v5256
        %v5754 = vadd.f32 %v5752, %v5753
        %5755 = vmatprep.subr.mxu0 0.0
        %5756 = vmatpush1.msra.mxu0 0.0
        %5757 = vmatprep.subr.mxu0 0.0
        %5758 = vmatpush1.msra.mxu0 0.0
        %5759 = vmatprep.subr.mxu0 0.0
        %5760 = vmatpush1.msra.mxu0 0.0
        %5761 = vmatprep.subr.mxu0 0.0
        %5762 = vmatpush1.msra.mxu0 0.0
        %5763 = vmatprep.subr.mxu0 0.0
        %5764 = vmatpush1.msra.mxu0 0.0
        %5765 = vmatprep.subr.mxu0 0.0
        %5766 = vmatpush1.msra.mxu0 0.0
        %5767 = vmatprep.subr.mxu0 0.0
        %5768 = vmatpush1.msra.mxu0 0.0
        %5769 = vmatprep.subr.mxu0 0.0
        %5770 = vmatpush1.msra.mxu0 0.0
        %5771 = vmatprep.subr.mxu0 0.0
        %5772 = vmatpush1.msra.mxu0 0.0
        %5773 = vmatprep.subr.mxu0 0.0
        %5774 = vmatpush1.msra.mxu0 0.0
        %5775 = vmatprep.subr.mxu0 0.0
        %5776 = vmatpush1.msra.mxu0 0.0
        %5777 = vmatprep.subr.mxu0 0.0
        %5778 = vmatpush1.msra.mxu0 0.0
        %5779 = vmatprep.subr.mxu0 0.0
        %5780 = vmatpush1.msra.mxu0 %v3244
        %5781 = vmatprep.subr.mxu0 0.0
        %5782 = vmatpush1.msra.mxu0 %v3243
        %5783 = vmatprep.subr.mxu0 0.0
        %5784 = vmatpush1.msra.mxu0 %v3242
        %5785 = vmatprep.subr.mxu0 0.0
        %5786 = vmatpush1.msra.mxu0 %v3241
        %5787 = vmatprep.subr.mxu0 0.0
        %5788 = vmatpush2.msra.mxu0 0.0
        %5789 = vmatprep.subr.mxu0 0.0
        %5790 = vmatpush2.msra.mxu0 0.0
        %5791 = vmatprep.subr.mxu0 0.0
        %5792 = vmatpush2.msra.mxu0 0.0
        %5793 = vmatprep.subr.mxu0 0.0
        %5794 = vmatpush2.msra.mxu0 0.0
        %5795 = vmatprep.subr.mxu0 0.0
        %5796 = vmatpush2.msra.mxu0 0.0
        %5797 = vmatprep.subr.mxu0 0.0
        %5798 = vmatpush2.msra.mxu0 0.0
        %5799 = vmatprep.subr.mxu0 0.0
        %5800 = vmatpush2.msra.mxu0 0.0
        %5801 = vmatprep.subr.mxu0 0.0
        %5802 = vmatpush2.msra.mxu0 0.0
        %5803 = vmatprep.subr.mxu0 0.0
        %5804 = vmatpush2.msra.mxu0 0.0
        %5805 = vmatprep.subr.mxu0 0.0
        %5806 = vmatpush2.msra.mxu0 0.0
        %5807 = vmatprep.subr.mxu0 0.0
        %5808 = vmatpush2.msra.mxu0 0.0
        %5809 = vmatprep.subr.mxu0 0.0
        %5810 = vmatpush2.msra.mxu0 0.0
        %5811 = vmatprep.subr.mxu0 0.0
        %5812 = vmatpush2.msra.mxu0 0.0
        %5813 = vmatprep.subr.mxu0 0.0
        %5814 = vmatpush2.msra.mxu0 0.0
        %5815 = vmatprep.subr.mxu0 0.0
        %5816 = vmatpush2.msra.mxu0 0.0
        %5817 = vmatprep.subr.mxu0 0.0
        %5818 = vmatpush2.msra.mxu0 0.0
        %5819 = vmatprep.mubr.f32.mxu0 0.0
        %5820 = vmatmul.mubr.f32.gmra.mxu0 %v5582
        %v5821 = vpop.f32.mrf.mxu0
        %v5822 = vadd.f32 %v3260, %v5821
        %v5823 = vpop.f32.mrf.mxu0
        %5824 = vdwg.mxu0
        %v5826 = vrot.slane %v5822, 3
        %v5827 = vrot.slane %v5822, 4
        %v5828 = vrot.slane %v5822, 5
        %v5829 = vrot.slane %v5822, 6
        %v5830 = vrot.slane %v5822, 7
        %v5831 = vrot.slane %v5822, 1
        %v5832 = vrot.slane %v5822, 2
        %v5841 = vadd.f32 %v3233, %v5826
        %v5842 = vadd.f32 %v3234, %v5827
        %v5843 = vadd.f32 %v3235, %v5828
        %v5844 = vadd.f32 %v3236, %v5829
        %v5845 = vadd.f32 %v3237, %v5830
        %v5846 = vadd.f32 %v3238, %v5822
        %v5847 = vadd.f32 %v3239, %v5831
        %v5848 = vadd.f32 %v3240, %v5832
        %v5849 = vxor.u32 %v5841, 2147483648
        %v5850 = vxor.u32 %v5842, 2147483648
        %v5851 = vxor.u32 %v5843, 2147483648
        %v5852 = vxor.u32 %v5844, 2147483648
        %v5853 = vxor.u32 %v5845, 2147483648
        %v5854 = vxor.u32 %v5846, 2147483648
        %v5855 = vxor.u32 %v5847, 2147483648
        %v5856 = vxor.u32 %v5848, 2147483648
        %v5857 = vmul.f32 %v5849, 1.442695
        %v5858 = vpow.pop %v5857
        %v5859 = vmul.f32 %v5850, 1.442695
        %v5860 = vpow.pop %v5859
        %v5861 = vmul.f32 %v5851, 1.442695
        %v5862 = vpow.pop %v5861
        %v5863 = vmul.f32 %v5852, 1.442695
        %v5864 = vpow.pop %v5863
        %v5865 = vmul.f32 %v5853, 1.442695
        %v5866 = vpow.pop %v5865
        %v5867 = vmul.f32 %v5854, 1.442695
        %v5868 = vpow.pop %v5867
        %v5869 = vmul.f32 %v5855, 1.442695
        %v5870 = vpow.pop %v5869
        %v5871 = vmul.f32 %v5856, 1.442695
        %v5872 = vpow.pop %v5871
        %v5873 = vadd.f32 %v5858, 1.0
        %v5874 = vadd.f32 %v5860, 1.0
        %v5875 = vadd.f32 %v5862, 1.0
        %v5876 = vadd.f32 %v5864, 1.0
        %v5877 = vadd.f32 %v5866, 1.0
        %v5878 = vadd.f32 %v5868, 1.0
        %v5879 = vadd.f32 %v5870, 1.0
        %v5880 = vadd.f32 %v5872, 1.0
        %v5881 = vrcp.pop %v5873
        %v5882 = vmul.f32 1.0, %v5881
        %v5883 = vrcp.pop %v5874
        %v5884 = vmul.f32 1.0, %v5883
        %v5885 = vrcp.pop %v5875
        %v5886 = vmul.f32 1.0, %v5885
        %v5887 = vrcp.pop %v5876
        %v5888 = vmul.f32 1.0, %v5887
        %v5889 = vrcp.pop %v5877
        %v5890 = vmul.f32 1.0, %v5889
        %v5891 = vrcp.pop %v5878
        %v5892 = vmul.f32 1.0, %v5891
        %v5893 = vrcp.pop %v5879
        %v5894 = vmul.f32 1.0, %v5893
        %v5895 = vrcp.pop %v5880
        %v5896 = vmul.f32 1.0, %v5895
        %5897 = vrot.lane.b32.xlu0 %v5826, 64
        %v5898 = vpop.permute.xlu0 %5897
        %5899 = vrot.lane.b32.xlu0 %v5827, 64
        %v5900 = vpop.permute.xlu0 %5899
        %5901 = vrot.lane.b32.xlu0 %v5828, 64
        %v5902 = vpop.permute.xlu0 %5901
        %5903 = vrot.lane.b32.xlu0 %v5829, 64
        %v5904 = vpop.permute.xlu0 %5903
        %5905 = vrot.lane.b32.xlu0 %v5830, 64
        %v5906 = vpop.permute.xlu0 %5905
        %5907 = vrot.lane.b32.xlu0 %v5822, 64
        %v5908 = vpop.permute.xlu0 %5907
        %5909 = vrot.lane.b32.xlu0 %v5831, 64
        %v5910 = vpop.permute.xlu0 %5909
        %5911 = vrot.lane.b32.xlu0 %v5832, 64
        %v5912 = vpop.permute.xlu0 %5911
        %v5921 = vmul.f32 %v5882, %v5898
        %v5922 = vmul.f32 %v5884, %v5900
        %v5923 = vmul.f32 %v5886, %v5902
        %v5924 = vmul.f32 %v5888, %v5904
        %v5925 = vmul.f32 %v5890, %v5906
        %v5926 = vmul.f32 %v5892, %v5908
        %v5927 = vmul.f32 %v5894, %v5910
        %v5928 = vmul.f32 %v5896, %v5912
        %5937 = vrot.lane.b32.xlu0 %v5921, 64
        %v5938 = vpop.permute.xlu0 %5937
        %5939 = vrot.lane.b32.xlu0 %v5922, 64
        %v5940 = vpop.permute.xlu0 %5939
        %5941 = vrot.lane.b32.xlu0 %v5923, 64
        %v5942 = vpop.permute.xlu0 %5941
        %5943 = vrot.lane.b32.xlu0 %v5924, 64
        %v5944 = vpop.permute.xlu0 %5943
        %5945 = vrot.lane.b32.xlu0 %v5925, 64
        %v5946 = vpop.permute.xlu0 %5945
        %5947 = vrot.lane.b32.xlu0 %v5926, 64
        %v5948 = vpop.permute.xlu0 %5947
        %5949 = vrot.lane.b32.xlu0 %v5927, 64
        %v5950 = vpop.permute.xlu0 %5949
        %5951 = vrot.lane.b32.xlu0 %v5928, 64
        %v5952 = vpop.permute.xlu0 %5951
        %v5961 = vadd.f32 %v3233, %v5938
        %v5962 = vadd.f32 %v3234, %v5940
        %v5963 = vadd.f32 %v3235, %v5942
        %v5964 = vadd.f32 %v3236, %v5944
        %v5965 = vadd.f32 %v3237, %v5946
        %v5966 = vadd.f32 %v3238, %v5948
        %v5967 = vadd.f32 %v3239, %v5950
        %v5968 = vadd.f32 %v3240, %v5952
        %v5969 = vtanh.pop %v5961
        %v5970 = vtanh.pop %v5962
        %v5971 = vtanh.pop %v5963
        %v5972 = vtanh.pop %v5964
        %v5973 = vtanh.pop %v5965
        %v5974 = vtanh.pop %v5966
        %v5975 = vtanh.pop %v5967
        %v5976 = vtanh.pop %v5968
        %v5977 = vsub.f32 1.0, %v5882
        %v5978 = vsub.f32 1.0, %v5884
        %v5979 = vsub.f32 1.0, %v5886
        %v5980 = vsub.f32 1.0, %v5888
        %v5981 = vsub.f32 1.0, %v5890
        %v5982 = vsub.f32 1.0, %v5892
        %v5983 = vsub.f32 1.0, %v5894
        %v5984 = vsub.f32 1.0, %v5896
        %5993 = vrot.lane.b32.xlu0 %v5969, 96
        %v5994 = vpop.permute.xlu0 %5993
        %5995 = vrot.lane.b32.xlu0 %v5970, 96
        %v5996 = vpop.permute.xlu0 %5995
        %5997 = vrot.lane.b32.xlu0 %v5971, 96
        %v5998 = vpop.permute.xlu0 %5997
        %5999 = vrot.lane.b32.xlu0 %v5972, 96
        %v6000 = vpop.permute.xlu0 %5999
        %6001 = vrot.lane.b32.xlu0 %v5973, 96
        %v6002 = vpop.permute.xlu0 %6001
        %6003 = vrot.lane.b32.xlu0 %v5974, 96
        %v6004 = vpop.permute.xlu0 %6003
        %6005 = vrot.lane.b32.xlu0 %v5975, 96
        %v6006 = vpop.permute.xlu0 %6005
        %6007 = vrot.lane.b32.xlu0 %v5976, 96
        %v6008 = vpop.permute.xlu0 %6007
        %v6017 = vmul.f32 %v5977, %v5994
        %v6018 = vmul.f32 %v5978, %v5996
        %v6019 = vmul.f32 %v5979, %v5998
        %v6020 = vmul.f32 %v5980, %v6000
        %v6021 = vmul.f32 %v5981, %v6002
        %v6022 = vmul.f32 %v5982, %v6004
        %v6023 = vmul.f32 %v5983, %v6006
        %v6024 = vmul.f32 %v5984, %v6008
        %v6025 = vrot.slane %v5550, 7
        %v6026 = vrot.slane %v5551, 7
        %v6027 = vrot.slane %v5552, 7
        %v6028 = vrot.slane %v5553, 7
        %v6029 = vrot.slane %v5554, 7
        %v6030 = vrot.slane %v5556, 7
        %v6031 = vrot.slane %v5557, 7
        %v6040 = vmul.f32 %v5882, %v6025
        %v6041 = vmul.f32 %v5884, %v6026
        %v6042 = vmul.f32 %v5886, %v6027
        %v6043 = vmul.f32 %v5888, %v6028
        %v6044 = vmul.f32 %v5890, %v6029
        %v6045 = vmul.f32 %v5892, %v5574
        %v6046 = vmul.f32 %v5894, %v6030
        %v6047 = vmul.f32 %v5896, %v6031
        %v6048 = vadd.f32 %v6017, %v6040
        %v6049 = vadd.f32 %v6018, %v6041
        %v6050 = vadd.f32 %v6019, %v6042
        %v6051 = vadd.f32 %v6020, %v6043
        %v6052 = vadd.f32 %v6021, %v6044
        %v6053 = vadd.f32 %v6022, %v6045
        %v6054 = vadd.f32 %v6023, %v6046
        %v6055 = vadd.f32 %v6024, %v6047
        %v6064 = vrot.slane %v6048, 5
        %v6065 = vrot.slane %v6049, 4
        %v6066 = vsel %vm3567, %v6065, %v6064
        %v6067 = vrot.slane %v6050, 3
        %v6068 = vsel %vm3570, %v6067, %v6066
        %v6069 = vrot.slane %v6051, 2
        %v6070 = vsel %vm3573, %v6069, %v6068
        %v6071 = vrot.slane %v6052, 1
        %v6072 = vsel %vm3576, %v6071, %v6070
        %v6073 = vsel %vm3579, %v6053, %v6072
        %v6074 = vrot.slane %v6054, 7
        %v6075 = vsel %vm3582, %v6074, %v6073
        %v6076 = vrot.slane %v6055, 6
        %v6077 = vsel %vm3585, %v6076, %v6075
        %6078 = vrot.lane.b32.xlu0 %v6077, 96
        %v6079 = vpop.permute.xlu0 %6078
        %v6080 = vsel %vm3262, %v6079, 0
        %6082 = vmatprep.subr.mxu0 0.0
        %6083 = vmatpush1.msra.mxu0 0.0
        %6084 = vmatprep.subr.mxu0 0.0
        %6085 = vmatpush1.msra.mxu0 0.0
        %6086 = vmatprep.subr.mxu0 0.0
        %6087 = vmatpush1.msra.mxu0 0.0
        %6088 = vmatprep.subr.mxu0 0.0
        %6089 = vmatpush1.msra.mxu0 0.0
        %6090 = vmatprep.subr.mxu0 0.0
        %6091 = vmatpush1.msra.mxu0 0.0
        %6092 = vmatprep.subr.mxu0 0.0
        %6093 = vmatpush1.msra.mxu0 0.0
        %6094 = vmatprep.subr.mxu0 0.0
        %6095 = vmatpush1.msra.mxu0 0.0
        %6096 = vmatprep.subr.mxu0 0.0
        %6097 = vmatpush1.msra.mxu0 0.0
        %6098 = vmatprep.subr.mxu0 0.0
        %6099 = vmatpush1.msra.mxu0 0.0
        %6100 = vmatprep.subr.mxu0 0.0
        %6101 = vmatpush1.msra.mxu0 0.0
        %6102 = vmatprep.subr.mxu0 0.0
        %6103 = vmatpush1.msra.mxu0 0.0
        %6104 = vmatprep.subr.mxu0 0.0
        %6105 = vmatpush1.msra.mxu0 0.0
        %6106 = vmatprep.subr.mxu0 0.0
        %6107 = vmatpush1.msra.mxu0 %v3249
        %6108 = vmatprep.subr.mxu0 0.0
        %6109 = vmatpush1.msra.mxu0 %v3248
        %6110 = vmatprep.subr.mxu0 0.0
        %6111 = vmatpush1.msra.mxu0 %v3247
        %6112 = vmatprep.subr.mxu0 0.0
        %6113 = vmatpush1.msra.mxu0 %v3246
        %6114 = vmatprep.subr.mxu0 0.0
        %6115 = vmatpush2.msra.mxu0 0.0
        %6116 = vmatprep.subr.mxu0 0.0
        %6117 = vmatpush2.msra.mxu0 0.0
        %6118 = vmatprep.subr.mxu0 0.0
        %6119 = vmatpush2.msra.mxu0 0.0
        %6120 = vmatprep.subr.mxu0 0.0
        %6121 = vmatpush2.msra.mxu0 0.0
        %6122 = vmatprep.subr.mxu0 0.0
        %6123 = vmatpush2.msra.mxu0 0.0
        %6124 = vmatprep.subr.mxu0 0.0
        %6125 = vmatpush2.msra.mxu0 0.0
        %6126 = vmatprep.subr.mxu0 0.0
        %6127 = vmatpush2.msra.mxu0 0.0
        %6128 = vmatprep.subr.mxu0 0.0
        %6129 = vmatpush2.msra.mxu0 0.0
        %6130 = vmatprep.subr.mxu0 0.0
        %6131 = vmatpush2.msra.mxu0 0.0
        %6132 = vmatprep.subr.mxu0 0.0
        %6133 = vmatpush2.msra.mxu0 0.0
        %6134 = vmatprep.subr.mxu0 0.0
        %6135 = vmatpush2.msra.mxu0 0.0
        %6136 = vmatprep.subr.mxu0 0.0
        %6137 = vmatpush2.msra.mxu0 0.0
        %6138 = vmatprep.subr.mxu0 0.0
        %6139 = vmatpush2.msra.mxu0 0.0
        %6140 = vmatprep.subr.mxu0 0.0
        %6141 = vmatpush2.msra.mxu0 0.0
        %6142 = vmatprep.subr.mxu0 0.0
        %6143 = vmatpush2.msra.mxu0 0.0
        %6144 = vmatprep.subr.mxu0 0.0
        %6145 = vmatpush2.msra.mxu0 0.0
        %6146 = vmatprep.mubr.f32.mxu0 0.0
        %6147 = vmatmul.mubr.f32.gmra.mxu0 %v6080
        %v6148 = vpop.f32.mrf.mxu0
        %v6149 = vadd.f32 %v3556, %v6148
        %v6150 = vpop.f32.mrf.mxu0
        %6151 = vdwg.mxu0
        %6153 = vrot.lane.b32.xlu0 %v5754, 96
        %v6154 = vpop.permute.xlu0 %6153
        %v6155 = vsel %vm3262, %v6154, 0
        %6157 = vmatprep.subr.mxu0 0.0
        %6158 = vmatpush1.msra.mxu0 0.0
        %6159 = vmatprep.subr.mxu0 0.0
        %6160 = vmatpush1.msra.mxu0 0.0
        %6161 = vmatprep.subr.mxu0 0.0
        %6162 = vmatpush1.msra.mxu0 0.0
        %6163 = vmatprep.subr.mxu0 0.0
        %6164 = vmatpush1.msra.mxu0 0.0
        %6165 = vmatprep.subr.mxu0 0.0
        %6166 = vmatpush1.msra.mxu0 0.0
        %6167 = vmatprep.subr.mxu0 0.0
        %6168 = vmatpush1.msra.mxu0 0.0
        %6169 = vmatprep.subr.mxu0 0.0
        %6170 = vmatpush1.msra.mxu0 0.0
        %6171 = vmatprep.subr.mxu0 0.0
        %6172 = vmatpush1.msra.mxu0 0.0
        %6173 = vmatprep.subr.mxu0 0.0
        %6174 = vmatpush1.msra.mxu0 0.0
        %6175 = vmatprep.subr.mxu0 0.0
        %6176 = vmatpush1.msra.mxu0 0.0
        %6177 = vmatprep.subr.mxu0 0.0
        %6178 = vmatpush1.msra.mxu0 0.0
        %6179 = vmatprep.subr.mxu0 0.0
        %6180 = vmatpush1.msra.mxu0 0.0
        %6181 = vmatprep.subr.mxu0 0.0
        %6182 = vmatpush1.msra.mxu0 %v3254
        %6183 = vmatprep.subr.mxu0 0.0
        %6184 = vmatpush1.msra.mxu0 %v3253
        %6185 = vmatprep.subr.mxu0 0.0
        %6186 = vmatpush1.msra.mxu0 %v3252
        %6187 = vmatprep.subr.mxu0 0.0
        %6188 = vmatpush1.msra.mxu0 %v3251
        %6189 = vmatprep.subr.mxu0 0.0
        %6190 = vmatpush2.msra.mxu0 0.0
        %6191 = vmatprep.subr.mxu0 0.0
        %6192 = vmatpush2.msra.mxu0 0.0
        %6193 = vmatprep.subr.mxu0 0.0
        %6194 = vmatpush2.msra.mxu0 0.0
        %6195 = vmatprep.subr.mxu0 0.0
        %6196 = vmatpush2.msra.mxu0 0.0
        %6197 = vmatprep.subr.mxu0 0.0
        %6198 = vmatpush2.msra.mxu0 0.0
        %6199 = vmatprep.subr.mxu0 0.0
        %6200 = vmatpush2.msra.mxu0 0.0
        %6201 = vmatprep.subr.mxu0 0.0
        %6202 = vmatpush2.msra.mxu0 0.0
        %6203 = vmatprep.subr.mxu0 0.0
        %6204 = vmatpush2.msra.mxu0 0.0
        %6205 = vmatprep.subr.mxu0 0.0
        %6206 = vmatpush2.msra.mxu0 0.0
        %6207 = vmatprep.subr.mxu0 0.0
        %6208 = vmatpush2.msra.mxu0 0.0
        %6209 = vmatprep.subr.mxu0 0.0
        %6210 = vmatpush2.msra.mxu0 0.0
        %6211 = vmatprep.subr.mxu0 0.0
        %6212 = vmatpush2.msra.mxu0 0.0
        %6213 = vmatprep.subr.mxu0 0.0
        %6214 = vmatpush2.msra.mxu0 0.0
        %6215 = vmatprep.subr.mxu0 0.0
        %6216 = vmatpush2.msra.mxu0 0.0
        %6217 = vmatprep.subr.mxu0 0.0
        %6218 = vmatpush2.msra.mxu0 0.0
        %6219 = vmatprep.subr.mxu0 0.0
        %6220 = vmatpush2.msra.mxu0 0.0
        %6221 = vmatprep.mubr.f32.mxu0 0.0
        %6222 = vmatmul.mubr.f32.gmra.mxu0 %v6155
        %v6223 = vpop.f32.mrf.mxu0
        %v6224 = vadd.f32 %v3665, %v6223
        %v6225 = vpop.f32.mrf.mxu0
        %6226 = vdwg.mxu0
        %v6227 = vadd.f32 %v6149, %v6224
        %v6228 = vxor.u32 %v6227, 2147483648
        %v6229 = vmul.f32 %v6228, 1.442695
        %v6230 = vpow.pop %v6229
        %v6231 = vadd.f32 %v6230, 1.0
        %v6232 = vrcp.pop %v6231
        %v6233 = vmul.f32 1.0, %v6232
        %6235 = vrot.lane.b32.xlu0 %v6224, 64
        %v6236 = vpop.permute.xlu0 %6235
        %v6238 = vmul.f32 %v6233, %v6236
        %6240 = vrot.lane.b32.xlu0 %v6238, 64
        %v6241 = vpop.permute.xlu0 %6240
        %v6243 = vadd.f32 %v6149, %v6241
        %v6244 = vtanh.pop %v6243
        %v6245 = vsub.f32 1.0, %v6233
        %6247 = vrot.lane.b32.xlu0 %v6244, 96
        %v6248 = vpop.permute.xlu0 %6247
        %v6250 = vmul.f32 %v6245, %v6248
        %v6251 = vmul.f32 %v6233, %v5754
        %v6252 = vadd.f32 %v6250, %v6251
        %6253 = vmatprep.subr.mxu0 0.0
        %6254 = vmatpush1.msra.mxu0 0.0
        %6255 = vmatprep.subr.mxu0 0.0
        %6256 = vmatpush1.msra.mxu0 0.0
        %6257 = vmatprep.subr.mxu0 0.0
        %6258 = vmatpush1.msra.mxu0 0.0
        %6259 = vmatprep.subr.mxu0 0.0
        %6260 = vmatpush1.msra.mxu0 0.0
        %6261 = vmatprep.subr.mxu0 0.0
        %6262 = vmatpush1.msra.mxu0 0.0
        %6263 = vmatprep.subr.mxu0 0.0
        %6264 = vmatpush1.msra.mxu0 0.0
        %6265 = vmatprep.subr.mxu0 0.0
        %6266 = vmatpush1.msra.mxu0 0.0
        %6267 = vmatprep.subr.mxu0 0.0
        %6268 = vmatpush1.msra.mxu0 0.0
        %6269 = vmatprep.subr.mxu0 0.0
        %6270 = vmatpush1.msra.mxu0 0.0
        %6271 = vmatprep.subr.mxu0 0.0
        %6272 = vmatpush1.msra.mxu0 0.0
        %6273 = vmatprep.subr.mxu0 0.0
        %6274 = vmatpush1.msra.mxu0 0.0
        %6275 = vmatprep.subr.mxu0 0.0
        %6276 = vmatpush1.msra.mxu0 0.0
        %6277 = vmatprep.subr.mxu0 0.0
        %6278 = vmatpush1.msra.mxu0 %v3244
        %6279 = vmatprep.subr.mxu0 0.0
        %6280 = vmatpush1.msra.mxu0 %v3243
        %6281 = vmatprep.subr.mxu0 0.0
        %6282 = vmatpush1.msra.mxu0 %v3242
        %6283 = vmatprep.subr.mxu0 0.0
        %6284 = vmatpush1.msra.mxu0 %v3241
        %6285 = vmatprep.subr.mxu0 0.0
        %6286 = vmatpush2.msra.mxu0 0.0
        %6287 = vmatprep.subr.mxu0 0.0
        %6288 = vmatpush2.msra.mxu0 0.0
        %6289 = vmatprep.subr.mxu0 0.0
        %6290 = vmatpush2.msra.mxu0 0.0
        %6291 = vmatprep.subr.mxu0 0.0
        %6292 = vmatpush2.msra.mxu0 0.0
        %6293 = vmatprep.subr.mxu0 0.0
        %6294 = vmatpush2.msra.mxu0 0.0
        %6295 = vmatprep.subr.mxu0 0.0
        %6296 = vmatpush2.msra.mxu0 0.0
        %6297 = vmatprep.subr.mxu0 0.0
        %6298 = vmatpush2.msra.mxu0 0.0
        %6299 = vmatprep.subr.mxu0 0.0
        %6300 = vmatpush2.msra.mxu0 0.0
        %6301 = vmatprep.subr.mxu0 0.0
        %6302 = vmatpush2.msra.mxu0 0.0
        %6303 = vmatprep.subr.mxu0 0.0
        %6304 = vmatpush2.msra.mxu0 0.0
        %6305 = vmatprep.subr.mxu0 0.0
        %6306 = vmatpush2.msra.mxu0 0.0
        %6307 = vmatprep.subr.mxu0 0.0
        %6308 = vmatpush2.msra.mxu0 0.0
        %6309 = vmatprep.subr.mxu0 0.0
        %6310 = vmatpush2.msra.mxu0 0.0
        %6311 = vmatprep.subr.mxu0 0.0
        %6312 = vmatpush2.msra.mxu0 0.0
        %6313 = vmatprep.subr.mxu0 0.0
        %6314 = vmatpush2.msra.mxu0 0.0
        %6315 = vmatprep.subr.mxu0 0.0
        %6316 = vmatpush2.msra.mxu0 0.0
        %6317 = vmatprep.mubr.f32.mxu0 0.0
        %6318 = vmatmul.mubr.f32.gmra.mxu0 %v6080
        %v6319 = vpop.f32.mrf.mxu0
        %v6320 = vadd.f32 %v3260, %v6319
        %v6321 = vpop.f32.mrf.mxu0
        %6322 = vdwg.mxu0
        %v6324 = vrot.slane %v6320, 2
        %v6325 = vrot.slane %v6320, 3
        %v6326 = vrot.slane %v6320, 4
        %v6327 = vrot.slane %v6320, 5
        %v6328 = vrot.slane %v6320, 6
        %v6329 = vrot.slane %v6320, 7
        %v6330 = vrot.slane %v6320, 1
        %v6339 = vadd.f32 %v3233, %v6324
        %v6340 = vadd.f32 %v3234, %v6325
        %v6341 = vadd.f32 %v3235, %v6326
        %v6342 = vadd.f32 %v3236, %v6327
        %v6343 = vadd.f32 %v3237, %v6328
        %v6344 = vadd.f32 %v3238, %v6329
        %v6345 = vadd.f32 %v3239, %v6320
        %v6346 = vadd.f32 %v3240, %v6330
        %v6347 = vxor.u32 %v6339, 2147483648
        %v6348 = vxor.u32 %v6340, 2147483648
        %v6349 = vxor.u32 %v6341, 2147483648
        %v6350 = vxor.u32 %v6342, 2147483648
        %v6351 = vxor.u32 %v6343, 2147483648
        %v6352 = vxor.u32 %v6344, 2147483648
        %v6353 = vxor.u32 %v6345, 2147483648
        %v6354 = vxor.u32 %v6346, 2147483648
        %v6355 = vmul.f32 %v6347, 1.442695
        %v6356 = vpow.pop %v6355
        %v6357 = vmul.f32 %v6348, 1.442695
        %v6358 = vpow.pop %v6357
        %v6359 = vmul.f32 %v6349, 1.442695
        %v6360 = vpow.pop %v6359
        %v6361 = vmul.f32 %v6350, 1.442695
        %v6362 = vpow.pop %v6361
        %v6363 = vmul.f32 %v6351, 1.442695
        %v6364 = vpow.pop %v6363
        %v6365 = vmul.f32 %v6352, 1.442695
        %v6366 = vpow.pop %v6365
        %v6367 = vmul.f32 %v6353, 1.442695
        %v6368 = vpow.pop %v6367
        %v6369 = vmul.f32 %v6354, 1.442695
        %v6370 = vpow.pop %v6369
        %v6371 = vadd.f32 %v6356, 1.0
        %v6372 = vadd.f32 %v6358, 1.0
        %v6373 = vadd.f32 %v6360, 1.0
        %v6374 = vadd.f32 %v6362, 1.0
        %v6375 = vadd.f32 %v6364, 1.0
        %v6376 = vadd.f32 %v6366, 1.0
        %v6377 = vadd.f32 %v6368, 1.0
        %v6378 = vadd.f32 %v6370, 1.0
        %v6379 = vrcp.pop %v6371
        %v6380 = vmul.f32 1.0, %v6379
        %v6381 = vrcp.pop %v6372
        %v6382 = vmul.f32 1.0, %v6381
        %v6383 = vrcp.pop %v6373
        %v6384 = vmul.f32 1.0, %v6383
        %v6385 = vrcp.pop %v6374
        %v6386 = vmul.f32 1.0, %v6385
        %v6387 = vrcp.pop %v6375
        %v6388 = vmul.f32 1.0, %v6387
        %v6389 = vrcp.pop %v6376
        %v6390 = vmul.f32 1.0, %v6389
        %v6391 = vrcp.pop %v6377
        %v6392 = vmul.f32 1.0, %v6391
        %v6393 = vrcp.pop %v6378
        %v6394 = vmul.f32 1.0, %v6393
        %6395 = vrot.lane.b32.xlu0 %v6324, 64
        %v6396 = vpop.permute.xlu0 %6395
        %6397 = vrot.lane.b32.xlu0 %v6325, 64
        %v6398 = vpop.permute.xlu0 %6397
        %6399 = vrot.lane.b32.xlu0 %v6326, 64
        %v6400 = vpop.permute.xlu0 %6399
        %6401 = vrot.lane.b32.xlu0 %v6327, 64
        %v6402 = vpop.permute.xlu0 %6401
        %6403 = vrot.lane.b32.xlu0 %v6328, 64
        %v6404 = vpop.permute.xlu0 %6403
        %6405 = vrot.lane.b32.xlu0 %v6329, 64
        %v6406 = vpop.permute.xlu0 %6405
        %6407 = vrot.lane.b32.xlu0 %v6320, 64
        %v6408 = vpop.permute.xlu0 %6407
        %6409 = vrot.lane.b32.xlu0 %v6330, 64
        %v6410 = vpop.permute.xlu0 %6409
        %v6419 = vmul.f32 %v6380, %v6396
        %v6420 = vmul.f32 %v6382, %v6398
        %v6421 = vmul.f32 %v6384, %v6400
        %v6422 = vmul.f32 %v6386, %v6402
        %v6423 = vmul.f32 %v6388, %v6404
        %v6424 = vmul.f32 %v6390, %v6406
        %v6425 = vmul.f32 %v6392, %v6408
        %v6426 = vmul.f32 %v6394, %v6410
        %6435 = vrot.lane.b32.xlu0 %v6419, 64
        %v6436 = vpop.permute.xlu0 %6435
        %6437 = vrot.lane.b32.xlu0 %v6420, 64
        %v6438 = vpop.permute.xlu0 %6437
        %6439 = vrot.lane.b32.xlu0 %v6421, 64
        %v6440 = vpop.permute.xlu0 %6439
        %6441 = vrot.lane.b32.xlu0 %v6422, 64
        %v6442 = vpop.permute.xlu0 %6441
        %6443 = vrot.lane.b32.xlu0 %v6423, 64
        %v6444 = vpop.permute.xlu0 %6443
        %6445 = vrot.lane.b32.xlu0 %v6424, 64
        %v6446 = vpop.permute.xlu0 %6445
        %6447 = vrot.lane.b32.xlu0 %v6425, 64
        %v6448 = vpop.permute.xlu0 %6447
        %6449 = vrot.lane.b32.xlu0 %v6426, 64
        %v6450 = vpop.permute.xlu0 %6449
        %v6459 = vadd.f32 %v3233, %v6436
        %v6460 = vadd.f32 %v3234, %v6438
        %v6461 = vadd.f32 %v3235, %v6440
        %v6462 = vadd.f32 %v3236, %v6442
        %v6463 = vadd.f32 %v3237, %v6444
        %v6464 = vadd.f32 %v3238, %v6446
        %v6465 = vadd.f32 %v3239, %v6448
        %v6466 = vadd.f32 %v3240, %v6450
        %v6467 = vtanh.pop %v6459
        %v6468 = vtanh.pop %v6460
        %v6469 = vtanh.pop %v6461
        %v6470 = vtanh.pop %v6462
        %v6471 = vtanh.pop %v6463
        %v6472 = vtanh.pop %v6464
        %v6473 = vtanh.pop %v6465
        %v6474 = vtanh.pop %v6466
        %v6475 = vsub.f32 1.0, %v6380
        %v6476 = vsub.f32 1.0, %v6382
        %v6477 = vsub.f32 1.0, %v6384
        %v6478 = vsub.f32 1.0, %v6386
        %v6479 = vsub.f32 1.0, %v6388
        %v6480 = vsub.f32 1.0, %v6390
        %v6481 = vsub.f32 1.0, %v6392
        %v6482 = vsub.f32 1.0, %v6394
        %6491 = vrot.lane.b32.xlu0 %v6467, 96
        %v6492 = vpop.permute.xlu0 %6491
        %6493 = vrot.lane.b32.xlu0 %v6468, 96
        %v6494 = vpop.permute.xlu0 %6493
        %6495 = vrot.lane.b32.xlu0 %v6469, 96
        %v6496 = vpop.permute.xlu0 %6495
        %6497 = vrot.lane.b32.xlu0 %v6470, 96
        %v6498 = vpop.permute.xlu0 %6497
        %6499 = vrot.lane.b32.xlu0 %v6471, 96
        %v6500 = vpop.permute.xlu0 %6499
        %6501 = vrot.lane.b32.xlu0 %v6472, 96
        %v6502 = vpop.permute.xlu0 %6501
        %6503 = vrot.lane.b32.xlu0 %v6473, 96
        %v6504 = vpop.permute.xlu0 %6503
        %6505 = vrot.lane.b32.xlu0 %v6474, 96
        %v6506 = vpop.permute.xlu0 %6505
        %v6515 = vmul.f32 %v6475, %v6492
        %v6516 = vmul.f32 %v6476, %v6494
        %v6517 = vmul.f32 %v6477, %v6496
        %v6518 = vmul.f32 %v6478, %v6498
        %v6519 = vmul.f32 %v6479, %v6500
        %v6520 = vmul.f32 %v6480, %v6502
        %v6521 = vmul.f32 %v6481, %v6504
        %v6522 = vmul.f32 %v6482, %v6506
        %v6523 = vrot.slane %v6048, 7
        %v6524 = vrot.slane %v6049, 7
        %v6525 = vrot.slane %v6050, 7
        %v6526 = vrot.slane %v6051, 7
        %v6527 = vrot.slane %v6052, 7
        %v6528 = vrot.slane %v6053, 7
        %v6529 = vrot.slane %v6055, 7
        %v6538 = vmul.f32 %v6380, %v6523
        %v6539 = vmul.f32 %v6382, %v6524
        %v6540 = vmul.f32 %v6384, %v6525
        %v6541 = vmul.f32 %v6386, %v6526
        %v6542 = vmul.f32 %v6388, %v6527
        %v6543 = vmul.f32 %v6390, %v6528
        %v6544 = vmul.f32 %v6392, %v6074
        %v6545 = vmul.f32 %v6394, %v6529
        %v6546 = vadd.f32 %v6515, %v6538
        %v6547 = vadd.f32 %v6516, %v6539
        %v6548 = vadd.f32 %v6517, %v6540
        %v6549 = vadd.f32 %v6518, %v6541
        %v6550 = vadd.f32 %v6519, %v6542
        %v6551 = vadd.f32 %v6520, %v6543
        %v6552 = vadd.f32 %v6521, %v6544
        %v6553 = vadd.f32 %v6522, %v6545
        %v6562 = vrot.slane %v6546, 6
        %v6563 = vrot.slane %v6547, 5
        %v6564 = vsel %vm3567, %v6563, %v6562
        %v6565 = vrot.slane %v6548, 4
        %v6566 = vsel %vm3570, %v6565, %v6564
        %v6567 = vrot.slane %v6549, 3
        %v6568 = vsel %vm3573, %v6567, %v6566
        %v6569 = vrot.slane %v6550, 2
        %v6570 = vsel %vm3576, %v6569, %v6568
        %v6571 = vrot.slane %v6551, 1
        %v6572 = vsel %vm3579, %v6571, %v6570
        %v6573 = vsel %vm3582, %v6552, %v6572
        %v6574 = vrot.slane %v6553, 7
        %v6575 = vsel %vm3585, %v6574, %v6573
        %6576 = vrot.lane.b32.xlu0 %v6575, 96
        %v6577 = vpop.permute.xlu0 %6576
        %v6578 = vsel %vm3262, %v6577, 0
        %6580 = vmatprep.subr.mxu0 0.0
        %6581 = vmatpush1.msra.mxu0 0.0
        %6582 = vmatprep.subr.mxu0 0.0
        %6583 = vmatpush1.msra.mxu0 0.0
        %6584 = vmatprep.subr.mxu0 0.0
        %6585 = vmatpush1.msra.mxu0 0.0
        %6586 = vmatprep.subr.mxu0 0.0
        %6587 = vmatpush1.msra.mxu0 0.0
        %6588 = vmatprep.subr.mxu0 0.0
        %6589 = vmatpush1.msra.mxu0 0.0
        %6590 = vmatprep.subr.mxu0 0.0
        %6591 = vmatpush1.msra.mxu0 0.0
        %6592 = vmatprep.subr.mxu0 0.0
        %6593 = vmatpush1.msra.mxu0 0.0
        %6594 = vmatprep.subr.mxu0 0.0
        %6595 = vmatpush1.msra.mxu0 0.0
        %6596 = vmatprep.subr.mxu0 0.0
        %6597 = vmatpush1.msra.mxu0 0.0
        %6598 = vmatprep.subr.mxu0 0.0
        %6599 = vmatpush1.msra.mxu0 0.0
        %6600 = vmatprep.subr.mxu0 0.0
        %6601 = vmatpush1.msra.mxu0 0.0
        %6602 = vmatprep.subr.mxu0 0.0
        %6603 = vmatpush1.msra.mxu0 0.0
        %6604 = vmatprep.subr.mxu0 0.0
        %6605 = vmatpush1.msra.mxu0 %v3249
        %6606 = vmatprep.subr.mxu0 0.0
        %6607 = vmatpush1.msra.mxu0 %v3248
        %6608 = vmatprep.subr.mxu0 0.0
        %6609 = vmatpush1.msra.mxu0 %v3247
        %6610 = vmatprep.subr.mxu0 0.0
        %6611 = vmatpush1.msra.mxu0 %v3246
        %6612 = vmatprep.subr.mxu0 0.0
        %6613 = vmatpush2.msra.mxu0 0.0
        %6614 = vmatprep.subr.mxu0 0.0
        %6615 = vmatpush2.msra.mxu0 0.0
        %6616 = vmatprep.subr.mxu0 0.0
        %6617 = vmatpush2.msra.mxu0 0.0
        %6618 = vmatprep.subr.mxu0 0.0
        %6619 = vmatpush2.msra.mxu0 0.0
        %6620 = vmatprep.subr.mxu0 0.0
        %6621 = vmatpush2.msra.mxu0 0.0
        %6622 = vmatprep.subr.mxu0 0.0
        %6623 = vmatpush2.msra.mxu0 0.0
        %6624 = vmatprep.subr.mxu0 0.0
        %6625 = vmatpush2.msra.mxu0 0.0
        %6626 = vmatprep.subr.mxu0 0.0
        %6627 = vmatpush2.msra.mxu0 0.0
        %6628 = vmatprep.subr.mxu0 0.0
        %6629 = vmatpush2.msra.mxu0 0.0
        %6630 = vmatprep.subr.mxu0 0.0
        %6631 = vmatpush2.msra.mxu0 0.0
        %6632 = vmatprep.subr.mxu0 0.0
        %6633 = vmatpush2.msra.mxu0 0.0
        %6634 = vmatprep.subr.mxu0 0.0
        %6635 = vmatpush2.msra.mxu0 0.0
        %6636 = vmatprep.subr.mxu0 0.0
        %6637 = vmatpush2.msra.mxu0 0.0
        %6638 = vmatprep.subr.mxu0 0.0
        %6639 = vmatpush2.msra.mxu0 0.0
        %6640 = vmatprep.subr.mxu0 0.0
        %6641 = vmatpush2.msra.mxu0 0.0
        %6642 = vmatprep.subr.mxu0 0.0
        %6643 = vmatpush2.msra.mxu0 0.0
        %6644 = vmatprep.mubr.f32.mxu0 0.0
        %6645 = vmatmul.mubr.f32.gmra.mxu0 %v6578
        %v6646 = vpop.f32.mrf.mxu0
        %v6647 = vadd.f32 %v3556, %v6646
        %v6648 = vpop.f32.mrf.mxu0
        %6649 = vdwg.mxu0
        %6651 = vrot.lane.b32.xlu0 %v6252, 96
        %v6652 = vpop.permute.xlu0 %6651
        %v6653 = vsel %vm3262, %v6652, 0
        %6655 = vmatprep.subr.mxu0 0.0
        %6656 = vmatpush1.msra.mxu0 0.0
        %6657 = vmatprep.subr.mxu0 0.0
        %6658 = vmatpush1.msra.mxu0 0.0
        %6659 = vmatprep.subr.mxu0 0.0
        %6660 = vmatpush1.msra.mxu0 0.0
        %6661 = vmatprep.subr.mxu0 0.0
        %6662 = vmatpush1.msra.mxu0 0.0
        %6663 = vmatprep.subr.mxu0 0.0
        %6664 = vmatpush1.msra.mxu0 0.0
        %6665 = vmatprep.subr.mxu0 0.0
        %6666 = vmatpush1.msra.mxu0 0.0
        %6667 = vmatprep.subr.mxu0 0.0
        %6668 = vmatpush1.msra.mxu0 0.0
        %6669 = vmatprep.subr.mxu0 0.0
        %6670 = vmatpush1.msra.mxu0 0.0
        %6671 = vmatprep.subr.mxu0 0.0
        %6672 = vmatpush1.msra.mxu0 0.0
        %6673 = vmatprep.subr.mxu0 0.0
        %6674 = vmatpush1.msra.mxu0 0.0
        %6675 = vmatprep.subr.mxu0 0.0
        %6676 = vmatpush1.msra.mxu0 0.0
        %6677 = vmatprep.subr.mxu0 0.0
        %6678 = vmatpush1.msra.mxu0 0.0
        %6679 = vmatprep.subr.mxu0 0.0
        %6680 = vmatpush1.msra.mxu0 %v3254
        %6681 = vmatprep.subr.mxu0 0.0
        %6682 = vmatpush1.msra.mxu0 %v3253
        %6683 = vmatprep.subr.mxu0 0.0
        %6684 = vmatpush1.msra.mxu0 %v3252
        %6685 = vmatprep.subr.mxu0 0.0
        %6686 = vmatpush1.msra.mxu0 %v3251
        %6687 = vmatprep.subr.mxu0 0.0
        %6688 = vmatpush2.msra.mxu0 0.0
        %6689 = vmatprep.subr.mxu0 0.0
        %6690 = vmatpush2.msra.mxu0 0.0
        %6691 = vmatprep.subr.mxu0 0.0
        %6692 = vmatpush2.msra.mxu0 0.0
        %6693 = vmatprep.subr.mxu0 0.0
        %6694 = vmatpush2.msra.mxu0 0.0
        %6695 = vmatprep.subr.mxu0 0.0
        %6696 = vmatpush2.msra.mxu0 0.0
        %6697 = vmatprep.subr.mxu0 0.0
        %6698 = vmatpush2.msra.mxu0 0.0
        %6699 = vmatprep.subr.mxu0 0.0
        %6700 = vmatpush2.msra.mxu0 0.0
        %6701 = vmatprep.subr.mxu0 0.0
        %6702 = vmatpush2.msra.mxu0 0.0
        %6703 = vmatprep.subr.mxu0 0.0
        %6704 = vmatpush2.msra.mxu0 0.0
        %6705 = vmatprep.subr.mxu0 0.0
        %6706 = vmatpush2.msra.mxu0 0.0
        %6707 = vmatprep.subr.mxu0 0.0
        %6708 = vmatpush2.msra.mxu0 0.0
        %6709 = vmatprep.subr.mxu0 0.0
        %6710 = vmatpush2.msra.mxu0 0.0
        %6711 = vmatprep.subr.mxu0 0.0
        %6712 = vmatpush2.msra.mxu0 0.0
        %6713 = vmatprep.subr.mxu0 0.0
        %6714 = vmatpush2.msra.mxu0 0.0
        %6715 = vmatprep.subr.mxu0 0.0
        %6716 = vmatpush2.msra.mxu0 0.0
        %6717 = vmatprep.subr.mxu0 0.0
        %6718 = vmatpush2.msra.mxu0 0.0
        %6719 = vmatprep.mubr.f32.mxu0 0.0
        %6720 = vmatmul.mubr.f32.gmra.mxu0 %v6653
        %v6721 = vpop.f32.mrf.mxu0
        %v6722 = vadd.f32 %v3665, %v6721
        %v6723 = vpop.f32.mrf.mxu0
        %6724 = vdwg.mxu0
        %v6725 = vadd.f32 %v6647, %v6722
        %v6726 = vxor.u32 %v6725, 2147483648
        %v6727 = vmul.f32 %v6726, 1.442695
        %v6728 = vpow.pop %v6727
        %v6729 = vadd.f32 %v6728, 1.0
        %v6730 = vrcp.pop %v6729
        %v6731 = vmul.f32 1.0, %v6730
        %6733 = vrot.lane.b32.xlu0 %v6722, 64
        %v6734 = vpop.permute.xlu0 %6733
        %v6736 = vmul.f32 %v6731, %v6734
        %6738 = vrot.lane.b32.xlu0 %v6736, 64
        %v6739 = vpop.permute.xlu0 %6738
        %v6741 = vadd.f32 %v6647, %v6739
        %v6742 = vtanh.pop %v6741
        %v6743 = vsub.f32 1.0, %v6731
        %6745 = vrot.lane.b32.xlu0 %v6742, 96
        %v6746 = vpop.permute.xlu0 %6745
        %v6748 = vmul.f32 %v6743, %v6746
        %v6749 = vmul.f32 %v6731, %v6252
        %v6750 = vadd.f32 %v6748, %v6749
        %6751 = vmatprep.subr.mxu0 0.0
        %6752 = vmatpush1.msra.mxu0 0.0
        %6753 = vmatprep.subr.mxu0 0.0
        %6754 = vmatpush1.msra.mxu0 0.0
        %6755 = vmatprep.subr.mxu0 0.0
        %6756 = vmatpush1.msra.mxu0 0.0
        %6757 = vmatprep.subr.mxu0 0.0
        %6758 = vmatpush1.msra.mxu0 0.0
        %6759 = vmatprep.subr.mxu0 0.0
        %6760 = vmatpush1.msra.mxu0 0.0
        %6761 = vmatprep.subr.mxu0 0.0
        %6762 = vmatpush1.msra.mxu0 0.0
        %6763 = vmatprep.subr.mxu0 0.0
        %6764 = vmatpush1.msra.mxu0 0.0
        %6765 = vmatprep.subr.mxu0 0.0
        %6766 = vmatpush1.msra.mxu0 0.0
        %6767 = vmatprep.subr.mxu0 0.0
        %6768 = vmatpush1.msra.mxu0 0.0
        %6769 = vmatprep.subr.mxu0 0.0
        %6770 = vmatpush1.msra.mxu0 0.0
        %6771 = vmatprep.subr.mxu0 0.0
        %6772 = vmatpush1.msra.mxu0 0.0
        %6773 = vmatprep.subr.mxu0 0.0
        %6774 = vmatpush1.msra.mxu0 0.0
        %6775 = vmatprep.subr.mxu0 0.0
        %6776 = vmatpush1.msra.mxu0 %v3244
        %6777 = vmatprep.subr.mxu0 0.0
        %6778 = vmatpush1.msra.mxu0 %v3243
        %6779 = vmatprep.subr.mxu0 0.0
        %6780 = vmatpush1.msra.mxu0 %v3242
        %6781 = vmatprep.subr.mxu0 0.0
        %6782 = vmatpush1.msra.mxu0 %v3241
        %6783 = vmatprep.subr.mxu0 0.0
        %6784 = vmatpush2.msra.mxu0 0.0
        %6785 = vmatprep.subr.mxu0 0.0
        %6786 = vmatpush2.msra.mxu0 0.0
        %6787 = vmatprep.subr.mxu0 0.0
        %6788 = vmatpush2.msra.mxu0 0.0
        %6789 = vmatprep.subr.mxu0 0.0
        %6790 = vmatpush2.msra.mxu0 0.0
        %6791 = vmatprep.subr.mxu0 0.0
        %6792 = vmatpush2.msra.mxu0 0.0
        %6793 = vmatprep.subr.mxu0 0.0
        %6794 = vmatpush2.msra.mxu0 0.0
        %6795 = vmatprep.subr.mxu0 0.0
        %6796 = vmatpush2.msra.mxu0 0.0
        %6797 = vmatprep.subr.mxu0 0.0
        %6798 = vmatpush2.msra.mxu0 0.0
        %6799 = vmatprep.subr.mxu0 0.0
        %6800 = vmatpush2.msra.mxu0 0.0
        %6801 = vmatprep.subr.mxu0 0.0
        %6802 = vmatpush2.msra.mxu0 0.0
        %6803 = vmatprep.subr.mxu0 0.0
        %6804 = vmatpush2.msra.mxu0 0.0
        %6805 = vmatprep.subr.mxu0 0.0
        %6806 = vmatpush2.msra.mxu0 0.0
        %6807 = vmatprep.subr.mxu0 0.0
        %6808 = vmatpush2.msra.mxu0 0.0
        %6809 = vmatprep.subr.mxu0 0.0
        %6810 = vmatpush2.msra.mxu0 0.0
        %6811 = vmatprep.subr.mxu0 0.0
        %6812 = vmatpush2.msra.mxu0 0.0
        %6813 = vmatprep.subr.mxu0 0.0
        %6814 = vmatpush2.msra.mxu0 0.0
        %6815 = vmatprep.mubr.f32.mxu0 0.0
        %6816 = vmatmul.mubr.f32.gmra.mxu0 %v6578
        %v6817 = vpop.f32.mrf.mxu0
        %v6818 = vadd.f32 %v3260, %v6817
        %v6819 = vpop.f32.mrf.mxu0
        %6820 = vdwg.mxu0
        %v6822 = vrot.slane %v6818, 1
        %v6823 = vrot.slane %v6818, 2
        %v6824 = vrot.slane %v6818, 3
        %v6825 = vrot.slane %v6818, 4
        %v6826 = vrot.slane %v6818, 5
        %v6827 = vrot.slane %v6818, 6
        %v6828 = vrot.slane %v6818, 7
        %v6837 = vadd.f32 %v3233, %v6822
        %v6838 = vadd.f32 %v3234, %v6823
        %v6839 = vadd.f32 %v3235, %v6824
        %v6840 = vadd.f32 %v3236, %v6825
        %v6841 = vadd.f32 %v3237, %v6826
        %v6842 = vadd.f32 %v3238, %v6827
        %v6843 = vadd.f32 %v3239, %v6828
        %v6844 = vadd.f32 %v3240, %v6818
        %v6845 = vxor.u32 %v6837, 2147483648
        %v6846 = vxor.u32 %v6838, 2147483648
        %v6847 = vxor.u32 %v6839, 2147483648
        %v6848 = vxor.u32 %v6840, 2147483648
        %v6849 = vxor.u32 %v6841, 2147483648
        %v6850 = vxor.u32 %v6842, 2147483648
        %v6851 = vxor.u32 %v6843, 2147483648
        %v6852 = vxor.u32 %v6844, 2147483648
        %v6853 = vmul.f32 %v6845, 1.442695
        %v6854 = vpow.pop %v6853
        %v6855 = vmul.f32 %v6846, 1.442695
        %v6856 = vpow.pop %v6855
        %v6857 = vmul.f32 %v6847, 1.442695
        %v6858 = vpow.pop %v6857
        %v6859 = vmul.f32 %v6848, 1.442695
        %v6860 = vpow.pop %v6859
        %v6861 = vmul.f32 %v6849, 1.442695
        %v6862 = vpow.pop %v6861
        %v6863 = vmul.f32 %v6850, 1.442695
        %v6864 = vpow.pop %v6863
        %v6865 = vmul.f32 %v6851, 1.442695
        %v6866 = vpow.pop %v6865
        %v6867 = vmul.f32 %v6852, 1.442695
        %v6868 = vpow.pop %v6867
        %v6869 = vadd.f32 %v6854, 1.0
        %v6870 = vadd.f32 %v6856, 1.0
        %v6871 = vadd.f32 %v6858, 1.0
        %v6872 = vadd.f32 %v6860, 1.0
        %v6873 = vadd.f32 %v6862, 1.0
        %v6874 = vadd.f32 %v6864, 1.0
        %v6875 = vadd.f32 %v6866, 1.0
        %v6876 = vadd.f32 %v6868, 1.0
        %v6877 = vrcp.pop %v6869
        %v6878 = vmul.f32 1.0, %v6877
        %v6879 = vrcp.pop %v6870
        %v6880 = vmul.f32 1.0, %v6879
        %v6881 = vrcp.pop %v6871
        %v6882 = vmul.f32 1.0, %v6881
        %v6883 = vrcp.pop %v6872
        %v6884 = vmul.f32 1.0, %v6883
        %v6885 = vrcp.pop %v6873
        %v6886 = vmul.f32 1.0, %v6885
        %v6887 = vrcp.pop %v6874
        %v6888 = vmul.f32 1.0, %v6887
        %v6889 = vrcp.pop %v6875
        %v6890 = vmul.f32 1.0, %v6889
        %v6891 = vrcp.pop %v6876
        %v6892 = vmul.f32 1.0, %v6891
        %6893 = vrot.lane.b32.xlu0 %v6822, 64
        %v6894 = vpop.permute.xlu0 %6893
        %6895 = vrot.lane.b32.xlu0 %v6823, 64
        %v6896 = vpop.permute.xlu0 %6895
        %6897 = vrot.lane.b32.xlu0 %v6824, 64
        %v6898 = vpop.permute.xlu0 %6897
        %6899 = vrot.lane.b32.xlu0 %v6825, 64
        %v6900 = vpop.permute.xlu0 %6899
        %6901 = vrot.lane.b32.xlu0 %v6826, 64
        %v6902 = vpop.permute.xlu0 %6901
        %6903 = vrot.lane.b32.xlu0 %v6827, 64
        %v6904 = vpop.permute.xlu0 %6903
        %6905 = vrot.lane.b32.xlu0 %v6828, 64
        %v6906 = vpop.permute.xlu0 %6905
        %6907 = vrot.lane.b32.xlu0 %v6818, 64
        %v6908 = vpop.permute.xlu0 %6907
        %v6917 = vmul.f32 %v6878, %v6894
        %v6918 = vmul.f32 %v6880, %v6896
        %v6919 = vmul.f32 %v6882, %v6898
        %v6920 = vmul.f32 %v6884, %v6900
        %v6921 = vmul.f32 %v6886, %v6902
        %v6922 = vmul.f32 %v6888, %v6904
        %v6923 = vmul.f32 %v6890, %v6906
        %v6924 = vmul.f32 %v6892, %v6908
        %6933 = vrot.lane.b32.xlu0 %v6917, 64
        %v6934 = vpop.permute.xlu0 %6933
        %6935 = vrot.lane.b32.xlu0 %v6918, 64
        %v6936 = vpop.permute.xlu0 %6935
        %6937 = vrot.lane.b32.xlu0 %v6919, 64
        %v6938 = vpop.permute.xlu0 %6937
        %6939 = vrot.lane.b32.xlu0 %v6920, 64
        %v6940 = vpop.permute.xlu0 %6939
        %6941 = vrot.lane.b32.xlu0 %v6921, 64
        %v6942 = vpop.permute.xlu0 %6941
        %6943 = vrot.lane.b32.xlu0 %v6922, 64
        %v6944 = vpop.permute.xlu0 %6943
        %6945 = vrot.lane.b32.xlu0 %v6923, 64
        %v6946 = vpop.permute.xlu0 %6945
        %6947 = vrot.lane.b32.xlu0 %v6924, 64
        %v6948 = vpop.permute.xlu0 %6947
        %v6957 = vadd.f32 %v3233, %v6934
        %v6958 = vadd.f32 %v3234, %v6936
        %v6959 = vadd.f32 %v3235, %v6938
        %v6960 = vadd.f32 %v3236, %v6940
        %v6961 = vadd.f32 %v3237, %v6942
        %v6962 = vadd.f32 %v3238, %v6944
        %v6963 = vadd.f32 %v3239, %v6946
        %v6964 = vadd.f32 %v3240, %v6948
        %v6965 = vtanh.pop %v6957
        %v6966 = vtanh.pop %v6958
        %v6967 = vtanh.pop %v6959
        %v6968 = vtanh.pop %v6960
        %v6969 = vtanh.pop %v6961
        %v6970 = vtanh.pop %v6962
        %v6971 = vtanh.pop %v6963
        %v6972 = vtanh.pop %v6964
        %v6973 = vsub.f32 1.0, %v6878
        %v6974 = vsub.f32 1.0, %v6880
        %v6975 = vsub.f32 1.0, %v6882
        %v6976 = vsub.f32 1.0, %v6884
        %v6977 = vsub.f32 1.0, %v6886
        %v6978 = vsub.f32 1.0, %v6888
        %v6979 = vsub.f32 1.0, %v6890
        %v6980 = vsub.f32 1.0, %v6892
        %6989 = vrot.lane.b32.xlu0 %v6965, 96
        %v6990 = vpop.permute.xlu0 %6989
        %6991 = vrot.lane.b32.xlu0 %v6966, 96
        %v6992 = vpop.permute.xlu0 %6991
        %6993 = vrot.lane.b32.xlu0 %v6967, 96
        %v6994 = vpop.permute.xlu0 %6993
        %6995 = vrot.lane.b32.xlu0 %v6968, 96
        %v6996 = vpop.permute.xlu0 %6995
        %6997 = vrot.lane.b32.xlu0 %v6969, 96
        %v6998 = vpop.permute.xlu0 %6997
        %6999 = vrot.lane.b32.xlu0 %v6970, 96
        %v7000 = vpop.permute.xlu0 %6999
        %7001 = vrot.lane.b32.xlu0 %v6971, 96
        %v7002 = vpop.permute.xlu0 %7001
        %7003 = vrot.lane.b32.xlu0 %v6972, 96
        %v7004 = vpop.permute.xlu0 %7003
        %v7013 = vmul.f32 %v6973, %v6990
        %v7014 = vmul.f32 %v6974, %v6992
        %v7015 = vmul.f32 %v6975, %v6994
        %v7016 = vmul.f32 %v6976, %v6996
        %v7017 = vmul.f32 %v6977, %v6998
        %v7018 = vmul.f32 %v6978, %v7000
        %v7019 = vmul.f32 %v6979, %v7002
        %v7020 = vmul.f32 %v6980, %v7004
        %v7021 = vrot.slane %v6546, 7
        %v7022 = vrot.slane %v6547, 7
        %v7023 = vrot.slane %v6548, 7
        %v7024 = vrot.slane %v6549, 7
        %v7025 = vrot.slane %v6550, 7
        %v7026 = vrot.slane %v6551, 7
        %v7027 = vrot.slane %v6552, 7
        %v7036 = vmul.f32 %v6878, %v7021
        %v7037 = vmul.f32 %v6880, %v7022
        %v7038 = vmul.f32 %v6882, %v7023
        %v7039 = vmul.f32 %v6884, %v7024
        %v7040 = vmul.f32 %v6886, %v7025
        %v7041 = vmul.f32 %v6888, %v7026
        %v7042 = vmul.f32 %v6890, %v7027
        %v7043 = vmul.f32 %v6892, %v6574
        %v7044 = vadd.f32 %v7013, %v7036
        %v7045 = vadd.f32 %v7014, %v7037
        %v7046 = vadd.f32 %v7015, %v7038
        %v7047 = vadd.f32 %v7016, %v7039
        %v7048 = vadd.f32 %v7017, %v7040
        %v7049 = vadd.f32 %v7018, %v7041
        %v7050 = vadd.f32 %v7019, %v7042
        %v7051 = vadd.f32 %v7020, %v7043
        %v7060 = vrot.slane %v7044, 7
        %v7061 = vrot.slane %v7045, 6
        %v7062 = vsel %vm3567, %v7061, %v7060
        %v7063 = vrot.slane %v7046, 5
        %v7064 = vsel %vm3570, %v7063, %v7062
        %v7065 = vrot.slane %v7047, 4
        %v7066 = vsel %vm3573, %v7065, %v7064
        %v7067 = vrot.slane %v7048, 3
        %v7068 = vsel %vm3576, %v7067, %v7066
        %v7069 = vrot.slane %v7049, 2
        %v7070 = vsel %vm3579, %v7069, %v7068
        %v7071 = vrot.slane %v7050, 1
        %v7072 = vsel %vm3582, %v7071, %v7070
        %v7073 = vsel %vm3585, %v7051, %v7072
        %7074 = vrot.lane.b32.xlu0 %v7073, 96
        %v7075 = vpop.permute.xlu0 %7074
        %v7076 = vsel %vm3262, %v7075, 0
        %7078 = vmatprep.subr.mxu0 0.0
        %7079 = vmatpush1.msra.mxu0 0.0
        %7080 = vmatprep.subr.mxu0 0.0
        %7081 = vmatpush1.msra.mxu0 0.0
        %7082 = vmatprep.subr.mxu0 0.0
        %7083 = vmatpush1.msra.mxu0 0.0
        %7084 = vmatprep.subr.mxu0 0.0
        %7085 = vmatpush1.msra.mxu0 0.0
        %7086 = vmatprep.subr.mxu0 0.0
        %7087 = vmatpush1.msra.mxu0 0.0
        %7088 = vmatprep.subr.mxu0 0.0
        %7089 = vmatpush1.msra.mxu0 0.0
        %7090 = vmatprep.subr.mxu0 0.0
        %7091 = vmatpush1.msra.mxu0 0.0
        %7092 = vmatprep.subr.mxu0 0.0
        %7093 = vmatpush1.msra.mxu0 0.0
        %7094 = vmatprep.subr.mxu0 0.0
        %7095 = vmatpush1.msra.mxu0 0.0
        %7096 = vmatprep.subr.mxu0 0.0
        %7097 = vmatpush1.msra.mxu0 0.0
        %7098 = vmatprep.subr.mxu0 0.0
        %7099 = vmatpush1.msra.mxu0 0.0
        %7100 = vmatprep.subr.mxu0 0.0
        %7101 = vmatpush1.msra.mxu0 0.0
        %7102 = vmatprep.subr.mxu0 0.0
        %7103 = vmatpush1.msra.mxu0 %v3249
        %7104 = vmatprep.subr.mxu0 0.0
        %7105 = vmatpush1.msra.mxu0 %v3248
        %7106 = vmatprep.subr.mxu0 0.0
        %7107 = vmatpush1.msra.mxu0 %v3247
        %7108 = vmatprep.subr.mxu0 0.0
        %7109 = vmatpush1.msra.mxu0 %v3246
        %7110 = vmatprep.subr.mxu0 0.0
        %7111 = vmatpush2.msra.mxu0 0.0
        %7112 = vmatprep.subr.mxu0 0.0
        %7113 = vmatpush2.msra.mxu0 0.0
        %7114 = vmatprep.subr.mxu0 0.0
        %7115 = vmatpush2.msra.mxu0 0.0
        %7116 = vmatprep.subr.mxu0 0.0
        %7117 = vmatpush2.msra.mxu0 0.0
        %7118 = vmatprep.subr.mxu0 0.0
        %7119 = vmatpush2.msra.mxu0 0.0
        %7120 = vmatprep.subr.mxu0 0.0
        %7121 = vmatpush2.msra.mxu0 0.0
        %7122 = vmatprep.subr.mxu0 0.0
        %7123 = vmatpush2.msra.mxu0 0.0
        %7124 = vmatprep.subr.mxu0 0.0
        %7125 = vmatpush2.msra.mxu0 0.0
        %7126 = vmatprep.subr.mxu0 0.0
        %7127 = vmatpush2.msra.mxu0 0.0
        %7128 = vmatprep.subr.mxu0 0.0
        %7129 = vmatpush2.msra.mxu0 0.0
        %7130 = vmatprep.subr.mxu0 0.0
        %7131 = vmatpush2.msra.mxu0 0.0
        %7132 = vmatprep.subr.mxu0 0.0
        %7133 = vmatpush2.msra.mxu0 0.0
        %7134 = vmatprep.subr.mxu0 0.0
        %7135 = vmatpush2.msra.mxu0 0.0
        %7136 = vmatprep.subr.mxu0 0.0
        %7137 = vmatpush2.msra.mxu0 0.0
        %7138 = vmatprep.subr.mxu0 0.0
        %7139 = vmatpush2.msra.mxu0 0.0
        %7140 = vmatprep.subr.mxu0 0.0
        %7141 = vmatpush2.msra.mxu0 0.0
        %7142 = vmatprep.mubr.f32.mxu0 0.0
        %7143 = vmatmul.mubr.f32.gmra.mxu0 %v7076
        %v7144 = vpop.f32.mrf.mxu0
        %v7145 = vadd.f32 %v3556, %v7144
        %v7146 = vpop.f32.mrf.mxu0
        %7147 = vdwg.mxu0
        %7149 = vrot.lane.b32.xlu0 %v6750, 96
        %v7150 = vpop.permute.xlu0 %7149
        %v7151 = vsel %vm3262, %v7150, 0
        %7153 = vmatprep.subr.mxu0 0.0
        %7154 = vmatpush1.msra.mxu0 0.0
        %7155 = vmatprep.subr.mxu0 0.0
        %7156 = vmatpush1.msra.mxu0 0.0
        %7157 = vmatprep.subr.mxu0 0.0
        %7158 = vmatpush1.msra.mxu0 0.0
        %7159 = vmatprep.subr.mxu0 0.0
        %7160 = vmatpush1.msra.mxu0 0.0
        %7161 = vmatprep.subr.mxu0 0.0
        %7162 = vmatpush1.msra.mxu0 0.0
        %7163 = vmatprep.subr.mxu0 0.0
        %7164 = vmatpush1.msra.mxu0 0.0
        %7165 = vmatprep.subr.mxu0 0.0
        %7166 = vmatpush1.msra.mxu0 0.0
        %7167 = vmatprep.subr.mxu0 0.0
        %7168 = vmatpush1.msra.mxu0 0.0
        %7169 = vmatprep.subr.mxu0 0.0
        %7170 = vmatpush1.msra.mxu0 0.0
        %7171 = vmatprep.subr.mxu0 0.0
        %7172 = vmatpush1.msra.mxu0 0.0
        %7173 = vmatprep.subr.mxu0 0.0
        %7174 = vmatpush1.msra.mxu0 0.0
        %7175 = vmatprep.subr.mxu0 0.0
        %7176 = vmatpush1.msra.mxu0 0.0
        %7177 = vmatprep.subr.mxu0 0.0
        %7178 = vmatpush1.msra.mxu0 %v3254
        %7179 = vmatprep.subr.mxu0 0.0
        %7180 = vmatpush1.msra.mxu0 %v3253
        %7181 = vmatprep.subr.mxu0 0.0
        %7182 = vmatpush1.msra.mxu0 %v3252
        %7183 = vmatprep.subr.mxu0 0.0
        %7184 = vmatpush1.msra.mxu0 %v3251
        %7185 = vmatprep.subr.mxu0 0.0
        %7186 = vmatpush2.msra.mxu0 0.0
        %7187 = vmatprep.subr.mxu0 0.0
        %7188 = vmatpush2.msra.mxu0 0.0
        %7189 = vmatprep.subr.mxu0 0.0
        %7190 = vmatpush2.msra.mxu0 0.0
        %7191 = vmatprep.subr.mxu0 0.0
        %7192 = vmatpush2.msra.mxu0 0.0
        %7193 = vmatprep.subr.mxu0 0.0
        %7194 = vmatpush2.msra.mxu0 0.0
        %7195 = vmatprep.subr.mxu0 0.0
        %7196 = vmatpush2.msra.mxu0 0.0
        %7197 = vmatprep.subr.mxu0 0.0
        %7198 = vmatpush2.msra.mxu0 0.0
        %7199 = vmatprep.subr.mxu0 0.0
        %7200 = vmatpush2.msra.mxu0 0.0
        %7201 = vmatprep.subr.mxu0 0.0
        %7202 = vmatpush2.msra.mxu0 0.0
        %7203 = vmatprep.subr.mxu0 0.0
        %7204 = vmatpush2.msra.mxu0 0.0
        %7205 = vmatprep.subr.mxu0 0.0
        %7206 = vmatpush2.msra.mxu0 0.0
        %7207 = vmatprep.subr.mxu0 0.0
        %7208 = vmatpush2.msra.mxu0 0.0
        %7209 = vmatprep.subr.mxu0 0.0
        %7210 = vmatpush2.msra.mxu0 0.0
        %7211 = vmatprep.subr.mxu0 0.0
        %7212 = vmatpush2.msra.mxu0 0.0
        %7213 = vmatprep.subr.mxu0 0.0
        %7214 = vmatpush2.msra.mxu0 0.0
        %7215 = vmatprep.subr.mxu0 0.0
        %7216 = vmatpush2.msra.mxu0 0.0
        %7217 = vmatprep.mubr.f32.mxu0 0.0
        %7218 = vmatmul.mubr.f32.gmra.mxu0 %v7151
        %v7219 = vpop.f32.mrf.mxu0
        %v7220 = vadd.f32 %v3665, %v7219
        %v7221 = vpop.f32.mrf.mxu0
        %7222 = vdwg.mxu0
        %v7223 = vadd.f32 %v7145, %v7220
        %v7224 = vxor.u32 %v7223, 2147483648
        %v7225 = vmul.f32 %v7224, 1.442695
        %v7226 = vpow.pop %v7225
        %v7227 = vadd.f32 %v7226, 1.0
        %v7228 = vrcp.pop %v7227
        %v7229 = vmul.f32 1.0, %v7228
        %7231 = vrot.lane.b32.xlu0 %v7220, 64
        %v7232 = vpop.permute.xlu0 %7231
        %v7234 = vmul.f32 %v7229, %v7232
        %7236 = vrot.lane.b32.xlu0 %v7234, 64
        %v7237 = vpop.permute.xlu0 %7236
        %v7239 = vadd.f32 %v7145, %v7237
        %v7240 = vtanh.pop %v7239
        %v7241 = vsub.f32 1.0, %v7229
        %7243 = vrot.lane.b32.xlu0 %v7240, 96
        %v7244 = vpop.permute.xlu0 %7243
        %v7246 = vmul.f32 %v7241, %v7244
        %v7247 = vmul.f32 %v7229, %v6750
        %v7248 = vadd.f32 %v7246, %v7247
        %v7249 = vrot.slane %v7045, 7
        %v7250 = vrot.slane %v7046, 6
        %v7251 = vsel %vm3567, %v7250, %v7249
        %v7252 = vrot.slane %v7047, 5
        %v7253 = vsel %vm3570, %v7252, %v7251
        %v7254 = vrot.slane %v7048, 4
        %v7255 = vsel %vm3573, %v7254, %v7253
        %v7256 = vrot.slane %v7049, 3
        %v7257 = vsel %vm3576, %v7256, %v7255
        %v7258 = vrot.slane %v7050, 2
        %v7259 = vsel %vm3579, %v7258, %v7257
        %v7260 = vrot.slane %v7051, 1
        %v7261 = vsel %vm3582, %v7260, %v7259
        %7262 = vrot.lane.b32.xlu0 %v7044, 96
        %v7263 = vpop.permute.xlu0 %7262
        %7264 = vrot.lane.b32.xlu0 %v7261, 96
        %v7265 = vpop.permute.xlu0 %7264
        %vm7268 = vcmask 261127
        %7269 = vst.msk [vmem:[%s1130 - $0x7] sm:$0x80] %vm7268, %v7263
        %vm7270 = vcmask 260096
        %7271 = vst.msk [vmem:[%s1130 + $0x1] sm:$0x7f] %vm7270, %v7265
        %7273 = vrot.lane.b32.xlu0 %v7248, 96
        %v7274 = vpop.permute.xlu0 %7273
        %s7276 = scalar_lea.vmem %s1130, 8 [#allocation35]
        %7277 = vst.msk [vmem:[%s7276] sm:$0xff] %vm3262, %v7274
        %v7278 = vmax.f32 %v7248, 0.0
        %v7279 = vld [vmem:[#allocation32] sm:$0xff]
        %v7280 = vld [vmem:[#allocation32 + $0x8] sm:$0xff]
        %v7281 = vld [vmem:[#allocation32 + $0x10] sm:$0xff]
        %v7282 = vld [vmem:[#allocation32 + $0x18] sm:$0xff]
        %v7283 = vld [vmem:[%s23] sm:$0x1]
        %v7285 = vlaneseq
        %v7286 = vshrl.u32 %v7285, 7
        %v7287 = vsub.s32 0, %v7286
        %v7288 = vrot.slane %v7283, %v7287
        %7291 = vrot.lane.b32.xlu0 %v7278, 96
        %v7292 = vpop.permute.xlu0 %7291
        %v7293 = vsel %vm3262, %v7292, 0
        %7295 = vmatprep.subr.mxu0 0.0
        %7296 = vmatpush1.msra.mxu0 0.0
        %7297 = vmatprep.subr.mxu0 0.0
        %7298 = vmatpush1.msra.mxu0 0.0
        %7299 = vmatprep.subr.mxu0 0.0
        %7300 = vmatpush1.msra.mxu0 0.0
        %7301 = vmatprep.subr.mxu0 0.0
        %7302 = vmatpush1.msra.mxu0 0.0
        %7303 = vmatprep.subr.mxu0 0.0
        %7304 = vmatpush1.msra.mxu0 0.0
        %7305 = vmatprep.subr.mxu0 0.0
        %7306 = vmatpush1.msra.mxu0 0.0
        %7307 = vmatprep.subr.mxu0 0.0
        %7308 = vmatpush1.msra.mxu0 0.0
        %7309 = vmatprep.subr.mxu0 0.0
        %7310 = vmatpush1.msra.mxu0 0.0
        %7311 = vmatprep.subr.mxu0 0.0
        %7312 = vmatpush1.msra.mxu0 0.0
        %7313 = vmatprep.subr.mxu0 0.0
        %7314 = vmatpush1.msra.mxu0 0.0
        %7315 = vmatprep.subr.mxu0 0.0
        %7316 = vmatpush1.msra.mxu0 0.0
        %7317 = vmatprep.subr.mxu0 0.0
        %7318 = vmatpush1.msra.mxu0 0.0
        %7319 = vmatprep.subr.mxu0 0.0
        %7320 = vmatpush1.msra.mxu0 %v7282
        %7321 = vmatprep.subr.mxu0 0.0
        %7322 = vmatpush1.msra.mxu0 %v7281
        %7323 = vmatprep.subr.mxu0 0.0
        %7324 = vmatpush1.msra.mxu0 %v7280
        %7325 = vmatprep.subr.mxu0 0.0
        %7326 = vmatpush1.msra.mxu0 %v7279
        %7327 = vmatprep.subr.mxu0 0.0
        %7328 = vmatpush2.msra.mxu0 0.0
        %7329 = vmatprep.subr.mxu0 0.0
        %7330 = vmatpush2.msra.mxu0 0.0
        %7331 = vmatprep.subr.mxu0 0.0
        %7332 = vmatpush2.msra.mxu0 0.0
        %7333 = vmatprep.subr.mxu0 0.0
        %7334 = vmatpush2.msra.mxu0 0.0
        %7335 = vmatprep.subr.mxu0 0.0
        %7336 = vmatpush2.msra.mxu0 0.0
        %7337 = vmatprep.subr.mxu0 0.0
        %7338 = vmatpush2.msra.mxu0 0.0
        %7339 = vmatprep.subr.mxu0 0.0
        %7340 = vmatpush2.msra.mxu0 0.0
        %7341 = vmatprep.subr.mxu0 0.0
        %7342 = vmatpush2.msra.mxu0 0.0
        %7343 = vmatprep.subr.mxu0 0.0
        %7344 = vmatpush2.msra.mxu0 0.0
        %7345 = vmatprep.subr.mxu0 0.0
        %7346 = vmatpush2.msra.mxu0 0.0
        %7347 = vmatprep.subr.mxu0 0.0
        %7348 = vmatpush2.msra.mxu0 0.0
        %7349 = vmatprep.subr.mxu0 0.0
        %7350 = vmatpush2.msra.mxu0 0.0
        %7351 = vmatprep.subr.mxu0 0.0
        %7352 = vmatpush2.msra.mxu0 0.0
        %7353 = vmatprep.subr.mxu0 0.0
        %7354 = vmatpush2.msra.mxu0 0.0
        %7355 = vmatprep.subr.mxu0 0.0
        %7356 = vmatpush2.msra.mxu0 0.0
        %7357 = vmatprep.subr.mxu0 0.0
        %7358 = vmatpush2.msra.mxu0 0.0
        %7359 = vmatprep.mubr.f32.mxu0 0.0
        %7360 = vmatmul.mubr.f32.gmra.mxu0 %v7293
        %v7361 = vpop.f32.mrf.mxu0
        %v7362 = vadd.f32 %v7288, %v7361
        %v7363 = vpop.f32.mrf.mxu0
        %7364 = vdwg.mxu0
        %7365 = vst [vmem:[%s1123] sm:$0xff] %v7362
        %s7366 = sand.u32 %s592, 1
        %s7367 = scalar_lea.sflag [#allocation4], %s7366
        %s7368 = sand.u32 %s592, 1
        %s7369 = smul.addr %s7368, 8
        %s7370 = scalar_lea.vmem [#allocation34], %s7369
        %s7371 = sand.u32 %s618, 1
        %s7372 = scalar_lea.sflag [#allocation36], %s7371
        %s7373 = sand.u32 %s618, 1
        %s7374 = smul.addr %s7373, 16
        %s7375 = scalar_lea.vmem [#allocation35], %s7374
        // Predicated region
        $region197: #{tpu_custom_call.1} parent=115 // pred_check
          %p7376 = pneg %p602
        $region198: #{tpu_custom_call.1} parent=115 // pred_check_branch
          %7378 = sbr.rel (%p7376) target = $region200
        $region199: #{tpu_custom_call.1} parent=115 // pred_region
          %s7380 = ssub.s32 128, 128
          %7381 = vsyncadd %s7367, %s7380
          %s7382 = smul.addr %s60, 128
          %s7383 = scalar_lea.hbm %s24, %s7382
          %s7385 = sshll.u32 %s7370, 4
          %s7386 = int_to_ptr.vmem [resolvable:$true] %s7385
          %7388 = dma.vmem_to_hbm [thread:$0]  %s7386, 128, %s7383, %s7367
        $region200: #{tpu_custom_call.1} parent=115 // pred_fallthru
          _
        // Predicated region
        $region201: #{tpu_custom_call.1} parent=115 // pred_check
          %p7389 = pneg %p628
        $region202: #{tpu_custom_call.1} parent=115 // pred_check_branch
          %7391 = sbr.rel (%p7389) target = $region204
        $region203: #{tpu_custom_call.1} parent=115 // pred_region
          %s7393 = ssub.s32 256, 256
          %7394 = vsyncadd %s7372, %s7393
          %s7395 = smul.addr %s60, 128
          %s7396 = scalar_lea.hbm %s25, %s7395
          %s7397 = sshll.u32 %s7375, 4
          %s7398 = int_to_ptr.vmem [resolvable:$true] %s7397
          %7403 = dma.vmem_to_hbm [thread:$0]  %s7398, 256, %s7396, %s7372, 128, 256, 8
        $region204: #{tpu_custom_call.1} parent=115 // pred_fallthru
          _
      $region116: #{tpu_custom_call.1} parent=5 // pred_fallthru
        _
      %p7404 = scmp.le.s32.totalorder 2, %s55
      // Predicated region
      $region205: #{tpu_custom_call.1} parent=5 // pred_check
        %p7405 = pneg %p7404
      $region206: #{tpu_custom_call.1} parent=5 // pred_check_branch
        %7407 = sbr.rel (%p7405) target = $region208
      $region207: #{tpu_custom_call.1} parent=5 // pred_region
        %s7408 = ssub.s32 %s55, 2
        // Predicated region
        $region209: #{tpu_custom_call.1} parent=207 // pred_check
          %p7409 = pneg %p608
        $region210: #{tpu_custom_call.1} parent=207 // pred_check_branch
          %7411 = sbr.rel (%p7409) target = $region212
        $region211: #{tpu_custom_call.1} parent=207 // pred_region
          %s7412 = sand.u32 %s593, 1
          %s7413 = scalar_lea.sflag [#allocation4], %s7412
          %s7414 = sand.u32 %s593, 1
          %s7415 = smul.addr %s7414, 8
          %s7416 = scalar_lea.vmem [#allocation34], %s7415
          %7417 = dma.done %s7413, 128
        $region212: #{tpu_custom_call.1} parent=207 // pred_fallthru
          _
        // Predicated region
        $region213: #{tpu_custom_call.1} parent=207 // pred_check
          %p7418 = pneg %p634
        $region214: #{tpu_custom_call.1} parent=207 // pred_check_branch
          %7420 = sbr.rel (%p7418) target = $region216
        $region215: #{tpu_custom_call.1} parent=207 // pred_region
          %s7421 = sand.u32 %s619, 1
          %s7422 = scalar_lea.sflag [#allocation36], %s7421
          %s7423 = sand.u32 %s619, 1
          %s7424 = smul.addr %s7423, 16
          %s7425 = scalar_lea.vmem [#allocation35], %s7424
          %7426 = dma.done %s7422, 256
        $region216: #{tpu_custom_call.1} parent=207 // pred_fallthru
          _
      $region208: #{tpu_custom_call.1} parent=5 // pred_fallthru
        _
    $region6: #{tpu_custom_call.1} parent=1 // loop_footer
      %s59 = sadd.s32 1, %s55
    $region7: #{tpu_custom_call.1} parent=1 // loop_footer_branch
      %54 = sbr.rel target = $region3
    $region8: #{tpu_custom_call.1} parent=1 // loop_exit
      _
    %7427 = vsyncpa [#allocation3], 1
    %s7428 = scalar_lea.sflag [#allocation3], 1
    %7429 = vsyncpa %s7428, 1
    %7430 = vsyncpa [#allocation6], 1
    %s7431 = scalar_lea.sflag [#allocation6], 1
    %7432 = vsyncpa %s7431, 1
    %7433 = vsyncpa [#allocation9], 1
    %s7434 = scalar_lea.sflag [#allocation9], 1
    %7435 = vsyncpa %s7434, 1
    %7436 = vsyncpa [#allocation12], 1
    %7437 = vsyncpa [#allocation15], 1
    %7438 = vsyncpa [#allocation18], 1
    %7439 = vsyncpa [#allocation21], 1
    %7440 = vsyncpa [#allocation24], 1
    %7441 = vsyncpa [#allocation27], 1
    %7442 = vsyncpa [#allocation30], 1
    %7443 = vsyncpa [#allocation33], 1
    %7444 = vsyncpa [#allocation4], 1
    %s7445 = scalar_lea.sflag [#allocation4], 1
    %7446 = vsyncpa %s7445, 1
    %7447 = vsyncpa [#allocation36], 1
    %s7448 = scalar_lea.sflag [#allocation36], 1
    %7449 = vsyncpa %s7448, 1

</llo_original>
